<compile_context>
chip_gen: v7x
topology: tpu7x:2x2x1
jax: 0.10.0
libtpu: 0.0.40
codegen_flags: <defaults>
</compile_context>

<pallas_src>
import functools

import jax
import jax.numpy as jnp
from jax.experimental import pallas as pl
from jax.experimental.pallas import tpu as pltpu

_TM = 2048                     # fallback row tile (review: 512 was too small)
_LRELU_SLOPE = 0.1             # matches F.leaky_relu(x, 0.1)
_BN_EPS = 1e-5
_FUSED_VMEM_BUDGET = 12 << 20  # fits default scoped VMEM on v5e/v6e/v7x
_MAX_FUSED_M_DEFAULT = 1 << 30


def _fused_row_budget(k, cout):
    """Max rows for the fused single-block path under the VMEM budget.

    Conservative per-row footprint: bf16 patches (x2 buffers) + f32 matmul
    result + centered copy + bf16 output (x2 buffers).
    """
    bytes_per_row = 4 * k + 12 * cout
    return max(1, _FUSED_VMEM_BUDGET // bytes_per_row)


# ---------------------------------------------------------------------------
# Kernels
# ---------------------------------------------------------------------------

def _conv_act_kernel(p_ref, w_ref, o_ref, *, act, slope):
    """(M,K)bf16 @ (K,Cout)bf16 -> f32 accumulate, fused activation, bf16 out."""
    y = jnp.dot(p_ref[...], w_ref[...], preferred_element_type=jnp.float32)
    if act == "lrelu":
        y = jnp.where(y >= 0, y, slope * y)
    elif act == "sigmoid":
        y = jax.nn.sigmoid(y)
    o_ref[...] = y.astype(o_ref.dtype)


def _conv_bn_act_kernel(p_ref, w_ref, o_ref, *, slope, eps):
    """Fully fused conv + training-mode BatchNorm (gamma=1, beta=0, biased
    var, exact two-pass stats) + leaky-ReLU over a single full-M block."""
    y = jnp.dot(p_ref[...], w_ref[...], preferred_element_type=jnp.float32)
    mean = jnp.mean(y, axis=0, keepdims=True)            # (1, Cout)
    c = y - mean
    var = jnp.mean(c * c, axis=0, keepdims=True)         # exact two-pass
    z = c * jax.lax.rsqrt(var + eps)
    o_ref[...] = jnp.where(z >= 0, z, slope * z).astype(o_ref.dtype)


def _conv_pstats_kernel(p_ref, w_ref, o_ref, s_ref, *, tm, m_valid):
    """Tiled conv matmul + per-tile partial sum / sum-of-squares.

    Partial stats go to a per-tile output block (no shared accumulator ->
    safe under "parallel" semantics on v7x).  Rows beyond `m_valid` in a
    ragged last tile are masked out of the statistics in-kernel.
    """
    y = jnp.dot(p_ref[...], w_ref[...], preferred_element_type=jnp.float32)
    rows = jax.lax.broadcasted_iota(jnp.int32, y.shape, 0) + pl.program_id(0) * tm
    ym = jnp.where(rows < m_valid, y, 0.0)
    s_ref[...] = jnp.concatenate(
        [jnp.sum(ym, axis=0, keepdims=True),
         jnp.sum(ym * ym, axis=0, keepdims=True)], axis=0)
    o_ref[...] = y


def _bn_act_kernel(y_ref, ss_ref, o_ref, *, slope):
    """Tiled normalize (+ leaky-ReLU) with precomputed scale/shift rows."""
    ss = ss_ref[...]                                      # (2, Cout)
    z = y_ref[...] * ss[0:1, :] + ss[1:2, :]
    o_ref[...] = jnp.where(z >= 0, z, slope * z).astype(o_ref.dtype)


# ---------------------------------------------------------------------------
# Plain-JAX glue: im2col in NHWC
# ---------------------------------------------------------------------------

def _im2col_nhwc(x, kh, kw, stride, pad):
    """x: (N,H,W,C) -> bf16 patches (N*Ho*Wo, kh*kw*C), plus Ho, Wo."""
    n, h, w, c = x.shape
    if pad:
        x = jnp.pad(x, ((0, 0), (pad, pad), (pad, pad), (0, 0)))
    hp, wp = h + 2 * pad, w + 2 * pad
    ho = (hp - kh) // stride + 1
    wo = (wp - kw) // stride + 1
    cols = [x[:, i:i + stride * ho:stride, j:j + stride * wo:stride, :]
            for i in range(kh) for j in range(kw)]
    patches = jnp.stack(cols, axis=3).reshape(n * ho * wo, kh * kw * c)
    return patches.astype(jnp.bfloat16), ho, wo


# ---------------------------------------------------------------------------
# One discriminator layer
# ---------------------------------------------------------------------------

def conv_block(x, w, *, stride, pad, use_bn, act, max_fused_m, tile_m):
    """x: (N,H,W,Cin) NHWC bf16; w: (Cout,Cin,KH,KW) f32. Returns NHWC bf16."""
    n = x.shape[0]
    cout, cin, kh, kw = w.shape

    patches, ho, wo = _im2col_nhwc(x, kh, kw, stride, pad)
    m, k = patches.shape
    # Patch K ordering is (kh, kw, cin) -> match the weight layout.
    w_mat = jnp.transpose(w, (2, 3, 1, 0)).reshape(k, cout).astype(jnp.bfloat16)

    flops = 2 * m * k * cout
    bytes_io = m * k * 2 + k * cout * 2 + m * cout * 2

    # ---- primary path: single full-M block, fully fused -------------------
    if m <= min(max_fused_m, _fused_row_budget(k, cout)):
        if use_bn:
            kern = functools.partial(_conv_bn_act_kernel,
                                     slope=_LRELU_SLOPE, eps=_BN_EPS)
        else:
            kern = functools.partial(_conv_act_kernel,
                                     act=act, slope=_LRELU_SLOPE)
        out = pl.pallas_call(
            kern,
            out_shape=jax.ShapeDtypeStruct((m, cout), jnp.bfloat16),
            grid=(1,),
            in_specs=[pl.BlockSpec((m, k), lambda i: (0, 0)),
                      pl.BlockSpec((k, cout), lambda i: (0, 0))],
            out_specs=pl.BlockSpec((m, cout), lambda i: (0, 0)),
            compiler_params=pltpu.CompilerParams(
                dimension_semantics=("parallel",)),
            cost_estimate=pl.CostEstimate(
                flops=flops,
                transcendentals=m * cout if act == "sigmoid" else 0,
                bytes_accessed=bytes_io),
        )(patches, w_mat)
        return out.reshape(n, ho, wo, cout)

    # ---- fallback: tiled over M (only when M exceeds the VMEM budget) -----
    tm = min(tile_m, m)
    grid = (pl.cdiv(m, tm),)
    p_spec = pl.BlockSpec((tm, k), lambda i: (i, 0))
    w_spec = pl.BlockSpec((k, cout), lambda i: (0, 0))      # resident weights
    o_spec = pl.BlockSpec((tm, cout), lambda i: (i, 0))
    par = pltpu.CompilerParams(dimension_semantics=("parallel",))

    if not use_bn:
        out = pl.pallas_call(
            functools.partial(_conv_act_kernel, act=act, slope=_LRELU_SLOPE),
            out_shape=jax.ShapeDtypeStruct((m, cout), jnp.bfloat16),
            grid=grid, in_specs=[p_spec, w_spec], out_specs=o_spec,
            compiler_params=par,
            cost_estimate=pl.CostEstimate(
                flops=flops,
                transcendentals=m * cout if act == "sigmoid" else 0,
                bytes_accessed=bytes_io),
        )(patches, w_mat)
        return out.reshape(n, ho, wo, cout)

    # BN: conv matmul + per-tile partial stats (parallel-safe), reduce in JAX,
    # then a tiled normalize + leaky-ReLU pass.
    conv_out, pstats = pl.pallas_call(
        functools.partial(_conv_pstats_kernel, tm=tm, m_valid=m),
        out_shape=(jax.ShapeDtypeStruct((m, cout), jnp.float32),
                   jax.ShapeDtypeStruct((grid[0], 2, cout), jnp.float32)),
        grid=grid, in_specs=[p_spec, w_spec],
        out_specs=(o_spec, pl.BlockSpec((None, 2, cout), lambda i: (i, 0, 0))),
        compiler_params=par,
        cost_estimate=pl.CostEstimate(
            flops=flops, transcendentals=0,
            bytes_accessed=bytes_io + m * cout * 2),
    )(patches, w_mat)

    s = jnp.sum(pstats, axis=0)                   # (2, Cout) exact f32 sums
    mean = s[0] / m
    var = s[1] / m - mean * mean                  # one-pass (fallback only)
    scale = jax.lax.rsqrt(var + _BN_EPS)
    ss = jnp.stack([scale, -mean * scale], axis=0)          # (2, Cout)

    out = pl.pallas_call(
        functools.partial(_bn_act_kernel, slope=_LRELU_SLOPE),
        out_shape=jax.ShapeDtypeStruct((m, cout), jnp.bfloat16),
        grid=grid,
        in_specs=[o_spec, pl.BlockSpec((2, cout), lambda i: (0, 0))],
        out_specs=o_spec,
        compiler_params=par,
        cost_estimate=pl.CostEstimate(
            flops=3 * m * cout, transcendentals=0,
            bytes_accessed=m * cout * 6),
    )(conv_out, ss)
    return out.reshape(n, ho, wo, cout)


def _final_conv_sigmoid(x, w):
    """Final valid conv (Cout=1) + sigmoid as a plain jnp dot (negligible
    compute; a Pallas launch with a lane-sparse (M,1) store costs more)."""
    cout, cin, kh, kw = w.shape
    patches, _, _ = _im2col_nhwc(x, kh, kw, stride=1, pad=0)
    w_mat = jnp.transpose(w, (2, 3, 1, 0)).reshape(kh * kw * cin, cout)
    y = jnp.dot(patches, w_mat.astype(jnp.bfloat16),
                preferred_element_type=jnp.float32)
    return jax.nn.sigmoid(y).reshape(-1, 1)


# ---------------------------------------------------------------------------
# Full forward pass
# ---------------------------------------------------------------------------

def init_params(nfeats, key):
    ks = jax.random.split(key, 5)
    shapes = [
        (nfeats, 3, 4, 4),
        (nfeats * 2, nfeats, 4, 4),
        (nfeats * 4, nfeats * 2, 4, 4),
        (nfeats * 8, nfeats * 4, 4, 4),
        (1, nfeats * 8, 4, 4),
    ]
    # Deterministic DCGAN-style init N(0, 0.02).
    return [0.02 * jax.random.normal(k, s, jnp.float32) for k, s in zip(ks, shapes)]


@functools.partial(jax.jit, static_argnames=("max_fused_m", "tile_m"))
def discriminator_forward(x, w1, w2, w3, w4, w5,
                          max_fused_m=_MAX_FUSED_M_DEFAULT, tile_m=_TM):
    """x: (N, 3, H, W) NCHW (PyTorch layout). Returns (N*Ho*Wo, 1)."""
    h = jnp.transpose(x, (0, 2, 3, 1)).astype(jnp.bfloat16)   # NCHW->NHWC once
    blk = functools.partial(conv_block, max_fused_m=max_fused_m, tile_m=tile_m)
    h = blk(h, w1, stride=2, pad=1, use_bn=False, act="lrelu")
    h = blk(h, w2, stride=2, pad=1, use_bn=True, act="lrelu")
    h = blk(h, w3, stride=2, pad=1, use_bn=True, act="lrelu")
    h = blk(h, w4, stride=2, pad=1, use_bn=True, act="lrelu")
    return _final_conv_sigmoid(h, w5)


def _reference_forward(x, w1, w2, w3, w4, w5):
    """Pure-JAX reference (lax conv, same bf16 operand cast, f32 accumulate)."""
    def conv(v, w, stride, pad):
        return jax.lax.conv_general_dilated(
            v.astype(jnp.bfloat16), w.astype(jnp.bfloat16),
            (stride, stride), [(pad, pad), (pad, pad)],
            dimension_numbers=("NCHW", "OIHW", "NCHW"),
            preferred_element_type=jnp.float32)

    def bn(v):
        mean = v.mean(axis=(0, 2, 3), keepdims=True)
        var = ((v - mean) ** 2).mean(axis=(0, 2, 3), keepdims=True)
        return (v - mean) * jax.lax.rsqrt(var + _BN_EPS)

    lrelu = lambda v: jnp.where(v >= 0, v, _LRELU_SLOPE * v)
    h = lrelu(conv(x, w1, 2, 1))
    h = lrelu(bn(conv(h, w2, 2, 1)))
    h = lrelu(bn(conv(h, w3, 2, 1)))
    h = lrelu(bn(conv(h, w4, 2, 1)))
    h = jax.nn.sigmoid(conv(h, w5, 1, 0))
    return h.reshape(-1, 1)


if __name__ == "__main__":
    key = jax.random.PRNGKey(0)
    k_x, k_w = jax.random.split(key)

    batch, nfeats = 3, 8
    # 64x64 input: four stride-2 convs -> 4x4, final 4x4 valid conv -> 1x1.
    x = jax.random.normal(k_x, (batch, 3, 64, 64), jnp.float32)
    w1, w2, w3, w4, w5 = init_params(nfeats, k_w)

    ref = jax.block_until_ready(_reference_forward(x, w1, w2, w3, w4, w5))

    # Primary (fully fused single-block) path.
    out = jax.block_until_ready(discriminator_forward(x, w1, w2, w3, w4, w5))
    assert out.shape == (batch, 1), out.shape
    assert jnp.allclose(out, ref, rtol=1e-3, atol=1e-3), (out, ref)

    # Also exercise the tiled fallback path (per-tile partial BN stats,
    # ragged-tile masking, "parallel" grid semantics).
    out_tiled = jax.block_until_ready(
        discriminator_forward(x, w1, w2, w3, w4, w5, max_fused_m=0, tile_m=512))
    assert out_tiled.shape == (batch, 1), out_tiled.shape
    assert jnp.allclose(out_tiled, ref, rtol=1e-3, atol=1e-3), (out_tiled, ref)

    print("KERNEL_OK")
</pallas_src>

<mosaic_0001>
module attributes {stable_mosaic.version = 11 : i64} {
  func.func @_conv_act_kernel(%arg0: i32, %arg1: memref<3072x48xbf16, #tpu.memory_space<vmem>>, %arg2: memref<48x8xbf16, #tpu.memory_space<vmem>>, %arg3: memref<3072x8xbf16, #tpu.memory_space<vmem>>) attributes {dimension_semantics = [#tpu.dimension_semantics<parallel>], iteration_bounds = array<i64: 1>, scalar_prefetch = 0 : i64, scratch_operands = 0 : i64, tpu.core_type = #tpu.core_type<tc>, window_params = [{pipeline_mode = #tpu.pipeline_mode<synchronous>, transform_indices = @transform_0, window_bounds = array<i64: 3072, 48>}, {pipeline_mode = #tpu.pipeline_mode<synchronous>, transform_indices = @transform_1, window_bounds = array<i64: 48, 8>}, {pipeline_mode = #tpu.pipeline_mode<synchronous>, transform_indices = @transform_2, window_bounds = array<i64: 3072, 8>}]} {
    %c0 = arith.constant 0 : index
    %c0_0 = arith.constant 0 : index
    %0 = vector.load %arg1[%c0, %c0_0] : memref<3072x48xbf16, #tpu.memory_space<vmem>>, vector<3072x48xbf16>
    %c0_1 = arith.constant 0 : index
    %c0_2 = arith.constant 0 : index
    %1 = vector.load %arg2[%c0_1, %c0_2] : memref<48x8xbf16, #tpu.memory_space<vmem>>, vector<48x8xbf16>
    %cst = arith.constant dense<0.000000e+00> : vector<3072x8xf32>
    %2 = tpu.matmul %0, %1, %cst {dimension_numbers = #tpu.dot_dimension_numbers<[1], [0], [0], [1], [0, 0, 1, 1], [], []>} : vector<3072x48xbf16>, vector<48x8xbf16>, vector<3072x8xf32> -> vector<3072x8xf32>
    %cst_3 = arith.constant 0.000000e+00 : f32
    %3 = vector.broadcast %cst_3 : f32 to vector<3072x8xf32>
    %4 = arith.cmpf oge, %2, %3 : vector<3072x8xf32>
    %cst_4 = arith.constant 1.000000e-01 : f32
    %5 = vector.broadcast %cst_4 : f32 to vector<3072x8xf32>
    %6 = arith.mulf %5, %2 : vector<3072x8xf32>
    %7 = arith.select %4, %2, %6 : vector<3072x8xi1>, vector<3072x8xf32>
    %8 = arith.truncf %7 : vector<3072x8xf32> to vector<3072x8xbf16>
    %c0_5 = arith.constant 0 : index
    %c0_6 = arith.constant 0 : index
    %9 = vector.load %arg3[%c0_5, %c0_6] : memref<3072x8xbf16, #tpu.memory_space<vmem>>, vector<3072x8xbf16>
    tpu.vector_store %arg3[%c0_5, %c0_6], %8 {strides = array<i32>} : memref<3072x8xbf16, #tpu.memory_space<vmem>>, vector<3072x8xbf16>,
    return
  }
  func.func @transform_0(%arg0: i32) -> (i32, i32) {
    %c0_i32 = arith.constant 0 : i32
    %c0_i32_0 = arith.constant 0 : i32
    %c0_i32_1 = arith.constant 0 : i32
    return %c0_i32, %c0_i32_0 : i32, i32
  }
  func.func @transform_1(%arg0: i32) -> (i32, i32) {
    %c0_i32 = arith.constant 0 : i32
    %c0_i32_0 = arith.constant 0 : i32
    %c0_i32_1 = arith.constant 0 : i32
    return %c0_i32, %c0_i32_0 : i32, i32
  }
  func.func @transform_2(%arg0: i32) -> (i32, i32) {
    %c0_i32 = arith.constant 0 : i32
    %c0_i32_0 = arith.constant 0 : i32
    %c0_i32_1 = arith.constant 0 : i32
    return %c0_i32, %c0_i32_0 : i32, i32
  }
}

module attributes {stable_mosaic.version = 11 : i64} {
  func.func @_conv_bn_act_kernel(%arg0: i32, %arg1: memref<768x128xbf16, #tpu.memory_space<vmem>>, %arg2: memref<128x16xbf16, #tpu.memory_space<vmem>>, %arg3: memref<768x16xbf16, #tpu.memory_space<vmem>>) attributes {dimension_semantics = [#tpu.dimension_semantics<parallel>], iteration_bounds = array<i64: 1>, scalar_prefetch = 0 : i64, scratch_operands = 0 : i64, tpu.core_type = #tpu.core_type<tc>, window_params = [{pipeline_mode = #tpu.pipeline_mode<synchronous>, transform_indices = @transform_0, window_bounds = array<i64: 768, 128>}, {pipeline_mode = #tpu.pipeline_mode<synchronous>, transform_indices = @transform_1, window_bounds = array<i64: 128, 16>}, {pipeline_mode = #tpu.pipeline_mode<synchronous>, transform_indices = @transform_2, window_bounds = array<i64: 768, 16>}]} {
    %c0 = arith.constant 0 : index
    %c0_0 = arith.constant 0 : index
    %0 = vector.load %arg1[%c0, %c0_0] : memref<768x128xbf16, #tpu.memory_space<vmem>>, vector<768x128xbf16>
    %c0_1 = arith.constant 0 : index
    %c0_2 = arith.constant 0 : index
    %1 = vector.load %arg2[%c0_1, %c0_2] : memref<128x16xbf16, #tpu.memory_space<vmem>>, vector<128x16xbf16>
    %cst = arith.constant dense<0.000000e+00> : vector<768x16xf32>
    %2 = tpu.matmul %0, %1, %cst {dimension_numbers = #tpu.dot_dimension_numbers<[1], [0], [0], [1], [0, 0, 1, 1], [], []>} : vector<768x128xbf16>, vector<128x16xbf16>, vector<768x16xf32> -> vector<768x16xf32>
    %cst_3 = arith.constant dense<0.000000e+00> : vector<16xf32>
    %3 = vector.multi_reduction <add>, %2, %cst_3 [0] : vector<768x16xf32> to vector<16xf32>
    %4 = vector.shape_cast %3 : vector<16xf32> to vector<1x16xf32>
    %cst_4 = arith.constant 7.680000e+02 : f32
    %5 = vector.broadcast %cst_4 : f32 to vector<1x16xf32>
    %6 = arith.divf %4, %5 : vector<1x16xf32>
    %7 = vector.broadcast %6 : vector<1x16xf32> to vector<768x16xf32>
    %8 = arith.subf %2, %7 : vector<768x16xf32>
    %9 = arith.mulf %8, %8 : vector<768x16xf32>
    %cst_5 = arith.constant dense<0.000000e+00> : vector<16xf32>
    %10 = vector.multi_reduction <add>, %9, %cst_5 [0] : vector<768x16xf32> to vector<16xf32>
    %11 = vector.shape_cast %10 : vector<16xf32> to vector<1x16xf32>
    %cst_6 = arith.constant 7.680000e+02 : f32
    %12 = vector.broadcast %cst_6 : f32 to vector<1x16xf32>
    %13 = arith.divf %11, %12 : vector<1x16xf32>
    %cst_7 = arith.constant 9.99999974E-6 : f32
    %14 = vector.broadcast %cst_7 : f32 to vector<1x16xf32>
    %15 = arith.addf %13, %14 : vector<1x16xf32>
    %16 = math.rsqrt %15 : vector<1x16xf32>
    %17 = vector.broadcast %16 : vector<1x16xf32> to vector<768x16xf32>
    %18 = arith.mulf %8, %17 : vector<768x16xf32>
    %cst_8 = arith.constant 0.000000e+00 : f32
    %19 = vector.broadcast %cst_8 : f32 to vector<768x16xf32>
    %20 = arith.cmpf oge, %18, %19 : vector<768x16xf32>
    %cst_9 = arith.constant 1.000000e-01 : f32
    %21 = vector.broadcast %cst_9 : f32 to vector<768x16xf32>
    %22 = arith.mulf %21, %18 : vector<768x16xf32>
    %23 = arith.select %20, %18, %22 : vector<768x16xi1>, vector<768x16xf32>
    %24 = arith.truncf %23 : vector<768x16xf32> to vector<768x16xbf16>
    %c0_10 = arith.constant 0 : index
    %c0_11 = arith.constant 0 : index
    %25 = vector.load %arg3[%c0_10, %c0_11] : memref<768x16xbf16, #tpu.memory_space<vmem>>, vector<768x16xbf16>
    tpu.vector_store %arg3[%c0_10, %c0_11], %24 {strides = array<i32>} : memref<768x16xbf16, #tpu.memory_space<vmem>>, vector<768x16xbf16>,
    return
  }
  func.func @transform_0(%arg0: i32) -> (i32, i32) {
    %c0_i32 = arith.constant 0 : i32
    %c0_i32_0 = arith.constant 0 : i32
    %c0_i32_1 = arith.constant 0 : i32
    return %c0_i32, %c0_i32_0 : i32, i32
  }
  func.func @transform_1(%arg0: i32) -> (i32, i32) {
    %c0_i32 = arith.constant 0 : i32
    %c0_i32_0 = arith.constant 0 : i32
    %c0_i32_1 = arith.constant 0 : i32
    return %c0_i32, %c0_i32_0 : i32, i32
  }
  func.func @transform_2(%arg0: i32) -> (i32, i32) {
    %c0_i32 = arith.constant 0 : i32
    %c0_i32_0 = arith.constant 0 : i32
    %c0_i32_1 = arith.constant 0 : i32
    return %c0_i32, %c0_i32_0 : i32, i32
  }
}

module attributes {stable_mosaic.version = 11 : i64} {
  func.func @_conv_bn_act_kernel(%arg0: i32, %arg1: memref<192x256xbf16, #tpu.memory_space<vmem>>, %arg2: memref<256x32xbf16, #tpu.memory_space<vmem>>, %arg3: memref<192x32xbf16, #tpu.memory_space<vmem>>) attributes {dimension_semantics = [#tpu.dimension_semantics<parallel>], iteration_bounds = array<i64: 1>, scalar_prefetch = 0 : i64, scratch_operands = 0 : i64, tpu.core_type = #tpu.core_type<tc>, window_params = [{pipeline_mode = #tpu.pipeline_mode<synchronous>, transform_indices = @transform_0, window_bounds = array<i64: 192, 256>}, {pipeline_mode = #tpu.pipeline_mode<synchronous>, transform_indices = @transform_1, window_bounds = array<i64: 256, 32>}, {pipeline_mode = #tpu.pipeline_mode<synchronous>, transform_indices = @transform_2, window_bounds = array<i64: 192, 32>}]} {
    %c0 = arith.constant 0 : index
    %c0_0 = arith.constant 0 : index
    %0 = vector.load %arg1[%c0, %c0_0] : memref<192x256xbf16, #tpu.memory_space<vmem>>, vector<192x256xbf16>
    %c0_1 = arith.constant 0 : index
    %c0_2 = arith.constant 0 : index
    %1 = vector.load %arg2[%c0_1, %c0_2] : memref<256x32xbf16, #tpu.memory_space<vmem>>, vector<256x32xbf16>
    %cst = arith.constant dense<0.000000e+00> : vector<192x32xf32>
    %2 = tpu.matmul %0, %1, %cst {dimension_numbers = #tpu.dot_dimension_numbers<[1], [0], [0], [1], [0, 0, 1, 1], [], []>} : vector<192x256xbf16>, vector<256x32xbf16>, vector<192x32xf32> -> vector<192x32xf32>
    %cst_3 = arith.constant dense<0.000000e+00> : vector<32xf32>
    %3 = vector.multi_reduction <add>, %2, %cst_3 [0] : vector<192x32xf32> to vector<32xf32>
    %4 = vector.shape_cast %3 : vector<32xf32> to vector<1x32xf32>
    %cst_4 = arith.constant 1.920000e+02 : f32
    %5 = vector.broadcast %cst_4 : f32 to vector<1x32xf32>
    %6 = arith.divf %4, %5 : vector<1x32xf32>
    %7 = vector.broadcast %6 : vector<1x32xf32> to vector<192x32xf32>
    %8 = arith.subf %2, %7 : vector<192x32xf32>
    %9 = arith.mulf %8, %8 : vector<192x32xf32>
    %cst_5 = arith.constant dense<0.000000e+00> : vector<32xf32>
    %10 = vector.multi_reduction <add>, %9, %cst_5 [0] : vector<192x32xf32> to vector<32xf32>
    %11 = vector.shape_cast %10 : vector<32xf32> to vector<1x32xf32>
    %cst_6 = arith.constant 1.920000e+02 : f32
    %12 = vector.broadcast %cst_6 : f32 to vector<1x32xf32>
    %13 = arith.divf %11, %12 : vector<1x32xf32>
    %cst_7 = arith.constant 9.99999974E-6 : f32
    %14 = vector.broadcast %cst_7 : f32 to vector<1x32xf32>
    %15 = arith.addf %13, %14 : vector<1x32xf32>
    %16 = math.rsqrt %15 : vector<1x32xf32>
    %17 = vector.broadcast %16 : vector<1x32xf32> to vector<192x32xf32>
    %18 = arith.mulf %8, %17 : vector<192x32xf32>
    %cst_8 = arith.constant 0.000000e+00 : f32
    %19 = vector.broadcast %cst_8 : f32 to vector<192x32xf32>
    %20 = arith.cmpf oge, %18, %19 : vector<192x32xf32>
    %cst_9 = arith.constant 1.000000e-01 : f32
    %21 = vector.broadcast %cst_9 : f32 to vector<192x32xf32>
    %22 = arith.mulf %21, %18 : vector<192x32xf32>
    %23 = arith.select %20, %18, %22 : vector<192x32xi1>, vector<192x32xf32>
    %24 = arith.truncf %23 : vector<192x32xf32> to vector<192x32xbf16>
    %c0_10 = arith.constant 0 : index
    %c0_11 = arith.constant 0 : index
    %25 = vector.load %arg3[%c0_10, %c0_11] : memref<192x32xbf16, #tpu.memory_space<vmem>>, vector<192x32xbf16>
    tpu.vector_store %arg3[%c0_10, %c0_11], %24 {strides = array<i32>} : memref<192x32xbf16, #tpu.memory_space<vmem>>, vector<192x32xbf16>,
    return
  }
  func.func @transform_0(%arg0: i32) -> (i32, i32) {
    %c0_i32 = arith.constant 0 : i32
    %c0_i32_0 = arith.constant 0 : i32
    %c0_i32_1 = arith.constant 0 : i32
    return %c0_i32, %c0_i32_0 : i32, i32
  }
  func.func @transform_1(%arg0: i32) -> (i32, i32) {
    %c0_i32 = arith.constant 0 : i32
    %c0_i32_0 = arith.constant 0 : i32
    %c0_i32_1 = arith.constant 0 : i32
    return %c0_i32, %c0_i32_0 : i32, i32
  }
  func.func @transform_2(%arg0: i32) -> (i32, i32) {
    %c0_i32 = arith.constant 0 : i32
    %c0_i32_0 = arith.constant 0 : i32
    %c0_i32_1 = arith.constant 0 : i32
    return %c0_i32, %c0_i32_0 : i32, i32
  }
}

module attributes {stable_mosaic.version = 11 : i64} {
  func.func @_conv_bn_act_kernel(%arg0: i32, %arg1: memref<48x512xbf16, #tpu.memory_space<vmem>>, %arg2: memref<512x64xbf16, #tpu.memory_space<vmem>>, %arg3: memref<48x64xbf16, #tpu.memory_space<vmem>>) attributes {dimension_semantics = [#tpu.dimension_semantics<parallel>], iteration_bounds = array<i64: 1>, scalar_prefetch = 0 : i64, scratch_operands = 0 : i64, tpu.core_type = #tpu.core_type<tc>, window_params = [{pipeline_mode = #tpu.pipeline_mode<synchronous>, transform_indices = @transform_0, window_bounds = array<i64: 48, 512>}, {pipeline_mode = #tpu.pipeline_mode<synchronous>, transform_indices = @transform_1, window_bounds = array<i64: 512, 64>}, {pipeline_mode = #tpu.pipeline_mode<synchronous>, transform_indices = @transform_2, window_bounds = array<i64: 48, 64>}]} {
    %c0 = arith.constant 0 : index
    %c0_0 = arith.constant 0 : index
    %0 = vector.load %arg1[%c0, %c0_0] : memref<48x512xbf16, #tpu.memory_space<vmem>>, vector<48x512xbf16>
    %c0_1 = arith.constant 0 : index
    %c0_2 = arith.constant 0 : index
    %1 = vector.load %arg2[%c0_1, %c0_2] : memref<512x64xbf16, #tpu.memory_space<vmem>>, vector<512x64xbf16>
    %cst = arith.constant dense<0.000000e+00> : vector<48x64xf32>
    %2 = tpu.matmul %0, %1, %cst {dimension_numbers = #tpu.dot_dimension_numbers<[1], [0], [0], [1], [0, 0, 1, 1], [], []>} : vector<48x512xbf16>, vector<512x64xbf16>, vector<48x64xf32> -> vector<48x64xf32>
    %cst_3 = arith.constant dense<0.000000e+00> : vector<64xf32>
    %3 = vector.multi_reduction <add>, %2, %cst_3 [0] : vector<48x64xf32> to vector<64xf32>
    %4 = vector.shape_cast %3 : vector<64xf32> to vector<1x64xf32>
    %cst_4 = arith.constant 4.800000e+01 : f32
    %5 = vector.broadcast %cst_4 : f32 to vector<1x64xf32>
    %6 = arith.divf %4, %5 : vector<1x64xf32>
    %7 = vector.broadcast %6 : vector<1x64xf32> to vector<48x64xf32>
    %8 = arith.subf %2, %7 : vector<48x64xf32>
    %9 = arith.mulf %8, %8 : vector<48x64xf32>
    %cst_5 = arith.constant dense<0.000000e+00> : vector<64xf32>
    %10 = vector.multi_reduction <add>, %9, %cst_5 [0] : vector<48x64xf32> to vector<64xf32>
    %11 = vector.shape_cast %10 : vector<64xf32> to vector<1x64xf32>
    %cst_6 = arith.constant 4.800000e+01 : f32
    %12 = vector.broadcast %cst_6 : f32 to vector<1x64xf32>
    %13 = arith.divf %11, %12 : vector<1x64xf32>
    %cst_7 = arith.constant 9.99999974E-6 : f32
    %14 = vector.broadcast %cst_7 : f32 to vector<1x64xf32>
    %15 = arith.addf %13, %14 : vector<1x64xf32>
    %16 = math.rsqrt %15 : vector<1x64xf32>
    %17 = vector.broadcast %16 : vector<1x64xf32> to vector<48x64xf32>
    %18 = arith.mulf %8, %17 : vector<48x64xf32>
    %cst_8 = arith.constant 0.000000e+00 : f32
    %19 = vector.broadcast %cst_8 : f32 to vector<48x64xf32>
    %20 = arith.cmpf oge, %18, %19 : vector<48x64xf32>
    %cst_9 = arith.constant 1.000000e-01 : f32
    %21 = vector.broadcast %cst_9 : f32 to vector<48x64xf32>
    %22 = arith.mulf %21, %18 : vector<48x64xf32>
    %23 = arith.select %20, %18, %22 : vector<48x64xi1>, vector<48x64xf32>
    %24 = arith.truncf %23 : vector<48x64xf32> to vector<48x64xbf16>
    %c0_10 = arith.constant 0 : index
    %c0_11 = arith.constant 0 : index
    %25 = vector.load %arg3[%c0_10, %c0_11] : memref<48x64xbf16, #tpu.memory_space<vmem>>, vector<48x64xbf16>
    tpu.vector_store %arg3[%c0_10, %c0_11], %24 {strides = array<i32>} : memref<48x64xbf16, #tpu.memory_space<vmem>>, vector<48x64xbf16>,
    return
  }
  func.func @transform_0(%arg0: i32) -> (i32, i32) {
    %c0_i32 = arith.constant 0 : i32
    %c0_i32_0 = arith.constant 0 : i32
    %c0_i32_1 = arith.constant 0 : i32
    return %c0_i32, %c0_i32_0 : i32, i32
  }
  func.func @transform_1(%arg0: i32) -> (i32, i32) {
    %c0_i32 = arith.constant 0 : i32
    %c0_i32_0 = arith.constant 0 : i32
    %c0_i32_1 = arith.constant 0 : i32
    return %c0_i32, %c0_i32_0 : i32, i32
  }
  func.func @transform_2(%arg0: i32) -> (i32, i32) {
    %c0_i32 = arith.constant 0 : i32
    %c0_i32_0 = arith.constant 0 : i32
    %c0_i32_1 = arith.constant 0 : i32
    return %c0_i32, %c0_i32_0 : i32, i32
  }
}

</mosaic_0001>

<llo_original>
// kernel: discriminator_forward.4
$region0: #{discriminator_forward.4}
  #allocation0 [shape = 'u32[]', space=smem, size = 0x4, offset = 0x4, fixed_abs, tag = 'smem constant byte address 0x4 - core index']
  #allocation1 [shape = 'u32[144,128]{1,0:T(1,128)}', space=vmem, size = 0x12000, scoped, tag = 'internal scratch']
  %s0 = inlined_call_operand.vmem [shape: bf16[3072,48], index: 0, kind: input, shape index: {}]
  %s1 = inlined_call_operand.vmem [shape: bf16[48,8], index: 1, kind: input, shape index: {}]
  %s2 = inlined_call_operand.vmem [shape: bf16[3072,8], index: 2, kind: output, shape index: {}]
  %s3 = sld [smem:[#allocation0]]
  $region18: #{discriminator_forward.4} parent=0
    _
  %s5 = ssub.s32 1, %s3
  %s6 = scalar_select 0, %s5, %s3
  // Predicated region
  $region2: #{discriminator_forward.4} parent=0 // pred_check
    _
  $region3: #{discriminator_forward.4} parent=0 // pred_check_branch
    %8 = sbr.rel (0) target = $region5
  $region4: #{discriminator_forward.4} parent=0 // pred_region
    _
  $region5: #{discriminator_forward.4} parent=0 // pred_fallthru
    _
  // Predicated region
  $region6: #{discriminator_forward.4} parent=0 // pred_check
    _
  $region7: #{discriminator_forward.4} parent=0 // pred_check_branch
    %10 = sbr.rel (0) target = $region9
  $region8: #{discriminator_forward.4} parent=0 // pred_region
    _
  $region9: #{discriminator_forward.4} parent=0 // pred_fallthru
    _
  %v12 = vld [vmem:[%s0] sm:$0xf]
  %v13 = vld [vmem:[%s0 + $0x4] sm:$0xf]
  %v14 = vld [vmem:[%s0 + $0x8] sm:$0xf]
  %v15 = vld [vmem:[%s0 + $0xc] sm:$0xf]
  %v16 = vld [vmem:[%s0 + $0x10] sm:$0xf]
  %v17 = vld [vmem:[%s0 + $0x14] sm:$0xf]
  %v18 = vld [vmem:[%s0 + $0x18] sm:$0xf]
  %v19 = vld [vmem:[%s0 + $0x1c] sm:$0xf]
  %v20 = vld [vmem:[%s0 + $0x20] sm:$0xf]
  %v21 = vld [vmem:[%s0 + $0x24] sm:$0xf]
  %v22 = vld [vmem:[%s0 + $0x28] sm:$0xf]
  %v23 = vld [vmem:[%s0 + $0x2c] sm:$0xf]
  %v24 = vld [vmem:[%s0 + $0x30] sm:$0xf]
  %v25 = vld [vmem:[%s0 + $0x34] sm:$0xf]
  %v26 = vld [vmem:[%s0 + $0x38] sm:$0xf]
  %v27 = vld [vmem:[%s0 + $0x3c] sm:$0xf]
  %v28 = vld [vmem:[%s0 + $0x40] sm:$0xf]
  %v29 = vld [vmem:[%s0 + $0x44] sm:$0xf]
  %v30 = vld [vmem:[%s0 + $0x48] sm:$0xf]
  %v31 = vld [vmem:[%s0 + $0x4c] sm:$0xf]
  %v32 = vld [vmem:[%s0 + $0x50] sm:$0xf]
  %v33 = vld [vmem:[%s0 + $0x54] sm:$0xf]
  %v34 = vld [vmem:[%s0 + $0x58] sm:$0xf]
  %v35 = vld [vmem:[%s0 + $0x5c] sm:$0xf]
  %v36 = vld [vmem:[%s0 + $0x60] sm:$0xf]
  %v37 = vld [vmem:[%s0 + $0x64] sm:$0xf]
  %v38 = vld [vmem:[%s0 + $0x68] sm:$0xf]
  %v39 = vld [vmem:[%s0 + $0x6c] sm:$0xf]
  %v40 = vld [vmem:[%s0 + $0x70] sm:$0xf]
  %v41 = vld [vmem:[%s0 + $0x74] sm:$0xf]
  %v42 = vld [vmem:[%s0 + $0x78] sm:$0xf]
  %v43 = vld [vmem:[%s0 + $0x7c] sm:$0xf]
  %v44 = vld [vmem:[%s0 + $0x80] sm:$0xf]
  %v45 = vld [vmem:[%s0 + $0x84] sm:$0xf]
  %v46 = vld [vmem:[%s0 + $0x88] sm:$0xf]
  %v47 = vld [vmem:[%s0 + $0x8c] sm:$0xf]
  %v48 = vld [vmem:[%s0 + $0x90] sm:$0xf]
  %v49 = vld [vmem:[%s0 + $0x94] sm:$0xf]
  %v50 = vld [vmem:[%s0 + $0x98] sm:$0xf]
  %v51 = vld [vmem:[%s0 + $0x9c] sm:$0xf]
  %v52 = vld [vmem:[%s0 + $0xa0] sm:$0xf]
  %v53 = vld [vmem:[%s0 + $0xa4] sm:$0xf]
  %v54 = vld [vmem:[%s0 + $0xa8] sm:$0xf]
  %v55 = vld [vmem:[%s0 + $0xac] sm:$0xf]
  %v56 = vld [vmem:[%s0 + $0xb0] sm:$0xf]
  %v57 = vld [vmem:[%s0 + $0xb4] sm:$0xf]
  %v58 = vld [vmem:[%s0 + $0xb8] sm:$0xf]
  %v59 = vld [vmem:[%s0 + $0xbc] sm:$0xf]
  %v60 = vld [vmem:[%s0 + $0xc0] sm:$0xf]
  %v61 = vld [vmem:[%s0 + $0xc4] sm:$0xf]
  %v62 = vld [vmem:[%s0 + $0xc8] sm:$0xf]
  %v63 = vld [vmem:[%s0 + $0xcc] sm:$0xf]
  %v64 = vld [vmem:[%s0 + $0xd0] sm:$0xf]
  %v65 = vld [vmem:[%s0 + $0xd4] sm:$0xf]
  %v66 = vld [vmem:[%s0 + $0xd8] sm:$0xf]
  %v67 = vld [vmem:[%s0 + $0xdc] sm:$0xf]
  %v68 = vld [vmem:[%s0 + $0xe0] sm:$0xf]
  %v69 = vld [vmem:[%s0 + $0xe4] sm:$0xf]
  %v70 = vld [vmem:[%s0 + $0xe8] sm:$0xf]
  %v71 = vld [vmem:[%s0 + $0xec] sm:$0xf]
  %v72 = vld [vmem:[%s0 + $0xf0] sm:$0xf]
  %v73 = vld [vmem:[%s0 + $0xf4] sm:$0xf]
  %v74 = vld [vmem:[%s0 + $0xf8] sm:$0xf]
  %v75 = vld [vmem:[%s0 + $0xfc] sm:$0xf]
  %v76 = vld [vmem:[%s0 + $0x100] sm:$0xf]
  %v77 = vld [vmem:[%s0 + $0x104] sm:$0xf]
  %v78 = vld [vmem:[%s0 + $0x108] sm:$0xf]
  %v79 = vld [vmem:[%s0 + $0x10c] sm:$0xf]
  %v80 = vld [vmem:[%s0 + $0x110] sm:$0xf]
  %v81 = vld [vmem:[%s0 + $0x114] sm:$0xf]
  %v82 = vld [vmem:[%s0 + $0x118] sm:$0xf]
  %v83 = vld [vmem:[%s0 + $0x11c] sm:$0xf]
  %v84 = vld [vmem:[%s0 + $0x120] sm:$0xf]
  %v85 = vld [vmem:[%s0 + $0x124] sm:$0xf]
  %v86 = vld [vmem:[%s0 + $0x128] sm:$0xf]
  %v87 = vld [vmem:[%s0 + $0x12c] sm:$0xf]
  %v88 = vld [vmem:[%s0 + $0x130] sm:$0xf]
  %v89 = vld [vmem:[%s0 + $0x134] sm:$0xf]
  %v90 = vld [vmem:[%s0 + $0x138] sm:$0xf]
  %v91 = vld [vmem:[%s0 + $0x13c] sm:$0xf]
  %v92 = vld [vmem:[%s0 + $0x140] sm:$0xf]
  %v93 = vld [vmem:[%s0 + $0x144] sm:$0xf]
  %v94 = vld [vmem:[%s0 + $0x148] sm:$0xf]
  %v95 = vld [vmem:[%s0 + $0x14c] sm:$0xf]
  %v96 = vld [vmem:[%s0 + $0x150] sm:$0xf]
  %v97 = vld [vmem:[%s0 + $0x154] sm:$0xf]
  %v98 = vld [vmem:[%s0 + $0x158] sm:$0xf]
  %v99 = vld [vmem:[%s0 + $0x15c] sm:$0xf]
  %v100 = vld [vmem:[%s0 + $0x160] sm:$0xf]
  %v101 = vld [vmem:[%s0 + $0x164] sm:$0xf]
  %v102 = vld [vmem:[%s0 + $0x168] sm:$0xf]
  %v103 = vld [vmem:[%s0 + $0x16c] sm:$0xf]
  %v104 = vld [vmem:[%s0 + $0x170] sm:$0xf]
  %v105 = vld [vmem:[%s0 + $0x174] sm:$0xf]
  %v106 = vld [vmem:[%s0 + $0x178] sm:$0xf]
  %v107 = vld [vmem:[%s0 + $0x17c] sm:$0xf]
  %v108 = vld [vmem:[%s0 + $0x180] sm:$0xf]
  %v109 = vld [vmem:[%s0 + $0x184] sm:$0xf]
  %v110 = vld [vmem:[%s0 + $0x188] sm:$0xf]
  %v111 = vld [vmem:[%s0 + $0x18c] sm:$0xf]
  %v112 = vld [vmem:[%s0 + $0x190] sm:$0xf]
  %v113 = vld [vmem:[%s0 + $0x194] sm:$0xf]
  %v114 = vld [vmem:[%s0 + $0x198] sm:$0xf]
  %v115 = vld [vmem:[%s0 + $0x19c] sm:$0xf]
  %v116 = vld [vmem:[%s0 + $0x1a0] sm:$0xf]
  %v117 = vld [vmem:[%s0 + $0x1a4] sm:$0xf]
  %v118 = vld [vmem:[%s0 + $0x1a8] sm:$0xf]
  %v119 = vld [vmem:[%s0 + $0x1ac] sm:$0xf]
  %v120 = vld [vmem:[%s0 + $0x1b0] sm:$0xf]
  %v121 = vld [vmem:[%s0 + $0x1b4] sm:$0xf]
  %v122 = vld [vmem:[%s0 + $0x1b8] sm:$0xf]
  %v123 = vld [vmem:[%s0 + $0x1bc] sm:$0xf]
  %v124 = vld [vmem:[%s0 + $0x1c0] sm:$0xf]
  %v125 = vld [vmem:[%s0 + $0x1c4] sm:$0xf]
  %v126 = vld [vmem:[%s0 + $0x1c8] sm:$0xf]
  %v127 = vld [vmem:[%s0 + $0x1cc] sm:$0xf]
  %v128 = vld [vmem:[%s0 + $0x1d0] sm:$0xf]
  %v129 = vld [vmem:[%s0 + $0x1d4] sm:$0xf]
  %v130 = vld [vmem:[%s0 + $0x1d8] sm:$0xf]
  %v131 = vld [vmem:[%s0 + $0x1dc] sm:$0xf]
  %v132 = vld [vmem:[%s0 + $0x1e0] sm:$0xf]
  %v133 = vld [vmem:[%s0 + $0x1e4] sm:$0xf]
  %v134 = vld [vmem:[%s0 + $0x1e8] sm:$0xf]
  %v135 = vld [vmem:[%s0 + $0x1ec] sm:$0xf]
  %v136 = vld [vmem:[%s0 + $0x1f0] sm:$0xf]
  %v137 = vld [vmem:[%s0 + $0x1f4] sm:$0xf]
  %v138 = vld [vmem:[%s0 + $0x1f8] sm:$0xf]
  %v139 = vld [vmem:[%s0 + $0x1fc] sm:$0xf]
  %v140 = vld [vmem:[%s0 + $0x200] sm:$0xf]
  %v141 = vld [vmem:[%s0 + $0x204] sm:$0xf]
  %v142 = vld [vmem:[%s0 + $0x208] sm:$0xf]
  %v143 = vld [vmem:[%s0 + $0x20c] sm:$0xf]
  %v144 = vld [vmem:[%s0 + $0x210] sm:$0xf]
  %v145 = vld [vmem:[%s0 + $0x214] sm:$0xf]
  %v146 = vld [vmem:[%s0 + $0x218] sm:$0xf]
  %v147 = vld [vmem:[%s0 + $0x21c] sm:$0xf]
  %v148 = vld [vmem:[%s0 + $0x220] sm:$0xf]
  %v149 = vld [vmem:[%s0 + $0x224] sm:$0xf]
  %v150 = vld [vmem:[%s0 + $0x228] sm:$0xf]
  %v151 = vld [vmem:[%s0 + $0x22c] sm:$0xf]
  %v152 = vld [vmem:[%s0 + $0x230] sm:$0xf]
  %v153 = vld [vmem:[%s0 + $0x234] sm:$0xf]
  %v154 = vld [vmem:[%s0 + $0x238] sm:$0xf]
  %v155 = vld [vmem:[%s0 + $0x23c] sm:$0xf]
  %v156 = vld [vmem:[%s0 + $0x240] sm:$0xf]
  %v157 = vld [vmem:[%s0 + $0x244] sm:$0xf]
  %v158 = vld [vmem:[%s0 + $0x248] sm:$0xf]
  %v159 = vld [vmem:[%s0 + $0x24c] sm:$0xf]
  %v160 = vld [vmem:[%s0 + $0x250] sm:$0xf]
  %v161 = vld [vmem:[%s0 + $0x254] sm:$0xf]
  %v162 = vld [vmem:[%s0 + $0x258] sm:$0xf]
  %v163 = vld [vmem:[%s0 + $0x25c] sm:$0xf]
  %v164 = vld [vmem:[%s0 + $0x260] sm:$0xf]
  %v165 = vld [vmem:[%s0 + $0x264] sm:$0xf]
  %v166 = vld [vmem:[%s0 + $0x268] sm:$0xf]
  %v167 = vld [vmem:[%s0 + $0x26c] sm:$0xf]
  %v168 = vld [vmem:[%s0 + $0x270] sm:$0xf]
  %v169 = vld [vmem:[%s0 + $0x274] sm:$0xf]
  %v170 = vld [vmem:[%s0 + $0x278] sm:$0xf]
  %v171 = vld [vmem:[%s0 + $0x27c] sm:$0xf]
  %v172 = vld [vmem:[%s0 + $0x280] sm:$0xf]
  %v173 = vld [vmem:[%s0 + $0x284] sm:$0xf]
  %v174 = vld [vmem:[%s0 + $0x288] sm:$0xf]
  %v175 = vld [vmem:[%s0 + $0x28c] sm:$0xf]
  %v176 = vld [vmem:[%s0 + $0x290] sm:$0xf]
  %v177 = vld [vmem:[%s0 + $0x294] sm:$0xf]
  %v178 = vld [vmem:[%s0 + $0x298] sm:$0xf]
  %v179 = vld [vmem:[%s0 + $0x29c] sm:$0xf]
  %v180 = vld [vmem:[%s0 + $0x2a0] sm:$0xf]
  %v181 = vld [vmem:[%s0 + $0x2a4] sm:$0xf]
  %v182 = vld [vmem:[%s0 + $0x2a8] sm:$0xf]
  %v183 = vld [vmem:[%s0 + $0x2ac] sm:$0xf]
  %v184 = vld [vmem:[%s0 + $0x2b0] sm:$0xf]
  %v185 = vld [vmem:[%s0 + $0x2b4] sm:$0xf]
  %v186 = vld [vmem:[%s0 + $0x2b8] sm:$0xf]
  %v187 = vld [vmem:[%s0 + $0x2bc] sm:$0xf]
  %v188 = vld [vmem:[%s0 + $0x2c0] sm:$0xf]
  %v189 = vld [vmem:[%s0 + $0x2c4] sm:$0xf]
  %v190 = vld [vmem:[%s0 + $0x2c8] sm:$0xf]
  %v191 = vld [vmem:[%s0 + $0x2cc] sm:$0xf]
  %v192 = vld [vmem:[%s0 + $0x2d0] sm:$0xf]
  %v193 = vld [vmem:[%s0 + $0x2d4] sm:$0xf]
  %v194 = vld [vmem:[%s0 + $0x2d8] sm:$0xf]
  %v195 = vld [vmem:[%s0 + $0x2dc] sm:$0xf]
  %v196 = vld [vmem:[%s0 + $0x2e0] sm:$0xf]
  %v197 = vld [vmem:[%s0 + $0x2e4] sm:$0xf]
  %v198 = vld [vmem:[%s0 + $0x2e8] sm:$0xf]
  %v199 = vld [vmem:[%s0 + $0x2ec] sm:$0xf]
  %v200 = vld [vmem:[%s0 + $0x2f0] sm:$0xf]
  %v201 = vld [vmem:[%s0 + $0x2f4] sm:$0xf]
  %v202 = vld [vmem:[%s0 + $0x2f8] sm:$0xf]
  %v203 = vld [vmem:[%s0 + $0x2fc] sm:$0xf]
  %v204 = vld [vmem:[%s0 + $0x300] sm:$0xf]
  %v205 = vld [vmem:[%s0 + $0x304] sm:$0xf]
  %v206 = vld [vmem:[%s0 + $0x308] sm:$0xf]
  %v207 = vld [vmem:[%s0 + $0x30c] sm:$0xf]
  %v208 = vld [vmem:[%s0 + $0x310] sm:$0xf]
  %v209 = vld [vmem:[%s0 + $0x314] sm:$0xf]
  %v210 = vld [vmem:[%s0 + $0x318] sm:$0xf]
  %v211 = vld [vmem:[%s0 + $0x31c] sm:$0xf]
  %v212 = vld [vmem:[%s0 + $0x320] sm:$0xf]
  %v213 = vld [vmem:[%s0 + $0x324] sm:$0xf]
  %v214 = vld [vmem:[%s0 + $0x328] sm:$0xf]
  %v215 = vld [vmem:[%s0 + $0x32c] sm:$0xf]
  %v216 = vld [vmem:[%s0 + $0x330] sm:$0xf]
  %v217 = vld [vmem:[%s0 + $0x334] sm:$0xf]
  %v218 = vld [vmem:[%s0 + $0x338] sm:$0xf]
  %v219 = vld [vmem:[%s0 + $0x33c] sm:$0xf]
  %v220 = vld [vmem:[%s0 + $0x340] sm:$0xf]
  %v221 = vld [vmem:[%s0 + $0x344] sm:$0xf]
  %v222 = vld [vmem:[%s0 + $0x348] sm:$0xf]
  %v223 = vld [vmem:[%s0 + $0x34c] sm:$0xf]
  %v224 = vld [vmem:[%s0 + $0x350] sm:$0xf]
  %v225 = vld [vmem:[%s0 + $0x354] sm:$0xf]
  %v226 = vld [vmem:[%s0 + $0x358] sm:$0xf]
  %v227 = vld [vmem:[%s0 + $0x35c] sm:$0xf]
  %v228 = vld [vmem:[%s0 + $0x360] sm:$0xf]
  %v229 = vld [vmem:[%s0 + $0x364] sm:$0xf]
  %v230 = vld [vmem:[%s0 + $0x368] sm:$0xf]
  %v231 = vld [vmem:[%s0 + $0x36c] sm:$0xf]
  %v232 = vld [vmem:[%s0 + $0x370] sm:$0xf]
  %v233 = vld [vmem:[%s0 + $0x374] sm:$0xf]
  %v234 = vld [vmem:[%s0 + $0x378] sm:$0xf]
  %v235 = vld [vmem:[%s0 + $0x37c] sm:$0xf]
  %v236 = vld [vmem:[%s0 + $0x380] sm:$0xf]
  %v237 = vld [vmem:[%s0 + $0x384] sm:$0xf]
  %v238 = vld [vmem:[%s0 + $0x388] sm:$0xf]
  %v239 = vld [vmem:[%s0 + $0x38c] sm:$0xf]
  %v240 = vld [vmem:[%s0 + $0x390] sm:$0xf]
  %v241 = vld [vmem:[%s0 + $0x394] sm:$0xf]
  %v242 = vld [vmem:[%s0 + $0x398] sm:$0xf]
  %v243 = vld [vmem:[%s0 + $0x39c] sm:$0xf]
  %v244 = vld [vmem:[%s0 + $0x3a0] sm:$0xf]
  %v245 = vld [vmem:[%s0 + $0x3a4] sm:$0xf]
  %v246 = vld [vmem:[%s0 + $0x3a8] sm:$0xf]
  %v247 = vld [vmem:[%s0 + $0x3ac] sm:$0xf]
  %v248 = vld [vmem:[%s0 + $0x3b0] sm:$0xf]
  %v249 = vld [vmem:[%s0 + $0x3b4] sm:$0xf]
  %v250 = vld [vmem:[%s0 + $0x3b8] sm:$0xf]
  %v251 = vld [vmem:[%s0 + $0x3bc] sm:$0xf]
  %v252 = vld [vmem:[%s0 + $0x3c0] sm:$0xf]
  %v253 = vld [vmem:[%s0 + $0x3c4] sm:$0xf]
  %v254 = vld [vmem:[%s0 + $0x3c8] sm:$0xf]
  %v255 = vld [vmem:[%s0 + $0x3cc] sm:$0xf]
  %v256 = vld [vmem:[%s0 + $0x3d0] sm:$0xf]
  %v257 = vld [vmem:[%s0 + $0x3d4] sm:$0xf]
  %v258 = vld [vmem:[%s0 + $0x3d8] sm:$0xf]
  %v259 = vld [vmem:[%s0 + $0x3dc] sm:$0xf]
  %v260 = vld [vmem:[%s0 + $0x3e0] sm:$0xf]
  %v261 = vld [vmem:[%s0 + $0x3e4] sm:$0xf]
  %v262 = vld [vmem:[%s0 + $0x3e8] sm:$0xf]
  %v263 = vld [vmem:[%s0 + $0x3ec] sm:$0xf]
  %v264 = vld [vmem:[%s0 + $0x3f0] sm:$0xf]
  %v265 = vld [vmem:[%s0 + $0x3f4] sm:$0xf]
  %v266 = vld [vmem:[%s0 + $0x3f8] sm:$0xf]
  %v267 = vld [vmem:[%s0 + $0x3fc] sm:$0xf]
  %v268 = vld [vmem:[%s0 + $0x400] sm:$0xf]
  %v269 = vld [vmem:[%s0 + $0x404] sm:$0xf]
  %v270 = vld [vmem:[%s0 + $0x408] sm:$0xf]
  %v271 = vld [vmem:[%s0 + $0x40c] sm:$0xf]
  %v272 = vld [vmem:[%s0 + $0x410] sm:$0xf]
  %v273 = vld [vmem:[%s0 + $0x414] sm:$0xf]
  %v274 = vld [vmem:[%s0 + $0x418] sm:$0xf]
  %v275 = vld [vmem:[%s0 + $0x41c] sm:$0xf]
  %v276 = vld [vmem:[%s0 + $0x420] sm:$0xf]
  %v277 = vld [vmem:[%s0 + $0x424] sm:$0xf]
  %v278 = vld [vmem:[%s0 + $0x428] sm:$0xf]
  %v279 = vld [vmem:[%s0 + $0x42c] sm:$0xf]
  %v280 = vld [vmem:[%s0 + $0x430] sm:$0xf]
  %v281 = vld [vmem:[%s0 + $0x434] sm:$0xf]
  %v282 = vld [vmem:[%s0 + $0x438] sm:$0xf]
  %v283 = vld [vmem:[%s0 + $0x43c] sm:$0xf]
  %v284 = vld [vmem:[%s0 + $0x440] sm:$0xf]
  %v285 = vld [vmem:[%s0 + $0x444] sm:$0xf]
  %v286 = vld [vmem:[%s0 + $0x448] sm:$0xf]
  %v287 = vld [vmem:[%s0 + $0x44c] sm:$0xf]
  %v288 = vld [vmem:[%s0 + $0x450] sm:$0xf]
  %v289 = vld [vmem:[%s0 + $0x454] sm:$0xf]
  %v290 = vld [vmem:[%s0 + $0x458] sm:$0xf]
  %v291 = vld [vmem:[%s0 + $0x45c] sm:$0xf]
  %v292 = vld [vmem:[%s0 + $0x460] sm:$0xf]
  %v293 = vld [vmem:[%s0 + $0x464] sm:$0xf]
  %v294 = vld [vmem:[%s0 + $0x468] sm:$0xf]
  %v295 = vld [vmem:[%s0 + $0x46c] sm:$0xf]
  %v296 = vld [vmem:[%s0 + $0x470] sm:$0xf]
  %v297 = vld [vmem:[%s0 + $0x474] sm:$0xf]
  %v298 = vld [vmem:[%s0 + $0x478] sm:$0xf]
  %v299 = vld [vmem:[%s0 + $0x47c] sm:$0xf]
  %v300 = vld [vmem:[%s0 + $0x480] sm:$0xf]
  %v301 = vld [vmem:[%s0 + $0x484] sm:$0xf]
  %v302 = vld [vmem:[%s0 + $0x488] sm:$0xf]
  %v303 = vld [vmem:[%s0 + $0x48c] sm:$0xf]
  %v304 = vld [vmem:[%s0 + $0x490] sm:$0xf]
  %v305 = vld [vmem:[%s0 + $0x494] sm:$0xf]
  %v306 = vld [vmem:[%s0 + $0x498] sm:$0xf]
  %v307 = vld [vmem:[%s0 + $0x49c] sm:$0xf]
  %v308 = vld [vmem:[%s0 + $0x4a0] sm:$0xf]
  %v309 = vld [vmem:[%s0 + $0x4a4] sm:$0xf]
  %v310 = vld [vmem:[%s0 + $0x4a8] sm:$0xf]
  %v311 = vld [vmem:[%s0 + $0x4ac] sm:$0xf]
  %v312 = vld [vmem:[%s0 + $0x4b0] sm:$0xf]
  %v313 = vld [vmem:[%s0 + $0x4b4] sm:$0xf]
  %v314 = vld [vmem:[%s0 + $0x4b8] sm:$0xf]
  %v315 = vld [vmem:[%s0 + $0x4bc] sm:$0xf]
  %v316 = vld [vmem:[%s0 + $0x4c0] sm:$0xf]
  %v317 = vld [vmem:[%s0 + $0x4c4] sm:$0xf]
  %v318 = vld [vmem:[%s0 + $0x4c8] sm:$0xf]
  %v319 = vld [vmem:[%s0 + $0x4cc] sm:$0xf]
  %v320 = vld [vmem:[%s0 + $0x4d0] sm:$0xf]
  %v321 = vld [vmem:[%s0 + $0x4d4] sm:$0xf]
  %v322 = vld [vmem:[%s0 + $0x4d8] sm:$0xf]
  %v323 = vld [vmem:[%s0 + $0x4dc] sm:$0xf]
  %v324 = vld [vmem:[%s0 + $0x4e0] sm:$0xf]
  %v325 = vld [vmem:[%s0 + $0x4e4] sm:$0xf]
  %v326 = vld [vmem:[%s0 + $0x4e8] sm:$0xf]
  %v327 = vld [vmem:[%s0 + $0x4ec] sm:$0xf]
  %v328 = vld [vmem:[%s0 + $0x4f0] sm:$0xf]
  %v329 = vld [vmem:[%s0 + $0x4f4] sm:$0xf]
  %v330 = vld [vmem:[%s0 + $0x4f8] sm:$0xf]
  %v331 = vld [vmem:[%s0 + $0x4fc] sm:$0xf]
  %v332 = vld [vmem:[%s0 + $0x500] sm:$0xf]
  %v333 = vld [vmem:[%s0 + $0x504] sm:$0xf]
  %v334 = vld [vmem:[%s0 + $0x508] sm:$0xf]
  %v335 = vld [vmem:[%s0 + $0x50c] sm:$0xf]
  %v336 = vld [vmem:[%s0 + $0x510] sm:$0xf]
  %v337 = vld [vmem:[%s0 + $0x514] sm:$0xf]
  %v338 = vld [vmem:[%s0 + $0x518] sm:$0xf]
  %v339 = vld [vmem:[%s0 + $0x51c] sm:$0xf]
  %v340 = vld [vmem:[%s0 + $0x520] sm:$0xf]
  %v341 = vld [vmem:[%s0 + $0x524] sm:$0xf]
  %v342 = vld [vmem:[%s0 + $0x528] sm:$0xf]
  %v343 = vld [vmem:[%s0 + $0x52c] sm:$0xf]
  %v344 = vld [vmem:[%s0 + $0x530] sm:$0xf]
  %v345 = vld [vmem:[%s0 + $0x534] sm:$0xf]
  %v346 = vld [vmem:[%s0 + $0x538] sm:$0xf]
  %v347 = vld [vmem:[%s0 + $0x53c] sm:$0xf]
  %v348 = vld [vmem:[%s0 + $0x540] sm:$0xf]
  %v349 = vld [vmem:[%s0 + $0x544] sm:$0xf]
  %v350 = vld [vmem:[%s0 + $0x548] sm:$0xf]
  %v351 = vld [vmem:[%s0 + $0x54c] sm:$0xf]
  %v352 = vld [vmem:[%s0 + $0x550] sm:$0xf]
  %v353 = vld [vmem:[%s0 + $0x554] sm:$0xf]
  %v354 = vld [vmem:[%s0 + $0x558] sm:$0xf]
  %v355 = vld [vmem:[%s0 + $0x55c] sm:$0xf]
  %v356 = vld [vmem:[%s0 + $0x560] sm:$0xf]
  %v357 = vld [vmem:[%s0 + $0x564] sm:$0xf]
  %v358 = vld [vmem:[%s0 + $0x568] sm:$0xf]
  %v359 = vld [vmem:[%s0 + $0x56c] sm:$0xf]
  %v360 = vld [vmem:[%s0 + $0x570] sm:$0xf]
  %v361 = vld [vmem:[%s0 + $0x574] sm:$0xf]
  %v362 = vld [vmem:[%s0 + $0x578] sm:$0xf]
  %v363 = vld [vmem:[%s0 + $0x57c] sm:$0xf]
  %v364 = vld [vmem:[%s0 + $0x580] sm:$0xf]
  %v365 = vld [vmem:[%s0 + $0x584] sm:$0xf]
  %v366 = vld [vmem:[%s0 + $0x588] sm:$0xf]
  %v367 = vld [vmem:[%s0 + $0x58c] sm:$0xf]
  %v368 = vld [vmem:[%s0 + $0x590] sm:$0xf]
  %v369 = vld [vmem:[%s0 + $0x594] sm:$0xf]
  %v370 = vld [vmem:[%s0 + $0x598] sm:$0xf]
  %v371 = vld [vmem:[%s0 + $0x59c] sm:$0xf]
  %v372 = vld [vmem:[%s0 + $0x5a0] sm:$0xf]
  %v373 = vld [vmem:[%s0 + $0x5a4] sm:$0xf]
  %v374 = vld [vmem:[%s0 + $0x5a8] sm:$0xf]
  %v375 = vld [vmem:[%s0 + $0x5ac] sm:$0xf]
  %v376 = vld [vmem:[%s0 + $0x5b0] sm:$0xf]
  %v377 = vld [vmem:[%s0 + $0x5b4] sm:$0xf]
  %v378 = vld [vmem:[%s0 + $0x5b8] sm:$0xf]
  %v379 = vld [vmem:[%s0 + $0x5bc] sm:$0xf]
  %v380 = vld [vmem:[%s0 + $0x5c0] sm:$0xf]
  %v381 = vld [vmem:[%s0 + $0x5c4] sm:$0xf]
  %v382 = vld [vmem:[%s0 + $0x5c8] sm:$0xf]
  %v383 = vld [vmem:[%s0 + $0x5cc] sm:$0xf]
  %v384 = vld [vmem:[%s0 + $0x5d0] sm:$0xf]
  %v385 = vld [vmem:[%s0 + $0x5d4] sm:$0xf]
  %v386 = vld [vmem:[%s0 + $0x5d8] sm:$0xf]
  %v387 = vld [vmem:[%s0 + $0x5dc] sm:$0xf]
  %v388 = vld [vmem:[%s0 + $0x5e0] sm:$0xf]
  %v389 = vld [vmem:[%s0 + $0x5e4] sm:$0xf]
  %v390 = vld [vmem:[%s0 + $0x5e8] sm:$0xf]
  %v391 = vld [vmem:[%s0 + $0x5ec] sm:$0xf]
  %v392 = vld [vmem:[%s0 + $0x5f0] sm:$0xf]
  %v393 = vld [vmem:[%s0 + $0x5f4] sm:$0xf]
  %v394 = vld [vmem:[%s0 + $0x5f8] sm:$0xf]
  %v395 = vld [vmem:[%s0 + $0x5fc] sm:$0xf]
  %v396 = vld [vmem:[%s1] sm:$0xf]
  %v397 = vld [vmem:[%s1 + $0x4] sm:$0xf]
  %v398 = vld [vmem:[%s1 + $0x8] sm:$0xf]
  %v399 = vld [vmem:[%s1 + $0xc] sm:$0xf]
  %v400 = vld [vmem:[%s1 + $0x10] sm:$0xf]
  %v401 = vld [vmem:[%s1 + $0x14] sm:$0xf]
  %v786 = vunpack.c.l.b16 %v12
  %v787 = vunpack.c.l.b16 %v13
  %v788 = vunpack.c.l.b16 %v14
  %v789 = vunpack.c.l.b16 %v15
  %v790 = vunpack.c.l.b16 %v16
  %v791 = vunpack.c.l.b16 %v17
  %v792 = vunpack.c.l.b16 %v18
  %v793 = vunpack.c.l.b16 %v19
  %v794 = vunpack.c.l.b16 %v20
  %v795 = vunpack.c.l.b16 %v21
  %v796 = vunpack.c.l.b16 %v22
  %v797 = vunpack.c.l.b16 %v23
  %v798 = vunpack.c.l.b16 %v24
  %v799 = vunpack.c.l.b16 %v25
  %v800 = vunpack.c.l.b16 %v26
  %v801 = vunpack.c.l.b16 %v27
  %v802 = vunpack.c.l.b16 %v28
  %v803 = vunpack.c.l.b16 %v29
  %v804 = vunpack.c.l.b16 %v30
  %v805 = vunpack.c.l.b16 %v31
  %v806 = vunpack.c.l.b16 %v32
  %v807 = vunpack.c.l.b16 %v33
  %v808 = vunpack.c.l.b16 %v34
  %v809 = vunpack.c.l.b16 %v35
  %v810 = vunpack.c.l.b16 %v36
  %v811 = vunpack.c.l.b16 %v37
  %v812 = vunpack.c.l.b16 %v38
  %v813 = vunpack.c.l.b16 %v39
  %v814 = vunpack.c.l.b16 %v40
  %v815 = vunpack.c.l.b16 %v41
  %v816 = vunpack.c.l.b16 %v42
  %v817 = vunpack.c.l.b16 %v43
  %v818 = vunpack.c.l.b16 %v44
  %v819 = vunpack.c.l.b16 %v45
  %v820 = vunpack.c.l.b16 %v46
  %v821 = vunpack.c.l.b16 %v47
  %v822 = vunpack.c.l.b16 %v48
  %v823 = vunpack.c.l.b16 %v49
  %v824 = vunpack.c.l.b16 %v50
  %v825 = vunpack.c.l.b16 %v51
  %v826 = vunpack.c.l.b16 %v52
  %v827 = vunpack.c.l.b16 %v53
  %v828 = vunpack.c.l.b16 %v54
  %v829 = vunpack.c.l.b16 %v55
  %v830 = vunpack.c.l.b16 %v56
  %v831 = vunpack.c.l.b16 %v57
  %v832 = vunpack.c.l.b16 %v58
  %v833 = vunpack.c.l.b16 %v59
  %v834 = vunpack.c.l.b16 %v60
  %v835 = vunpack.c.l.b16 %v61
  %v836 = vunpack.c.l.b16 %v62
  %v837 = vunpack.c.l.b16 %v63
  %v838 = vunpack.c.l.b16 %v64
  %v839 = vunpack.c.l.b16 %v65
  %v840 = vunpack.c.l.b16 %v66
  %v841 = vunpack.c.l.b16 %v67
  %v842 = vunpack.c.l.b16 %v68
  %v843 = vunpack.c.l.b16 %v69
  %v844 = vunpack.c.l.b16 %v70
  %v845 = vunpack.c.l.b16 %v71
  %v846 = vunpack.c.l.b16 %v72
  %v847 = vunpack.c.l.b16 %v73
  %v848 = vunpack.c.l.b16 %v74
  %v849 = vunpack.c.l.b16 %v75
  %v850 = vunpack.c.l.b16 %v76
  %v851 = vunpack.c.l.b16 %v77
  %v852 = vunpack.c.l.b16 %v78
  %v853 = vunpack.c.l.b16 %v79
  %v854 = vunpack.c.l.b16 %v80
  %v855 = vunpack.c.l.b16 %v81
  %v856 = vunpack.c.l.b16 %v82
  %v857 = vunpack.c.l.b16 %v83
  %v858 = vunpack.c.l.b16 %v84
  %v859 = vunpack.c.l.b16 %v85
  %v860 = vunpack.c.l.b16 %v86
  %v861 = vunpack.c.l.b16 %v87
  %v862 = vunpack.c.l.b16 %v88
  %v863 = vunpack.c.l.b16 %v89
  %v864 = vunpack.c.l.b16 %v90
  %v865 = vunpack.c.l.b16 %v91
  %v866 = vunpack.c.l.b16 %v92
  %v867 = vunpack.c.l.b16 %v93
  %v868 = vunpack.c.l.b16 %v94
  %v869 = vunpack.c.l.b16 %v95
  %v870 = vunpack.c.l.b16 %v96
  %v871 = vunpack.c.l.b16 %v97
  %v872 = vunpack.c.l.b16 %v98
  %v873 = vunpack.c.l.b16 %v99
  %v874 = vunpack.c.l.b16 %v100
  %v875 = vunpack.c.l.b16 %v101
  %v876 = vunpack.c.l.b16 %v102
  %v877 = vunpack.c.l.b16 %v103
  %v878 = vunpack.c.l.b16 %v104
  %v879 = vunpack.c.l.b16 %v105
  %v880 = vunpack.c.l.b16 %v106
  %v881 = vunpack.c.l.b16 %v107
  %v882 = vunpack.c.l.b16 %v108
  %v883 = vunpack.c.l.b16 %v109
  %v884 = vunpack.c.l.b16 %v110
  %v885 = vunpack.c.l.b16 %v111
  %v886 = vunpack.c.l.b16 %v112
  %v887 = vunpack.c.l.b16 %v113
  %v888 = vunpack.c.l.b16 %v114
  %v889 = vunpack.c.l.b16 %v115
  %v890 = vunpack.c.l.b16 %v116
  %v891 = vunpack.c.l.b16 %v117
  %v892 = vunpack.c.l.b16 %v118
  %v893 = vunpack.c.l.b16 %v119
  %v894 = vunpack.c.l.b16 %v120
  %v895 = vunpack.c.l.b16 %v121
  %v896 = vunpack.c.l.b16 %v122
  %v897 = vunpack.c.l.b16 %v123
  %v898 = vunpack.c.l.b16 %v124
  %v899 = vunpack.c.l.b16 %v125
  %v900 = vunpack.c.l.b16 %v126
  %v901 = vunpack.c.l.b16 %v127
  %v902 = vunpack.c.l.b16 %v128
  %v903 = vunpack.c.l.b16 %v129
  %v904 = vunpack.c.l.b16 %v130
  %v905 = vunpack.c.l.b16 %v131
  %v906 = vunpack.c.l.b16 %v132
  %v907 = vunpack.c.l.b16 %v133
  %v908 = vunpack.c.l.b16 %v134
  %v909 = vunpack.c.l.b16 %v135
  %v910 = vunpack.c.l.b16 %v136
  %v911 = vunpack.c.l.b16 %v137
  %v912 = vunpack.c.l.b16 %v138
  %v913 = vunpack.c.l.b16 %v139
  %v914 = vunpack.c.l.b16 %v140
  %v915 = vunpack.c.l.b16 %v141
  %v916 = vunpack.c.l.b16 %v142
  %v917 = vunpack.c.l.b16 %v143
  %v918 = vunpack.c.l.b16 %v144
  %v919 = vunpack.c.l.b16 %v145
  %v920 = vunpack.c.l.b16 %v146
  %v921 = vunpack.c.l.b16 %v147
  %v922 = vunpack.c.l.b16 %v148
  %v923 = vunpack.c.l.b16 %v149
  %v924 = vunpack.c.l.b16 %v150
  %v925 = vunpack.c.l.b16 %v151
  %v926 = vunpack.c.l.b16 %v152
  %v927 = vunpack.c.l.b16 %v153
  %v928 = vunpack.c.l.b16 %v154
  %v929 = vunpack.c.l.b16 %v155
  %v930 = vunpack.c.l.b16 %v156
  %v931 = vunpack.c.l.b16 %v157
  %v932 = vunpack.c.l.b16 %v158
  %v933 = vunpack.c.l.b16 %v159
  %v934 = vunpack.c.l.b16 %v160
  %v935 = vunpack.c.l.b16 %v161
  %v936 = vunpack.c.l.b16 %v162
  %v937 = vunpack.c.l.b16 %v163
  %v938 = vunpack.c.l.b16 %v164
  %v939 = vunpack.c.l.b16 %v165
  %v940 = vunpack.c.l.b16 %v166
  %v941 = vunpack.c.l.b16 %v167
  %v942 = vunpack.c.l.b16 %v168
  %v943 = vunpack.c.l.b16 %v169
  %v944 = vunpack.c.l.b16 %v170
  %v945 = vunpack.c.l.b16 %v171
  %v946 = vunpack.c.l.b16 %v172
  %v947 = vunpack.c.l.b16 %v173
  %v948 = vunpack.c.l.b16 %v174
  %v949 = vunpack.c.l.b16 %v175
  %v950 = vunpack.c.l.b16 %v176
  %v951 = vunpack.c.l.b16 %v177
  %v952 = vunpack.c.l.b16 %v178
  %v953 = vunpack.c.l.b16 %v179
  %v954 = vunpack.c.l.b16 %v180
  %v955 = vunpack.c.l.b16 %v181
  %v956 = vunpack.c.l.b16 %v182
  %v957 = vunpack.c.l.b16 %v183
  %v958 = vunpack.c.l.b16 %v184
  %v959 = vunpack.c.l.b16 %v185
  %v960 = vunpack.c.l.b16 %v186
  %v961 = vunpack.c.l.b16 %v187
  %v962 = vunpack.c.l.b16 %v188
  %v963 = vunpack.c.l.b16 %v189
  %v964 = vunpack.c.l.b16 %v190
  %v965 = vunpack.c.l.b16 %v191
  %v966 = vunpack.c.l.b16 %v192
  %v967 = vunpack.c.l.b16 %v193
  %v968 = vunpack.c.l.b16 %v194
  %v969 = vunpack.c.l.b16 %v195
  %v970 = vunpack.c.l.b16 %v196
  %v971 = vunpack.c.l.b16 %v197
  %v972 = vunpack.c.l.b16 %v198
  %v973 = vunpack.c.l.b16 %v199
  %v974 = vunpack.c.l.b16 %v200
  %v975 = vunpack.c.l.b16 %v201
  %v976 = vunpack.c.l.b16 %v202
  %v977 = vunpack.c.l.b16 %v203
  %v978 = vunpack.c.l.b16 %v204
  %v979 = vunpack.c.l.b16 %v205
  %v980 = vunpack.c.l.b16 %v206
  %v981 = vunpack.c.l.b16 %v207
  %v982 = vunpack.c.l.b16 %v208
  %v983 = vunpack.c.l.b16 %v209
  %v984 = vunpack.c.l.b16 %v210
  %v985 = vunpack.c.l.b16 %v211
  %v986 = vunpack.c.l.b16 %v212
  %v987 = vunpack.c.l.b16 %v213
  %v988 = vunpack.c.l.b16 %v214
  %v989 = vunpack.c.l.b16 %v215
  %v990 = vunpack.c.l.b16 %v216
  %v991 = vunpack.c.l.b16 %v217
  %v992 = vunpack.c.l.b16 %v218
  %v993 = vunpack.c.l.b16 %v219
  %v994 = vunpack.c.l.b16 %v220
  %v995 = vunpack.c.l.b16 %v221
  %v996 = vunpack.c.l.b16 %v222
  %v997 = vunpack.c.l.b16 %v223
  %v998 = vunpack.c.l.b16 %v224
  %v999 = vunpack.c.l.b16 %v225
  %v1000 = vunpack.c.l.b16 %v226
  %v1001 = vunpack.c.l.b16 %v227
  %v1002 = vunpack.c.l.b16 %v228
  %v1003 = vunpack.c.l.b16 %v229
  %v1004 = vunpack.c.l.b16 %v230
  %v1005 = vunpack.c.l.b16 %v231
  %v1006 = vunpack.c.l.b16 %v232
  %v1007 = vunpack.c.l.b16 %v233
  %v1008 = vunpack.c.l.b16 %v234
  %v1009 = vunpack.c.l.b16 %v235
  %v1010 = vunpack.c.l.b16 %v236
  %v1011 = vunpack.c.l.b16 %v237
  %v1012 = vunpack.c.l.b16 %v238
  %v1013 = vunpack.c.l.b16 %v239
  %v1014 = vunpack.c.l.b16 %v240
  %v1015 = vunpack.c.l.b16 %v241
  %v1016 = vunpack.c.l.b16 %v242
  %v1017 = vunpack.c.l.b16 %v243
  %v1018 = vunpack.c.l.b16 %v244
  %v1019 = vunpack.c.l.b16 %v245
  %v1020 = vunpack.c.l.b16 %v246
  %v1021 = vunpack.c.l.b16 %v247
  %v1022 = vunpack.c.l.b16 %v248
  %v1023 = vunpack.c.l.b16 %v249
  %v1024 = vunpack.c.l.b16 %v250
  %v1025 = vunpack.c.l.b16 %v251
  %v1026 = vunpack.c.l.b16 %v252
  %v1027 = vunpack.c.l.b16 %v253
  %v1028 = vunpack.c.l.b16 %v254
  %v1029 = vunpack.c.l.b16 %v255
  %v1030 = vunpack.c.l.b16 %v256
  %v1031 = vunpack.c.l.b16 %v257
  %v1032 = vunpack.c.l.b16 %v258
  %v1033 = vunpack.c.l.b16 %v259
  %v1034 = vunpack.c.l.b16 %v260
  %v1035 = vunpack.c.l.b16 %v261
  %v1036 = vunpack.c.l.b16 %v262
  %v1037 = vunpack.c.l.b16 %v263
  %v1038 = vunpack.c.l.b16 %v264
  %v1039 = vunpack.c.l.b16 %v265
  %v1040 = vunpack.c.l.b16 %v266
  %v1041 = vunpack.c.l.b16 %v267
  %v1042 = vunpack.c.l.b16 %v268
  %v1043 = vunpack.c.l.b16 %v269
  %v1044 = vunpack.c.l.b16 %v270
  %v1045 = vunpack.c.l.b16 %v271
  %v1046 = vunpack.c.l.b16 %v272
  %v1047 = vunpack.c.l.b16 %v273
  %v1048 = vunpack.c.l.b16 %v274
  %v1049 = vunpack.c.l.b16 %v275
  %v1050 = vunpack.c.l.b16 %v276
  %v1051 = vunpack.c.l.b16 %v277
  %v1052 = vunpack.c.l.b16 %v278
  %v1053 = vunpack.c.l.b16 %v279
  %v1054 = vunpack.c.l.b16 %v280
  %v1055 = vunpack.c.l.b16 %v281
  %v1056 = vunpack.c.l.b16 %v282
  %v1057 = vunpack.c.l.b16 %v283
  %v1058 = vunpack.c.l.b16 %v284
  %v1059 = vunpack.c.l.b16 %v285
  %v1060 = vunpack.c.l.b16 %v286
  %v1061 = vunpack.c.l.b16 %v287
  %v1062 = vunpack.c.l.b16 %v288
  %v1063 = vunpack.c.l.b16 %v289
  %v1064 = vunpack.c.l.b16 %v290
  %v1065 = vunpack.c.l.b16 %v291
  %v1066 = vunpack.c.l.b16 %v292
  %v1067 = vunpack.c.l.b16 %v293
  %v1068 = vunpack.c.l.b16 %v294
  %v1069 = vunpack.c.l.b16 %v295
  %v1070 = vunpack.c.l.b16 %v296
  %v1071 = vunpack.c.l.b16 %v297
  %v1072 = vunpack.c.l.b16 %v298
  %v1073 = vunpack.c.l.b16 %v299
  %v1074 = vunpack.c.l.b16 %v300
  %v1075 = vunpack.c.l.b16 %v301
  %v1076 = vunpack.c.l.b16 %v302
  %v1077 = vunpack.c.l.b16 %v303
  %v1078 = vunpack.c.l.b16 %v304
  %v1079 = vunpack.c.l.b16 %v305
  %v1080 = vunpack.c.l.b16 %v306
  %v1081 = vunpack.c.l.b16 %v307
  %v1082 = vunpack.c.l.b16 %v308
  %v1083 = vunpack.c.l.b16 %v309
  %v1084 = vunpack.c.l.b16 %v310
  %v1085 = vunpack.c.l.b16 %v311
  %v1086 = vunpack.c.l.b16 %v312
  %v1087 = vunpack.c.l.b16 %v313
  %v1088 = vunpack.c.l.b16 %v314
  %v1089 = vunpack.c.l.b16 %v315
  %v1090 = vunpack.c.l.b16 %v316
  %v1091 = vunpack.c.l.b16 %v317
  %v1092 = vunpack.c.l.b16 %v318
  %v1093 = vunpack.c.l.b16 %v319
  %v1094 = vunpack.c.l.b16 %v320
  %v1095 = vunpack.c.l.b16 %v321
  %v1096 = vunpack.c.l.b16 %v322
  %v1097 = vunpack.c.l.b16 %v323
  %v1098 = vunpack.c.l.b16 %v324
  %v1099 = vunpack.c.l.b16 %v325
  %v1100 = vunpack.c.l.b16 %v326
  %v1101 = vunpack.c.l.b16 %v327
  %v1102 = vunpack.c.l.b16 %v328
  %v1103 = vunpack.c.l.b16 %v329
  %v1104 = vunpack.c.l.b16 %v330
  %v1105 = vunpack.c.l.b16 %v331
  %v1106 = vunpack.c.l.b16 %v332
  %v1107 = vunpack.c.l.b16 %v333
  %v1108 = vunpack.c.l.b16 %v334
  %v1109 = vunpack.c.l.b16 %v335
  %v1110 = vunpack.c.l.b16 %v336
  %v1111 = vunpack.c.l.b16 %v337
  %v1112 = vunpack.c.l.b16 %v338
  %v1113 = vunpack.c.l.b16 %v339
  %v1114 = vunpack.c.l.b16 %v340
  %v1115 = vunpack.c.l.b16 %v341
  %v1116 = vunpack.c.l.b16 %v342
  %v1117 = vunpack.c.l.b16 %v343
  %v1118 = vunpack.c.l.b16 %v344
  %v1119 = vunpack.c.l.b16 %v345
  %v1120 = vunpack.c.l.b16 %v346
  %v1121 = vunpack.c.l.b16 %v347
  %v1122 = vunpack.c.l.b16 %v348
  %v1123 = vunpack.c.l.b16 %v349
  %v1124 = vunpack.c.l.b16 %v350
  %v1125 = vunpack.c.l.b16 %v351
  %v1126 = vunpack.c.l.b16 %v352
  %v1127 = vunpack.c.l.b16 %v353
  %v1128 = vunpack.c.l.b16 %v354
  %v1129 = vunpack.c.l.b16 %v355
  %v1130 = vunpack.c.l.b16 %v356
  %v1131 = vunpack.c.l.b16 %v357
  %v1132 = vunpack.c.l.b16 %v358
  %v1133 = vunpack.c.l.b16 %v359
  %v1134 = vunpack.c.l.b16 %v360
  %v1135 = vunpack.c.l.b16 %v361
  %v1136 = vunpack.c.l.b16 %v362
  %v1137 = vunpack.c.l.b16 %v363
  %v1138 = vunpack.c.l.b16 %v364
  %v1139 = vunpack.c.l.b16 %v365
  %v1140 = vunpack.c.l.b16 %v366
  %v1141 = vunpack.c.l.b16 %v367
  %v1142 = vunpack.c.l.b16 %v368
  %v1143 = vunpack.c.l.b16 %v369
  %v1144 = vunpack.c.l.b16 %v370
  %v1145 = vunpack.c.l.b16 %v371
  %v1146 = vunpack.c.l.b16 %v372
  %v1147 = vunpack.c.l.b16 %v373
  %v1148 = vunpack.c.l.b16 %v374
  %v1149 = vunpack.c.l.b16 %v375
  %v1150 = vunpack.c.l.b16 %v376
  %v1151 = vunpack.c.l.b16 %v377
  %v1152 = vunpack.c.l.b16 %v378
  %v1153 = vunpack.c.l.b16 %v379
  %v1154 = vunpack.c.l.b16 %v380
  %v1155 = vunpack.c.l.b16 %v381
  %v1156 = vunpack.c.l.b16 %v382
  %v1157 = vunpack.c.l.b16 %v383
  %v1158 = vunpack.c.l.b16 %v384
  %v1159 = vunpack.c.l.b16 %v385
  %v1160 = vunpack.c.l.b16 %v386
  %v1161 = vunpack.c.l.b16 %v387
  %v1162 = vunpack.c.l.b16 %v388
  %v1163 = vunpack.c.l.b16 %v389
  %v1164 = vunpack.c.l.b16 %v390
  %v1165 = vunpack.c.l.b16 %v391
  %v1166 = vunpack.c.l.b16 %v392
  %v1167 = vunpack.c.l.b16 %v393
  %v1168 = vunpack.c.l.b16 %v394
  %v1169 = vunpack.c.l.b16 %v395
  %v1170 = vpack.c.b16 %v787, %v786
  %v1171 = vpack.c.b16 %v789, %v788
  %v1172 = vpack.c.b16 %v791, %v790
  %v1173 = vpack.c.b16 %v793, %v792
  %v1174 = vpack.c.b16 %v795, %v794
  %v1175 = vpack.c.b16 %v797, %v796
  %v1176 = vpack.c.b16 %v799, %v798
  %v1177 = vpack.c.b16 %v801, %v800
  %v1178 = vpack.c.b16 %v803, %v802
  %v1179 = vpack.c.b16 %v805, %v804
  %v1180 = vpack.c.b16 %v807, %v806
  %v1181 = vpack.c.b16 %v809, %v808
  %v1182 = vpack.c.b16 %v811, %v810
  %v1183 = vpack.c.b16 %v813, %v812
  %v1184 = vpack.c.b16 %v815, %v814
  %v1185 = vpack.c.b16 %v817, %v816
  %v1186 = vpack.c.b16 %v819, %v818
  %v1187 = vpack.c.b16 %v821, %v820
  %v1188 = vpack.c.b16 %v823, %v822
  %v1189 = vpack.c.b16 %v825, %v824
  %v1190 = vpack.c.b16 %v827, %v826
  %v1191 = vpack.c.b16 %v829, %v828
  %v1192 = vpack.c.b16 %v831, %v830
  %v1193 = vpack.c.b16 %v833, %v832
  %v1194 = vpack.c.b16 %v835, %v834
  %v1195 = vpack.c.b16 %v837, %v836
  %v1196 = vpack.c.b16 %v839, %v838
  %v1197 = vpack.c.b16 %v841, %v840
  %v1198 = vpack.c.b16 %v843, %v842
  %v1199 = vpack.c.b16 %v845, %v844
  %v1200 = vpack.c.b16 %v847, %v846
  %v1201 = vpack.c.b16 %v849, %v848
  %v1202 = vpack.c.b16 %v851, %v850
  %v1203 = vpack.c.b16 %v853, %v852
  %v1204 = vpack.c.b16 %v855, %v854
  %v1205 = vpack.c.b16 %v857, %v856
  %v1206 = vpack.c.b16 %v859, %v858
  %v1207 = vpack.c.b16 %v861, %v860
  %v1208 = vpack.c.b16 %v863, %v862
  %v1209 = vpack.c.b16 %v865, %v864
  %v1210 = vpack.c.b16 %v867, %v866
  %v1211 = vpack.c.b16 %v869, %v868
  %v1212 = vpack.c.b16 %v871, %v870
  %v1213 = vpack.c.b16 %v873, %v872
  %v1214 = vpack.c.b16 %v875, %v874
  %v1215 = vpack.c.b16 %v877, %v876
  %v1216 = vpack.c.b16 %v879, %v878
  %v1217 = vpack.c.b16 %v881, %v880
  %v1218 = vpack.c.b16 %v883, %v882
  %v1219 = vpack.c.b16 %v885, %v884
  %v1220 = vpack.c.b16 %v887, %v886
  %v1221 = vpack.c.b16 %v889, %v888
  %v1222 = vpack.c.b16 %v891, %v890
  %v1223 = vpack.c.b16 %v893, %v892
  %v1224 = vpack.c.b16 %v895, %v894
  %v1225 = vpack.c.b16 %v897, %v896
  %v1226 = vpack.c.b16 %v899, %v898
  %v1227 = vpack.c.b16 %v901, %v900
  %v1228 = vpack.c.b16 %v903, %v902
  %v1229 = vpack.c.b16 %v905, %v904
  %v1230 = vpack.c.b16 %v907, %v906
  %v1231 = vpack.c.b16 %v909, %v908
  %v1232 = vpack.c.b16 %v911, %v910
  %v1233 = vpack.c.b16 %v913, %v912
  %v1234 = vpack.c.b16 %v915, %v914
  %v1235 = vpack.c.b16 %v917, %v916
  %v1236 = vpack.c.b16 %v919, %v918
  %v1237 = vpack.c.b16 %v921, %v920
  %v1238 = vpack.c.b16 %v923, %v922
  %v1239 = vpack.c.b16 %v925, %v924
  %v1240 = vpack.c.b16 %v927, %v926
  %v1241 = vpack.c.b16 %v929, %v928
  %v1242 = vpack.c.b16 %v931, %v930
  %v1243 = vpack.c.b16 %v933, %v932
  %v1244 = vpack.c.b16 %v935, %v934
  %v1245 = vpack.c.b16 %v937, %v936
  %v1246 = vpack.c.b16 %v939, %v938
  %v1247 = vpack.c.b16 %v941, %v940
  %v1248 = vpack.c.b16 %v943, %v942
  %v1249 = vpack.c.b16 %v945, %v944
  %v1250 = vpack.c.b16 %v947, %v946
  %v1251 = vpack.c.b16 %v949, %v948
  %v1252 = vpack.c.b16 %v951, %v950
  %v1253 = vpack.c.b16 %v953, %v952
  %v1254 = vpack.c.b16 %v955, %v954
  %v1255 = vpack.c.b16 %v957, %v956
  %v1256 = vpack.c.b16 %v959, %v958
  %v1257 = vpack.c.b16 %v961, %v960
  %v1258 = vpack.c.b16 %v963, %v962
  %v1259 = vpack.c.b16 %v965, %v964
  %v1260 = vpack.c.b16 %v967, %v966
  %v1261 = vpack.c.b16 %v969, %v968
  %v1262 = vpack.c.b16 %v971, %v970
  %v1263 = vpack.c.b16 %v973, %v972
  %v1264 = vpack.c.b16 %v975, %v974
  %v1265 = vpack.c.b16 %v977, %v976
  %v1266 = vpack.c.b16 %v979, %v978
  %v1267 = vpack.c.b16 %v981, %v980
  %v1268 = vpack.c.b16 %v983, %v982
  %v1269 = vpack.c.b16 %v985, %v984
  %v1270 = vpack.c.b16 %v987, %v986
  %v1271 = vpack.c.b16 %v989, %v988
  %v1272 = vpack.c.b16 %v991, %v990
  %v1273 = vpack.c.b16 %v993, %v992
  %v1274 = vpack.c.b16 %v995, %v994
  %v1275 = vpack.c.b16 %v997, %v996
  %v1276 = vpack.c.b16 %v999, %v998
  %v1277 = vpack.c.b16 %v1001, %v1000
  %v1278 = vpack.c.b16 %v1003, %v1002
  %v1279 = vpack.c.b16 %v1005, %v1004
  %v1280 = vpack.c.b16 %v1007, %v1006
  %v1281 = vpack.c.b16 %v1009, %v1008
  %v1282 = vpack.c.b16 %v1011, %v1010
  %v1283 = vpack.c.b16 %v1013, %v1012
  %v1284 = vpack.c.b16 %v1015, %v1014
  %v1285 = vpack.c.b16 %v1017, %v1016
  %v1286 = vpack.c.b16 %v1019, %v1018
  %v1287 = vpack.c.b16 %v1021, %v1020
  %v1288 = vpack.c.b16 %v1023, %v1022
  %v1289 = vpack.c.b16 %v1025, %v1024
  %v1290 = vpack.c.b16 %v1027, %v1026
  %v1291 = vpack.c.b16 %v1029, %v1028
  %v1292 = vpack.c.b16 %v1031, %v1030
  %v1293 = vpack.c.b16 %v1033, %v1032
  %v1294 = vpack.c.b16 %v1035, %v1034
  %v1295 = vpack.c.b16 %v1037, %v1036
  %v1296 = vpack.c.b16 %v1039, %v1038
  %v1297 = vpack.c.b16 %v1041, %v1040
  %v1298 = vpack.c.b16 %v1043, %v1042
  %v1299 = vpack.c.b16 %v1045, %v1044
  %v1300 = vpack.c.b16 %v1047, %v1046
  %v1301 = vpack.c.b16 %v1049, %v1048
  %v1302 = vpack.c.b16 %v1051, %v1050
  %v1303 = vpack.c.b16 %v1053, %v1052
  %v1304 = vpack.c.b16 %v1055, %v1054
  %v1305 = vpack.c.b16 %v1057, %v1056
  %v1306 = vpack.c.b16 %v1059, %v1058
  %v1307 = vpack.c.b16 %v1061, %v1060
  %v1308 = vpack.c.b16 %v1063, %v1062
  %v1309 = vpack.c.b16 %v1065, %v1064
  %v1310 = vpack.c.b16 %v1067, %v1066
  %v1311 = vpack.c.b16 %v1069, %v1068
  %v1312 = vpack.c.b16 %v1071, %v1070
  %v1313 = vpack.c.b16 %v1073, %v1072
  %v1314 = vpack.c.b16 %v1075, %v1074
  %v1315 = vpack.c.b16 %v1077, %v1076
  %v1316 = vpack.c.b16 %v1079, %v1078
  %v1317 = vpack.c.b16 %v1081, %v1080
  %v1318 = vpack.c.b16 %v1083, %v1082
  %v1319 = vpack.c.b16 %v1085, %v1084
  %v1320 = vpack.c.b16 %v1087, %v1086
  %v1321 = vpack.c.b16 %v1089, %v1088
  %v1322 = vpack.c.b16 %v1091, %v1090
  %v1323 = vpack.c.b16 %v1093, %v1092
  %v1324 = vpack.c.b16 %v1095, %v1094
  %v1325 = vpack.c.b16 %v1097, %v1096
  %v1326 = vpack.c.b16 %v1099, %v1098
  %v1327 = vpack.c.b16 %v1101, %v1100
  %v1328 = vpack.c.b16 %v1103, %v1102
  %v1329 = vpack.c.b16 %v1105, %v1104
  %v1330 = vpack.c.b16 %v1107, %v1106
  %v1331 = vpack.c.b16 %v1109, %v1108
  %v1332 = vpack.c.b16 %v1111, %v1110
  %v1333 = vpack.c.b16 %v1113, %v1112
  %v1334 = vpack.c.b16 %v1115, %v1114
  %v1335 = vpack.c.b16 %v1117, %v1116
  %v1336 = vpack.c.b16 %v1119, %v1118
  %v1337 = vpack.c.b16 %v1121, %v1120
  %v1338 = vpack.c.b16 %v1123, %v1122
  %v1339 = vpack.c.b16 %v1125, %v1124
  %v1340 = vpack.c.b16 %v1127, %v1126
  %v1341 = vpack.c.b16 %v1129, %v1128
  %v1342 = vpack.c.b16 %v1131, %v1130
  %v1343 = vpack.c.b16 %v1133, %v1132
  %v1344 = vpack.c.b16 %v1135, %v1134
  %v1345 = vpack.c.b16 %v1137, %v1136
  %v1346 = vpack.c.b16 %v1139, %v1138
  %v1347 = vpack.c.b16 %v1141, %v1140
  %v1348 = vpack.c.b16 %v1143, %v1142
  %v1349 = vpack.c.b16 %v1145, %v1144
  %v1350 = vpack.c.b16 %v1147, %v1146
  %v1351 = vpack.c.b16 %v1149, %v1148
  %v1352 = vpack.c.b16 %v1151, %v1150
  %v1353 = vpack.c.b16 %v1153, %v1152
  %v1354 = vpack.c.b16 %v1155, %v1154
  %v1355 = vpack.c.b16 %v1157, %v1156
  %v1356 = vpack.c.b16 %v1159, %v1158
  %v1357 = vpack.c.b16 %v1161, %v1160
  %v1358 = vpack.c.b16 %v1163, %v1162
  %v1359 = vpack.c.b16 %v1165, %v1164
  %v1360 = vpack.c.b16 %v1167, %v1166
  %v1361 = vpack.c.b16 %v1169, %v1168
  %v1368 = vunpack.c.l.b16 %v396
  %v1369 = vunpack.c.l.b16 %v397
  %v1370 = vunpack.c.l.b16 %v398
  %v1371 = vunpack.c.l.b16 %v399
  %v1372 = vunpack.c.l.b16 %v400
  %v1373 = vunpack.c.l.b16 %v401
  %v1374 = vpack.c.b16 %v1369, %v1368
  %v1375 = vpack.c.b16 %v1371, %v1370
  %v1376 = vpack.c.b16 %v1373, %v1372
  %vm1380 = vcmask 392192
  %v1382 = vsel %vm1380, %v1170, 0
  %v1385 = vsel %vm1380, %v1171, 0
  %v1388 = vsel %vm1380, %v1172, 0
  %v1391 = vsel %vm1380, %v1173, 0
  %v1394 = vsel %vm1380, %v1174, 0
  %v1397 = vsel %vm1380, %v1175, 0
  %v1400 = vsel %vm1380, %v1176, 0
  %v1403 = vsel %vm1380, %v1177, 0
  %v1406 = vsel %vm1380, %v1178, 0
  %v1409 = vsel %vm1380, %v1179, 0
  %v1412 = vsel %vm1380, %v1180, 0
  %v1415 = vsel %vm1380, %v1181, 0
  %v1418 = vsel %vm1380, %v1182, 0
  %v1421 = vsel %vm1380, %v1183, 0
  %v1424 = vsel %vm1380, %v1184, 0
  %v1427 = vsel %vm1380, %v1185, 0
  %v1430 = vsel %vm1380, %v1186, 0
  %v1433 = vsel %vm1380, %v1187, 0
  %v1436 = vsel %vm1380, %v1188, 0
  %v1439 = vsel %vm1380, %v1189, 0
  %v1442 = vsel %vm1380, %v1190, 0
  %v1445 = vsel %vm1380, %v1191, 0
  %v1448 = vsel %vm1380, %v1192, 0
  %v1451 = vsel %vm1380, %v1193, 0
  %v1454 = vsel %vm1380, %v1194, 0
  %v1457 = vsel %vm1380, %v1195, 0
  %v1460 = vsel %vm1380, %v1196, 0
  %v1463 = vsel %vm1380, %v1197, 0
  %v1466 = vsel %vm1380, %v1198, 0
  %v1469 = vsel %vm1380, %v1199, 0
  %v1472 = vsel %vm1380, %v1200, 0
  %v1475 = vsel %vm1380, %v1201, 0
  %v1478 = vsel %vm1380, %v1202, 0
  %v1481 = vsel %vm1380, %v1203, 0
  %v1484 = vsel %vm1380, %v1204, 0
  %v1487 = vsel %vm1380, %v1205, 0
  %v1490 = vsel %vm1380, %v1206, 0
  %v1493 = vsel %vm1380, %v1207, 0
  %v1496 = vsel %vm1380, %v1208, 0
  %v1499 = vsel %vm1380, %v1209, 0
  %v1502 = vsel %vm1380, %v1210, 0
  %v1505 = vsel %vm1380, %v1211, 0
  %v1508 = vsel %vm1380, %v1212, 0
  %v1511 = vsel %vm1380, %v1213, 0
  %v1514 = vsel %vm1380, %v1214, 0
  %v1517 = vsel %vm1380, %v1215, 0
  %v1520 = vsel %vm1380, %v1216, 0
  %v1523 = vsel %vm1380, %v1217, 0
  %v1526 = vsel %vm1380, %v1218, 0
  %v1529 = vsel %vm1380, %v1219, 0
  %v1532 = vsel %vm1380, %v1220, 0
  %v1535 = vsel %vm1380, %v1221, 0
  %v1538 = vsel %vm1380, %v1222, 0
  %v1541 = vsel %vm1380, %v1223, 0
  %v1544 = vsel %vm1380, %v1224, 0
  %v1547 = vsel %vm1380, %v1225, 0
  %v1550 = vsel %vm1380, %v1226, 0
  %v1553 = vsel %vm1380, %v1227, 0
  %v1556 = vsel %vm1380, %v1228, 0
  %v1559 = vsel %vm1380, %v1229, 0
  %v1562 = vsel %vm1380, %v1230, 0
  %v1565 = vsel %vm1380, %v1231, 0
  %v1568 = vsel %vm1380, %v1232, 0
  %v1571 = vsel %vm1380, %v1233, 0
  %v1574 = vsel %vm1380, %v1234, 0
  %v1577 = vsel %vm1380, %v1235, 0
  %v1580 = vsel %vm1380, %v1236, 0
  %v1583 = vsel %vm1380, %v1237, 0
  %v1586 = vsel %vm1380, %v1238, 0
  %v1589 = vsel %vm1380, %v1239, 0
  %v1592 = vsel %vm1380, %v1240, 0
  %v1595 = vsel %vm1380, %v1241, 0
  %v1598 = vsel %vm1380, %v1242, 0
  %v1601 = vsel %vm1380, %v1243, 0
  %v1604 = vsel %vm1380, %v1244, 0
  %v1607 = vsel %vm1380, %v1245, 0
  %v1610 = vsel %vm1380, %v1246, 0
  %v1613 = vsel %vm1380, %v1247, 0
  %v1616 = vsel %vm1380, %v1248, 0
  %v1619 = vsel %vm1380, %v1249, 0
  %v1622 = vsel %vm1380, %v1250, 0
  %v1625 = vsel %vm1380, %v1251, 0
  %v1628 = vsel %vm1380, %v1252, 0
  %v1631 = vsel %vm1380, %v1253, 0
  %v1634 = vsel %vm1380, %v1254, 0
  %v1637 = vsel %vm1380, %v1255, 0
  %v1640 = vsel %vm1380, %v1256, 0
  %v1643 = vsel %vm1380, %v1257, 0
  %v1646 = vsel %vm1380, %v1258, 0
  %v1649 = vsel %vm1380, %v1259, 0
  %v1652 = vsel %vm1380, %v1260, 0
  %v1655 = vsel %vm1380, %v1261, 0
  %v1658 = vsel %vm1380, %v1262, 0
  %v1661 = vsel %vm1380, %v1263, 0
  %v1664 = vsel %vm1380, %v1264, 0
  %v1667 = vsel %vm1380, %v1265, 0
  %v1670 = vsel %vm1380, %v1266, 0
  %v1673 = vsel %vm1380, %v1267, 0
  %v1676 = vsel %vm1380, %v1268, 0
  %v1679 = vsel %vm1380, %v1269, 0
  %v1682 = vsel %vm1380, %v1270, 0
  %v1685 = vsel %vm1380, %v1271, 0
  %v1688 = vsel %vm1380, %v1272, 0
  %v1691 = vsel %vm1380, %v1273, 0
  %v1694 = vsel %vm1380, %v1274, 0
  %v1697 = vsel %vm1380, %v1275, 0
  %v1700 = vsel %vm1380, %v1276, 0
  %v1703 = vsel %vm1380, %v1277, 0
  %v1706 = vsel %vm1380, %v1278, 0
  %v1709 = vsel %vm1380, %v1279, 0
  %v1712 = vsel %vm1380, %v1280, 0
  %v1715 = vsel %vm1380, %v1281, 0
  %v1718 = vsel %vm1380, %v1282, 0
  %v1721 = vsel %vm1380, %v1283, 0
  %v1724 = vsel %vm1380, %v1284, 0
  %v1727 = vsel %vm1380, %v1285, 0
  %v1730 = vsel %vm1380, %v1286, 0
  %v1733 = vsel %vm1380, %v1287, 0
  %v1736 = vsel %vm1380, %v1288, 0
  %v1739 = vsel %vm1380, %v1289, 0
  %v1742 = vsel %vm1380, %v1290, 0
  %v1745 = vsel %vm1380, %v1291, 0
  %v1748 = vsel %vm1380, %v1292, 0
  %v1751 = vsel %vm1380, %v1293, 0
  %v1754 = vsel %vm1380, %v1294, 0
  %v1757 = vsel %vm1380, %v1295, 0
  %v1760 = vsel %vm1380, %v1296, 0
  %v1763 = vsel %vm1380, %v1297, 0
  %v1766 = vsel %vm1380, %v1298, 0
  %v1769 = vsel %vm1380, %v1299, 0
  %v1772 = vsel %vm1380, %v1300, 0
  %v1775 = vsel %vm1380, %v1301, 0
  %v1778 = vsel %vm1380, %v1302, 0
  %v1781 = vsel %vm1380, %v1303, 0
  %v1784 = vsel %vm1380, %v1304, 0
  %v1787 = vsel %vm1380, %v1305, 0
  %v1790 = vsel %vm1380, %v1306, 0
  %v1793 = vsel %vm1380, %v1307, 0
  %v1796 = vsel %vm1380, %v1308, 0
  %v1799 = vsel %vm1380, %v1309, 0
  %v1802 = vsel %vm1380, %v1310, 0
  %v1805 = vsel %vm1380, %v1311, 0
  %v1808 = vsel %vm1380, %v1312, 0
  %v1811 = vsel %vm1380, %v1313, 0
  %v1814 = vsel %vm1380, %v1314, 0
  %v1817 = vsel %vm1380, %v1315, 0
  %v1820 = vsel %vm1380, %v1316, 0
  %v1823 = vsel %vm1380, %v1317, 0
  %v1826 = vsel %vm1380, %v1318, 0
  %v1829 = vsel %vm1380, %v1319, 0
  %v1832 = vsel %vm1380, %v1320, 0
  %v1835 = vsel %vm1380, %v1321, 0
  %v1838 = vsel %vm1380, %v1322, 0
  %v1841 = vsel %vm1380, %v1323, 0
  %v1844 = vsel %vm1380, %v1324, 0
  %v1847 = vsel %vm1380, %v1325, 0
  %v1850 = vsel %vm1380, %v1326, 0
  %v1853 = vsel %vm1380, %v1327, 0
  %v1856 = vsel %vm1380, %v1328, 0
  %v1859 = vsel %vm1380, %v1329, 0
  %v1862 = vsel %vm1380, %v1330, 0
  %v1865 = vsel %vm1380, %v1331, 0
  %v1868 = vsel %vm1380, %v1332, 0
  %v1871 = vsel %vm1380, %v1333, 0
  %v1874 = vsel %vm1380, %v1334, 0
  %v1877 = vsel %vm1380, %v1335, 0
  %v1880 = vsel %vm1380, %v1336, 0
  %v1883 = vsel %vm1380, %v1337, 0
  %v1886 = vsel %vm1380, %v1338, 0
  %v1889 = vsel %vm1380, %v1339, 0
  %v1892 = vsel %vm1380, %v1340, 0
  %v1895 = vsel %vm1380, %v1341, 0
  %v1898 = vsel %vm1380, %v1342, 0
  %v1901 = vsel %vm1380, %v1343, 0
  %v1904 = vsel %vm1380, %v1344, 0
  %v1907 = vsel %vm1380, %v1345, 0
  %v1910 = vsel %vm1380, %v1346, 0
  %v1913 = vsel %vm1380, %v1347, 0
  %v1916 = vsel %vm1380, %v1348, 0
  %v1919 = vsel %vm1380, %v1349, 0
  %v1922 = vsel %vm1380, %v1350, 0
  %v1925 = vsel %vm1380, %v1351, 0
  %v1928 = vsel %vm1380, %v1352, 0
  %v1931 = vsel %vm1380, %v1353, 0
  %v1934 = vsel %vm1380, %v1354, 0
  %v1937 = vsel %vm1380, %v1355, 0
  %v1940 = vsel %vm1380, %v1356, 0
  %v1943 = vsel %vm1380, %v1357, 0
  %v1946 = vsel %vm1380, %v1358, 0
  %v1949 = vsel %vm1380, %v1359, 0
  %v1952 = vsel %vm1380, %v1360, 0
  %v1955 = vsel %vm1380, %v1361, 0
  %1957 = vmatprep.subr.bf16.mxu0 0
  %1958 = vmatpush1.bf16.msra.mxu0 %v1374
  %1959 = vmatprep.subr.bf16.mxu0 0
  %1960 = vmatpush1.bf16.msra.mxu0 %v1375
  %1961 = vmatprep.subr.bf16.mxu0 0
  %1962 = vmatpush1.bf16.msra.mxu0 %v1376
  %1963 = vmatprep.subr.bf16.mxu0 0
  %1964 = vmatpush1.bf16.msra.mxu0 0
  %1965 = vmatprep.subr.bf16.mxu0 0
  %1966 = vmatpush1.bf16.msra.mxu0 0
  %1967 = vmatprep.subr.bf16.mxu0 0
  %1968 = vmatpush1.bf16.msra.mxu0 0
  %1969 = vmatprep.subr.bf16.mxu0 0
  %1970 = vmatpush1.bf16.msra.mxu0 0
  %1971 = vmatprep.subr.bf16.mxu0 0
  %1972 = vmatpush1.bf16.msra.mxu0 0
  %1973 = vmatprep.subr.bf16.mxu0 0
  %1974 = vmatpush1.bf16.msra.mxu0 0
  %1975 = vmatprep.subr.bf16.mxu0 0
  %1976 = vmatpush1.bf16.msra.mxu0 0
  %1977 = vmatprep.subr.bf16.mxu0 0
  %1978 = vmatpush1.bf16.msra.mxu0 0
  %1979 = vmatprep.subr.bf16.mxu0 0
  %1980 = vmatpush1.bf16.msra.mxu0 0
  %1981 = vmatprep.subr.bf16.mxu0 0
  %1982 = vmatpush1.bf16.msra.mxu0 0
  %1983 = vmatprep.subr.bf16.mxu0 0
  %1984 = vmatpush1.bf16.msra.mxu0 0
  %1985 = vmatprep.subr.bf16.mxu0 0
  %1986 = vmatpush1.bf16.msra.mxu0 0
  %1987 = vmatprep.subr.bf16.mxu0 0
  %1988 = vmatpush1.bf16.msra.mxu0 0
  %1989 = vmatprep.mubr.bf16.mxu0 0
  %1990 = vmatmul.mubr.bf16.gmra.mrb[0].mxu0 %v1382
  %v1991 = vpop.f32.mrb[0].mxu0
  %v1992 = vadd.f32 0.0, %v1991
  %v1993 = vpop.f32.mrb[0].mxu0
  %v1994 = vpop.f32.mrb[0].mxu0
  %v1995 = vadd.f32 0.0, %v1994
  %v1996 = vpop.f32.mrb[0].mxu0
  %1997 = vmatprep.mubr.bf16.mxu0 0
  %1998 = vmatmul.mubr.bf16.gmra.mrb[0].mxu0 %v1385
  %v1999 = vpop.f32.mrb[0].mxu0
  %v2000 = vadd.f32 0.0, %v1999
  %v2001 = vpop.f32.mrb[0].mxu0
  %v2002 = vpop.f32.mrb[0].mxu0
  %v2003 = vadd.f32 0.0, %v2002
  %v2004 = vpop.f32.mrb[0].mxu0
  %2005 = vmatprep.mubr.bf16.mxu0 0
  %2006 = vmatmul.mubr.bf16.gmra.mrb[0].mxu0 %v1388
  %v2007 = vpop.f32.mrb[0].mxu0
  %v2008 = vadd.f32 0.0, %v2007
  %v2009 = vpop.f32.mrb[0].mxu0
  %v2010 = vpop.f32.mrb[0].mxu0
  %v2011 = vadd.f32 0.0, %v2010
  %v2012 = vpop.f32.mrb[0].mxu0
  %2013 = vmatprep.mubr.bf16.mxu0 0
  %2014 = vmatmul.mubr.bf16.gmra.mrb[0].mxu0 %v1391
  %v2015 = vpop.f32.mrb[0].mxu0
  %v2016 = vadd.f32 0.0, %v2015
  %v2017 = vpop.f32.mrb[0].mxu0
  %v2018 = vpop.f32.mrb[0].mxu0
  %v2019 = vadd.f32 0.0, %v2018
  %v2020 = vpop.f32.mrb[0].mxu0
  %2021 = vmatprep.mubr.bf16.mxu0 0
  %2022 = vmatmul.mubr.bf16.gmra.mrb[0].mxu0 %v1394
  %v2023 = vpop.f32.mrb[0].mxu0
  %v2024 = vadd.f32 0.0, %v2023
  %v2025 = vpop.f32.mrb[0].mxu0
  %v2026 = vpop.f32.mrb[0].mxu0
  %v2027 = vadd.f32 0.0, %v2026
  %v2028 = vpop.f32.mrb[0].mxu0
  %2029 = vmatprep.mubr.bf16.mxu0 0
  %2030 = vmatmul.mubr.bf16.gmra.mrb[0].mxu0 %v1397
  %v2031 = vpop.f32.mrb[0].mxu0
  %v2032 = vadd.f32 0.0, %v2031
  %v2033 = vpop.f32.mrb[0].mxu0
  %v2034 = vpop.f32.mrb[0].mxu0
  %v2035 = vadd.f32 0.0, %v2034
  %v2036 = vpop.f32.mrb[0].mxu0
  %2037 = vmatprep.mubr.bf16.mxu0 0
  %2038 = vmatmul.mubr.bf16.gmra.mrb[0].mxu0 %v1400
  %v2039 = vpop.f32.mrb[0].mxu0
  %v2040 = vadd.f32 0.0, %v2039
  %v2041 = vpop.f32.mrb[0].mxu0
  %v2042 = vpop.f32.mrb[0].mxu0
  %v2043 = vadd.f32 0.0, %v2042
  %v2044 = vpop.f32.mrb[0].mxu0
  %2045 = vmatprep.mubr.bf16.mxu0 0
  %2046 = vmatmul.mubr.bf16.gmra.mrb[0].mxu0 %v1403
  %v2047 = vpop.f32.mrb[0].mxu0
  %v2048 = vadd.f32 0.0, %v2047
  %v2049 = vpop.f32.mrb[0].mxu0
  %v2050 = vpop.f32.mrb[0].mxu0
  %v2051 = vadd.f32 0.0, %v2050
  %v2052 = vpop.f32.mrb[0].mxu0
  %2053 = vmatprep.mubr.bf16.mxu0 0
  %2054 = vmatmul.mubr.bf16.gmra.mrb[0].mxu0 %v1406
  %v2055 = vpop.f32.mrb[0].mxu0
  %v2056 = vadd.f32 0.0, %v2055
  %v2057 = vpop.f32.mrb[0].mxu0
  %v2058 = vpop.f32.mrb[0].mxu0
  %v2059 = vadd.f32 0.0, %v2058
  %v2060 = vpop.f32.mrb[0].mxu0
  %2061 = vmatprep.mubr.bf16.mxu0 0
  %2062 = vmatmul.mubr.bf16.gmra.mrb[0].mxu0 %v1409
  %v2063 = vpop.f32.mrb[0].mxu0
  %v2064 = vadd.f32 0.0, %v2063
  %v2065 = vpop.f32.mrb[0].mxu0
  %v2066 = vpop.f32.mrb[0].mxu0
  %v2067 = vadd.f32 0.0, %v2066
  %v2068 = vpop.f32.mrb[0].mxu0
  %2069 = vmatprep.mubr.bf16.mxu0 0
  %2070 = vmatmul.mubr.bf16.gmra.mrb[0].mxu0 %v1412
  %v2071 = vpop.f32.mrb[0].mxu0
  %v2072 = vadd.f32 0.0, %v2071
  %v2073 = vpop.f32.mrb[0].mxu0
  %v2074 = vpop.f32.mrb[0].mxu0
  %v2075 = vadd.f32 0.0, %v2074
  %v2076 = vpop.f32.mrb[0].mxu0
  %2077 = vmatprep.mubr.bf16.mxu0 0
  %2078 = vmatmul.mubr.bf16.gmra.mrb[0].mxu0 %v1415
  %v2079 = vpop.f32.mrb[0].mxu0
  %v2080 = vadd.f32 0.0, %v2079
  %v2081 = vpop.f32.mrb[0].mxu0
  %v2082 = vpop.f32.mrb[0].mxu0
  %v2083 = vadd.f32 0.0, %v2082
  %v2084 = vpop.f32.mrb[0].mxu0
  %2085 = vmatprep.mubr.bf16.mxu0 0
  %2086 = vmatmul.mubr.bf16.gmra.mrb[0].mxu0 %v1418
  %v2087 = vpop.f32.mrb[0].mxu0
  %v2088 = vadd.f32 0.0, %v2087
  %v2089 = vpop.f32.mrb[0].mxu0
  %v2090 = vpop.f32.mrb[0].mxu0
  %v2091 = vadd.f32 0.0, %v2090
  %v2092 = vpop.f32.mrb[0].mxu0
  %2093 = vmatprep.mubr.bf16.mxu0 0
  %2094 = vmatmul.mubr.bf16.gmra.mrb[0].mxu0 %v1421
  %v2095 = vpop.f32.mrb[0].mxu0
  %v2096 = vadd.f32 0.0, %v2095
  %v2097 = vpop.f32.mrb[0].mxu0
  %v2098 = vpop.f32.mrb[0].mxu0
  %v2099 = vadd.f32 0.0, %v2098
  %v2100 = vpop.f32.mrb[0].mxu0
  %2101 = vmatprep.mubr.bf16.mxu0 0
  %2102 = vmatmul.mubr.bf16.gmra.mrb[0].mxu0 %v1424
  %v2103 = vpop.f32.mrb[0].mxu0
  %v2104 = vadd.f32 0.0, %v2103
  %v2105 = vpop.f32.mrb[0].mxu0
  %v2106 = vpop.f32.mrb[0].mxu0
  %v2107 = vadd.f32 0.0, %v2106
  %v2108 = vpop.f32.mrb[0].mxu0
  %2109 = vmatprep.mubr.bf16.mxu0 0
  %2110 = vmatmul.mubr.bf16.gmra.mrb[0].mxu0 %v1427
  %v2111 = vpop.f32.mrb[0].mxu0
  %v2112 = vadd.f32 0.0, %v2111
  %v2113 = vpop.f32.mrb[0].mxu0
  %v2114 = vpop.f32.mrb[0].mxu0
  %v2115 = vadd.f32 0.0, %v2114
  %v2116 = vpop.f32.mrb[0].mxu0
  %2117 = vmatprep.mubr.bf16.mxu0 0
  %2118 = vmatmul.mubr.bf16.gmra.mrb[0].mxu0 %v1430
  %v2119 = vpop.f32.mrb[0].mxu0
  %v2120 = vadd.f32 0.0, %v2119
  %v2121 = vpop.f32.mrb[0].mxu0
  %v2122 = vpop.f32.mrb[0].mxu0
  %v2123 = vadd.f32 0.0, %v2122
  %v2124 = vpop.f32.mrb[0].mxu0
  %2125 = vmatprep.mubr.bf16.mxu0 0
  %2126 = vmatmul.mubr.bf16.gmra.mrb[0].mxu0 %v1433
  %v2127 = vpop.f32.mrb[0].mxu0
  %v2128 = vadd.f32 0.0, %v2127
  %v2129 = vpop.f32.mrb[0].mxu0
  %v2130 = vpop.f32.mrb[0].mxu0
  %v2131 = vadd.f32 0.0, %v2130
  %v2132 = vpop.f32.mrb[0].mxu0
  %2133 = vmatprep.mubr.bf16.mxu0 0
  %2134 = vmatmul.mubr.bf16.gmra.mrb[0].mxu0 %v1436
  %v2135 = vpop.f32.mrb[0].mxu0
  %v2136 = vadd.f32 0.0, %v2135
  %v2137 = vpop.f32.mrb[0].mxu0
  %v2138 = vpop.f32.mrb[0].mxu0
  %v2139 = vadd.f32 0.0, %v2138
  %v2140 = vpop.f32.mrb[0].mxu0
  %2141 = vmatprep.mubr.bf16.mxu0 0
  %2142 = vmatmul.mubr.bf16.gmra.mrb[0].mxu0 %v1439
  %v2143 = vpop.f32.mrb[0].mxu0
  %v2144 = vadd.f32 0.0, %v2143
  %v2145 = vpop.f32.mrb[0].mxu0
  %v2146 = vpop.f32.mrb[0].mxu0
  %v2147 = vadd.f32 0.0, %v2146
  %v2148 = vpop.f32.mrb[0].mxu0
  %2149 = vmatprep.mubr.bf16.mxu0 0
  %2150 = vmatmul.mubr.bf16.gmra.mrb[0].mxu0 %v1442
  %v2151 = vpop.f32.mrb[0].mxu0
  %v2152 = vadd.f32 0.0, %v2151
  %v2153 = vpop.f32.mrb[0].mxu0
  %v2154 = vpop.f32.mrb[0].mxu0
  %v2155 = vadd.f32 0.0, %v2154
  %v2156 = vpop.f32.mrb[0].mxu0
  %2157 = vmatprep.mubr.bf16.mxu0 0
  %2158 = vmatmul.mubr.bf16.gmra.mrb[0].mxu0 %v1445
  %v2159 = vpop.f32.mrb[0].mxu0
  %v2160 = vadd.f32 0.0, %v2159
  %v2161 = vpop.f32.mrb[0].mxu0
  %v2162 = vpop.f32.mrb[0].mxu0
  %v2163 = vadd.f32 0.0, %v2162
  %v2164 = vpop.f32.mrb[0].mxu0
  %2165 = vmatprep.mubr.bf16.mxu0 0
  %2166 = vmatmul.mubr.bf16.gmra.mrb[0].mxu0 %v1448
  %v2167 = vpop.f32.mrb[0].mxu0
  %v2168 = vadd.f32 0.0, %v2167
  %v2169 = vpop.f32.mrb[0].mxu0
  %v2170 = vpop.f32.mrb[0].mxu0
  %v2171 = vadd.f32 0.0, %v2170
  %v2172 = vpop.f32.mrb[0].mxu0
  %2173 = vmatprep.mubr.bf16.mxu0 0
  %2174 = vmatmul.mubr.bf16.gmra.mrb[0].mxu0 %v1451
  %v2175 = vpop.f32.mrb[0].mxu0
  %v2176 = vadd.f32 0.0, %v2175
  %v2177 = vpop.f32.mrb[0].mxu0
  %v2178 = vpop.f32.mrb[0].mxu0
  %v2179 = vadd.f32 0.0, %v2178
  %v2180 = vpop.f32.mrb[0].mxu0
  %2181 = vmatprep.mubr.bf16.mxu0 0
  %2182 = vmatmul.mubr.bf16.gmra.mrb[0].mxu0 %v1454
  %v2183 = vpop.f32.mrb[0].mxu0
  %v2184 = vadd.f32 0.0, %v2183
  %v2185 = vpop.f32.mrb[0].mxu0
  %v2186 = vpop.f32.mrb[0].mxu0
  %v2187 = vadd.f32 0.0, %v2186
  %v2188 = vpop.f32.mrb[0].mxu0
  %2189 = vmatprep.mubr.bf16.mxu0 0
  %2190 = vmatmul.mubr.bf16.gmra.mrb[0].mxu0 %v1457
  %v2191 = vpop.f32.mrb[0].mxu0
  %v2192 = vadd.f32 0.0, %v2191
  %v2193 = vpop.f32.mrb[0].mxu0
  %v2194 = vpop.f32.mrb[0].mxu0
  %v2195 = vadd.f32 0.0, %v2194
  %v2196 = vpop.f32.mrb[0].mxu0
  %2197 = vmatprep.mubr.bf16.mxu0 0
  %2198 = vmatmul.mubr.bf16.gmra.mrb[0].mxu0 %v1460
  %v2199 = vpop.f32.mrb[0].mxu0
  %v2200 = vadd.f32 0.0, %v2199
  %v2201 = vpop.f32.mrb[0].mxu0
  %v2202 = vpop.f32.mrb[0].mxu0
  %v2203 = vadd.f32 0.0, %v2202
  %v2204 = vpop.f32.mrb[0].mxu0
  %2205 = vmatprep.mubr.bf16.mxu0 0
  %2206 = vmatmul.mubr.bf16.gmra.mrb[0].mxu0 %v1463
  %v2207 = vpop.f32.mrb[0].mxu0
  %v2208 = vadd.f32 0.0, %v2207
  %v2209 = vpop.f32.mrb[0].mxu0
  %v2210 = vpop.f32.mrb[0].mxu0
  %v2211 = vadd.f32 0.0, %v2210
  %v2212 = vpop.f32.mrb[0].mxu0
  %2213 = vmatprep.mubr.bf16.mxu0 0
  %2214 = vmatmul.mubr.bf16.gmra.mrb[0].mxu0 %v1466
  %v2215 = vpop.f32.mrb[0].mxu0
  %v2216 = vadd.f32 0.0, %v2215
  %v2217 = vpop.f32.mrb[0].mxu0
  %v2218 = vpop.f32.mrb[0].mxu0
  %v2219 = vadd.f32 0.0, %v2218
  %v2220 = vpop.f32.mrb[0].mxu0
  %2221 = vmatprep.mubr.bf16.mxu0 0
  %2222 = vmatmul.mubr.bf16.gmra.mrb[0].mxu0 %v1469
  %v2223 = vpop.f32.mrb[0].mxu0
  %v2224 = vadd.f32 0.0, %v2223
  %v2225 = vpop.f32.mrb[0].mxu0
  %v2226 = vpop.f32.mrb[0].mxu0
  %v2227 = vadd.f32 0.0, %v2226
  %v2228 = vpop.f32.mrb[0].mxu0
  %2229 = vmatprep.mubr.bf16.mxu0 0
  %2230 = vmatmul.mubr.bf16.gmra.mrb[0].mxu0 %v1472
  %v2231 = vpop.f32.mrb[0].mxu0
  %v2232 = vadd.f32 0.0, %v2231
  %v2233 = vpop.f32.mrb[0].mxu0
  %v2234 = vpop.f32.mrb[0].mxu0
  %v2235 = vadd.f32 0.0, %v2234
  %v2236 = vpop.f32.mrb[0].mxu0
  %2237 = vmatprep.mubr.bf16.mxu0 0
  %2238 = vmatmul.mubr.bf16.gmra.mrb[0].mxu0 %v1475
  %v2239 = vpop.f32.mrb[0].mxu0
  %v2240 = vadd.f32 0.0, %v2239
  %v2241 = vpop.f32.mrb[0].mxu0
  %v2242 = vpop.f32.mrb[0].mxu0
  %v2243 = vadd.f32 0.0, %v2242
  %v2244 = vpop.f32.mrb[0].mxu0
  %2245 = vmatprep.mubr.bf16.mxu0 0
  %2246 = vmatmul.mubr.bf16.gmra.mrb[0].mxu0 %v1478
  %v2247 = vpop.f32.mrb[0].mxu0
  %v2248 = vadd.f32 0.0, %v2247
  %v2249 = vpop.f32.mrb[0].mxu0
  %v2250 = vpop.f32.mrb[0].mxu0
  %v2251 = vadd.f32 0.0, %v2250
  %v2252 = vpop.f32.mrb[0].mxu0
  %2253 = vmatprep.mubr.bf16.mxu0 0
  %2254 = vmatmul.mubr.bf16.gmra.mrb[0].mxu0 %v1481
  %v2255 = vpop.f32.mrb[0].mxu0
  %v2256 = vadd.f32 0.0, %v2255
  %v2257 = vpop.f32.mrb[0].mxu0
  %v2258 = vpop.f32.mrb[0].mxu0
  %v2259 = vadd.f32 0.0, %v2258
  %v2260 = vpop.f32.mrb[0].mxu0
  %2261 = vmatprep.mubr.bf16.mxu0 0
  %2262 = vmatmul.mubr.bf16.gmra.mrb[0].mxu0 %v1484
  %v2263 = vpop.f32.mrb[0].mxu0
  %v2264 = vadd.f32 0.0, %v2263
  %v2265 = vpop.f32.mrb[0].mxu0
  %v2266 = vpop.f32.mrb[0].mxu0
  %v2267 = vadd.f32 0.0, %v2266
  %v2268 = vpop.f32.mrb[0].mxu0
  %2269 = vmatprep.mubr.bf16.mxu0 0
  %2270 = vmatmul.mubr.bf16.gmra.mrb[0].mxu0 %v1487
  %v2271 = vpop.f32.mrb[0].mxu0
  %v2272 = vadd.f32 0.0, %v2271
  %v2273 = vpop.f32.mrb[0].mxu0
  %v2274 = vpop.f32.mrb[0].mxu0
  %v2275 = vadd.f32 0.0, %v2274
  %v2276 = vpop.f32.mrb[0].mxu0
  %2277 = vmatprep.mubr.bf16.mxu0 0
  %2278 = vmatmul.mubr.bf16.gmra.mrb[0].mxu0 %v1490
  %v2279 = vpop.f32.mrb[0].mxu0
  %v2280 = vadd.f32 0.0, %v2279
  %v2281 = vpop.f32.mrb[0].mxu0
  %v2282 = vpop.f32.mrb[0].mxu0
  %v2283 = vadd.f32 0.0, %v2282
  %v2284 = vpop.f32.mrb[0].mxu0
  %2285 = vmatprep.mubr.bf16.mxu0 0
  %2286 = vmatmul.mubr.bf16.gmra.mrb[0].mxu0 %v1493
  %v2287 = vpop.f32.mrb[0].mxu0
  %v2288 = vadd.f32 0.0, %v2287
  %v2289 = vpop.f32.mrb[0].mxu0
  %v2290 = vpop.f32.mrb[0].mxu0
  %v2291 = vadd.f32 0.0, %v2290
  %v2292 = vpop.f32.mrb[0].mxu0
  %2293 = vmatprep.mubr.bf16.mxu0 0
  %2294 = vmatmul.mubr.bf16.gmra.mrb[0].mxu0 %v1496
  %v2295 = vpop.f32.mrb[0].mxu0
  %v2296 = vadd.f32 0.0, %v2295
  %v2297 = vpop.f32.mrb[0].mxu0
  %v2298 = vpop.f32.mrb[0].mxu0
  %v2299 = vadd.f32 0.0, %v2298
  %v2300 = vpop.f32.mrb[0].mxu0
  %2301 = vmatprep.mubr.bf16.mxu0 0
  %2302 = vmatmul.mubr.bf16.gmra.mrb[0].mxu0 %v1499
  %v2303 = vpop.f32.mrb[0].mxu0
  %v2304 = vadd.f32 0.0, %v2303
  %v2305 = vpop.f32.mrb[0].mxu0
  %v2306 = vpop.f32.mrb[0].mxu0
  %v2307 = vadd.f32 0.0, %v2306
  %v2308 = vpop.f32.mrb[0].mxu0
  %2309 = vmatprep.mubr.bf16.mxu0 0
  %2310 = vmatmul.mubr.bf16.gmra.mrb[0].mxu0 %v1502
  %v2311 = vpop.f32.mrb[0].mxu0
  %v2312 = vadd.f32 0.0, %v2311
  %v2313 = vpop.f32.mrb[0].mxu0
  %v2314 = vpop.f32.mrb[0].mxu0
  %v2315 = vadd.f32 0.0, %v2314
  %v2316 = vpop.f32.mrb[0].mxu0
  %2317 = vmatprep.mubr.bf16.mxu0 0
  %2318 = vmatmul.mubr.bf16.gmra.mrb[0].mxu0 %v1505
  %v2319 = vpop.f32.mrb[0].mxu0
  %v2320 = vadd.f32 0.0, %v2319
  %v2321 = vpop.f32.mrb[0].mxu0
  %v2322 = vpop.f32.mrb[0].mxu0
  %v2323 = vadd.f32 0.0, %v2322
  %v2324 = vpop.f32.mrb[0].mxu0
  %2325 = vmatprep.mubr.bf16.mxu0 0
  %2326 = vmatmul.mubr.bf16.gmra.mrb[0].mxu0 %v1508
  %v2327 = vpop.f32.mrb[0].mxu0
  %v2328 = vadd.f32 0.0, %v2327
  %v2329 = vpop.f32.mrb[0].mxu0
  %v2330 = vpop.f32.mrb[0].mxu0
  %v2331 = vadd.f32 0.0, %v2330
  %v2332 = vpop.f32.mrb[0].mxu0
  %2333 = vmatprep.mubr.bf16.mxu0 0
  %2334 = vmatmul.mubr.bf16.gmra.mrb[0].mxu0 %v1511
  %v2335 = vpop.f32.mrb[0].mxu0
  %v2336 = vadd.f32 0.0, %v2335
  %v2337 = vpop.f32.mrb[0].mxu0
  %v2338 = vpop.f32.mrb[0].mxu0
  %v2339 = vadd.f32 0.0, %v2338
  %v2340 = vpop.f32.mrb[0].mxu0
  %2341 = vmatprep.mubr.bf16.mxu0 0
  %2342 = vmatmul.mubr.bf16.gmra.mrb[0].mxu0 %v1514
  %v2343 = vpop.f32.mrb[0].mxu0
  %v2344 = vadd.f32 0.0, %v2343
  %v2345 = vpop.f32.mrb[0].mxu0
  %v2346 = vpop.f32.mrb[0].mxu0
  %v2347 = vadd.f32 0.0, %v2346
  %v2348 = vpop.f32.mrb[0].mxu0
  %2349 = vmatprep.mubr.bf16.mxu0 0
  %2350 = vmatmul.mubr.bf16.gmra.mrb[0].mxu0 %v1517
  %v2351 = vpop.f32.mrb[0].mxu0
  %v2352 = vadd.f32 0.0, %v2351
  %v2353 = vpop.f32.mrb[0].mxu0
  %v2354 = vpop.f32.mrb[0].mxu0
  %v2355 = vadd.f32 0.0, %v2354
  %v2356 = vpop.f32.mrb[0].mxu0
  %2357 = vmatprep.mubr.bf16.mxu0 0
  %2358 = vmatmul.mubr.bf16.gmra.mrb[0].mxu0 %v1520
  %v2359 = vpop.f32.mrb[0].mxu0
  %v2360 = vadd.f32 0.0, %v2359
  %v2361 = vpop.f32.mrb[0].mxu0
  %v2362 = vpop.f32.mrb[0].mxu0
  %v2363 = vadd.f32 0.0, %v2362
  %v2364 = vpop.f32.mrb[0].mxu0
  %2365 = vmatprep.mubr.bf16.mxu0 0
  %2366 = vmatmul.mubr.bf16.gmra.mrb[0].mxu0 %v1523
  %v2367 = vpop.f32.mrb[0].mxu0
  %v2368 = vadd.f32 0.0, %v2367
  %v2369 = vpop.f32.mrb[0].mxu0
  %v2370 = vpop.f32.mrb[0].mxu0
  %v2371 = vadd.f32 0.0, %v2370
  %v2372 = vpop.f32.mrb[0].mxu0
  %2373 = vmatprep.mubr.bf16.mxu0 0
  %2374 = vmatmul.mubr.bf16.gmra.mrb[0].mxu0 %v1526
  %v2375 = vpop.f32.mrb[0].mxu0
  %v2376 = vadd.f32 0.0, %v2375
  %v2377 = vpop.f32.mrb[0].mxu0
  %v2378 = vpop.f32.mrb[0].mxu0
  %v2379 = vadd.f32 0.0, %v2378
  %v2380 = vpop.f32.mrb[0].mxu0
  %2381 = vmatprep.mubr.bf16.mxu0 0
  %2382 = vmatmul.mubr.bf16.gmra.mrb[0].mxu0 %v1529
  %v2383 = vpop.f32.mrb[0].mxu0
  %v2384 = vadd.f32 0.0, %v2383
  %v2385 = vpop.f32.mrb[0].mxu0
  %v2386 = vpop.f32.mrb[0].mxu0
  %v2387 = vadd.f32 0.0, %v2386
  %v2388 = vpop.f32.mrb[0].mxu0
  %2389 = vmatprep.mubr.bf16.mxu0 0
  %2390 = vmatmul.mubr.bf16.gmra.mrb[0].mxu0 %v1532
  %v2391 = vpop.f32.mrb[0].mxu0
  %v2392 = vadd.f32 0.0, %v2391
  %v2393 = vpop.f32.mrb[0].mxu0
  %v2394 = vpop.f32.mrb[0].mxu0
  %v2395 = vadd.f32 0.0, %v2394
  %v2396 = vpop.f32.mrb[0].mxu0
  %2397 = vmatprep.mubr.bf16.mxu0 0
  %2398 = vmatmul.mubr.bf16.gmra.mrb[0].mxu0 %v1535
  %v2399 = vpop.f32.mrb[0].mxu0
  %v2400 = vadd.f32 0.0, %v2399
  %v2401 = vpop.f32.mrb[0].mxu0
  %v2402 = vpop.f32.mrb[0].mxu0
  %v2403 = vadd.f32 0.0, %v2402
  %v2404 = vpop.f32.mrb[0].mxu0
  %2405 = vmatprep.mubr.bf16.mxu0 0
  %2406 = vmatmul.mubr.bf16.gmra.mrb[0].mxu0 %v1538
  %v2407 = vpop.f32.mrb[0].mxu0
  %v2408 = vadd.f32 0.0, %v2407
  %v2409 = vpop.f32.mrb[0].mxu0
  %v2410 = vpop.f32.mrb[0].mxu0
  %v2411 = vadd.f32 0.0, %v2410
  %v2412 = vpop.f32.mrb[0].mxu0
  %2413 = vmatprep.mubr.bf16.mxu0 0
  %2414 = vmatmul.mubr.bf16.gmra.mrb[0].mxu0 %v1541
  %v2415 = vpop.f32.mrb[0].mxu0
  %v2416 = vadd.f32 0.0, %v2415
  %v2417 = vpop.f32.mrb[0].mxu0
  %v2418 = vpop.f32.mrb[0].mxu0
  %v2419 = vadd.f32 0.0, %v2418
  %v2420 = vpop.f32.mrb[0].mxu0
  %2421 = vmatprep.mubr.bf16.mxu0 0
  %2422 = vmatmul.mubr.bf16.gmra.mrb[0].mxu0 %v1544
  %v2423 = vpop.f32.mrb[0].mxu0
  %v2424 = vadd.f32 0.0, %v2423
  %v2425 = vpop.f32.mrb[0].mxu0
  %v2426 = vpop.f32.mrb[0].mxu0
  %v2427 = vadd.f32 0.0, %v2426
  %v2428 = vpop.f32.mrb[0].mxu0
  %2429 = vmatprep.mubr.bf16.mxu0 0
  %2430 = vmatmul.mubr.bf16.gmra.mrb[0].mxu0 %v1547
  %v2431 = vpop.f32.mrb[0].mxu0
  %v2432 = vadd.f32 0.0, %v2431
  %v2433 = vpop.f32.mrb[0].mxu0
  %v2434 = vpop.f32.mrb[0].mxu0
  %v2435 = vadd.f32 0.0, %v2434
  %v2436 = vpop.f32.mrb[0].mxu0
  %2437 = vmatprep.mubr.bf16.mxu0 0
  %2438 = vmatmul.mubr.bf16.gmra.mrb[0].mxu0 %v1550
  %v2439 = vpop.f32.mrb[0].mxu0
  %v2440 = vadd.f32 0.0, %v2439
  %v2441 = vpop.f32.mrb[0].mxu0
  %v2442 = vpop.f32.mrb[0].mxu0
  %v2443 = vadd.f32 0.0, %v2442
  %v2444 = vpop.f32.mrb[0].mxu0
  %2445 = vmatprep.mubr.bf16.mxu0 0
  %2446 = vmatmul.mubr.bf16.gmra.mrb[0].mxu0 %v1553
  %v2447 = vpop.f32.mrb[0].mxu0
  %v2448 = vadd.f32 0.0, %v2447
  %v2449 = vpop.f32.mrb[0].mxu0
  %v2450 = vpop.f32.mrb[0].mxu0
  %v2451 = vadd.f32 0.0, %v2450
  %v2452 = vpop.f32.mrb[0].mxu0
  %2453 = vmatprep.mubr.bf16.mxu0 0
  %2454 = vmatmul.mubr.bf16.gmra.mrb[0].mxu0 %v1556
  %v2455 = vpop.f32.mrb[0].mxu0
  %v2456 = vadd.f32 0.0, %v2455
  %v2457 = vpop.f32.mrb[0].mxu0
  %v2458 = vpop.f32.mrb[0].mxu0
  %v2459 = vadd.f32 0.0, %v2458
  %v2460 = vpop.f32.mrb[0].mxu0
  %2461 = vmatprep.mubr.bf16.mxu0 0
  %2462 = vmatmul.mubr.bf16.gmra.mrb[0].mxu0 %v1559
  %v2463 = vpop.f32.mrb[0].mxu0
  %v2464 = vadd.f32 0.0, %v2463
  %v2465 = vpop.f32.mrb[0].mxu0
  %v2466 = vpop.f32.mrb[0].mxu0
  %v2467 = vadd.f32 0.0, %v2466
  %v2468 = vpop.f32.mrb[0].mxu0
  %2469 = vmatprep.mubr.bf16.mxu0 0
  %2470 = vmatmul.mubr.bf16.gmra.mrb[0].mxu0 %v1562
  %v2471 = vpop.f32.mrb[0].mxu0
  %v2472 = vadd.f32 0.0, %v2471
  %v2473 = vpop.f32.mrb[0].mxu0
  %v2474 = vpop.f32.mrb[0].mxu0
  %v2475 = vadd.f32 0.0, %v2474
  %v2476 = vpop.f32.mrb[0].mxu0
  %2477 = vmatprep.mubr.bf16.mxu0 0
  %2478 = vmatmul.mubr.bf16.gmra.mrb[0].mxu0 %v1565
  %v2479 = vpop.f32.mrb[0].mxu0
  %v2480 = vadd.f32 0.0, %v2479
  %v2481 = vpop.f32.mrb[0].mxu0
  %v2482 = vpop.f32.mrb[0].mxu0
  %v2483 = vadd.f32 0.0, %v2482
  %v2484 = vpop.f32.mrb[0].mxu0
  %2485 = vmatprep.mubr.bf16.mxu0 0
  %2486 = vmatmul.mubr.bf16.gmra.mrb[0].mxu0 %v1568
  %v2487 = vpop.f32.mrb[0].mxu0
  %v2488 = vadd.f32 0.0, %v2487
  %v2489 = vpop.f32.mrb[0].mxu0
  %v2490 = vpop.f32.mrb[0].mxu0
  %v2491 = vadd.f32 0.0, %v2490
  %v2492 = vpop.f32.mrb[0].mxu0
  %2493 = vmatprep.mubr.bf16.mxu0 0
  %2494 = vmatmul.mubr.bf16.gmra.mrb[0].mxu0 %v1571
  %v2495 = vpop.f32.mrb[0].mxu0
  %v2496 = vadd.f32 0.0, %v2495
  %v2497 = vpop.f32.mrb[0].mxu0
  %v2498 = vpop.f32.mrb[0].mxu0
  %v2499 = vadd.f32 0.0, %v2498
  %v2500 = vpop.f32.mrb[0].mxu0
  %2501 = vmatprep.mubr.bf16.mxu0 0
  %2502 = vmatmul.mubr.bf16.gmra.mrb[0].mxu0 %v1574
  %v2503 = vpop.f32.mrb[0].mxu0
  %v2504 = vadd.f32 0.0, %v2503
  %v2505 = vpop.f32.mrb[0].mxu0
  %v2506 = vpop.f32.mrb[0].mxu0
  %v2507 = vadd.f32 0.0, %v2506
  %v2508 = vpop.f32.mrb[0].mxu0
  %2509 = vmatprep.mubr.bf16.mxu0 0
  %2510 = vmatmul.mubr.bf16.gmra.mrb[0].mxu0 %v1577
  %v2511 = vpop.f32.mrb[0].mxu0
  %v2512 = vadd.f32 0.0, %v2511
  %v2513 = vpop.f32.mrb[0].mxu0
  %v2514 = vpop.f32.mrb[0].mxu0
  %v2515 = vadd.f32 0.0, %v2514
  %v2516 = vpop.f32.mrb[0].mxu0
  %2517 = vmatprep.mubr.bf16.mxu0 0
  %2518 = vmatmul.mubr.bf16.gmra.mrb[0].mxu0 %v1580
  %v2519 = vpop.f32.mrb[0].mxu0
  %v2520 = vadd.f32 0.0, %v2519
  %v2521 = vpop.f32.mrb[0].mxu0
  %v2522 = vpop.f32.mrb[0].mxu0
  %v2523 = vadd.f32 0.0, %v2522
  %v2524 = vpop.f32.mrb[0].mxu0
  %2525 = vmatprep.mubr.bf16.mxu0 0
  %2526 = vmatmul.mubr.bf16.gmra.mrb[0].mxu0 %v1583
  %v2527 = vpop.f32.mrb[0].mxu0
  %v2528 = vadd.f32 0.0, %v2527
  %v2529 = vpop.f32.mrb[0].mxu0
  %v2530 = vpop.f32.mrb[0].mxu0
  %v2531 = vadd.f32 0.0, %v2530
  %v2532 = vpop.f32.mrb[0].mxu0
  %2533 = vmatprep.mubr.bf16.mxu0 0
  %2534 = vmatmul.mubr.bf16.gmra.mrb[0].mxu0 %v1586
  %v2535 = vpop.f32.mrb[0].mxu0
  %v2536 = vadd.f32 0.0, %v2535
  %v2537 = vpop.f32.mrb[0].mxu0
  %v2538 = vpop.f32.mrb[0].mxu0
  %v2539 = vadd.f32 0.0, %v2538
  %v2540 = vpop.f32.mrb[0].mxu0
  %2541 = vmatprep.mubr.bf16.mxu0 0
  %2542 = vmatmul.mubr.bf16.gmra.mrb[0].mxu0 %v1589
  %v2543 = vpop.f32.mrb[0].mxu0
  %v2544 = vadd.f32 0.0, %v2543
  %v2545 = vpop.f32.mrb[0].mxu0
  %v2546 = vpop.f32.mrb[0].mxu0
  %v2547 = vadd.f32 0.0, %v2546
  %v2548 = vpop.f32.mrb[0].mxu0
  %2549 = vmatprep.mubr.bf16.mxu0 0
  %2550 = vmatmul.mubr.bf16.gmra.mrb[0].mxu0 %v1592
  %v2551 = vpop.f32.mrb[0].mxu0
  %v2552 = vadd.f32 0.0, %v2551
  %v2553 = vpop.f32.mrb[0].mxu0
  %v2554 = vpop.f32.mrb[0].mxu0
  %v2555 = vadd.f32 0.0, %v2554
  %v2556 = vpop.f32.mrb[0].mxu0
  %2557 = vmatprep.mubr.bf16.mxu0 0
  %2558 = vmatmul.mubr.bf16.gmra.mrb[0].mxu0 %v1595
  %v2559 = vpop.f32.mrb[0].mxu0
  %v2560 = vadd.f32 0.0, %v2559
  %v2561 = vpop.f32.mrb[0].mxu0
  %v2562 = vpop.f32.mrb[0].mxu0
  %v2563 = vadd.f32 0.0, %v2562
  %v2564 = vpop.f32.mrb[0].mxu0
  %2565 = vmatprep.mubr.bf16.mxu0 0
  %2566 = vmatmul.mubr.bf16.gmra.mrb[0].mxu0 %v1598
  %v2567 = vpop.f32.mrb[0].mxu0
  %v2568 = vadd.f32 0.0, %v2567
  %v2569 = vpop.f32.mrb[0].mxu0
  %v2570 = vpop.f32.mrb[0].mxu0
  %v2571 = vadd.f32 0.0, %v2570
  %v2572 = vpop.f32.mrb[0].mxu0
  %2573 = vmatprep.mubr.bf16.mxu0 0
  %2574 = vmatmul.mubr.bf16.gmra.mrb[0].mxu0 %v1601
  %v2575 = vpop.f32.mrb[0].mxu0
  %v2576 = vadd.f32 0.0, %v2575
  %v2577 = vpop.f32.mrb[0].mxu0
  %v2578 = vpop.f32.mrb[0].mxu0
  %v2579 = vadd.f32 0.0, %v2578
  %v2580 = vpop.f32.mrb[0].mxu0
  %2581 = vmatprep.mubr.bf16.mxu0 0
  %2582 = vmatmul.mubr.bf16.gmra.mrb[0].mxu0 %v1604
  %v2583 = vpop.f32.mrb[0].mxu0
  %v2584 = vadd.f32 0.0, %v2583
  %v2585 = vpop.f32.mrb[0].mxu0
  %v2586 = vpop.f32.mrb[0].mxu0
  %v2587 = vadd.f32 0.0, %v2586
  %v2588 = vpop.f32.mrb[0].mxu0
  %2589 = vmatprep.mubr.bf16.mxu0 0
  %2590 = vmatmul.mubr.bf16.gmra.mrb[0].mxu0 %v1607
  %v2591 = vpop.f32.mrb[0].mxu0
  %v2592 = vadd.f32 0.0, %v2591
  %v2593 = vpop.f32.mrb[0].mxu0
  %v2594 = vpop.f32.mrb[0].mxu0
  %v2595 = vadd.f32 0.0, %v2594
  %v2596 = vpop.f32.mrb[0].mxu0
  %2597 = vmatprep.mubr.bf16.mxu0 0
  %2598 = vmatmul.mubr.bf16.gmra.mrb[0].mxu0 %v1610
  %v2599 = vpop.f32.mrb[0].mxu0
  %v2600 = vadd.f32 0.0, %v2599
  %v2601 = vpop.f32.mrb[0].mxu0
  %v2602 = vpop.f32.mrb[0].mxu0
  %v2603 = vadd.f32 0.0, %v2602
  %v2604 = vpop.f32.mrb[0].mxu0
  %2605 = vmatprep.mubr.bf16.mxu0 0
  %2606 = vmatmul.mubr.bf16.gmra.mrb[0].mxu0 %v1613
  %v2607 = vpop.f32.mrb[0].mxu0
  %v2608 = vadd.f32 0.0, %v2607
  %v2609 = vpop.f32.mrb[0].mxu0
  %v2610 = vpop.f32.mrb[0].mxu0
  %v2611 = vadd.f32 0.0, %v2610
  %v2612 = vpop.f32.mrb[0].mxu0
  %2613 = vmatprep.mubr.bf16.mxu0 0
  %2614 = vmatmul.mubr.bf16.gmra.mrb[0].mxu0 %v1616
  %v2615 = vpop.f32.mrb[0].mxu0
  %v2616 = vadd.f32 0.0, %v2615
  %v2617 = vpop.f32.mrb[0].mxu0
  %v2618 = vpop.f32.mrb[0].mxu0
  %v2619 = vadd.f32 0.0, %v2618
  %v2620 = vpop.f32.mrb[0].mxu0
  %2621 = vmatprep.mubr.bf16.mxu0 0
  %2622 = vmatmul.mubr.bf16.gmra.mrb[0].mxu0 %v1619
  %v2623 = vpop.f32.mrb[0].mxu0
  %v2624 = vadd.f32 0.0, %v2623
  %v2625 = vpop.f32.mrb[0].mxu0
  %v2626 = vpop.f32.mrb[0].mxu0
  %v2627 = vadd.f32 0.0, %v2626
  %v2628 = vpop.f32.mrb[0].mxu0
  %2629 = vmatprep.mubr.bf16.mxu0 0
  %2630 = vmatmul.mubr.bf16.gmra.mrb[0].mxu0 %v1622
  %v2631 = vpop.f32.mrb[0].mxu0
  %v2632 = vadd.f32 0.0, %v2631
  %v2633 = vpop.f32.mrb[0].mxu0
  %v2634 = vpop.f32.mrb[0].mxu0
  %v2635 = vadd.f32 0.0, %v2634
  %v2636 = vpop.f32.mrb[0].mxu0
  %2637 = vmatprep.mubr.bf16.mxu0 0
  %2638 = vmatmul.mubr.bf16.gmra.mrb[0].mxu0 %v1625
  %v2639 = vpop.f32.mrb[0].mxu0
  %v2640 = vadd.f32 0.0, %v2639
  %v2641 = vpop.f32.mrb[0].mxu0
  %v2642 = vpop.f32.mrb[0].mxu0
  %v2643 = vadd.f32 0.0, %v2642
  %v2644 = vpop.f32.mrb[0].mxu0
  %2645 = vmatprep.mubr.bf16.mxu0 0
  %2646 = vmatmul.mubr.bf16.gmra.mrb[0].mxu0 %v1628
  %v2647 = vpop.f32.mrb[0].mxu0
  %v2648 = vadd.f32 0.0, %v2647
  %v2649 = vpop.f32.mrb[0].mxu0
  %v2650 = vpop.f32.mrb[0].mxu0
  %v2651 = vadd.f32 0.0, %v2650
  %v2652 = vpop.f32.mrb[0].mxu0
  %2653 = vmatprep.mubr.bf16.mxu0 0
  %2654 = vmatmul.mubr.bf16.gmra.mrb[0].mxu0 %v1631
  %v2655 = vpop.f32.mrb[0].mxu0
  %v2656 = vadd.f32 0.0, %v2655
  %v2657 = vpop.f32.mrb[0].mxu0
  %v2658 = vpop.f32.mrb[0].mxu0
  %v2659 = vadd.f32 0.0, %v2658
  %v2660 = vpop.f32.mrb[0].mxu0
  %2661 = vmatprep.mubr.bf16.mxu0 0
  %2662 = vmatmul.mubr.bf16.gmra.mrb[0].mxu0 %v1634
  %v2663 = vpop.f32.mrb[0].mxu0
  %v2664 = vadd.f32 0.0, %v2663
  %v2665 = vpop.f32.mrb[0].mxu0
  %v2666 = vpop.f32.mrb[0].mxu0
  %v2667 = vadd.f32 0.0, %v2666
  %v2668 = vpop.f32.mrb[0].mxu0
  %2669 = vmatprep.mubr.bf16.mxu0 0
  %2670 = vmatmul.mubr.bf16.gmra.mrb[0].mxu0 %v1637
  %v2671 = vpop.f32.mrb[0].mxu0
  %v2672 = vadd.f32 0.0, %v2671
  %v2673 = vpop.f32.mrb[0].mxu0
  %v2674 = vpop.f32.mrb[0].mxu0
  %v2675 = vadd.f32 0.0, %v2674
  %v2676 = vpop.f32.mrb[0].mxu0
  %2677 = vmatprep.mubr.bf16.mxu0 0
  %2678 = vmatmul.mubr.bf16.gmra.mrb[0].mxu0 %v1640
  %v2679 = vpop.f32.mrb[0].mxu0
  %v2680 = vadd.f32 0.0, %v2679
  %v2681 = vpop.f32.mrb[0].mxu0
  %v2682 = vpop.f32.mrb[0].mxu0
  %v2683 = vadd.f32 0.0, %v2682
  %v2684 = vpop.f32.mrb[0].mxu0
  %2685 = vmatprep.mubr.bf16.mxu0 0
  %2686 = vmatmul.mubr.bf16.gmra.mrb[0].mxu0 %v1643
  %v2687 = vpop.f32.mrb[0].mxu0
  %v2688 = vadd.f32 0.0, %v2687
  %v2689 = vpop.f32.mrb[0].mxu0
  %v2690 = vpop.f32.mrb[0].mxu0
  %v2691 = vadd.f32 0.0, %v2690
  %v2692 = vpop.f32.mrb[0].mxu0
  %2693 = vmatprep.mubr.bf16.mxu0 0
  %2694 = vmatmul.mubr.bf16.gmra.mrb[0].mxu0 %v1646
  %v2695 = vpop.f32.mrb[0].mxu0
  %v2696 = vadd.f32 0.0, %v2695
  %v2697 = vpop.f32.mrb[0].mxu0
  %v2698 = vpop.f32.mrb[0].mxu0
  %v2699 = vadd.f32 0.0, %v2698
  %v2700 = vpop.f32.mrb[0].mxu0
  %2701 = vmatprep.mubr.bf16.mxu0 0
  %2702 = vmatmul.mubr.bf16.gmra.mrb[0].mxu0 %v1649
  %v2703 = vpop.f32.mrb[0].mxu0
  %v2704 = vadd.f32 0.0, %v2703
  %v2705 = vpop.f32.mrb[0].mxu0
  %v2706 = vpop.f32.mrb[0].mxu0
  %v2707 = vadd.f32 0.0, %v2706
  %v2708 = vpop.f32.mrb[0].mxu0
  %2709 = vmatprep.mubr.bf16.mxu0 0
  %2710 = vmatmul.mubr.bf16.gmra.mrb[0].mxu0 %v1652
  %v2711 = vpop.f32.mrb[0].mxu0
  %v2712 = vadd.f32 0.0, %v2711
  %v2713 = vpop.f32.mrb[0].mxu0
  %v2714 = vpop.f32.mrb[0].mxu0
  %v2715 = vadd.f32 0.0, %v2714
  %v2716 = vpop.f32.mrb[0].mxu0
  %2717 = vmatprep.mubr.bf16.mxu0 0
  %2718 = vmatmul.mubr.bf16.gmra.mrb[0].mxu0 %v1655
  %v2719 = vpop.f32.mrb[0].mxu0
  %v2720 = vadd.f32 0.0, %v2719
  %v2721 = vpop.f32.mrb[0].mxu0
  %v2722 = vpop.f32.mrb[0].mxu0
  %v2723 = vadd.f32 0.0, %v2722
  %v2724 = vpop.f32.mrb[0].mxu0
  %2725 = vmatprep.mubr.bf16.mxu0 0
  %2726 = vmatmul.mubr.bf16.gmra.mrb[0].mxu0 %v1658
  %v2727 = vpop.f32.mrb[0].mxu0
  %v2728 = vadd.f32 0.0, %v2727
  %v2729 = vpop.f32.mrb[0].mxu0
  %v2730 = vpop.f32.mrb[0].mxu0
  %v2731 = vadd.f32 0.0, %v2730
  %v2732 = vpop.f32.mrb[0].mxu0
  %2733 = vmatprep.mubr.bf16.mxu0 0
  %2734 = vmatmul.mubr.bf16.gmra.mrb[0].mxu0 %v1661
  %v2735 = vpop.f32.mrb[0].mxu0
  %v2736 = vadd.f32 0.0, %v2735
  %v2737 = vpop.f32.mrb[0].mxu0
  %v2738 = vpop.f32.mrb[0].mxu0
  %v2739 = vadd.f32 0.0, %v2738
  %v2740 = vpop.f32.mrb[0].mxu0
  %2741 = vmatprep.mubr.bf16.mxu0 0
  %2742 = vmatmul.mubr.bf16.gmra.mrb[0].mxu0 %v1664
  %v2743 = vpop.f32.mrb[0].mxu0
  %v2744 = vadd.f32 0.0, %v2743
  %v2745 = vpop.f32.mrb[0].mxu0
  %v2746 = vpop.f32.mrb[0].mxu0
  %v2747 = vadd.f32 0.0, %v2746
  %v2748 = vpop.f32.mrb[0].mxu0
  %2749 = vmatprep.mubr.bf16.mxu0 0
  %2750 = vmatmul.mubr.bf16.gmra.mrb[0].mxu0 %v1667
  %v2751 = vpop.f32.mrb[0].mxu0
  %v2752 = vadd.f32 0.0, %v2751
  %v2753 = vpop.f32.mrb[0].mxu0
  %v2754 = vpop.f32.mrb[0].mxu0
  %v2755 = vadd.f32 0.0, %v2754
  %v2756 = vpop.f32.mrb[0].mxu0
  %2757 = vmatprep.mubr.bf16.mxu0 0
  %2758 = vmatmul.mubr.bf16.gmra.mrb[0].mxu0 %v1670
  %v2759 = vpop.f32.mrb[0].mxu0
  %v2760 = vadd.f32 0.0, %v2759
  %v2761 = vpop.f32.mrb[0].mxu0
  %v2762 = vpop.f32.mrb[0].mxu0
  %v2763 = vadd.f32 0.0, %v2762
  %v2764 = vpop.f32.mrb[0].mxu0
  %2765 = vmatprep.mubr.bf16.mxu0 0
  %2766 = vmatmul.mubr.bf16.gmra.mrb[0].mxu0 %v1673
  %v2767 = vpop.f32.mrb[0].mxu0
  %v2768 = vadd.f32 0.0, %v2767
  %v2769 = vpop.f32.mrb[0].mxu0
  %v2770 = vpop.f32.mrb[0].mxu0
  %v2771 = vadd.f32 0.0, %v2770
  %v2772 = vpop.f32.mrb[0].mxu0
  %2773 = vmatprep.mubr.bf16.mxu0 0
  %2774 = vmatmul.mubr.bf16.gmra.mrb[0].mxu0 %v1676
  %v2775 = vpop.f32.mrb[0].mxu0
  %v2776 = vadd.f32 0.0, %v2775
  %v2777 = vpop.f32.mrb[0].mxu0
  %v2778 = vpop.f32.mrb[0].mxu0
  %v2779 = vadd.f32 0.0, %v2778
  %v2780 = vpop.f32.mrb[0].mxu0
  %2781 = vmatprep.mubr.bf16.mxu0 0
  %2782 = vmatmul.mubr.bf16.gmra.mrb[0].mxu0 %v1679
  %v2783 = vpop.f32.mrb[0].mxu0
  %v2784 = vadd.f32 0.0, %v2783
  %v2785 = vpop.f32.mrb[0].mxu0
  %v2786 = vpop.f32.mrb[0].mxu0
  %v2787 = vadd.f32 0.0, %v2786
  %v2788 = vpop.f32.mrb[0].mxu0
  %2789 = vmatprep.mubr.bf16.mxu0 0
  %2790 = vmatmul.mubr.bf16.gmra.mrb[0].mxu0 %v1682
  %v2791 = vpop.f32.mrb[0].mxu0
  %v2792 = vadd.f32 0.0, %v2791
  %v2793 = vpop.f32.mrb[0].mxu0
  %v2794 = vpop.f32.mrb[0].mxu0
  %v2795 = vadd.f32 0.0, %v2794
  %v2796 = vpop.f32.mrb[0].mxu0
  %2797 = vmatprep.mubr.bf16.mxu0 0
  %2798 = vmatmul.mubr.bf16.gmra.mrb[0].mxu0 %v1685
  %v2799 = vpop.f32.mrb[0].mxu0
  %v2800 = vadd.f32 0.0, %v2799
  %v2801 = vpop.f32.mrb[0].mxu0
  %v2802 = vpop.f32.mrb[0].mxu0
  %v2803 = vadd.f32 0.0, %v2802
  %v2804 = vpop.f32.mrb[0].mxu0
  %2805 = vmatprep.mubr.bf16.mxu0 0
  %2806 = vmatmul.mubr.bf16.gmra.mrb[0].mxu0 %v1688
  %v2807 = vpop.f32.mrb[0].mxu0
  %v2808 = vadd.f32 0.0, %v2807
  %v2809 = vpop.f32.mrb[0].mxu0
  %v2810 = vpop.f32.mrb[0].mxu0
  %v2811 = vadd.f32 0.0, %v2810
  %v2812 = vpop.f32.mrb[0].mxu0
  %2813 = vmatprep.mubr.bf16.mxu0 0
  %2814 = vmatmul.mubr.bf16.gmra.mrb[0].mxu0 %v1691
  %v2815 = vpop.f32.mrb[0].mxu0
  %v2816 = vadd.f32 0.0, %v2815
  %v2817 = vpop.f32.mrb[0].mxu0
  %v2818 = vpop.f32.mrb[0].mxu0
  %v2819 = vadd.f32 0.0, %v2818
  %v2820 = vpop.f32.mrb[0].mxu0
  %2821 = vmatprep.mubr.bf16.mxu0 0
  %2822 = vmatmul.mubr.bf16.gmra.mrb[0].mxu0 %v1694
  %v2823 = vpop.f32.mrb[0].mxu0
  %v2824 = vadd.f32 0.0, %v2823
  %v2825 = vpop.f32.mrb[0].mxu0
  %v2826 = vpop.f32.mrb[0].mxu0
  %v2827 = vadd.f32 0.0, %v2826
  %v2828 = vpop.f32.mrb[0].mxu0
  %2829 = vmatprep.mubr.bf16.mxu0 0
  %2830 = vmatmul.mubr.bf16.gmra.mrb[0].mxu0 %v1697
  %v2831 = vpop.f32.mrb[0].mxu0
  %v2832 = vadd.f32 0.0, %v2831
  %v2833 = vpop.f32.mrb[0].mxu0
  %v2834 = vpop.f32.mrb[0].mxu0
  %v2835 = vadd.f32 0.0, %v2834
  %v2836 = vpop.f32.mrb[0].mxu0
  %2837 = vmatprep.mubr.bf16.mxu0 0
  %2838 = vmatmul.mubr.bf16.gmra.mrb[0].mxu0 %v1700
  %v2839 = vpop.f32.mrb[0].mxu0
  %v2840 = vadd.f32 0.0, %v2839
  %v2841 = vpop.f32.mrb[0].mxu0
  %v2842 = vpop.f32.mrb[0].mxu0
  %v2843 = vadd.f32 0.0, %v2842
  %v2844 = vpop.f32.mrb[0].mxu0
  %2845 = vmatprep.mubr.bf16.mxu0 0
  %2846 = vmatmul.mubr.bf16.gmra.mrb[0].mxu0 %v1703
  %v2847 = vpop.f32.mrb[0].mxu0
  %v2848 = vadd.f32 0.0, %v2847
  %v2849 = vpop.f32.mrb[0].mxu0
  %v2850 = vpop.f32.mrb[0].mxu0
  %v2851 = vadd.f32 0.0, %v2850
  %v2852 = vpop.f32.mrb[0].mxu0
  %2853 = vmatprep.mubr.bf16.mxu0 0
  %2854 = vmatmul.mubr.bf16.gmra.mrb[0].mxu0 %v1706
  %v2855 = vpop.f32.mrb[0].mxu0
  %v2856 = vadd.f32 0.0, %v2855
  %v2857 = vpop.f32.mrb[0].mxu0
  %v2858 = vpop.f32.mrb[0].mxu0
  %v2859 = vadd.f32 0.0, %v2858
  %v2860 = vpop.f32.mrb[0].mxu0
  %2861 = vmatprep.mubr.bf16.mxu0 0
  %2862 = vmatmul.mubr.bf16.gmra.mrb[0].mxu0 %v1709
  %v2863 = vpop.f32.mrb[0].mxu0
  %v2864 = vadd.f32 0.0, %v2863
  %v2865 = vpop.f32.mrb[0].mxu0
  %v2866 = vpop.f32.mrb[0].mxu0
  %v2867 = vadd.f32 0.0, %v2866
  %v2868 = vpop.f32.mrb[0].mxu0
  %2869 = vmatprep.mubr.bf16.mxu0 0
  %2870 = vmatmul.mubr.bf16.gmra.mrb[0].mxu0 %v1712
  %v2871 = vpop.f32.mrb[0].mxu0
  %v2872 = vadd.f32 0.0, %v2871
  %v2873 = vpop.f32.mrb[0].mxu0
  %v2874 = vpop.f32.mrb[0].mxu0
  %v2875 = vadd.f32 0.0, %v2874
  %v2876 = vpop.f32.mrb[0].mxu0
  %2877 = vmatprep.mubr.bf16.mxu0 0
  %2878 = vmatmul.mubr.bf16.gmra.mrb[0].mxu0 %v1715
  %v2879 = vpop.f32.mrb[0].mxu0
  %v2880 = vadd.f32 0.0, %v2879
  %v2881 = vpop.f32.mrb[0].mxu0
  %v2882 = vpop.f32.mrb[0].mxu0
  %v2883 = vadd.f32 0.0, %v2882
  %v2884 = vpop.f32.mrb[0].mxu0
  %2885 = vmatprep.mubr.bf16.mxu0 0
  %2886 = vmatmul.mubr.bf16.gmra.mrb[0].mxu0 %v1718
  %v2887 = vpop.f32.mrb[0].mxu0
  %v2888 = vadd.f32 0.0, %v2887
  %v2889 = vpop.f32.mrb[0].mxu0
  %v2890 = vpop.f32.mrb[0].mxu0
  %v2891 = vadd.f32 0.0, %v2890
  %v2892 = vpop.f32.mrb[0].mxu0
  %2893 = vmatprep.mubr.bf16.mxu0 0
  %2894 = vmatmul.mubr.bf16.gmra.mrb[0].mxu0 %v1721
  %v2895 = vpop.f32.mrb[0].mxu0
  %v2896 = vadd.f32 0.0, %v2895
  %v2897 = vpop.f32.mrb[0].mxu0
  %v2898 = vpop.f32.mrb[0].mxu0
  %v2899 = vadd.f32 0.0, %v2898
  %v2900 = vpop.f32.mrb[0].mxu0
  %2901 = vmatprep.mubr.bf16.mxu0 0
  %2902 = vmatmul.mubr.bf16.gmra.mrb[0].mxu0 %v1724
  %v2903 = vpop.f32.mrb[0].mxu0
  %v2904 = vadd.f32 0.0, %v2903
  %v2905 = vpop.f32.mrb[0].mxu0
  %v2906 = vpop.f32.mrb[0].mxu0
  %v2907 = vadd.f32 0.0, %v2906
  %v2908 = vpop.f32.mrb[0].mxu0
  %2909 = vmatprep.mubr.bf16.mxu0 0
  %2910 = vmatmul.mubr.bf16.gmra.mrb[0].mxu0 %v1727
  %v2911 = vpop.f32.mrb[0].mxu0
  %v2912 = vadd.f32 0.0, %v2911
  %v2913 = vpop.f32.mrb[0].mxu0
  %v2914 = vpop.f32.mrb[0].mxu0
  %v2915 = vadd.f32 0.0, %v2914
  %v2916 = vpop.f32.mrb[0].mxu0
  %2917 = vmatprep.mubr.bf16.mxu0 0
  %2918 = vmatmul.mubr.bf16.gmra.mrb[0].mxu0 %v1730
  %v2919 = vpop.f32.mrb[0].mxu0
  %v2920 = vadd.f32 0.0, %v2919
  %v2921 = vpop.f32.mrb[0].mxu0
  %v2922 = vpop.f32.mrb[0].mxu0
  %v2923 = vadd.f32 0.0, %v2922
  %v2924 = vpop.f32.mrb[0].mxu0
  %2925 = vmatprep.mubr.bf16.mxu0 0
  %2926 = vmatmul.mubr.bf16.gmra.mrb[0].mxu0 %v1733
  %v2927 = vpop.f32.mrb[0].mxu0
  %v2928 = vadd.f32 0.0, %v2927
  %v2929 = vpop.f32.mrb[0].mxu0
  %v2930 = vpop.f32.mrb[0].mxu0
  %v2931 = vadd.f32 0.0, %v2930
  %v2932 = vpop.f32.mrb[0].mxu0
  %2933 = vmatprep.mubr.bf16.mxu0 0
  %2934 = vmatmul.mubr.bf16.gmra.mrb[0].mxu0 %v1736
  %v2935 = vpop.f32.mrb[0].mxu0
  %v2936 = vadd.f32 0.0, %v2935
  %v2937 = vpop.f32.mrb[0].mxu0
  %v2938 = vpop.f32.mrb[0].mxu0
  %v2939 = vadd.f32 0.0, %v2938
  %v2940 = vpop.f32.mrb[0].mxu0
  %2941 = vmatprep.mubr.bf16.mxu0 0
  %2942 = vmatmul.mubr.bf16.gmra.mrb[0].mxu0 %v1739
  %v2943 = vpop.f32.mrb[0].mxu0
  %v2944 = vadd.f32 0.0, %v2943
  %v2945 = vpop.f32.mrb[0].mxu0
  %v2946 = vpop.f32.mrb[0].mxu0
  %v2947 = vadd.f32 0.0, %v2946
  %v2948 = vpop.f32.mrb[0].mxu0
  %2949 = vmatprep.mubr.bf16.mxu0 0
  %2950 = vmatmul.mubr.bf16.gmra.mrb[0].mxu0 %v1742
  %v2951 = vpop.f32.mrb[0].mxu0
  %v2952 = vadd.f32 0.0, %v2951
  %v2953 = vpop.f32.mrb[0].mxu0
  %v2954 = vpop.f32.mrb[0].mxu0
  %v2955 = vadd.f32 0.0, %v2954
  %v2956 = vpop.f32.mrb[0].mxu0
  %2957 = vmatprep.mubr.bf16.mxu0 0
  %2958 = vmatmul.mubr.bf16.gmra.mrb[0].mxu0 %v1745
  %v2959 = vpop.f32.mrb[0].mxu0
  %v2960 = vadd.f32 0.0, %v2959
  %v2961 = vpop.f32.mrb[0].mxu0
  %v2962 = vpop.f32.mrb[0].mxu0
  %v2963 = vadd.f32 0.0, %v2962
  %v2964 = vpop.f32.mrb[0].mxu0
  %2965 = vmatprep.mubr.bf16.mxu0 0
  %2966 = vmatmul.mubr.bf16.gmra.mrb[0].mxu0 %v1748
  %v2967 = vpop.f32.mrb[0].mxu0
  %v2968 = vadd.f32 0.0, %v2967
  %v2969 = vpop.f32.mrb[0].mxu0
  %v2970 = vpop.f32.mrb[0].mxu0
  %v2971 = vadd.f32 0.0, %v2970
  %v2972 = vpop.f32.mrb[0].mxu0
  %2973 = vmatprep.mubr.bf16.mxu0 0
  %2974 = vmatmul.mubr.bf16.gmra.mrb[0].mxu0 %v1751
  %v2975 = vpop.f32.mrb[0].mxu0
  %v2976 = vadd.f32 0.0, %v2975
  %v2977 = vpop.f32.mrb[0].mxu0
  %v2978 = vpop.f32.mrb[0].mxu0
  %v2979 = vadd.f32 0.0, %v2978
  %v2980 = vpop.f32.mrb[0].mxu0
  %2981 = vmatprep.mubr.bf16.mxu0 0
  %2982 = vmatmul.mubr.bf16.gmra.mrb[0].mxu0 %v1754
  %v2983 = vpop.f32.mrb[0].mxu0
  %v2984 = vadd.f32 0.0, %v2983
  %v2985 = vpop.f32.mrb[0].mxu0
  %v2986 = vpop.f32.mrb[0].mxu0
  %v2987 = vadd.f32 0.0, %v2986
  %v2988 = vpop.f32.mrb[0].mxu0
  %2989 = vmatprep.mubr.bf16.mxu0 0
  %2990 = vmatmul.mubr.bf16.gmra.mrb[0].mxu0 %v1757
  %v2991 = vpop.f32.mrb[0].mxu0
  %v2992 = vadd.f32 0.0, %v2991
  %v2993 = vpop.f32.mrb[0].mxu0
  %v2994 = vpop.f32.mrb[0].mxu0
  %v2995 = vadd.f32 0.0, %v2994
  %v2996 = vpop.f32.mrb[0].mxu0
  %2997 = vmatprep.mubr.bf16.mxu0 0
  %2998 = vmatmul.mubr.bf16.gmra.mrb[0].mxu0 %v1760
  %v2999 = vpop.f32.mrb[0].mxu0
  %v3000 = vadd.f32 0.0, %v2999
  %v3001 = vpop.f32.mrb[0].mxu0
  %v3002 = vpop.f32.mrb[0].mxu0
  %v3003 = vadd.f32 0.0, %v3002
  %v3004 = vpop.f32.mrb[0].mxu0
  %3005 = vmatprep.mubr.bf16.mxu0 0
  %3006 = vmatmul.mubr.bf16.gmra.mrb[0].mxu0 %v1763
  %v3007 = vpop.f32.mrb[0].mxu0
  %v3008 = vadd.f32 0.0, %v3007
  %v3009 = vpop.f32.mrb[0].mxu0
  %v3010 = vpop.f32.mrb[0].mxu0
  %v3011 = vadd.f32 0.0, %v3010
  %v3012 = vpop.f32.mrb[0].mxu0
  %3013 = vmatprep.mubr.bf16.mxu0 0
  %3014 = vmatmul.mubr.bf16.gmra.mrb[0].mxu0 %v1766
  %v3015 = vpop.f32.mrb[0].mxu0
  %v3016 = vadd.f32 0.0, %v3015
  %v3017 = vpop.f32.mrb[0].mxu0
  %v3018 = vpop.f32.mrb[0].mxu0
  %v3019 = vadd.f32 0.0, %v3018
  %v3020 = vpop.f32.mrb[0].mxu0
  %3021 = vmatprep.mubr.bf16.mxu0 0
  %3022 = vmatmul.mubr.bf16.gmra.mrb[0].mxu0 %v1769
  %v3023 = vpop.f32.mrb[0].mxu0
  %v3024 = vadd.f32 0.0, %v3023
  %v3025 = vpop.f32.mrb[0].mxu0
  %v3026 = vpop.f32.mrb[0].mxu0
  %v3027 = vadd.f32 0.0, %v3026
  %v3028 = vpop.f32.mrb[0].mxu0
  %3029 = vmatprep.mubr.bf16.mxu0 0
  %3030 = vmatmul.mubr.bf16.gmra.mrb[0].mxu0 %v1772
  %v3031 = vpop.f32.mrb[0].mxu0
  %v3032 = vadd.f32 0.0, %v3031
  %v3033 = vpop.f32.mrb[0].mxu0
  %v3034 = vpop.f32.mrb[0].mxu0
  %v3035 = vadd.f32 0.0, %v3034
  %v3036 = vpop.f32.mrb[0].mxu0
  %3037 = vmatprep.mubr.bf16.mxu0 0
  %3038 = vmatmul.mubr.bf16.gmra.mrb[0].mxu0 %v1775
  %v3039 = vpop.f32.mrb[0].mxu0
  %v3040 = vadd.f32 0.0, %v3039
  %v3041 = vpop.f32.mrb[0].mxu0
  %v3042 = vpop.f32.mrb[0].mxu0
  %v3043 = vadd.f32 0.0, %v3042
  %v3044 = vpop.f32.mrb[0].mxu0
  %3045 = vmatprep.mubr.bf16.mxu0 0
  %3046 = vmatmul.mubr.bf16.gmra.mrb[0].mxu0 %v1778
  %v3047 = vpop.f32.mrb[0].mxu0
  %v3048 = vadd.f32 0.0, %v3047
  %v3049 = vpop.f32.mrb[0].mxu0
  %v3050 = vpop.f32.mrb[0].mxu0
  %v3051 = vadd.f32 0.0, %v3050
  %v3052 = vpop.f32.mrb[0].mxu0
  %3053 = vmatprep.mubr.bf16.mxu0 0
  %3054 = vmatmul.mubr.bf16.gmra.mrb[0].mxu0 %v1781
  %v3055 = vpop.f32.mrb[0].mxu0
  %v3056 = vadd.f32 0.0, %v3055
  %v3057 = vpop.f32.mrb[0].mxu0
  %v3058 = vpop.f32.mrb[0].mxu0
  %v3059 = vadd.f32 0.0, %v3058
  %v3060 = vpop.f32.mrb[0].mxu0
  %3061 = vmatprep.mubr.bf16.mxu0 0
  %3062 = vmatmul.mubr.bf16.gmra.mrb[0].mxu0 %v1784
  %v3063 = vpop.f32.mrb[0].mxu0
  %v3064 = vadd.f32 0.0, %v3063
  %v3065 = vpop.f32.mrb[0].mxu0
  %v3066 = vpop.f32.mrb[0].mxu0
  %v3067 = vadd.f32 0.0, %v3066
  %v3068 = vpop.f32.mrb[0].mxu0
  %3069 = vmatprep.mubr.bf16.mxu0 0
  %3070 = vmatmul.mubr.bf16.gmra.mrb[0].mxu0 %v1787
  %v3071 = vpop.f32.mrb[0].mxu0
  %v3072 = vadd.f32 0.0, %v3071
  %v3073 = vpop.f32.mrb[0].mxu0
  %v3074 = vpop.f32.mrb[0].mxu0
  %v3075 = vadd.f32 0.0, %v3074
  %v3076 = vpop.f32.mrb[0].mxu0
  %3077 = vmatprep.mubr.bf16.mxu0 0
  %3078 = vmatmul.mubr.bf16.gmra.mrb[0].mxu0 %v1790
  %v3079 = vpop.f32.mrb[0].mxu0
  %v3080 = vadd.f32 0.0, %v3079
  %v3081 = vpop.f32.mrb[0].mxu0
  %v3082 = vpop.f32.mrb[0].mxu0
  %v3083 = vadd.f32 0.0, %v3082
  %v3084 = vpop.f32.mrb[0].mxu0
  %3085 = vmatprep.mubr.bf16.mxu0 0
  %3086 = vmatmul.mubr.bf16.gmra.mrb[0].mxu0 %v1793
  %v3087 = vpop.f32.mrb[0].mxu0
  %v3088 = vadd.f32 0.0, %v3087
  %v3089 = vpop.f32.mrb[0].mxu0
  %v3090 = vpop.f32.mrb[0].mxu0
  %v3091 = vadd.f32 0.0, %v3090
  %v3092 = vpop.f32.mrb[0].mxu0
  %3093 = vmatprep.mubr.bf16.mxu0 0
  %3094 = vmatmul.mubr.bf16.gmra.mrb[0].mxu0 %v1796
  %v3095 = vpop.f32.mrb[0].mxu0
  %v3096 = vadd.f32 0.0, %v3095
  %v3097 = vpop.f32.mrb[0].mxu0
  %v3098 = vpop.f32.mrb[0].mxu0
  %v3099 = vadd.f32 0.0, %v3098
  %v3100 = vpop.f32.mrb[0].mxu0
  %3101 = vmatprep.mubr.bf16.mxu0 0
  %3102 = vmatmul.mubr.bf16.gmra.mrb[0].mxu0 %v1799
  %v3103 = vpop.f32.mrb[0].mxu0
  %v3104 = vadd.f32 0.0, %v3103
  %v3105 = vpop.f32.mrb[0].mxu0
  %v3106 = vpop.f32.mrb[0].mxu0
  %v3107 = vadd.f32 0.0, %v3106
  %v3108 = vpop.f32.mrb[0].mxu0
  %3109 = vmatprep.mubr.bf16.mxu0 0
  %3110 = vmatmul.mubr.bf16.gmra.mrb[0].mxu0 %v1802
  %v3111 = vpop.f32.mrb[0].mxu0
  %v3112 = vadd.f32 0.0, %v3111
  %v3113 = vpop.f32.mrb[0].mxu0
  %v3114 = vpop.f32.mrb[0].mxu0
  %v3115 = vadd.f32 0.0, %v3114
  %v3116 = vpop.f32.mrb[0].mxu0
  %3117 = vmatprep.mubr.bf16.mxu0 0
  %3118 = vmatmul.mubr.bf16.gmra.mrb[0].mxu0 %v1805
  %v3119 = vpop.f32.mrb[0].mxu0
  %v3120 = vadd.f32 0.0, %v3119
  %v3121 = vpop.f32.mrb[0].mxu0
  %v3122 = vpop.f32.mrb[0].mxu0
  %v3123 = vadd.f32 0.0, %v3122
  %v3124 = vpop.f32.mrb[0].mxu0
  %3125 = vmatprep.mubr.bf16.mxu0 0
  %3126 = vmatmul.mubr.bf16.gmra.mrb[0].mxu0 %v1808
  %v3127 = vpop.f32.mrb[0].mxu0
  %v3128 = vadd.f32 0.0, %v3127
  %v3129 = vpop.f32.mrb[0].mxu0
  %v3130 = vpop.f32.mrb[0].mxu0
  %v3131 = vadd.f32 0.0, %v3130
  %v3132 = vpop.f32.mrb[0].mxu0
  %3133 = vmatprep.mubr.bf16.mxu0 0
  %3134 = vmatmul.mubr.bf16.gmra.mrb[0].mxu0 %v1811
  %v3135 = vpop.f32.mrb[0].mxu0
  %v3136 = vadd.f32 0.0, %v3135
  %v3137 = vpop.f32.mrb[0].mxu0
  %v3138 = vpop.f32.mrb[0].mxu0
  %v3139 = vadd.f32 0.0, %v3138
  %v3140 = vpop.f32.mrb[0].mxu0
  %3141 = vmatprep.mubr.bf16.mxu0 0
  %3142 = vmatmul.mubr.bf16.gmra.mrb[0].mxu0 %v1814
  %v3143 = vpop.f32.mrb[0].mxu0
  %v3144 = vadd.f32 0.0, %v3143
  %v3145 = vpop.f32.mrb[0].mxu0
  %v3146 = vpop.f32.mrb[0].mxu0
  %v3147 = vadd.f32 0.0, %v3146
  %v3148 = vpop.f32.mrb[0].mxu0
  %3149 = vmatprep.mubr.bf16.mxu0 0
  %3150 = vmatmul.mubr.bf16.gmra.mrb[0].mxu0 %v1817
  %v3151 = vpop.f32.mrb[0].mxu0
  %v3152 = vadd.f32 0.0, %v3151
  %v3153 = vpop.f32.mrb[0].mxu0
  %v3154 = vpop.f32.mrb[0].mxu0
  %v3155 = vadd.f32 0.0, %v3154
  %v3156 = vpop.f32.mrb[0].mxu0
  %3157 = vmatprep.mubr.bf16.mxu0 0
  %3158 = vmatmul.mubr.bf16.gmra.mrb[0].mxu0 %v1820
  %v3159 = vpop.f32.mrb[0].mxu0
  %v3160 = vadd.f32 0.0, %v3159
  %v3161 = vpop.f32.mrb[0].mxu0
  %v3162 = vpop.f32.mrb[0].mxu0
  %v3163 = vadd.f32 0.0, %v3162
  %v3164 = vpop.f32.mrb[0].mxu0
  %3165 = vmatprep.mubr.bf16.mxu0 0
  %3166 = vmatmul.mubr.bf16.gmra.mrb[0].mxu0 %v1823
  %v3167 = vpop.f32.mrb[0].mxu0
  %v3168 = vadd.f32 0.0, %v3167
  %v3169 = vpop.f32.mrb[0].mxu0
  %v3170 = vpop.f32.mrb[0].mxu0
  %v3171 = vadd.f32 0.0, %v3170
  %v3172 = vpop.f32.mrb[0].mxu0
  %3173 = vmatprep.mubr.bf16.mxu0 0
  %3174 = vmatmul.mubr.bf16.gmra.mrb[0].mxu0 %v1826
  %v3175 = vpop.f32.mrb[0].mxu0
  %v3176 = vadd.f32 0.0, %v3175
  %v3177 = vpop.f32.mrb[0].mxu0
  %v3178 = vpop.f32.mrb[0].mxu0
  %v3179 = vadd.f32 0.0, %v3178
  %v3180 = vpop.f32.mrb[0].mxu0
  %3181 = vmatprep.mubr.bf16.mxu0 0
  %3182 = vmatmul.mubr.bf16.gmra.mrb[0].mxu0 %v1829
  %v3183 = vpop.f32.mrb[0].mxu0
  %v3184 = vadd.f32 0.0, %v3183
  %v3185 = vpop.f32.mrb[0].mxu0
  %v3186 = vpop.f32.mrb[0].mxu0
  %v3187 = vadd.f32 0.0, %v3186
  %v3188 = vpop.f32.mrb[0].mxu0
  %3189 = vmatprep.mubr.bf16.mxu0 0
  %3190 = vmatmul.mubr.bf16.gmra.mrb[0].mxu0 %v1832
  %v3191 = vpop.f32.mrb[0].mxu0
  %v3192 = vadd.f32 0.0, %v3191
  %v3193 = vpop.f32.mrb[0].mxu0
  %v3194 = vpop.f32.mrb[0].mxu0
  %v3195 = vadd.f32 0.0, %v3194
  %v3196 = vpop.f32.mrb[0].mxu0
  %3197 = vmatprep.mubr.bf16.mxu0 0
  %3198 = vmatmul.mubr.bf16.gmra.mrb[0].mxu0 %v1835
  %v3199 = vpop.f32.mrb[0].mxu0
  %v3200 = vadd.f32 0.0, %v3199
  %v3201 = vpop.f32.mrb[0].mxu0
  %v3202 = vpop.f32.mrb[0].mxu0
  %v3203 = vadd.f32 0.0, %v3202
  %v3204 = vpop.f32.mrb[0].mxu0
  %3205 = vmatprep.mubr.bf16.mxu0 0
  %3206 = vmatmul.mubr.bf16.gmra.mrb[0].mxu0 %v1838
  %v3207 = vpop.f32.mrb[0].mxu0
  %v3208 = vadd.f32 0.0, %v3207
  %v3209 = vpop.f32.mrb[0].mxu0
  %v3210 = vpop.f32.mrb[0].mxu0
  %v3211 = vadd.f32 0.0, %v3210
  %v3212 = vpop.f32.mrb[0].mxu0
  %3213 = vmatprep.mubr.bf16.mxu0 0
  %3214 = vmatmul.mubr.bf16.gmra.mrb[0].mxu0 %v1841
  %v3215 = vpop.f32.mrb[0].mxu0
  %v3216 = vadd.f32 0.0, %v3215
  %v3217 = vpop.f32.mrb[0].mxu0
  %v3218 = vpop.f32.mrb[0].mxu0
  %v3219 = vadd.f32 0.0, %v3218
  %v3220 = vpop.f32.mrb[0].mxu0
  %3221 = vmatprep.mubr.bf16.mxu0 0
  %3222 = vmatmul.mubr.bf16.gmra.mrb[0].mxu0 %v1844
  %v3223 = vpop.f32.mrb[0].mxu0
  %v3224 = vadd.f32 0.0, %v3223
  %v3225 = vpop.f32.mrb[0].mxu0
  %v3226 = vpop.f32.mrb[0].mxu0
  %v3227 = vadd.f32 0.0, %v3226
  %v3228 = vpop.f32.mrb[0].mxu0
  %3229 = vmatprep.mubr.bf16.mxu0 0
  %3230 = vmatmul.mubr.bf16.gmra.mrb[0].mxu0 %v1847
  %v3231 = vpop.f32.mrb[0].mxu0
  %v3232 = vadd.f32 0.0, %v3231
  %v3233 = vpop.f32.mrb[0].mxu0
  %v3234 = vpop.f32.mrb[0].mxu0
  %v3235 = vadd.f32 0.0, %v3234
  %v3236 = vpop.f32.mrb[0].mxu0
  %3237 = vmatprep.mubr.bf16.mxu0 0
  %3238 = vmatmul.mubr.bf16.gmra.mrb[0].mxu0 %v1850
  %v3239 = vpop.f32.mrb[0].mxu0
  %v3240 = vadd.f32 0.0, %v3239
  %v3241 = vpop.f32.mrb[0].mxu0
  %v3242 = vpop.f32.mrb[0].mxu0
  %v3243 = vadd.f32 0.0, %v3242
  %v3244 = vpop.f32.mrb[0].mxu0
  %3245 = vmatprep.mubr.bf16.mxu0 0
  %3246 = vmatmul.mubr.bf16.gmra.mrb[0].mxu0 %v1853
  %v3247 = vpop.f32.mrb[0].mxu0
  %v3248 = vadd.f32 0.0, %v3247
  %v3249 = vpop.f32.mrb[0].mxu0
  %v3250 = vpop.f32.mrb[0].mxu0
  %v3251 = vadd.f32 0.0, %v3250
  %v3252 = vpop.f32.mrb[0].mxu0
  %3253 = vmatprep.mubr.bf16.mxu0 0
  %3254 = vmatmul.mubr.bf16.gmra.mrb[0].mxu0 %v1856
  %v3255 = vpop.f32.mrb[0].mxu0
  %v3256 = vadd.f32 0.0, %v3255
  %v3257 = vpop.f32.mrb[0].mxu0
  %v3258 = vpop.f32.mrb[0].mxu0
  %v3259 = vadd.f32 0.0, %v3258
  %v3260 = vpop.f32.mrb[0].mxu0
  %3261 = vmatprep.mubr.bf16.mxu0 0
  %3262 = vmatmul.mubr.bf16.gmra.mrb[0].mxu0 %v1859
  %v3263 = vpop.f32.mrb[0].mxu0
  %v3264 = vadd.f32 0.0, %v3263
  %v3265 = vpop.f32.mrb[0].mxu0
  %v3266 = vpop.f32.mrb[0].mxu0
  %v3267 = vadd.f32 0.0, %v3266
  %v3268 = vpop.f32.mrb[0].mxu0
  %3269 = vmatprep.mubr.bf16.mxu0 0
  %3270 = vmatmul.mubr.bf16.gmra.mrb[0].mxu0 %v1862
  %v3271 = vpop.f32.mrb[0].mxu0
  %v3272 = vadd.f32 0.0, %v3271
  %v3273 = vpop.f32.mrb[0].mxu0
  %v3274 = vpop.f32.mrb[0].mxu0
  %v3275 = vadd.f32 0.0, %v3274
  %v3276 = vpop.f32.mrb[0].mxu0
  %3277 = vmatprep.mubr.bf16.mxu0 0
  %3278 = vmatmul.mubr.bf16.gmra.mrb[0].mxu0 %v1865
  %v3279 = vpop.f32.mrb[0].mxu0
  %v3280 = vadd.f32 0.0, %v3279
  %v3281 = vpop.f32.mrb[0].mxu0
  %v3282 = vpop.f32.mrb[0].mxu0
  %v3283 = vadd.f32 0.0, %v3282
  %v3284 = vpop.f32.mrb[0].mxu0
  %3285 = vmatprep.mubr.bf16.mxu0 0
  %3286 = vmatmul.mubr.bf16.gmra.mrb[0].mxu0 %v1868
  %v3287 = vpop.f32.mrb[0].mxu0
  %v3288 = vadd.f32 0.0, %v3287
  %v3289 = vpop.f32.mrb[0].mxu0
  %v3290 = vpop.f32.mrb[0].mxu0
  %v3291 = vadd.f32 0.0, %v3290
  %v3292 = vpop.f32.mrb[0].mxu0
  %3293 = vmatprep.mubr.bf16.mxu0 0
  %3294 = vmatmul.mubr.bf16.gmra.mrb[0].mxu0 %v1871
  %v3295 = vpop.f32.mrb[0].mxu0
  %v3296 = vadd.f32 0.0, %v3295
  %v3297 = vpop.f32.mrb[0].mxu0
  %v3298 = vpop.f32.mrb[0].mxu0
  %v3299 = vadd.f32 0.0, %v3298
  %v3300 = vpop.f32.mrb[0].mxu0
  %3301 = vmatprep.mubr.bf16.mxu0 0
  %3302 = vmatmul.mubr.bf16.gmra.mrb[0].mxu0 %v1874
  %v3303 = vpop.f32.mrb[0].mxu0
  %v3304 = vadd.f32 0.0, %v3303
  %v3305 = vpop.f32.mrb[0].mxu0
  %v3306 = vpop.f32.mrb[0].mxu0
  %v3307 = vadd.f32 0.0, %v3306
  %v3308 = vpop.f32.mrb[0].mxu0
  %3309 = vmatprep.mubr.bf16.mxu0 0
  %3310 = vmatmul.mubr.bf16.gmra.mrb[0].mxu0 %v1877
  %v3311 = vpop.f32.mrb[0].mxu0
  %v3312 = vadd.f32 0.0, %v3311
  %v3313 = vpop.f32.mrb[0].mxu0
  %v3314 = vpop.f32.mrb[0].mxu0
  %v3315 = vadd.f32 0.0, %v3314
  %v3316 = vpop.f32.mrb[0].mxu0
  %3317 = vmatprep.mubr.bf16.mxu0 0
  %3318 = vmatmul.mubr.bf16.gmra.mrb[0].mxu0 %v1880
  %v3319 = vpop.f32.mrb[0].mxu0
  %v3320 = vadd.f32 0.0, %v3319
  %v3321 = vpop.f32.mrb[0].mxu0
  %v3322 = vpop.f32.mrb[0].mxu0
  %v3323 = vadd.f32 0.0, %v3322
  %v3324 = vpop.f32.mrb[0].mxu0
  %3325 = vmatprep.mubr.bf16.mxu0 0
  %3326 = vmatmul.mubr.bf16.gmra.mrb[0].mxu0 %v1883
  %v3327 = vpop.f32.mrb[0].mxu0
  %v3328 = vadd.f32 0.0, %v3327
  %v3329 = vpop.f32.mrb[0].mxu0
  %v3330 = vpop.f32.mrb[0].mxu0
  %v3331 = vadd.f32 0.0, %v3330
  %v3332 = vpop.f32.mrb[0].mxu0
  %3333 = vmatprep.mubr.bf16.mxu0 0
  %3334 = vmatmul.mubr.bf16.gmra.mrb[0].mxu0 %v1886
  %v3335 = vpop.f32.mrb[0].mxu0
  %v3336 = vadd.f32 0.0, %v3335
  %v3337 = vpop.f32.mrb[0].mxu0
  %v3338 = vpop.f32.mrb[0].mxu0
  %v3339 = vadd.f32 0.0, %v3338
  %v3340 = vpop.f32.mrb[0].mxu0
  %3341 = vmatprep.mubr.bf16.mxu0 0
  %3342 = vmatmul.mubr.bf16.gmra.mrb[0].mxu0 %v1889
  %v3343 = vpop.f32.mrb[0].mxu0
  %v3344 = vadd.f32 0.0, %v3343
  %v3345 = vpop.f32.mrb[0].mxu0
  %v3346 = vpop.f32.mrb[0].mxu0
  %v3347 = vadd.f32 0.0, %v3346
  %v3348 = vpop.f32.mrb[0].mxu0
  %3349 = vmatprep.mubr.bf16.mxu0 0
  %3350 = vmatmul.mubr.bf16.gmra.mrb[0].mxu0 %v1892
  %v3351 = vpop.f32.mrb[0].mxu0
  %v3352 = vadd.f32 0.0, %v3351
  %v3353 = vpop.f32.mrb[0].mxu0
  %v3354 = vpop.f32.mrb[0].mxu0
  %v3355 = vadd.f32 0.0, %v3354
  %v3356 = vpop.f32.mrb[0].mxu0
  %3357 = vmatprep.mubr.bf16.mxu0 0
  %3358 = vmatmul.mubr.bf16.gmra.mrb[0].mxu0 %v1895
  %v3359 = vpop.f32.mrb[0].mxu0
  %v3360 = vadd.f32 0.0, %v3359
  %v3361 = vpop.f32.mrb[0].mxu0
  %v3362 = vpop.f32.mrb[0].mxu0
  %v3363 = vadd.f32 0.0, %v3362
  %v3364 = vpop.f32.mrb[0].mxu0
  %3365 = vmatprep.mubr.bf16.mxu0 0
  %3366 = vmatmul.mubr.bf16.gmra.mrb[0].mxu0 %v1898
  %v3367 = vpop.f32.mrb[0].mxu0
  %v3368 = vadd.f32 0.0, %v3367
  %v3369 = vpop.f32.mrb[0].mxu0
  %v3370 = vpop.f32.mrb[0].mxu0
  %v3371 = vadd.f32 0.0, %v3370
  %v3372 = vpop.f32.mrb[0].mxu0
  %3373 = vmatprep.mubr.bf16.mxu0 0
  %3374 = vmatmul.mubr.bf16.gmra.mrb[0].mxu0 %v1901
  %v3375 = vpop.f32.mrb[0].mxu0
  %v3376 = vadd.f32 0.0, %v3375
  %v3377 = vpop.f32.mrb[0].mxu0
  %v3378 = vpop.f32.mrb[0].mxu0
  %v3379 = vadd.f32 0.0, %v3378
  %v3380 = vpop.f32.mrb[0].mxu0
  %3381 = vmatprep.mubr.bf16.mxu0 0
  %3382 = vmatmul.mubr.bf16.gmra.mrb[0].mxu0 %v1904
  %v3383 = vpop.f32.mrb[0].mxu0
  %v3384 = vadd.f32 0.0, %v3383
  %v3385 = vpop.f32.mrb[0].mxu0
  %v3386 = vpop.f32.mrb[0].mxu0
  %v3387 = vadd.f32 0.0, %v3386
  %v3388 = vpop.f32.mrb[0].mxu0
  %3389 = vmatprep.mubr.bf16.mxu0 0
  %3390 = vmatmul.mubr.bf16.gmra.mrb[0].mxu0 %v1907
  %v3391 = vpop.f32.mrb[0].mxu0
  %v3392 = vadd.f32 0.0, %v3391
  %v3393 = vpop.f32.mrb[0].mxu0
  %v3394 = vpop.f32.mrb[0].mxu0
  %v3395 = vadd.f32 0.0, %v3394
  %v3396 = vpop.f32.mrb[0].mxu0
  %3397 = vmatprep.mubr.bf16.mxu0 0
  %3398 = vmatmul.mubr.bf16.gmra.mrb[0].mxu0 %v1910
  %v3399 = vpop.f32.mrb[0].mxu0
  %v3400 = vadd.f32 0.0, %v3399
  %v3401 = vpop.f32.mrb[0].mxu0
  %v3402 = vpop.f32.mrb[0].mxu0
  %v3403 = vadd.f32 0.0, %v3402
  %v3404 = vpop.f32.mrb[0].mxu0
  %3405 = vmatprep.mubr.bf16.mxu0 0
  %3406 = vmatmul.mubr.bf16.gmra.mrb[0].mxu0 %v1913
  %v3407 = vpop.f32.mrb[0].mxu0
  %v3408 = vadd.f32 0.0, %v3407
  %v3409 = vpop.f32.mrb[0].mxu0
  %v3410 = vpop.f32.mrb[0].mxu0
  %v3411 = vadd.f32 0.0, %v3410
  %v3412 = vpop.f32.mrb[0].mxu0
  %3413 = vmatprep.mubr.bf16.mxu0 0
  %3414 = vmatmul.mubr.bf16.gmra.mrb[0].mxu0 %v1916
  %v3415 = vpop.f32.mrb[0].mxu0
  %v3416 = vadd.f32 0.0, %v3415
  %v3417 = vpop.f32.mrb[0].mxu0
  %v3418 = vpop.f32.mrb[0].mxu0
  %v3419 = vadd.f32 0.0, %v3418
  %v3420 = vpop.f32.mrb[0].mxu0
  %3421 = vmatprep.mubr.bf16.mxu0 0
  %3422 = vmatmul.mubr.bf16.gmra.mrb[0].mxu0 %v1919
  %v3423 = vpop.f32.mrb[0].mxu0
  %v3424 = vadd.f32 0.0, %v3423
  %v3425 = vpop.f32.mrb[0].mxu0
  %v3426 = vpop.f32.mrb[0].mxu0
  %v3427 = vadd.f32 0.0, %v3426
  %v3428 = vpop.f32.mrb[0].mxu0
  %3429 = vmatprep.mubr.bf16.mxu0 0
  %3430 = vmatmul.mubr.bf16.gmra.mrb[0].mxu0 %v1922
  %v3431 = vpop.f32.mrb[0].mxu0
  %v3432 = vadd.f32 0.0, %v3431
  %v3433 = vpop.f32.mrb[0].mxu0
  %v3434 = vpop.f32.mrb[0].mxu0
  %v3435 = vadd.f32 0.0, %v3434
  %v3436 = vpop.f32.mrb[0].mxu0
  %3437 = vmatprep.mubr.bf16.mxu0 0
  %3438 = vmatmul.mubr.bf16.gmra.mrb[0].mxu0 %v1925
  %v3439 = vpop.f32.mrb[0].mxu0
  %v3440 = vadd.f32 0.0, %v3439
  %v3441 = vpop.f32.mrb[0].mxu0
  %v3442 = vpop.f32.mrb[0].mxu0
  %v3443 = vadd.f32 0.0, %v3442
  %v3444 = vpop.f32.mrb[0].mxu0
  %3445 = vmatprep.mubr.bf16.mxu0 0
  %3446 = vmatmul.mubr.bf16.gmra.mrb[0].mxu0 %v1928
  %v3447 = vpop.f32.mrb[0].mxu0
  %v3448 = vadd.f32 0.0, %v3447
  %v3449 = vpop.f32.mrb[0].mxu0
  %v3450 = vpop.f32.mrb[0].mxu0
  %v3451 = vadd.f32 0.0, %v3450
  %v3452 = vpop.f32.mrb[0].mxu0
  %3453 = vmatprep.mubr.bf16.mxu0 0
  %3454 = vmatmul.mubr.bf16.gmra.mrb[0].mxu0 %v1931
  %v3455 = vpop.f32.mrb[0].mxu0
  %v3456 = vadd.f32 0.0, %v3455
  %v3457 = vpop.f32.mrb[0].mxu0
  %v3458 = vpop.f32.mrb[0].mxu0
  %v3459 = vadd.f32 0.0, %v3458
  %v3460 = vpop.f32.mrb[0].mxu0
  %3461 = vmatprep.mubr.bf16.mxu0 0
  %3462 = vmatmul.mubr.bf16.gmra.mrb[0].mxu0 %v1934
  %v3463 = vpop.f32.mrb[0].mxu0
  %v3464 = vadd.f32 0.0, %v3463
  %v3465 = vpop.f32.mrb[0].mxu0
  %v3466 = vpop.f32.mrb[0].mxu0
  %v3467 = vadd.f32 0.0, %v3466
  %v3468 = vpop.f32.mrb[0].mxu0
  %3469 = vmatprep.mubr.bf16.mxu0 0
  %3470 = vmatmul.mubr.bf16.gmra.mrb[0].mxu0 %v1937
  %v3471 = vpop.f32.mrb[0].mxu0
  %v3472 = vadd.f32 0.0, %v3471
  %v3473 = vpop.f32.mrb[0].mxu0
  %v3474 = vpop.f32.mrb[0].mxu0
  %v3475 = vadd.f32 0.0, %v3474
  %v3476 = vpop.f32.mrb[0].mxu0
  %3477 = vmatprep.mubr.bf16.mxu0 0
  %3478 = vmatmul.mubr.bf16.gmra.mrb[0].mxu0 %v1940
  %v3479 = vpop.f32.mrb[0].mxu0
  %v3480 = vadd.f32 0.0, %v3479
  %v3481 = vpop.f32.mrb[0].mxu0
  %v3482 = vpop.f32.mrb[0].mxu0
  %v3483 = vadd.f32 0.0, %v3482
  %v3484 = vpop.f32.mrb[0].mxu0
  %3485 = vmatprep.mubr.bf16.mxu0 0
  %3486 = vmatmul.mubr.bf16.gmra.mrb[0].mxu0 %v1943
  %v3487 = vpop.f32.mrb[0].mxu0
  %v3488 = vadd.f32 0.0, %v3487
  %v3489 = vpop.f32.mrb[0].mxu0
  %v3490 = vpop.f32.mrb[0].mxu0
  %v3491 = vadd.f32 0.0, %v3490
  %v3492 = vpop.f32.mrb[0].mxu0
  %3493 = vmatprep.mubr.bf16.mxu0 0
  %3494 = vmatmul.mubr.bf16.gmra.mrb[0].mxu0 %v1946
  %v3495 = vpop.f32.mrb[0].mxu0
  %v3496 = vadd.f32 0.0, %v3495
  %v3497 = vpop.f32.mrb[0].mxu0
  %v3498 = vpop.f32.mrb[0].mxu0
  %v3499 = vadd.f32 0.0, %v3498
  %v3500 = vpop.f32.mrb[0].mxu0
  %3501 = vmatprep.mubr.bf16.mxu0 0
  %3502 = vmatmul.mubr.bf16.gmra.mrb[0].mxu0 %v1949
  %v3503 = vpop.f32.mrb[0].mxu0
  %v3504 = vadd.f32 0.0, %v3503
  %v3505 = vpop.f32.mrb[0].mxu0
  %v3506 = vpop.f32.mrb[0].mxu0
  %v3507 = vadd.f32 0.0, %v3506
  %v3508 = vpop.f32.mrb[0].mxu0
  %3509 = vmatprep.mubr.bf16.mxu0 0
  %3510 = vmatmul.mubr.bf16.gmra.mrb[0].mxu0 %v1952
  %v3511 = vpop.f32.mrb[0].mxu0
  %v3512 = vadd.f32 0.0, %v3511
  %v3513 = vpop.f32.mrb[0].mxu0
  %v3514 = vpop.f32.mrb[0].mxu0
  %v3515 = vadd.f32 0.0, %v3514
  %v3516 = vpop.f32.mrb[0].mxu0
  %3517 = vmatprep.mubr.bf16.mxu0 0
  %3518 = vmatmul.mubr.bf16.gmra.mrb[0].mxu0 %v1955
  %v3519 = vpop.f32.mrb[0].mxu0
  %v3520 = vadd.f32 0.0, %v3519
  %v3521 = vpop.f32.mrb[0].mxu0
  %v3522 = vpop.f32.mrb[0].mxu0
  %v3523 = vadd.f32 0.0, %v3522
  %v3524 = vpop.f32.mrb[0].mxu0
  %3525 = vdwg.mxu0
  %vm3526 = vcmp.ge.f32.partialorder %v1992, 0.0
  %vm3527 = vcmp.ge.f32.partialorder %v1995, 0.0
  %vm3528 = vcmp.ge.f32.partialorder %v2000, 0.0
  %vm3529 = vcmp.ge.f32.partialorder %v2003, 0.0
  %vm3530 = vcmp.ge.f32.partialorder %v2008, 0.0
  %vm3531 = vcmp.ge.f32.partialorder %v2011, 0.0
  %vm3532 = vcmp.ge.f32.partialorder %v2016, 0.0
  %vm3533 = vcmp.ge.f32.partialorder %v2019, 0.0
  %vm3534 = vcmp.ge.f32.partialorder %v2024, 0.0
  %vm3535 = vcmp.ge.f32.partialorder %v2027, 0.0
  %vm3536 = vcmp.ge.f32.partialorder %v2032, 0.0
  %vm3537 = vcmp.ge.f32.partialorder %v2035, 0.0
  %vm3538 = vcmp.ge.f32.partialorder %v2040, 0.0
  %vm3539 = vcmp.ge.f32.partialorder %v2043, 0.0
  %vm3540 = vcmp.ge.f32.partialorder %v2048, 0.0
  %vm3541 = vcmp.ge.f32.partialorder %v2051, 0.0
  %vm3542 = vcmp.ge.f32.partialorder %v2056, 0.0
  %vm3543 = vcmp.ge.f32.partialorder %v2059, 0.0
  %vm3544 = vcmp.ge.f32.partialorder %v2064, 0.0
  %vm3545 = vcmp.ge.f32.partialorder %v2067, 0.0
  %vm3546 = vcmp.ge.f32.partialorder %v2072, 0.0
  %vm3547 = vcmp.ge.f32.partialorder %v2075, 0.0
  %vm3548 = vcmp.ge.f32.partialorder %v2080, 0.0
  %vm3549 = vcmp.ge.f32.partialorder %v2083, 0.0
  %vm3550 = vcmp.ge.f32.partialorder %v2088, 0.0
  %vm3551 = vcmp.ge.f32.partialorder %v2091, 0.0
  %vm3552 = vcmp.ge.f32.partialorder %v2096, 0.0
  %vm3553 = vcmp.ge.f32.partialorder %v2099, 0.0
  %vm3554 = vcmp.ge.f32.partialorder %v2104, 0.0
  %vm3555 = vcmp.ge.f32.partialorder %v2107, 0.0
  %vm3556 = vcmp.ge.f32.partialorder %v2112, 0.0
  %vm3557 = vcmp.ge.f32.partialorder %v2115, 0.0
  %vm3558 = vcmp.ge.f32.partialorder %v2120, 0.0
  %vm3559 = vcmp.ge.f32.partialorder %v2123, 0.0
  %vm3560 = vcmp.ge.f32.partialorder %v2128, 0.0
  %vm3561 = vcmp.ge.f32.partialorder %v2131, 0.0
  %vm3562 = vcmp.ge.f32.partialorder %v2136, 0.0
  %vm3563 = vcmp.ge.f32.partialorder %v2139, 0.0
  %vm3564 = vcmp.ge.f32.partialorder %v2144, 0.0
  %vm3565 = vcmp.ge.f32.partialorder %v2147, 0.0
  %vm3566 = vcmp.ge.f32.partialorder %v2152, 0.0
  %vm3567 = vcmp.ge.f32.partialorder %v2155, 0.0
  %vm3568 = vcmp.ge.f32.partialorder %v2160, 0.0
  %vm3569 = vcmp.ge.f32.partialorder %v2163, 0.0
  %vm3570 = vcmp.ge.f32.partialorder %v2168, 0.0
  %vm3571 = vcmp.ge.f32.partialorder %v2171, 0.0
  %vm3572 = vcmp.ge.f32.partialorder %v2176, 0.0
  %vm3573 = vcmp.ge.f32.partialorder %v2179, 0.0
  %vm3574 = vcmp.ge.f32.partialorder %v2184, 0.0
  %vm3575 = vcmp.ge.f32.partialorder %v2187, 0.0
  %vm3576 = vcmp.ge.f32.partialorder %v2192, 0.0
  %vm3577 = vcmp.ge.f32.partialorder %v2195, 0.0
  %vm3578 = vcmp.ge.f32.partialorder %v2200, 0.0
  %vm3579 = vcmp.ge.f32.partialorder %v2203, 0.0
  %vm3580 = vcmp.ge.f32.partialorder %v2208, 0.0
  %vm3581 = vcmp.ge.f32.partialorder %v2211, 0.0
  %vm3582 = vcmp.ge.f32.partialorder %v2216, 0.0
  %vm3583 = vcmp.ge.f32.partialorder %v2219, 0.0
  %vm3584 = vcmp.ge.f32.partialorder %v2224, 0.0
  %vm3585 = vcmp.ge.f32.partialorder %v2227, 0.0
  %vm3586 = vcmp.ge.f32.partialorder %v2232, 0.0
  %vm3587 = vcmp.ge.f32.partialorder %v2235, 0.0
  %vm3588 = vcmp.ge.f32.partialorder %v2240, 0.0
  %vm3589 = vcmp.ge.f32.partialorder %v2243, 0.0
  %vm3590 = vcmp.ge.f32.partialorder %v2248, 0.0
  %vm3591 = vcmp.ge.f32.partialorder %v2251, 0.0
  %vm3592 = vcmp.ge.f32.partialorder %v2256, 0.0
  %vm3593 = vcmp.ge.f32.partialorder %v2259, 0.0
  %vm3594 = vcmp.ge.f32.partialorder %v2264, 0.0
  %vm3595 = vcmp.ge.f32.partialorder %v2267, 0.0
  %vm3596 = vcmp.ge.f32.partialorder %v2272, 0.0
  %vm3597 = vcmp.ge.f32.partialorder %v2275, 0.0
  %vm3598 = vcmp.ge.f32.partialorder %v2280, 0.0
  %vm3599 = vcmp.ge.f32.partialorder %v2283, 0.0
  %vm3600 = vcmp.ge.f32.partialorder %v2288, 0.0
  %vm3601 = vcmp.ge.f32.partialorder %v2291, 0.0
  %vm3602 = vcmp.ge.f32.partialorder %v2296, 0.0
  %vm3603 = vcmp.ge.f32.partialorder %v2299, 0.0
  %vm3604 = vcmp.ge.f32.partialorder %v2304, 0.0
  %vm3605 = vcmp.ge.f32.partialorder %v2307, 0.0
  %vm3606 = vcmp.ge.f32.partialorder %v2312, 0.0
  %vm3607 = vcmp.ge.f32.partialorder %v2315, 0.0
  %vm3608 = vcmp.ge.f32.partialorder %v2320, 0.0
  %vm3609 = vcmp.ge.f32.partialorder %v2323, 0.0
  %vm3610 = vcmp.ge.f32.partialorder %v2328, 0.0
  %vm3611 = vcmp.ge.f32.partialorder %v2331, 0.0
  %vm3612 = vcmp.ge.f32.partialorder %v2336, 0.0
  %vm3613 = vcmp.ge.f32.partialorder %v2339, 0.0
  %vm3614 = vcmp.ge.f32.partialorder %v2344, 0.0
  %vm3615 = vcmp.ge.f32.partialorder %v2347, 0.0
  %vm3616 = vcmp.ge.f32.partialorder %v2352, 0.0
  %vm3617 = vcmp.ge.f32.partialorder %v2355, 0.0
  %vm3618 = vcmp.ge.f32.partialorder %v2360, 0.0
  %vm3619 = vcmp.ge.f32.partialorder %v2363, 0.0
  %vm3620 = vcmp.ge.f32.partialorder %v2368, 0.0
  %vm3621 = vcmp.ge.f32.partialorder %v2371, 0.0
  %vm3622 = vcmp.ge.f32.partialorder %v2376, 0.0
  %vm3623 = vcmp.ge.f32.partialorder %v2379, 0.0
  %vm3624 = vcmp.ge.f32.partialorder %v2384, 0.0
  %vm3625 = vcmp.ge.f32.partialorder %v2387, 0.0
  %vm3626 = vcmp.ge.f32.partialorder %v2392, 0.0
  %vm3627 = vcmp.ge.f32.partialorder %v2395, 0.0
  %vm3628 = vcmp.ge.f32.partialorder %v2400, 0.0
  %vm3629 = vcmp.ge.f32.partialorder %v2403, 0.0
  %vm3630 = vcmp.ge.f32.partialorder %v2408, 0.0
  %vm3631 = vcmp.ge.f32.partialorder %v2411, 0.0
  %vm3632 = vcmp.ge.f32.partialorder %v2416, 0.0
  %vm3633 = vcmp.ge.f32.partialorder %v2419, 0.0
  %vm3634 = vcmp.ge.f32.partialorder %v2424, 0.0
  %vm3635 = vcmp.ge.f32.partialorder %v2427, 0.0
  %vm3636 = vcmp.ge.f32.partialorder %v2432, 0.0
  %vm3637 = vcmp.ge.f32.partialorder %v2435, 0.0
  %vm3638 = vcmp.ge.f32.partialorder %v2440, 0.0
  %vm3639 = vcmp.ge.f32.partialorder %v2443, 0.0
  %vm3640 = vcmp.ge.f32.partialorder %v2448, 0.0
  %vm3641 = vcmp.ge.f32.partialorder %v2451, 0.0
  %vm3642 = vcmp.ge.f32.partialorder %v2456, 0.0
  %vm3643 = vcmp.ge.f32.partialorder %v2459, 0.0
  %vm3644 = vcmp.ge.f32.partialorder %v2464, 0.0
  %vm3645 = vcmp.ge.f32.partialorder %v2467, 0.0
  %vm3646 = vcmp.ge.f32.partialorder %v2472, 0.0
  %vm3647 = vcmp.ge.f32.partialorder %v2475, 0.0
  %vm3648 = vcmp.ge.f32.partialorder %v2480, 0.0
  %vm3649 = vcmp.ge.f32.partialorder %v2483, 0.0
  %vm3650 = vcmp.ge.f32.partialorder %v2488, 0.0
  %vm3651 = vcmp.ge.f32.partialorder %v2491, 0.0
  %vm3652 = vcmp.ge.f32.partialorder %v2496, 0.0
  %vm3653 = vcmp.ge.f32.partialorder %v2499, 0.0
  %vm3654 = vcmp.ge.f32.partialorder %v2504, 0.0
  %vm3655 = vcmp.ge.f32.partialorder %v2507, 0.0
  %vm3656 = vcmp.ge.f32.partialorder %v2512, 0.0
  %vm3657 = vcmp.ge.f32.partialorder %v2515, 0.0
  %vm3658 = vcmp.ge.f32.partialorder %v2520, 0.0
  %vm3659 = vcmp.ge.f32.partialorder %v2523, 0.0
  %vm3660 = vcmp.ge.f32.partialorder %v2528, 0.0
  %vm3661 = vcmp.ge.f32.partialorder %v2531, 0.0
  %vm3662 = vcmp.ge.f32.partialorder %v2536, 0.0
  %vm3663 = vcmp.ge.f32.partialorder %v2539, 0.0
  %vm3664 = vcmp.ge.f32.partialorder %v2544, 0.0
  %vm3665 = vcmp.ge.f32.partialorder %v2547, 0.0
  %vm3666 = vcmp.ge.f32.partialorder %v2552, 0.0
  %vm3667 = vcmp.ge.f32.partialorder %v2555, 0.0
  %vm3668 = vcmp.ge.f32.partialorder %v2560, 0.0
  %vm3669 = vcmp.ge.f32.partialorder %v2563, 0.0
  %vm3670 = vcmp.ge.f32.partialorder %v2568, 0.0
  %vm3671 = vcmp.ge.f32.partialorder %v2571, 0.0
  %vm3672 = vcmp.ge.f32.partialorder %v2576, 0.0
  %vm3673 = vcmp.ge.f32.partialorder %v2579, 0.0
  %vm3674 = vcmp.ge.f32.partialorder %v2584, 0.0
  %vm3675 = vcmp.ge.f32.partialorder %v2587, 0.0
  %vm3676 = vcmp.ge.f32.partialorder %v2592, 0.0
  %vm3677 = vcmp.ge.f32.partialorder %v2595, 0.0
  %vm3678 = vcmp.ge.f32.partialorder %v2600, 0.0
  %vm3679 = vcmp.ge.f32.partialorder %v2603, 0.0
  %vm3680 = vcmp.ge.f32.partialorder %v2608, 0.0
  %vm3681 = vcmp.ge.f32.partialorder %v2611, 0.0
  %vm3682 = vcmp.ge.f32.partialorder %v2616, 0.0
  %vm3683 = vcmp.ge.f32.partialorder %v2619, 0.0
  %vm3684 = vcmp.ge.f32.partialorder %v2624, 0.0
  %vm3685 = vcmp.ge.f32.partialorder %v2627, 0.0
  %vm3686 = vcmp.ge.f32.partialorder %v2632, 0.0
  %vm3687 = vcmp.ge.f32.partialorder %v2635, 0.0
  %vm3688 = vcmp.ge.f32.partialorder %v2640, 0.0
  %vm3689 = vcmp.ge.f32.partialorder %v2643, 0.0
  %vm3690 = vcmp.ge.f32.partialorder %v2648, 0.0
  %vm3691 = vcmp.ge.f32.partialorder %v2651, 0.0
  %vm3692 = vcmp.ge.f32.partialorder %v2656, 0.0
  %vm3693 = vcmp.ge.f32.partialorder %v2659, 0.0
  %vm3694 = vcmp.ge.f32.partialorder %v2664, 0.0
  %vm3695 = vcmp.ge.f32.partialorder %v2667, 0.0
  %vm3696 = vcmp.ge.f32.partialorder %v2672, 0.0
  %vm3697 = vcmp.ge.f32.partialorder %v2675, 0.0
  %vm3698 = vcmp.ge.f32.partialorder %v2680, 0.0
  %vm3699 = vcmp.ge.f32.partialorder %v2683, 0.0
  %vm3700 = vcmp.ge.f32.partialorder %v2688, 0.0
  %vm3701 = vcmp.ge.f32.partialorder %v2691, 0.0
  %vm3702 = vcmp.ge.f32.partialorder %v2696, 0.0
  %vm3703 = vcmp.ge.f32.partialorder %v2699, 0.0
  %vm3704 = vcmp.ge.f32.partialorder %v2704, 0.0
  %vm3705 = vcmp.ge.f32.partialorder %v2707, 0.0
  %vm3706 = vcmp.ge.f32.partialorder %v2712, 0.0
  %vm3707 = vcmp.ge.f32.partialorder %v2715, 0.0
  %vm3708 = vcmp.ge.f32.partialorder %v2720, 0.0
  %vm3709 = vcmp.ge.f32.partialorder %v2723, 0.0
  %vm3710 = vcmp.ge.f32.partialorder %v2728, 0.0
  %vm3711 = vcmp.ge.f32.partialorder %v2731, 0.0
  %vm3712 = vcmp.ge.f32.partialorder %v2736, 0.0
  %vm3713 = vcmp.ge.f32.partialorder %v2739, 0.0
  %vm3714 = vcmp.ge.f32.partialorder %v2744, 0.0
  %vm3715 = vcmp.ge.f32.partialorder %v2747, 0.0
  %vm3716 = vcmp.ge.f32.partialorder %v2752, 0.0
  %vm3717 = vcmp.ge.f32.partialorder %v2755, 0.0
  %vm3718 = vcmp.ge.f32.partialorder %v2760, 0.0
  %vm3719 = vcmp.ge.f32.partialorder %v2763, 0.0
  %vm3720 = vcmp.ge.f32.partialorder %v2768, 0.0
  %vm3721 = vcmp.ge.f32.partialorder %v2771, 0.0
  %vm3722 = vcmp.ge.f32.partialorder %v2776, 0.0
  %vm3723 = vcmp.ge.f32.partialorder %v2779, 0.0
  %vm3724 = vcmp.ge.f32.partialorder %v2784, 0.0
  %vm3725 = vcmp.ge.f32.partialorder %v2787, 0.0
  %vm3726 = vcmp.ge.f32.partialorder %v2792, 0.0
  %vm3727 = vcmp.ge.f32.partialorder %v2795, 0.0
  %vm3728 = vcmp.ge.f32.partialorder %v2800, 0.0
  %vm3729 = vcmp.ge.f32.partialorder %v2803, 0.0
  %vm3730 = vcmp.ge.f32.partialorder %v2808, 0.0
  %vm3731 = vcmp.ge.f32.partialorder %v2811, 0.0
  %vm3732 = vcmp.ge.f32.partialorder %v2816, 0.0
  %vm3733 = vcmp.ge.f32.partialorder %v2819, 0.0
  %vm3734 = vcmp.ge.f32.partialorder %v2824, 0.0
  %vm3735 = vcmp.ge.f32.partialorder %v2827, 0.0
  %vm3736 = vcmp.ge.f32.partialorder %v2832, 0.0
  %vm3737 = vcmp.ge.f32.partialorder %v2835, 0.0
  %vm3738 = vcmp.ge.f32.partialorder %v2840, 0.0
  %vm3739 = vcmp.ge.f32.partialorder %v2843, 0.0
  %vm3740 = vcmp.ge.f32.partialorder %v2848, 0.0
  %vm3741 = vcmp.ge.f32.partialorder %v2851, 0.0
  %vm3742 = vcmp.ge.f32.partialorder %v2856, 0.0
  %vm3743 = vcmp.ge.f32.partialorder %v2859, 0.0
  %vm3744 = vcmp.ge.f32.partialorder %v2864, 0.0
  %vm3745 = vcmp.ge.f32.partialorder %v2867, 0.0
  %vm3746 = vcmp.ge.f32.partialorder %v2872, 0.0
  %vm3747 = vcmp.ge.f32.partialorder %v2875, 0.0
  %vm3748 = vcmp.ge.f32.partialorder %v2880, 0.0
  %vm3749 = vcmp.ge.f32.partialorder %v2883, 0.0
  %vm3750 = vcmp.ge.f32.partialorder %v2888, 0.0
  %vm3751 = vcmp.ge.f32.partialorder %v2891, 0.0
  %vm3752 = vcmp.ge.f32.partialorder %v2896, 0.0
  %vm3753 = vcmp.ge.f32.partialorder %v2899, 0.0
  %vm3754 = vcmp.ge.f32.partialorder %v2904, 0.0
  %vm3755 = vcmp.ge.f32.partialorder %v2907, 0.0
  %vm3756 = vcmp.ge.f32.partialorder %v2912, 0.0
  %vm3757 = vcmp.ge.f32.partialorder %v2915, 0.0
  %vm3758 = vcmp.ge.f32.partialorder %v2920, 0.0
  %vm3759 = vcmp.ge.f32.partialorder %v2923, 0.0
  %vm3760 = vcmp.ge.f32.partialorder %v2928, 0.0
  %vm3761 = vcmp.ge.f32.partialorder %v2931, 0.0
  %vm3762 = vcmp.ge.f32.partialorder %v2936, 0.0
  %vm3763 = vcmp.ge.f32.partialorder %v2939, 0.0
  %vm3764 = vcmp.ge.f32.partialorder %v2944, 0.0
  %vm3765 = vcmp.ge.f32.partialorder %v2947, 0.0
  %vm3766 = vcmp.ge.f32.partialorder %v2952, 0.0
  %vm3767 = vcmp.ge.f32.partialorder %v2955, 0.0
  %vm3768 = vcmp.ge.f32.partialorder %v2960, 0.0
  %vm3769 = vcmp.ge.f32.partialorder %v2963, 0.0
  %vm3770 = vcmp.ge.f32.partialorder %v2968, 0.0
  %vm3771 = vcmp.ge.f32.partialorder %v2971, 0.0
  %vm3772 = vcmp.ge.f32.partialorder %v2976, 0.0
  %vm3773 = vcmp.ge.f32.partialorder %v2979, 0.0
  %vm3774 = vcmp.ge.f32.partialorder %v2984, 0.0
  %vm3775 = vcmp.ge.f32.partialorder %v2987, 0.0
  %vm3776 = vcmp.ge.f32.partialorder %v2992, 0.0
  %vm3777 = vcmp.ge.f32.partialorder %v2995, 0.0
  %vm3778 = vcmp.ge.f32.partialorder %v3000, 0.0
  %vm3779 = vcmp.ge.f32.partialorder %v3003, 0.0
  %vm3780 = vcmp.ge.f32.partialorder %v3008, 0.0
  %vm3781 = vcmp.ge.f32.partialorder %v3011, 0.0
  %vm3782 = vcmp.ge.f32.partialorder %v3016, 0.0
  %vm3783 = vcmp.ge.f32.partialorder %v3019, 0.0
  %vm3784 = vcmp.ge.f32.partialorder %v3024, 0.0
  %vm3785 = vcmp.ge.f32.partialorder %v3027, 0.0
  %vm3786 = vcmp.ge.f32.partialorder %v3032, 0.0
  %vm3787 = vcmp.ge.f32.partialorder %v3035, 0.0
  %vm3788 = vcmp.ge.f32.partialorder %v3040, 0.0
  %vm3789 = vcmp.ge.f32.partialorder %v3043, 0.0
  %vm3790 = vcmp.ge.f32.partialorder %v3048, 0.0
  %vm3791 = vcmp.ge.f32.partialorder %v3051, 0.0
  %vm3792 = vcmp.ge.f32.partialorder %v3056, 0.0
  %vm3793 = vcmp.ge.f32.partialorder %v3059, 0.0
  %vm3794 = vcmp.ge.f32.partialorder %v3064, 0.0
  %vm3795 = vcmp.ge.f32.partialorder %v3067, 0.0
  %vm3796 = vcmp.ge.f32.partialorder %v3072, 0.0
  %vm3797 = vcmp.ge.f32.partialorder %v3075, 0.0
  %vm3798 = vcmp.ge.f32.partialorder %v3080, 0.0
  %vm3799 = vcmp.ge.f32.partialorder %v3083, 0.0
  %vm3800 = vcmp.ge.f32.partialorder %v3088, 0.0
  %vm3801 = vcmp.ge.f32.partialorder %v3091, 0.0
  %vm3802 = vcmp.ge.f32.partialorder %v3096, 0.0
  %vm3803 = vcmp.ge.f32.partialorder %v3099, 0.0
  %vm3804 = vcmp.ge.f32.partialorder %v3104, 0.0
  %vm3805 = vcmp.ge.f32.partialorder %v3107, 0.0
  %vm3806 = vcmp.ge.f32.partialorder %v3112, 0.0
  %vm3807 = vcmp.ge.f32.partialorder %v3115, 0.0
  %vm3808 = vcmp.ge.f32.partialorder %v3120, 0.0
  %vm3809 = vcmp.ge.f32.partialorder %v3123, 0.0
  %vm3810 = vcmp.ge.f32.partialorder %v3128, 0.0
  %vm3811 = vcmp.ge.f32.partialorder %v3131, 0.0
  %vm3812 = vcmp.ge.f32.partialorder %v3136, 0.0
  %vm3813 = vcmp.ge.f32.partialorder %v3139, 0.0
  %vm3814 = vcmp.ge.f32.partialorder %v3144, 0.0
  %vm3815 = vcmp.ge.f32.partialorder %v3147, 0.0
  %vm3816 = vcmp.ge.f32.partialorder %v3152, 0.0
  %vm3817 = vcmp.ge.f32.partialorder %v3155, 0.0
  %vm3818 = vcmp.ge.f32.partialorder %v3160, 0.0
  %vm3819 = vcmp.ge.f32.partialorder %v3163, 0.0
  %vm3820 = vcmp.ge.f32.partialorder %v3168, 0.0
  %vm3821 = vcmp.ge.f32.partialorder %v3171, 0.0
  %vm3822 = vcmp.ge.f32.partialorder %v3176, 0.0
  %vm3823 = vcmp.ge.f32.partialorder %v3179, 0.0
  %vm3824 = vcmp.ge.f32.partialorder %v3184, 0.0
  %vm3825 = vcmp.ge.f32.partialorder %v3187, 0.0
  %vm3826 = vcmp.ge.f32.partialorder %v3192, 0.0
  %vm3827 = vcmp.ge.f32.partialorder %v3195, 0.0
  %vm3828 = vcmp.ge.f32.partialorder %v3200, 0.0
  %vm3829 = vcmp.ge.f32.partialorder %v3203, 0.0
  %vm3830 = vcmp.ge.f32.partialorder %v3208, 0.0
  %vm3831 = vcmp.ge.f32.partialorder %v3211, 0.0
  %vm3832 = vcmp.ge.f32.partialorder %v3216, 0.0
  %vm3833 = vcmp.ge.f32.partialorder %v3219, 0.0
  %vm3834 = vcmp.ge.f32.partialorder %v3224, 0.0
  %vm3835 = vcmp.ge.f32.partialorder %v3227, 0.0
  %vm3836 = vcmp.ge.f32.partialorder %v3232, 0.0
  %vm3837 = vcmp.ge.f32.partialorder %v3235, 0.0
  %vm3838 = vcmp.ge.f32.partialorder %v3240, 0.0
  %vm3839 = vcmp.ge.f32.partialorder %v3243, 0.0
  %vm3840 = vcmp.ge.f32.partialorder %v3248, 0.0
  %vm3841 = vcmp.ge.f32.partialorder %v3251, 0.0
  %vm3842 = vcmp.ge.f32.partialorder %v3256, 0.0
  %vm3843 = vcmp.ge.f32.partialorder %v3259, 0.0
  %vm3844 = vcmp.ge.f32.partialorder %v3264, 0.0
  %vm3845 = vcmp.ge.f32.partialorder %v3267, 0.0
  %vm3846 = vcmp.ge.f32.partialorder %v3272, 0.0
  %vm3847 = vcmp.ge.f32.partialorder %v3275, 0.0
  %vm3848 = vcmp.ge.f32.partialorder %v3280, 0.0
  %vm3849 = vcmp.ge.f32.partialorder %v3283, 0.0
  %vm3850 = vcmp.ge.f32.partialorder %v3288, 0.0
  %vm3851 = vcmp.ge.f32.partialorder %v3291, 0.0
  %vm3852 = vcmp.ge.f32.partialorder %v3296, 0.0
  %vm3853 = vcmp.ge.f32.partialorder %v3299, 0.0
  %vm3854 = vcmp.ge.f32.partialorder %v3304, 0.0
  %vm3855 = vcmp.ge.f32.partialorder %v3307, 0.0
  %vm3856 = vcmp.ge.f32.partialorder %v3312, 0.0
  %vm3857 = vcmp.ge.f32.partialorder %v3315, 0.0
  %vm3858 = vcmp.ge.f32.partialorder %v3320, 0.0
  %vm3859 = vcmp.ge.f32.partialorder %v3323, 0.0
  %vm3860 = vcmp.ge.f32.partialorder %v3328, 0.0
  %vm3861 = vcmp.ge.f32.partialorder %v3331, 0.0
  %vm3862 = vcmp.ge.f32.partialorder %v3336, 0.0
  %vm3863 = vcmp.ge.f32.partialorder %v3339, 0.0
  %vm3864 = vcmp.ge.f32.partialorder %v3344, 0.0
  %vm3865 = vcmp.ge.f32.partialorder %v3347, 0.0
  %vm3866 = vcmp.ge.f32.partialorder %v3352, 0.0
  %vm3867 = vcmp.ge.f32.partialorder %v3355, 0.0
  %vm3868 = vcmp.ge.f32.partialorder %v3360, 0.0
  %vm3869 = vcmp.ge.f32.partialorder %v3363, 0.0
  %vm3870 = vcmp.ge.f32.partialorder %v3368, 0.0
  %vm3871 = vcmp.ge.f32.partialorder %v3371, 0.0
  %vm3872 = vcmp.ge.f32.partialorder %v3376, 0.0
  %vm3873 = vcmp.ge.f32.partialorder %v3379, 0.0
  %vm3874 = vcmp.ge.f32.partialorder %v3384, 0.0
  %vm3875 = vcmp.ge.f32.partialorder %v3387, 0.0
  %vm3876 = vcmp.ge.f32.partialorder %v3392, 0.0
  %vm3877 = vcmp.ge.f32.partialorder %v3395, 0.0
  %vm3878 = vcmp.ge.f32.partialorder %v3400, 0.0
  %vm3879 = vcmp.ge.f32.partialorder %v3403, 0.0
  %vm3880 = vcmp.ge.f32.partialorder %v3408, 0.0
  %vm3881 = vcmp.ge.f32.partialorder %v3411, 0.0
  %vm3882 = vcmp.ge.f32.partialorder %v3416, 0.0
  %vm3883 = vcmp.ge.f32.partialorder %v3419, 0.0
  %vm3884 = vcmp.ge.f32.partialorder %v3424, 0.0
  %vm3885 = vcmp.ge.f32.partialorder %v3427, 0.0
  %vm3886 = vcmp.ge.f32.partialorder %v3432, 0.0
  %vm3887 = vcmp.ge.f32.partialorder %v3435, 0.0
  %vm3888 = vcmp.ge.f32.partialorder %v3440, 0.0
  %vm3889 = vcmp.ge.f32.partialorder %v3443, 0.0
  %vm3890 = vcmp.ge.f32.partialorder %v3448, 0.0
  %vm3891 = vcmp.ge.f32.partialorder %v3451, 0.0
  %vm3892 = vcmp.ge.f32.partialorder %v3456, 0.0
  %vm3893 = vcmp.ge.f32.partialorder %v3459, 0.0
  %vm3894 = vcmp.ge.f32.partialorder %v3464, 0.0
  %vm3895 = vcmp.ge.f32.partialorder %v3467, 0.0
  %vm3896 = vcmp.ge.f32.partialorder %v3472, 0.0
  %vm3897 = vcmp.ge.f32.partialorder %v3475, 0.0
  %vm3898 = vcmp.ge.f32.partialorder %v3480, 0.0
  %vm3899 = vcmp.ge.f32.partialorder %v3483, 0.0
  %vm3900 = vcmp.ge.f32.partialorder %v3488, 0.0
  %vm3901 = vcmp.ge.f32.partialorder %v3491, 0.0
  %vm3902 = vcmp.ge.f32.partialorder %v3496, 0.0
  %vm3903 = vcmp.ge.f32.partialorder %v3499, 0.0
  %vm3904 = vcmp.ge.f32.partialorder %v3504, 0.0
  %vm3905 = vcmp.ge.f32.partialorder %v3507, 0.0
  %vm3906 = vcmp.ge.f32.partialorder %v3512, 0.0
  %vm3907 = vcmp.ge.f32.partialorder %v3515, 0.0
  %vm3908 = vcmp.ge.f32.partialorder %v3520, 0.0
  %vm3909 = vcmp.ge.f32.partialorder %v3523, 0.0
  %v3910 = vmul.f32 %v1992, 0.1
  %v3911 = vmul.f32 %v1995, 0.1
  %v3912 = vmul.f32 %v2000, 0.1
  %v3913 = vmul.f32 %v2003, 0.1
  %v3914 = vmul.f32 %v2008, 0.1
  %v3915 = vmul.f32 %v2011, 0.1
  %v3916 = vmul.f32 %v2016, 0.1
  %v3917 = vmul.f32 %v2019, 0.1
  %v3918 = vmul.f32 %v2024, 0.1
  %v3919 = vmul.f32 %v2027, 0.1
  %v3920 = vmul.f32 %v2032, 0.1
  %v3921 = vmul.f32 %v2035, 0.1
  %v3922 = vmul.f32 %v2040, 0.1
  %v3923 = vmul.f32 %v2043, 0.1
  %v3924 = vmul.f32 %v2048, 0.1
  %v3925 = vmul.f32 %v2051, 0.1
  %v3926 = vmul.f32 %v2056, 0.1
  %v3927 = vmul.f32 %v2059, 0.1
  %v3928 = vmul.f32 %v2064, 0.1
  %v3929 = vmul.f32 %v2067, 0.1
  %v3930 = vmul.f32 %v2072, 0.1
  %v3931 = vmul.f32 %v2075, 0.1
  %v3932 = vmul.f32 %v2080, 0.1
  %v3933 = vmul.f32 %v2083, 0.1
  %v3934 = vmul.f32 %v2088, 0.1
  %v3935 = vmul.f32 %v2091, 0.1
  %v3936 = vmul.f32 %v2096, 0.1
  %v3937 = vmul.f32 %v2099, 0.1
  %v3938 = vmul.f32 %v2104, 0.1
  %v3939 = vmul.f32 %v2107, 0.1
  %v3940 = vmul.f32 %v2112, 0.1
  %v3941 = vmul.f32 %v2115, 0.1
  %v3942 = vmul.f32 %v2120, 0.1
  %v3943 = vmul.f32 %v2123, 0.1
  %v3944 = vmul.f32 %v2128, 0.1
  %v3945 = vmul.f32 %v2131, 0.1
  %v3946 = vmul.f32 %v2136, 0.1
  %v3947 = vmul.f32 %v2139, 0.1
  %v3948 = vmul.f32 %v2144, 0.1
  %v3949 = vmul.f32 %v2147, 0.1
  %v3950 = vmul.f32 %v2152, 0.1
  %v3951 = vmul.f32 %v2155, 0.1
  %v3952 = vmul.f32 %v2160, 0.1
  %v3953 = vmul.f32 %v2163, 0.1
  %v3954 = vmul.f32 %v2168, 0.1
  %v3955 = vmul.f32 %v2171, 0.1
  %v3956 = vmul.f32 %v2176, 0.1
  %v3957 = vmul.f32 %v2179, 0.1
  %v3958 = vmul.f32 %v2184, 0.1
  %v3959 = vmul.f32 %v2187, 0.1
  %v3960 = vmul.f32 %v2192, 0.1
  %v3961 = vmul.f32 %v2195, 0.1
  %v3962 = vmul.f32 %v2200, 0.1
  %v3963 = vmul.f32 %v2203, 0.1
  %v3964 = vmul.f32 %v2208, 0.1
  %v3965 = vmul.f32 %v2211, 0.1
  %v3966 = vmul.f32 %v2216, 0.1
  %v3967 = vmul.f32 %v2219, 0.1
  %v3968 = vmul.f32 %v2224, 0.1
  %v3969 = vmul.f32 %v2227, 0.1
  %v3970 = vmul.f32 %v2232, 0.1
  %v3971 = vmul.f32 %v2235, 0.1
  %v3972 = vmul.f32 %v2240, 0.1
  %v3973 = vmul.f32 %v2243, 0.1
  %v3974 = vmul.f32 %v2248, 0.1
  %v3975 = vmul.f32 %v2251, 0.1
  %v3976 = vmul.f32 %v2256, 0.1
  %v3977 = vmul.f32 %v2259, 0.1
  %v3978 = vmul.f32 %v2264, 0.1
  %v3979 = vmul.f32 %v2267, 0.1
  %v3980 = vmul.f32 %v2272, 0.1
  %v3981 = vmul.f32 %v2275, 0.1
  %v3982 = vmul.f32 %v2280, 0.1
  %v3983 = vmul.f32 %v2283, 0.1
  %v3984 = vmul.f32 %v2288, 0.1
  %v3985 = vmul.f32 %v2291, 0.1
  %v3986 = vmul.f32 %v2296, 0.1
  %v3987 = vmul.f32 %v2299, 0.1
  %v3988 = vmul.f32 %v2304, 0.1
  %v3989 = vmul.f32 %v2307, 0.1
  %v3990 = vmul.f32 %v2312, 0.1
  %v3991 = vmul.f32 %v2315, 0.1
  %v3992 = vmul.f32 %v2320, 0.1
  %v3993 = vmul.f32 %v2323, 0.1
  %v3994 = vmul.f32 %v2328, 0.1
  %v3995 = vmul.f32 %v2331, 0.1
  %v3996 = vmul.f32 %v2336, 0.1
  %v3997 = vmul.f32 %v2339, 0.1
  %v3998 = vmul.f32 %v2344, 0.1
  %v3999 = vmul.f32 %v2347, 0.1
  %v4000 = vmul.f32 %v2352, 0.1
  %v4001 = vmul.f32 %v2355, 0.1
  %v4002 = vmul.f32 %v2360, 0.1
  %v4003 = vmul.f32 %v2363, 0.1
  %v4004 = vmul.f32 %v2368, 0.1
  %v4005 = vmul.f32 %v2371, 0.1
  %v4006 = vmul.f32 %v2376, 0.1
  %v4007 = vmul.f32 %v2379, 0.1
  %v4008 = vmul.f32 %v2384, 0.1
  %v4009 = vmul.f32 %v2387, 0.1
  %v4010 = vmul.f32 %v2392, 0.1
  %v4011 = vmul.f32 %v2395, 0.1
  %v4012 = vmul.f32 %v2400, 0.1
  %v4013 = vmul.f32 %v2403, 0.1
  %v4014 = vmul.f32 %v2408, 0.1
  %v4015 = vmul.f32 %v2411, 0.1
  %v4016 = vmul.f32 %v2416, 0.1
  %v4017 = vmul.f32 %v2419, 0.1
  %v4018 = vmul.f32 %v2424, 0.1
  %v4019 = vmul.f32 %v2427, 0.1
  %v4020 = vmul.f32 %v2432, 0.1
  %v4021 = vmul.f32 %v2435, 0.1
  %v4022 = vmul.f32 %v2440, 0.1
  %v4023 = vmul.f32 %v2443, 0.1
  %v4024 = vmul.f32 %v2448, 0.1
  %v4025 = vmul.f32 %v2451, 0.1
  %v4026 = vmul.f32 %v2456, 0.1
  %v4027 = vmul.f32 %v2459, 0.1
  %v4028 = vmul.f32 %v2464, 0.1
  %v4029 = vmul.f32 %v2467, 0.1
  %v4030 = vmul.f32 %v2472, 0.1
  %v4031 = vmul.f32 %v2475, 0.1
  %v4032 = vmul.f32 %v2480, 0.1
  %v4033 = vmul.f32 %v2483, 0.1
  %v4034 = vmul.f32 %v2488, 0.1
  %v4035 = vmul.f32 %v2491, 0.1
  %v4036 = vmul.f32 %v2496, 0.1
  %v4037 = vmul.f32 %v2499, 0.1
  %v4038 = vmul.f32 %v2504, 0.1
  %v4039 = vmul.f32 %v2507, 0.1
  %v4040 = vmul.f32 %v2512, 0.1
  %v4041 = vmul.f32 %v2515, 0.1
  %v4042 = vmul.f32 %v2520, 0.1
  %v4043 = vmul.f32 %v2523, 0.1
  %v4044 = vmul.f32 %v2528, 0.1
  %v4045 = vmul.f32 %v2531, 0.1
  %v4046 = vmul.f32 %v2536, 0.1
  %v4047 = vmul.f32 %v2539, 0.1
  %v4048 = vmul.f32 %v2544, 0.1
  %v4049 = vmul.f32 %v2547, 0.1
  %v4050 = vmul.f32 %v2552, 0.1
  %v4051 = vmul.f32 %v2555, 0.1
  %v4052 = vmul.f32 %v2560, 0.1
  %v4053 = vmul.f32 %v2563, 0.1
  %v4054 = vmul.f32 %v2568, 0.1
  %v4055 = vmul.f32 %v2571, 0.1
  %v4056 = vmul.f32 %v2576, 0.1
  %v4057 = vmul.f32 %v2579, 0.1
  %v4058 = vmul.f32 %v2584, 0.1
  %v4059 = vmul.f32 %v2587, 0.1
  %v4060 = vmul.f32 %v2592, 0.1
  %v4061 = vmul.f32 %v2595, 0.1
  %v4062 = vmul.f32 %v2600, 0.1
  %v4063 = vmul.f32 %v2603, 0.1
  %v4064 = vmul.f32 %v2608, 0.1
  %v4065 = vmul.f32 %v2611, 0.1
  %v4066 = vmul.f32 %v2616, 0.1
  %v4067 = vmul.f32 %v2619, 0.1
  %v4068 = vmul.f32 %v2624, 0.1
  %v4069 = vmul.f32 %v2627, 0.1
  %v4070 = vmul.f32 %v2632, 0.1
  %v4071 = vmul.f32 %v2635, 0.1
  %v4072 = vmul.f32 %v2640, 0.1
  %v4073 = vmul.f32 %v2643, 0.1
  %v4074 = vmul.f32 %v2648, 0.1
  %v4075 = vmul.f32 %v2651, 0.1
  %v4076 = vmul.f32 %v2656, 0.1
  %v4077 = vmul.f32 %v2659, 0.1
  %v4078 = vmul.f32 %v2664, 0.1
  %v4079 = vmul.f32 %v2667, 0.1
  %v4080 = vmul.f32 %v2672, 0.1
  %v4081 = vmul.f32 %v2675, 0.1
  %v4082 = vmul.f32 %v2680, 0.1
  %v4083 = vmul.f32 %v2683, 0.1
  %v4084 = vmul.f32 %v2688, 0.1
  %v4085 = vmul.f32 %v2691, 0.1
  %v4086 = vmul.f32 %v2696, 0.1
  %v4087 = vmul.f32 %v2699, 0.1
  %v4088 = vmul.f32 %v2704, 0.1
  %v4089 = vmul.f32 %v2707, 0.1
  %v4090 = vmul.f32 %v2712, 0.1
  %v4091 = vmul.f32 %v2715, 0.1
  %v4092 = vmul.f32 %v2720, 0.1
  %v4093 = vmul.f32 %v2723, 0.1
  %v4094 = vmul.f32 %v2728, 0.1
  %v4095 = vmul.f32 %v2731, 0.1
  %v4096 = vmul.f32 %v2736, 0.1
  %v4097 = vmul.f32 %v2739, 0.1
  %v4098 = vmul.f32 %v2744, 0.1
  %v4099 = vmul.f32 %v2747, 0.1
  %v4100 = vmul.f32 %v2752, 0.1
  %v4101 = vmul.f32 %v2755, 0.1
  %v4102 = vmul.f32 %v2760, 0.1
  %v4103 = vmul.f32 %v2763, 0.1
  %v4104 = vmul.f32 %v2768, 0.1
  %v4105 = vmul.f32 %v2771, 0.1
  %v4106 = vmul.f32 %v2776, 0.1
  %v4107 = vmul.f32 %v2779, 0.1
  %v4108 = vmul.f32 %v2784, 0.1
  %v4109 = vmul.f32 %v2787, 0.1
  %v4110 = vmul.f32 %v2792, 0.1
  %v4111 = vmul.f32 %v2795, 0.1
  %v4112 = vmul.f32 %v2800, 0.1
  %v4113 = vmul.f32 %v2803, 0.1
  %v4114 = vmul.f32 %v2808, 0.1
  %v4115 = vmul.f32 %v2811, 0.1
  %v4116 = vmul.f32 %v2816, 0.1
  %v4117 = vmul.f32 %v2819, 0.1
  %v4118 = vmul.f32 %v2824, 0.1
  %v4119 = vmul.f32 %v2827, 0.1
  %v4120 = vmul.f32 %v2832, 0.1
  %v4121 = vmul.f32 %v2835, 0.1
  %v4122 = vmul.f32 %v2840, 0.1
  %v4123 = vmul.f32 %v2843, 0.1
  %v4124 = vmul.f32 %v2848, 0.1
  %v4125 = vmul.f32 %v2851, 0.1
  %v4126 = vmul.f32 %v2856, 0.1
  %v4127 = vmul.f32 %v2859, 0.1
  %v4128 = vmul.f32 %v2864, 0.1
  %v4129 = vmul.f32 %v2867, 0.1
  %v4130 = vmul.f32 %v2872, 0.1
  %v4131 = vmul.f32 %v2875, 0.1
  %v4132 = vmul.f32 %v2880, 0.1
  %v4133 = vmul.f32 %v2883, 0.1
  %v4134 = vmul.f32 %v2888, 0.1
  %v4135 = vmul.f32 %v2891, 0.1
  %v4136 = vmul.f32 %v2896, 0.1
  %v4137 = vmul.f32 %v2899, 0.1
  %v4138 = vmul.f32 %v2904, 0.1
  %v4139 = vmul.f32 %v2907, 0.1
  %v4140 = vmul.f32 %v2912, 0.1
  %v4141 = vmul.f32 %v2915, 0.1
  %v4142 = vmul.f32 %v2920, 0.1
  %v4143 = vmul.f32 %v2923, 0.1
  %v4144 = vmul.f32 %v2928, 0.1
  %v4145 = vmul.f32 %v2931, 0.1
  %v4146 = vmul.f32 %v2936, 0.1
  %v4147 = vmul.f32 %v2939, 0.1
  %v4148 = vmul.f32 %v2944, 0.1
  %v4149 = vmul.f32 %v2947, 0.1
  %v4150 = vmul.f32 %v2952, 0.1
  %v4151 = vmul.f32 %v2955, 0.1
  %v4152 = vmul.f32 %v2960, 0.1
  %v4153 = vmul.f32 %v2963, 0.1
  %v4154 = vmul.f32 %v2968, 0.1
  %v4155 = vmul.f32 %v2971, 0.1
  %v4156 = vmul.f32 %v2976, 0.1
  %v4157 = vmul.f32 %v2979, 0.1
  %v4158 = vmul.f32 %v2984, 0.1
  %v4159 = vmul.f32 %v2987, 0.1
  %v4160 = vmul.f32 %v2992, 0.1
  %v4161 = vmul.f32 %v2995, 0.1
  %v4162 = vmul.f32 %v3000, 0.1
  %v4163 = vmul.f32 %v3003, 0.1
  %v4164 = vmul.f32 %v3008, 0.1
  %v4165 = vmul.f32 %v3011, 0.1
  %v4166 = vmul.f32 %v3016, 0.1
  %v4167 = vmul.f32 %v3019, 0.1
  %v4168 = vmul.f32 %v3024, 0.1
  %v4169 = vmul.f32 %v3027, 0.1
  %v4170 = vmul.f32 %v3032, 0.1
  %v4171 = vmul.f32 %v3035, 0.1
  %v4172 = vmul.f32 %v3040, 0.1
  %v4173 = vmul.f32 %v3043, 0.1
  %v4174 = vmul.f32 %v3048, 0.1
  %v4175 = vmul.f32 %v3051, 0.1
  %v4176 = vmul.f32 %v3056, 0.1
  %v4177 = vmul.f32 %v3059, 0.1
  %v4178 = vmul.f32 %v3064, 0.1
  %v4179 = vmul.f32 %v3067, 0.1
  %v4180 = vmul.f32 %v3072, 0.1
  %v4181 = vmul.f32 %v3075, 0.1
  %v4182 = vmul.f32 %v3080, 0.1
  %v4183 = vmul.f32 %v3083, 0.1
  %v4184 = vmul.f32 %v3088, 0.1
  %v4185 = vmul.f32 %v3091, 0.1
  %v4186 = vmul.f32 %v3096, 0.1
  %v4187 = vmul.f32 %v3099, 0.1
  %v4188 = vmul.f32 %v3104, 0.1
  %v4189 = vmul.f32 %v3107, 0.1
  %v4190 = vmul.f32 %v3112, 0.1
  %v4191 = vmul.f32 %v3115, 0.1
  %v4192 = vmul.f32 %v3120, 0.1
  %v4193 = vmul.f32 %v3123, 0.1
  %v4194 = vmul.f32 %v3128, 0.1
  %v4195 = vmul.f32 %v3131, 0.1
  %v4196 = vmul.f32 %v3136, 0.1
  %v4197 = vmul.f32 %v3139, 0.1
  %v4198 = vmul.f32 %v3144, 0.1
  %v4199 = vmul.f32 %v3147, 0.1
  %v4200 = vmul.f32 %v3152, 0.1
  %v4201 = vmul.f32 %v3155, 0.1
  %v4202 = vmul.f32 %v3160, 0.1
  %v4203 = vmul.f32 %v3163, 0.1
  %v4204 = vmul.f32 %v3168, 0.1
  %v4205 = vmul.f32 %v3171, 0.1
  %v4206 = vmul.f32 %v3176, 0.1
  %v4207 = vmul.f32 %v3179, 0.1
  %v4208 = vmul.f32 %v3184, 0.1
  %v4209 = vmul.f32 %v3187, 0.1
  %v4210 = vmul.f32 %v3192, 0.1
  %v4211 = vmul.f32 %v3195, 0.1
  %v4212 = vmul.f32 %v3200, 0.1
  %v4213 = vmul.f32 %v3203, 0.1
  %v4214 = vmul.f32 %v3208, 0.1
  %v4215 = vmul.f32 %v3211, 0.1
  %v4216 = vmul.f32 %v3216, 0.1
  %v4217 = vmul.f32 %v3219, 0.1
  %v4218 = vmul.f32 %v3224, 0.1
  %v4219 = vmul.f32 %v3227, 0.1
  %v4220 = vmul.f32 %v3232, 0.1
  %v4221 = vmul.f32 %v3235, 0.1
  %v4222 = vmul.f32 %v3240, 0.1
  %v4223 = vmul.f32 %v3243, 0.1
  %v4224 = vmul.f32 %v3248, 0.1
  %v4225 = vmul.f32 %v3251, 0.1
  %v4226 = vmul.f32 %v3256, 0.1
  %v4227 = vmul.f32 %v3259, 0.1
  %v4228 = vmul.f32 %v3264, 0.1
  %v4229 = vmul.f32 %v3267, 0.1
  %v4230 = vmul.f32 %v3272, 0.1
  %v4231 = vmul.f32 %v3275, 0.1
  %v4232 = vmul.f32 %v3280, 0.1
  %v4233 = vmul.f32 %v3283, 0.1
  %v4234 = vmul.f32 %v3288, 0.1
  %v4235 = vmul.f32 %v3291, 0.1
  %v4236 = vmul.f32 %v3296, 0.1
  %v4237 = vmul.f32 %v3299, 0.1
  %v4238 = vmul.f32 %v3304, 0.1
  %v4239 = vmul.f32 %v3307, 0.1
  %v4240 = vmul.f32 %v3312, 0.1
  %v4241 = vmul.f32 %v3315, 0.1
  %v4242 = vmul.f32 %v3320, 0.1
  %v4243 = vmul.f32 %v3323, 0.1
  %v4244 = vmul.f32 %v3328, 0.1
  %v4245 = vmul.f32 %v3331, 0.1
  %v4246 = vmul.f32 %v3336, 0.1
  %v4247 = vmul.f32 %v3339, 0.1
  %v4248 = vmul.f32 %v3344, 0.1
  %v4249 = vmul.f32 %v3347, 0.1
  %v4250 = vmul.f32 %v3352, 0.1
  %v4251 = vmul.f32 %v3355, 0.1
  %v4252 = vmul.f32 %v3360, 0.1
  %v4253 = vmul.f32 %v3363, 0.1
  %v4254 = vmul.f32 %v3368, 0.1
  %v4255 = vmul.f32 %v3371, 0.1
  %v4256 = vmul.f32 %v3376, 0.1
  %v4257 = vmul.f32 %v3379, 0.1
  %v4258 = vmul.f32 %v3384, 0.1
  %v4259 = vmul.f32 %v3387, 0.1
  %v4260 = vmul.f32 %v3392, 0.1
  %v4261 = vmul.f32 %v3395, 0.1
  %v4262 = vmul.f32 %v3400, 0.1
  %v4263 = vmul.f32 %v3403, 0.1
  %v4264 = vmul.f32 %v3408, 0.1
  %v4265 = vmul.f32 %v3411, 0.1
  %v4266 = vmul.f32 %v3416, 0.1
  %v4267 = vmul.f32 %v3419, 0.1
  %v4268 = vmul.f32 %v3424, 0.1
  %v4269 = vmul.f32 %v3427, 0.1
  %v4270 = vmul.f32 %v3432, 0.1
  %v4271 = vmul.f32 %v3435, 0.1
  %v4272 = vmul.f32 %v3440, 0.1
  %v4273 = vmul.f32 %v3443, 0.1
  %v4274 = vmul.f32 %v3448, 0.1
  %v4275 = vmul.f32 %v3451, 0.1
  %v4276 = vmul.f32 %v3456, 0.1
  %v4277 = vmul.f32 %v3459, 0.1
  %v4278 = vmul.f32 %v3464, 0.1
  %v4279 = vmul.f32 %v3467, 0.1
  %v4280 = vmul.f32 %v3472, 0.1
  %v4281 = vmul.f32 %v3475, 0.1
  %v4282 = vmul.f32 %v3480, 0.1
  %v4283 = vmul.f32 %v3483, 0.1
  %v4284 = vmul.f32 %v3488, 0.1
  %v4285 = vmul.f32 %v3491, 0.1
  %v4286 = vmul.f32 %v3496, 0.1
  %v4287 = vmul.f32 %v3499, 0.1
  %v4288 = vmul.f32 %v3504, 0.1
  %v4289 = vmul.f32 %v3507, 0.1
  %v4290 = vmul.f32 %v3512, 0.1
  %v4291 = vmul.f32 %v3515, 0.1
  %v4292 = vmul.f32 %v3520, 0.1
  %v4293 = vmul.f32 %v3523, 0.1
  %v4294 = vsel %vm3526, %v1992, %v3910
  %v4295 = vsel %vm3527, %v1995, %v3911
  %v4296 = vsel %vm3528, %v2000, %v3912
  %v4297 = vsel %vm3529, %v2003, %v3913
  %v4298 = vsel %vm3530, %v2008, %v3914
  %v4299 = vsel %vm3531, %v2011, %v3915
  %v4300 = vsel %vm3532, %v2016, %v3916
  %v4301 = vsel %vm3533, %v2019, %v3917
  %v4302 = vsel %vm3534, %v2024, %v3918
  %v4303 = vsel %vm3535, %v2027, %v3919
  %v4304 = vsel %vm3536, %v2032, %v3920
  %v4305 = vsel %vm3537, %v2035, %v3921
  %v4306 = vsel %vm3538, %v2040, %v3922
  %v4307 = vsel %vm3539, %v2043, %v3923
  %v4308 = vsel %vm3540, %v2048, %v3924
  %v4309 = vsel %vm3541, %v2051, %v3925
  %v4310 = vsel %vm3542, %v2056, %v3926
  %v4311 = vsel %vm3543, %v2059, %v3927
  %v4312 = vsel %vm3544, %v2064, %v3928
  %v4313 = vsel %vm3545, %v2067, %v3929
  %v4314 = vsel %vm3546, %v2072, %v3930
  %v4315 = vsel %vm3547, %v2075, %v3931
  %v4316 = vsel %vm3548, %v2080, %v3932
  %v4317 = vsel %vm3549, %v2083, %v3933
  %v4318 = vsel %vm3550, %v2088, %v3934
  %v4319 = vsel %vm3551, %v2091, %v3935
  %v4320 = vsel %vm3552, %v2096, %v3936
  %v4321 = vsel %vm3553, %v2099, %v3937
  %v4322 = vsel %vm3554, %v2104, %v3938
  %v4323 = vsel %vm3555, %v2107, %v3939
  %v4324 = vsel %vm3556, %v2112, %v3940
  %v4325 = vsel %vm3557, %v2115, %v3941
  %v4326 = vsel %vm3558, %v2120, %v3942
  %v4327 = vsel %vm3559, %v2123, %v3943
  %v4328 = vsel %vm3560, %v2128, %v3944
  %v4329 = vsel %vm3561, %v2131, %v3945
  %v4330 = vsel %vm3562, %v2136, %v3946
  %v4331 = vsel %vm3563, %v2139, %v3947
  %v4332 = vsel %vm3564, %v2144, %v3948
  %v4333 = vsel %vm3565, %v2147, %v3949
  %v4334 = vsel %vm3566, %v2152, %v3950
  %v4335 = vsel %vm3567, %v2155, %v3951
  %v4336 = vsel %vm3568, %v2160, %v3952
  %v4337 = vsel %vm3569, %v2163, %v3953
  %v4338 = vsel %vm3570, %v2168, %v3954
  %v4339 = vsel %vm3571, %v2171, %v3955
  %v4340 = vsel %vm3572, %v2176, %v3956
  %v4341 = vsel %vm3573, %v2179, %v3957
  %v4342 = vsel %vm3574, %v2184, %v3958
  %v4343 = vsel %vm3575, %v2187, %v3959
  %v4344 = vsel %vm3576, %v2192, %v3960
  %v4345 = vsel %vm3577, %v2195, %v3961
  %v4346 = vsel %vm3578, %v2200, %v3962
  %v4347 = vsel %vm3579, %v2203, %v3963
  %v4348 = vsel %vm3580, %v2208, %v3964
  %v4349 = vsel %vm3581, %v2211, %v3965
  %v4350 = vsel %vm3582, %v2216, %v3966
  %v4351 = vsel %vm3583, %v2219, %v3967
  %v4352 = vsel %vm3584, %v2224, %v3968
  %v4353 = vsel %vm3585, %v2227, %v3969
  %v4354 = vsel %vm3586, %v2232, %v3970
  %v4355 = vsel %vm3587, %v2235, %v3971
  %v4356 = vsel %vm3588, %v2240, %v3972
  %v4357 = vsel %vm3589, %v2243, %v3973
  %v4358 = vsel %vm3590, %v2248, %v3974
  %v4359 = vsel %vm3591, %v2251, %v3975
  %v4360 = vsel %vm3592, %v2256, %v3976
  %v4361 = vsel %vm3593, %v2259, %v3977
  %v4362 = vsel %vm3594, %v2264, %v3978
  %v4363 = vsel %vm3595, %v2267, %v3979
  %v4364 = vsel %vm3596, %v2272, %v3980
  %v4365 = vsel %vm3597, %v2275, %v3981
  %v4366 = vsel %vm3598, %v2280, %v3982
  %v4367 = vsel %vm3599, %v2283, %v3983
  %v4368 = vsel %vm3600, %v2288, %v3984
  %v4369 = vsel %vm3601, %v2291, %v3985
  %v4370 = vsel %vm3602, %v2296, %v3986
  %v4371 = vsel %vm3603, %v2299, %v3987
  %v4372 = vsel %vm3604, %v2304, %v3988
  %v4373 = vsel %vm3605, %v2307, %v3989
  %v4374 = vsel %vm3606, %v2312, %v3990
  %v4375 = vsel %vm3607, %v2315, %v3991
  %v4376 = vsel %vm3608, %v2320, %v3992
  %v4377 = vsel %vm3609, %v2323, %v3993
  %v4378 = vsel %vm3610, %v2328, %v3994
  %v4379 = vsel %vm3611, %v2331, %v3995
  %v4380 = vsel %vm3612, %v2336, %v3996
  %v4381 = vsel %vm3613, %v2339, %v3997
  %v4382 = vsel %vm3614, %v2344, %v3998
  %v4383 = vsel %vm3615, %v2347, %v3999
  %v4384 = vsel %vm3616, %v2352, %v4000
  %v4385 = vsel %vm3617, %v2355, %v4001
  %v4386 = vsel %vm3618, %v2360, %v4002
  %v4387 = vsel %vm3619, %v2363, %v4003
  %v4388 = vsel %vm3620, %v2368, %v4004
  %v4389 = vsel %vm3621, %v2371, %v4005
  %v4390 = vsel %vm3622, %v2376, %v4006
  %v4391 = vsel %vm3623, %v2379, %v4007
  %v4392 = vsel %vm3624, %v2384, %v4008
  %v4393 = vsel %vm3625, %v2387, %v4009
  %v4394 = vsel %vm3626, %v2392, %v4010
  %v4395 = vsel %vm3627, %v2395, %v4011
  %v4396 = vsel %vm3628, %v2400, %v4012
  %v4397 = vsel %vm3629, %v2403, %v4013
  %v4398 = vsel %vm3630, %v2408, %v4014
  %v4399 = vsel %vm3631, %v2411, %v4015
  %v4400 = vsel %vm3632, %v2416, %v4016
  %v4401 = vsel %vm3633, %v2419, %v4017
  %v4402 = vsel %vm3634, %v2424, %v4018
  %v4403 = vsel %vm3635, %v2427, %v4019
  %v4404 = vsel %vm3636, %v2432, %v4020
  %v4405 = vsel %vm3637, %v2435, %v4021
  %v4406 = vsel %vm3638, %v2440, %v4022
  %v4407 = vsel %vm3639, %v2443, %v4023
  %v4408 = vsel %vm3640, %v2448, %v4024
  %v4409 = vsel %vm3641, %v2451, %v4025
  %v4410 = vsel %vm3642, %v2456, %v4026
  %v4411 = vsel %vm3643, %v2459, %v4027
  %v4412 = vsel %vm3644, %v2464, %v4028
  %v4413 = vsel %vm3645, %v2467, %v4029
  %v4414 = vsel %vm3646, %v2472, %v4030
  %v4415 = vsel %vm3647, %v2475, %v4031
  %v4416 = vsel %vm3648, %v2480, %v4032
  %v4417 = vsel %vm3649, %v2483, %v4033
  %v4418 = vsel %vm3650, %v2488, %v4034
  %v4419 = vsel %vm3651, %v2491, %v4035
  %v4420 = vsel %vm3652, %v2496, %v4036
  %v4421 = vsel %vm3653, %v2499, %v4037
  %v4422 = vsel %vm3654, %v2504, %v4038
  %v4423 = vsel %vm3655, %v2507, %v4039
  %v4424 = vsel %vm3656, %v2512, %v4040
  %v4425 = vsel %vm3657, %v2515, %v4041
  %v4426 = vsel %vm3658, %v2520, %v4042
  %v4427 = vsel %vm3659, %v2523, %v4043
  %v4428 = vsel %vm3660, %v2528, %v4044
  %v4429 = vsel %vm3661, %v2531, %v4045
  %v4430 = vsel %vm3662, %v2536, %v4046
  %v4431 = vsel %vm3663, %v2539, %v4047
  %v4432 = vsel %vm3664, %v2544, %v4048
  %v4433 = vsel %vm3665, %v2547, %v4049
  %v4434 = vsel %vm3666, %v2552, %v4050
  %v4435 = vsel %vm3667, %v2555, %v4051
  %v4436 = vsel %vm3668, %v2560, %v4052
  %v4437 = vsel %vm3669, %v2563, %v4053
  %v4438 = vsel %vm3670, %v2568, %v4054
  %v4439 = vsel %vm3671, %v2571, %v4055
  %v4440 = vsel %vm3672, %v2576, %v4056
  %v4441 = vsel %vm3673, %v2579, %v4057
  %v4442 = vsel %vm3674, %v2584, %v4058
  %v4443 = vsel %vm3675, %v2587, %v4059
  %v4444 = vsel %vm3676, %v2592, %v4060
  %v4445 = vsel %vm3677, %v2595, %v4061
  %v4446 = vsel %vm3678, %v2600, %v4062
  %v4447 = vsel %vm3679, %v2603, %v4063
  %v4448 = vsel %vm3680, %v2608, %v4064
  %v4449 = vsel %vm3681, %v2611, %v4065
  %v4450 = vsel %vm3682, %v2616, %v4066
  %v4451 = vsel %vm3683, %v2619, %v4067
  %v4452 = vsel %vm3684, %v2624, %v4068
  %v4453 = vsel %vm3685, %v2627, %v4069
  %v4454 = vsel %vm3686, %v2632, %v4070
  %v4455 = vsel %vm3687, %v2635, %v4071
  %v4456 = vsel %vm3688, %v2640, %v4072
  %v4457 = vsel %vm3689, %v2643, %v4073
  %v4458 = vsel %vm3690, %v2648, %v4074
  %v4459 = vsel %vm3691, %v2651, %v4075
  %v4460 = vsel %vm3692, %v2656, %v4076
  %v4461 = vsel %vm3693, %v2659, %v4077
  %v4462 = vsel %vm3694, %v2664, %v4078
  %v4463 = vsel %vm3695, %v2667, %v4079
  %v4464 = vsel %vm3696, %v2672, %v4080
  %v4465 = vsel %vm3697, %v2675, %v4081
  %v4466 = vsel %vm3698, %v2680, %v4082
  %v4467 = vsel %vm3699, %v2683, %v4083
  %v4468 = vsel %vm3700, %v2688, %v4084
  %v4469 = vsel %vm3701, %v2691, %v4085
  %v4470 = vsel %vm3702, %v2696, %v4086
  %v4471 = vsel %vm3703, %v2699, %v4087
  %v4472 = vsel %vm3704, %v2704, %v4088
  %v4473 = vsel %vm3705, %v2707, %v4089
  %v4474 = vsel %vm3706, %v2712, %v4090
  %v4475 = vsel %vm3707, %v2715, %v4091
  %v4476 = vsel %vm3708, %v2720, %v4092
  %v4477 = vsel %vm3709, %v2723, %v4093
  %v4478 = vsel %vm3710, %v2728, %v4094
  %v4479 = vsel %vm3711, %v2731, %v4095
  %v4480 = vsel %vm3712, %v2736, %v4096
  %v4481 = vsel %vm3713, %v2739, %v4097
  %v4482 = vsel %vm3714, %v2744, %v4098
  %v4483 = vsel %vm3715, %v2747, %v4099
  %v4484 = vsel %vm3716, %v2752, %v4100
  %v4485 = vsel %vm3717, %v2755, %v4101
  %v4486 = vsel %vm3718, %v2760, %v4102
  %v4487 = vsel %vm3719, %v2763, %v4103
  %v4488 = vsel %vm3720, %v2768, %v4104
  %v4489 = vsel %vm3721, %v2771, %v4105
  %v4490 = vsel %vm3722, %v2776, %v4106
  %v4491 = vsel %vm3723, %v2779, %v4107
  %v4492 = vsel %vm3724, %v2784, %v4108
  %v4493 = vsel %vm3725, %v2787, %v4109
  %v4494 = vsel %vm3726, %v2792, %v4110
  %v4495 = vsel %vm3727, %v2795, %v4111
  %v4496 = vsel %vm3728, %v2800, %v4112
  %v4497 = vsel %vm3729, %v2803, %v4113
  %v4498 = vsel %vm3730, %v2808, %v4114
  %v4499 = vsel %vm3731, %v2811, %v4115
  %v4500 = vsel %vm3732, %v2816, %v4116
  %v4501 = vsel %vm3733, %v2819, %v4117
  %v4502 = vsel %vm3734, %v2824, %v4118
  %v4503 = vsel %vm3735, %v2827, %v4119
  %v4504 = vsel %vm3736, %v2832, %v4120
  %v4505 = vsel %vm3737, %v2835, %v4121
  %v4506 = vsel %vm3738, %v2840, %v4122
  %v4507 = vsel %vm3739, %v2843, %v4123
  %v4508 = vsel %vm3740, %v2848, %v4124
  %v4509 = vsel %vm3741, %v2851, %v4125
  %v4510 = vsel %vm3742, %v2856, %v4126
  %v4511 = vsel %vm3743, %v2859, %v4127
  %v4512 = vsel %vm3744, %v2864, %v4128
  %v4513 = vsel %vm3745, %v2867, %v4129
  %v4514 = vsel %vm3746, %v2872, %v4130
  %v4515 = vsel %vm3747, %v2875, %v4131
  %v4516 = vsel %vm3748, %v2880, %v4132
  %v4517 = vsel %vm3749, %v2883, %v4133
  %v4518 = vsel %vm3750, %v2888, %v4134
  %v4519 = vsel %vm3751, %v2891, %v4135
  %v4520 = vsel %vm3752, %v2896, %v4136
  %v4521 = vsel %vm3753, %v2899, %v4137
  %v4522 = vsel %vm3754, %v2904, %v4138
  %v4523 = vsel %vm3755, %v2907, %v4139
  %v4524 = vsel %vm3756, %v2912, %v4140
  %v4525 = vsel %vm3757, %v2915, %v4141
  %v4526 = vsel %vm3758, %v2920, %v4142
  %v4527 = vsel %vm3759, %v2923, %v4143
  %v4528 = vsel %vm3760, %v2928, %v4144
  %v4529 = vsel %vm3761, %v2931, %v4145
  %v4530 = vsel %vm3762, %v2936, %v4146
  %v4531 = vsel %vm3763, %v2939, %v4147
  %v4532 = vsel %vm3764, %v2944, %v4148
  %v4533 = vsel %vm3765, %v2947, %v4149
  %v4534 = vsel %vm3766, %v2952, %v4150
  %v4535 = vsel %vm3767, %v2955, %v4151
  %v4536 = vsel %vm3768, %v2960, %v4152
  %v4537 = vsel %vm3769, %v2963, %v4153
  %v4538 = vsel %vm3770, %v2968, %v4154
  %v4539 = vsel %vm3771, %v2971, %v4155
  %v4540 = vsel %vm3772, %v2976, %v4156
  %v4541 = vsel %vm3773, %v2979, %v4157
  %v4542 = vsel %vm3774, %v2984, %v4158
  %v4543 = vsel %vm3775, %v2987, %v4159
  %v4544 = vsel %vm3776, %v2992, %v4160
  %v4545 = vsel %vm3777, %v2995, %v4161
  %v4546 = vsel %vm3778, %v3000, %v4162
  %v4547 = vsel %vm3779, %v3003, %v4163
  %v4548 = vsel %vm3780, %v3008, %v4164
  %v4549 = vsel %vm3781, %v3011, %v4165
  %v4550 = vsel %vm3782, %v3016, %v4166
  %v4551 = vsel %vm3783, %v3019, %v4167
  %v4552 = vsel %vm3784, %v3024, %v4168
  %v4553 = vsel %vm3785, %v3027, %v4169
  %v4554 = vsel %vm3786, %v3032, %v4170
  %v4555 = vsel %vm3787, %v3035, %v4171
  %v4556 = vsel %vm3788, %v3040, %v4172
  %v4557 = vsel %vm3789, %v3043, %v4173
  %v4558 = vsel %vm3790, %v3048, %v4174
  %v4559 = vsel %vm3791, %v3051, %v4175
  %v4560 = vsel %vm3792, %v3056, %v4176
  %v4561 = vsel %vm3793, %v3059, %v4177
  %v4562 = vsel %vm3794, %v3064, %v4178
  %v4563 = vsel %vm3795, %v3067, %v4179
  %v4564 = vsel %vm3796, %v3072, %v4180
  %v4565 = vsel %vm3797, %v3075, %v4181
  %v4566 = vsel %vm3798, %v3080, %v4182
  %v4567 = vsel %vm3799, %v3083, %v4183
  %v4568 = vsel %vm3800, %v3088, %v4184
  %v4569 = vsel %vm3801, %v3091, %v4185
  %v4570 = vsel %vm3802, %v3096, %v4186
  %v4571 = vsel %vm3803, %v3099, %v4187
  %v4572 = vsel %vm3804, %v3104, %v4188
  %v4573 = vsel %vm3805, %v3107, %v4189
  %v4574 = vsel %vm3806, %v3112, %v4190
  %v4575 = vsel %vm3807, %v3115, %v4191
  %v4576 = vsel %vm3808, %v3120, %v4192
  %v4577 = vsel %vm3809, %v3123, %v4193
  %v4578 = vsel %vm3810, %v3128, %v4194
  %v4579 = vsel %vm3811, %v3131, %v4195
  %v4580 = vsel %vm3812, %v3136, %v4196
  %v4581 = vsel %vm3813, %v3139, %v4197
  %v4582 = vsel %vm3814, %v3144, %v4198
  %v4583 = vsel %vm3815, %v3147, %v4199
  %v4584 = vsel %vm3816, %v3152, %v4200
  %v4585 = vsel %vm3817, %v3155, %v4201
  %v4586 = vsel %vm3818, %v3160, %v4202
  %v4587 = vsel %vm3819, %v3163, %v4203
  %v4588 = vsel %vm3820, %v3168, %v4204
  %v4589 = vsel %vm3821, %v3171, %v4205
  %v4590 = vsel %vm3822, %v3176, %v4206
  %v4591 = vsel %vm3823, %v3179, %v4207
  %v4592 = vsel %vm3824, %v3184, %v4208
  %v4593 = vsel %vm3825, %v3187, %v4209
  %v4594 = vsel %vm3826, %v3192, %v4210
  %v4595 = vsel %vm3827, %v3195, %v4211
  %v4596 = vsel %vm3828, %v3200, %v4212
  %v4597 = vsel %vm3829, %v3203, %v4213
  %v4598 = vsel %vm3830, %v3208, %v4214
  %v4599 = vsel %vm3831, %v3211, %v4215
  %v4600 = vsel %vm3832, %v3216, %v4216
  %v4601 = vsel %vm3833, %v3219, %v4217
  %v4602 = vsel %vm3834, %v3224, %v4218
  %v4603 = vsel %vm3835, %v3227, %v4219
  %v4604 = vsel %vm3836, %v3232, %v4220
  %v4605 = vsel %vm3837, %v3235, %v4221
  %v4606 = vsel %vm3838, %v3240, %v4222
  %v4607 = vsel %vm3839, %v3243, %v4223
  %v4608 = vsel %vm3840, %v3248, %v4224
  %v4609 = vsel %vm3841, %v3251, %v4225
  %v4610 = vsel %vm3842, %v3256, %v4226
  %v4611 = vsel %vm3843, %v3259, %v4227
  %v4612 = vsel %vm3844, %v3264, %v4228
  %v4613 = vsel %vm3845, %v3267, %v4229
  %v4614 = vsel %vm3846, %v3272, %v4230
  %v4615 = vsel %vm3847, %v3275, %v4231
  %v4616 = vsel %vm3848, %v3280, %v4232
  %v4617 = vsel %vm3849, %v3283, %v4233
  %v4618 = vsel %vm3850, %v3288, %v4234
  %v4619 = vsel %vm3851, %v3291, %v4235
  %v4620 = vsel %vm3852, %v3296, %v4236
  %v4621 = vsel %vm3853, %v3299, %v4237
  %v4622 = vsel %vm3854, %v3304, %v4238
  %v4623 = vsel %vm3855, %v3307, %v4239
  %v4624 = vsel %vm3856, %v3312, %v4240
  %v4625 = vsel %vm3857, %v3315, %v4241
  %v4626 = vsel %vm3858, %v3320, %v4242
  %v4627 = vsel %vm3859, %v3323, %v4243
  %v4628 = vsel %vm3860, %v3328, %v4244
  %v4629 = vsel %vm3861, %v3331, %v4245
  %v4630 = vsel %vm3862, %v3336, %v4246
  %v4631 = vsel %vm3863, %v3339, %v4247
  %v4632 = vsel %vm3864, %v3344, %v4248
  %v4633 = vsel %vm3865, %v3347, %v4249
  %v4634 = vsel %vm3866, %v3352, %v4250
  %v4635 = vsel %vm3867, %v3355, %v4251
  %v4636 = vsel %vm3868, %v3360, %v4252
  %v4637 = vsel %vm3869, %v3363, %v4253
  %v4638 = vsel %vm3870, %v3368, %v4254
  %v4639 = vsel %vm3871, %v3371, %v4255
  %v4640 = vsel %vm3872, %v3376, %v4256
  %v4641 = vsel %vm3873, %v3379, %v4257
  %v4642 = vsel %vm3874, %v3384, %v4258
  %v4643 = vsel %vm3875, %v3387, %v4259
  %v4644 = vsel %vm3876, %v3392, %v4260
  %v4645 = vsel %vm3877, %v3395, %v4261
  %v4646 = vsel %vm3878, %v3400, %v4262
  %v4647 = vsel %vm3879, %v3403, %v4263
  %v4648 = vsel %vm3880, %v3408, %v4264
  %v4649 = vsel %vm3881, %v3411, %v4265
  %v4650 = vsel %vm3882, %v3416, %v4266
  %v4651 = vsel %vm3883, %v3419, %v4267
  %v4652 = vsel %vm3884, %v3424, %v4268
  %v4653 = vsel %vm3885, %v3427, %v4269
  %v4654 = vsel %vm3886, %v3432, %v4270
  %v4655 = vsel %vm3887, %v3435, %v4271
  %v4656 = vsel %vm3888, %v3440, %v4272
  %v4657 = vsel %vm3889, %v3443, %v4273
  %v4658 = vsel %vm3890, %v3448, %v4274
  %v4659 = vsel %vm3891, %v3451, %v4275
  %v4660 = vsel %vm3892, %v3456, %v4276
  %v4661 = vsel %vm3893, %v3459, %v4277
  %v4662 = vsel %vm3894, %v3464, %v4278
  %v4663 = vsel %vm3895, %v3467, %v4279
  %v4664 = vsel %vm3896, %v3472, %v4280
  %v4665 = vsel %vm3897, %v3475, %v4281
  %v4666 = vsel %vm3898, %v3480, %v4282
  %v4667 = vsel %vm3899, %v3483, %v4283
  %v4668 = vsel %vm3900, %v3488, %v4284
  %v4669 = vsel %vm3901, %v3491, %v4285
  %v4670 = vsel %vm3902, %v3496, %v4286
  %v4671 = vsel %vm3903, %v3499, %v4287
  %v4672 = vsel %vm3904, %v3504, %v4288
  %v4673 = vsel %vm3905, %v3507, %v4289
  %v4674 = vsel %vm3906, %v3512, %v4290
  %v4675 = vsel %vm3907, %v3515, %v4291
  %v4676 = vsel %vm3908, %v3520, %v4292
  %v4677 = vsel %vm3909, %v3523, %v4293
  %v4678 = vpack.c.bf16 %v4295, %v4294
  %v4679 = vpack.c.bf16 %v4297, %v4296
  %v4680 = vpack.c.bf16 %v4299, %v4298
  %v4681 = vpack.c.bf16 %v4301, %v4300
  %v4682 = vpack.c.bf16 %v4303, %v4302
  %v4683 = vpack.c.bf16 %v4305, %v4304
  %v4684 = vpack.c.bf16 %v4307, %v4306
  %v4685 = vpack.c.bf16 %v4309, %v4308
  %v4686 = vpack.c.bf16 %v4311, %v4310
  %v4687 = vpack.c.bf16 %v4313, %v4312
  %v4688 = vpack.c.bf16 %v4315, %v4314
  %v4689 = vpack.c.bf16 %v4317, %v4316
  %v4690 = vpack.c.bf16 %v4319, %v4318
  %v4691 = vpack.c.bf16 %v4321, %v4320
  %v4692 = vpack.c.bf16 %v4323, %v4322
  %v4693 = vpack.c.bf16 %v4325, %v4324
  %v4694 = vpack.c.bf16 %v4327, %v4326
  %v4695 = vpack.c.bf16 %v4329, %v4328
  %v4696 = vpack.c.bf16 %v4331, %v4330
  %v4697 = vpack.c.bf16 %v4333, %v4332
  %v4698 = vpack.c.bf16 %v4335, %v4334
  %v4699 = vpack.c.bf16 %v4337, %v4336
  %v4700 = vpack.c.bf16 %v4339, %v4338
  %v4701 = vpack.c.bf16 %v4341, %v4340
  %v4702 = vpack.c.bf16 %v4343, %v4342
  %v4703 = vpack.c.bf16 %v4345, %v4344
  %v4704 = vpack.c.bf16 %v4347, %v4346
  %v4705 = vpack.c.bf16 %v4349, %v4348
  %v4706 = vpack.c.bf16 %v4351, %v4350
  %v4707 = vpack.c.bf16 %v4353, %v4352
  %v4708 = vpack.c.bf16 %v4355, %v4354
  %v4709 = vpack.c.bf16 %v4357, %v4356
  %v4710 = vpack.c.bf16 %v4359, %v4358
  %v4711 = vpack.c.bf16 %v4361, %v4360
  %v4712 = vpack.c.bf16 %v4363, %v4362
  %v4713 = vpack.c.bf16 %v4365, %v4364
  %v4714 = vpack.c.bf16 %v4367, %v4366
  %v4715 = vpack.c.bf16 %v4369, %v4368
  %v4716 = vpack.c.bf16 %v4371, %v4370
  %v4717 = vpack.c.bf16 %v4373, %v4372
  %v4718 = vpack.c.bf16 %v4375, %v4374
  %v4719 = vpack.c.bf16 %v4377, %v4376
  %v4720 = vpack.c.bf16 %v4379, %v4378
  %v4721 = vpack.c.bf16 %v4381, %v4380
  %v4722 = vpack.c.bf16 %v4383, %v4382
  %v4723 = vpack.c.bf16 %v4385, %v4384
  %v4724 = vpack.c.bf16 %v4387, %v4386
  %v4725 = vpack.c.bf16 %v4389, %v4388
  %v4726 = vpack.c.bf16 %v4391, %v4390
  %v4727 = vpack.c.bf16 %v4393, %v4392
  %v4728 = vpack.c.bf16 %v4395, %v4394
  %v4729 = vpack.c.bf16 %v4397, %v4396
  %v4730 = vpack.c.bf16 %v4399, %v4398
  %v4731 = vpack.c.bf16 %v4401, %v4400
  %v4732 = vpack.c.bf16 %v4403, %v4402
  %v4733 = vpack.c.bf16 %v4405, %v4404
  %v4734 = vpack.c.bf16 %v4407, %v4406
  %v4735 = vpack.c.bf16 %v4409, %v4408
  %v4736 = vpack.c.bf16 %v4411, %v4410
  %v4737 = vpack.c.bf16 %v4413, %v4412
  %v4738 = vpack.c.bf16 %v4415, %v4414
  %v4739 = vpack.c.bf16 %v4417, %v4416
  %v4740 = vpack.c.bf16 %v4419, %v4418
  %v4741 = vpack.c.bf16 %v4421, %v4420
  %v4742 = vpack.c.bf16 %v4423, %v4422
  %v4743 = vpack.c.bf16 %v4425, %v4424
  %v4744 = vpack.c.bf16 %v4427, %v4426
  %v4745 = vpack.c.bf16 %v4429, %v4428
  %v4746 = vpack.c.bf16 %v4431, %v4430
  %v4747 = vpack.c.bf16 %v4433, %v4432
  %v4748 = vpack.c.bf16 %v4435, %v4434
  %v4749 = vpack.c.bf16 %v4437, %v4436
  %v4750 = vpack.c.bf16 %v4439, %v4438
  %v4751 = vpack.c.bf16 %v4441, %v4440
  %v4752 = vpack.c.bf16 %v4443, %v4442
  %v4753 = vpack.c.bf16 %v4445, %v4444
  %v4754 = vpack.c.bf16 %v4447, %v4446
  %v4755 = vpack.c.bf16 %v4449, %v4448
  %v4756 = vpack.c.bf16 %v4451, %v4450
  %v4757 = vpack.c.bf16 %v4453, %v4452
  %v4758 = vpack.c.bf16 %v4455, %v4454
  %v4759 = vpack.c.bf16 %v4457, %v4456
  %v4760 = vpack.c.bf16 %v4459, %v4458
  %v4761 = vpack.c.bf16 %v4461, %v4460
  %v4762 = vpack.c.bf16 %v4463, %v4462
  %v4763 = vpack.c.bf16 %v4465, %v4464
  %v4764 = vpack.c.bf16 %v4467, %v4466
  %v4765 = vpack.c.bf16 %v4469, %v4468
  %v4766 = vpack.c.bf16 %v4471, %v4470
  %v4767 = vpack.c.bf16 %v4473, %v4472
  %v4768 = vpack.c.bf16 %v4475, %v4474
  %v4769 = vpack.c.bf16 %v4477, %v4476
  %v4770 = vpack.c.bf16 %v4479, %v4478
  %v4771 = vpack.c.bf16 %v4481, %v4480
  %v4772 = vpack.c.bf16 %v4483, %v4482
  %v4773 = vpack.c.bf16 %v4485, %v4484
  %v4774 = vpack.c.bf16 %v4487, %v4486
  %v4775 = vpack.c.bf16 %v4489, %v4488
  %v4776 = vpack.c.bf16 %v4491, %v4490
  %v4777 = vpack.c.bf16 %v4493, %v4492
  %v4778 = vpack.c.bf16 %v4495, %v4494
  %v4779 = vpack.c.bf16 %v4497, %v4496
  %v4780 = vpack.c.bf16 %v4499, %v4498
  %v4781 = vpack.c.bf16 %v4501, %v4500
  %v4782 = vpack.c.bf16 %v4503, %v4502
  %v4783 = vpack.c.bf16 %v4505, %v4504
  %v4784 = vpack.c.bf16 %v4507, %v4506
  %v4785 = vpack.c.bf16 %v4509, %v4508
  %v4786 = vpack.c.bf16 %v4511, %v4510
  %v4787 = vpack.c.bf16 %v4513, %v4512
  %v4788 = vpack.c.bf16 %v4515, %v4514
  %v4789 = vpack.c.bf16 %v4517, %v4516
  %v4790 = vpack.c.bf16 %v4519, %v4518
  %v4791 = vpack.c.bf16 %v4521, %v4520
  %v4792 = vpack.c.bf16 %v4523, %v4522
  %v4793 = vpack.c.bf16 %v4525, %v4524
  %v4794 = vpack.c.bf16 %v4527, %v4526
  %v4795 = vpack.c.bf16 %v4529, %v4528
  %v4796 = vpack.c.bf16 %v4531, %v4530
  %v4797 = vpack.c.bf16 %v4533, %v4532
  %v4798 = vpack.c.bf16 %v4535, %v4534
  %v4799 = vpack.c.bf16 %v4537, %v4536
  %v4800 = vpack.c.bf16 %v4539, %v4538
  %v4801 = vpack.c.bf16 %v4541, %v4540
  %v4802 = vpack.c.bf16 %v4543, %v4542
  %v4803 = vpack.c.bf16 %v4545, %v4544
  %v4804 = vpack.c.bf16 %v4547, %v4546
  %v4805 = vpack.c.bf16 %v4549, %v4548
  %v4806 = vpack.c.bf16 %v4551, %v4550
  %v4807 = vpack.c.bf16 %v4553, %v4552
  %v4808 = vpack.c.bf16 %v4555, %v4554
  %v4809 = vpack.c.bf16 %v4557, %v4556
  %v4810 = vpack.c.bf16 %v4559, %v4558
  %v4811 = vpack.c.bf16 %v4561, %v4560
  %v4812 = vpack.c.bf16 %v4563, %v4562
  %v4813 = vpack.c.bf16 %v4565, %v4564
  %v4814 = vpack.c.bf16 %v4567, %v4566
  %v4815 = vpack.c.bf16 %v4569, %v4568
  %v4816 = vpack.c.bf16 %v4571, %v4570
  %v4817 = vpack.c.bf16 %v4573, %v4572
  %v4818 = vpack.c.bf16 %v4575, %v4574
  %v4819 = vpack.c.bf16 %v4577, %v4576
  %v4820 = vpack.c.bf16 %v4579, %v4578
  %v4821 = vpack.c.bf16 %v4581, %v4580
  %v4822 = vpack.c.bf16 %v4583, %v4582
  %v4823 = vpack.c.bf16 %v4585, %v4584
  %v4824 = vpack.c.bf16 %v4587, %v4586
  %v4825 = vpack.c.bf16 %v4589, %v4588
  %v4826 = vpack.c.bf16 %v4591, %v4590
  %v4827 = vpack.c.bf16 %v4593, %v4592
  %v4828 = vpack.c.bf16 %v4595, %v4594
  %v4829 = vpack.c.bf16 %v4597, %v4596
  %v4830 = vpack.c.bf16 %v4599, %v4598
  %v4831 = vpack.c.bf16 %v4601, %v4600
  %v4832 = vpack.c.bf16 %v4603, %v4602
  %v4833 = vpack.c.bf16 %v4605, %v4604
  %v4834 = vpack.c.bf16 %v4607, %v4606
  %v4835 = vpack.c.bf16 %v4609, %v4608
  %v4836 = vpack.c.bf16 %v4611, %v4610
  %v4837 = vpack.c.bf16 %v4613, %v4612
  %v4838 = vpack.c.bf16 %v4615, %v4614
  %v4839 = vpack.c.bf16 %v4617, %v4616
  %v4840 = vpack.c.bf16 %v4619, %v4618
  %v4841 = vpack.c.bf16 %v4621, %v4620
  %v4842 = vpack.c.bf16 %v4623, %v4622
  %v4843 = vpack.c.bf16 %v4625, %v4624
  %v4844 = vpack.c.bf16 %v4627, %v4626
  %v4845 = vpack.c.bf16 %v4629, %v4628
  %v4846 = vpack.c.bf16 %v4631, %v4630
  %v4847 = vpack.c.bf16 %v4633, %v4632
  %v4848 = vpack.c.bf16 %v4635, %v4634
  %v4849 = vpack.c.bf16 %v4637, %v4636
  %v4850 = vpack.c.bf16 %v4639, %v4638
  %v4851 = vpack.c.bf16 %v4641, %v4640
  %v4852 = vpack.c.bf16 %v4643, %v4642
  %v4853 = vpack.c.bf16 %v4645, %v4644
  %v4854 = vpack.c.bf16 %v4647, %v4646
  %v4855 = vpack.c.bf16 %v4649, %v4648
  %v4856 = vpack.c.bf16 %v4651, %v4650
  %v4857 = vpack.c.bf16 %v4653, %v4652
  %v4858 = vpack.c.bf16 %v4655, %v4654
  %v4859 = vpack.c.bf16 %v4657, %v4656
  %v4860 = vpack.c.bf16 %v4659, %v4658
  %v4861 = vpack.c.bf16 %v4661, %v4660
  %v4862 = vpack.c.bf16 %v4663, %v4662
  %v4863 = vpack.c.bf16 %v4665, %v4664
  %v4864 = vpack.c.bf16 %v4667, %v4666
  %v4865 = vpack.c.bf16 %v4669, %v4668
  %v4866 = vpack.c.bf16 %v4671, %v4670
  %v4867 = vpack.c.bf16 %v4673, %v4672
  %v4868 = vpack.c.bf16 %v4675, %v4674
  %v4869 = vpack.c.bf16 %v4677, %v4676
  %v5062 = vunpack.c.l.b16 %v4678
  %v5063 = vunpack.c.h.b16 %v4678
  %v5064 = vunpack.c.l.b16 %v4679
  %v5065 = vunpack.c.h.b16 %v4679
  %v5066 = vunpack.c.l.b16 %v4680
  %v5067 = vunpack.c.h.b16 %v4680
  %v5068 = vunpack.c.l.b16 %v4681
  %v5069 = vunpack.c.h.b16 %v4681
  %v5070 = vunpack.c.l.b16 %v4682
  %v5071 = vunpack.c.h.b16 %v4682
  %v5072 = vunpack.c.l.b16 %v4683
  %v5073 = vunpack.c.h.b16 %v4683
  %v5074 = vunpack.c.l.b16 %v4684
  %v5075 = vunpack.c.h.b16 %v4684
  %v5076 = vunpack.c.l.b16 %v4685
  %v5077 = vunpack.c.h.b16 %v4685
  %v5078 = vunpack.c.l.b16 %v4686
  %v5079 = vunpack.c.h.b16 %v4686
  %v5080 = vunpack.c.l.b16 %v4687
  %v5081 = vunpack.c.h.b16 %v4687
  %v5082 = vunpack.c.l.b16 %v4688
  %v5083 = vunpack.c.h.b16 %v4688
  %v5084 = vunpack.c.l.b16 %v4689
  %v5085 = vunpack.c.h.b16 %v4689
  %v5086 = vunpack.c.l.b16 %v4690
  %v5087 = vunpack.c.h.b16 %v4690
  %v5088 = vunpack.c.l.b16 %v4691
  %v5089 = vunpack.c.h.b16 %v4691
  %v5090 = vunpack.c.l.b16 %v4692
  %v5091 = vunpack.c.h.b16 %v4692
  %v5092 = vunpack.c.l.b16 %v4693
  %v5093 = vunpack.c.h.b16 %v4693
  %v5094 = vunpack.c.l.b16 %v4694
  %v5095 = vunpack.c.h.b16 %v4694
  %v5096 = vunpack.c.l.b16 %v4695
  %v5097 = vunpack.c.h.b16 %v4695
  %v5098 = vunpack.c.l.b16 %v4696
  %v5099 = vunpack.c.h.b16 %v4696
  %v5100 = vunpack.c.l.b16 %v4697
  %v5101 = vunpack.c.h.b16 %v4697
  %v5102 = vunpack.c.l.b16 %v4698
  %v5103 = vunpack.c.h.b16 %v4698
  %v5104 = vunpack.c.l.b16 %v4699
  %v5105 = vunpack.c.h.b16 %v4699
  %v5106 = vunpack.c.l.b16 %v4700
  %v5107 = vunpack.c.h.b16 %v4700
  %v5108 = vunpack.c.l.b16 %v4701
  %v5109 = vunpack.c.h.b16 %v4701
  %v5110 = vunpack.c.l.b16 %v4702
  %v5111 = vunpack.c.h.b16 %v4702
  %v5112 = vunpack.c.l.b16 %v4703
  %v5113 = vunpack.c.h.b16 %v4703
  %v5114 = vunpack.c.l.b16 %v4704
  %v5115 = vunpack.c.h.b16 %v4704
  %v5116 = vunpack.c.l.b16 %v4705
  %v5117 = vunpack.c.h.b16 %v4705
  %v5118 = vunpack.c.l.b16 %v4706
  %v5119 = vunpack.c.h.b16 %v4706
  %v5120 = vunpack.c.l.b16 %v4707
  %v5121 = vunpack.c.h.b16 %v4707
  %v5122 = vunpack.c.l.b16 %v4708
  %v5123 = vunpack.c.h.b16 %v4708
  %v5124 = vunpack.c.l.b16 %v4709
  %v5125 = vunpack.c.h.b16 %v4709
  %v5126 = vunpack.c.l.b16 %v4710
  %v5127 = vunpack.c.h.b16 %v4710
  %v5128 = vunpack.c.l.b16 %v4711
  %v5129 = vunpack.c.h.b16 %v4711
  %v5130 = vunpack.c.l.b16 %v4712
  %v5131 = vunpack.c.h.b16 %v4712
  %v5132 = vunpack.c.l.b16 %v4713
  %v5133 = vunpack.c.h.b16 %v4713
  %v5134 = vunpack.c.l.b16 %v4714
  %v5135 = vunpack.c.h.b16 %v4714
  %v5136 = vunpack.c.l.b16 %v4715
  %v5137 = vunpack.c.h.b16 %v4715
  %v5138 = vunpack.c.l.b16 %v4716
  %v5139 = vunpack.c.h.b16 %v4716
  %v5140 = vunpack.c.l.b16 %v4717
  %v5141 = vunpack.c.h.b16 %v4717
  %v5142 = vunpack.c.l.b16 %v4718
  %v5143 = vunpack.c.h.b16 %v4718
  %v5144 = vunpack.c.l.b16 %v4719
  %v5145 = vunpack.c.h.b16 %v4719
  %v5146 = vunpack.c.l.b16 %v4720
  %v5147 = vunpack.c.h.b16 %v4720
  %v5148 = vunpack.c.l.b16 %v4721
  %v5149 = vunpack.c.h.b16 %v4721
  %v5150 = vunpack.c.l.b16 %v4722
  %v5151 = vunpack.c.h.b16 %v4722
  %v5152 = vunpack.c.l.b16 %v4723
  %v5153 = vunpack.c.h.b16 %v4723
  %v5154 = vunpack.c.l.b16 %v4724
  %v5155 = vunpack.c.h.b16 %v4724
  %v5156 = vunpack.c.l.b16 %v4725
  %v5157 = vunpack.c.h.b16 %v4725
  %v5158 = vunpack.c.l.b16 %v4726
  %v5159 = vunpack.c.h.b16 %v4726
  %v5160 = vunpack.c.l.b16 %v4727
  %v5161 = vunpack.c.h.b16 %v4727
  %v5162 = vunpack.c.l.b16 %v4728
  %v5163 = vunpack.c.h.b16 %v4728
  %v5164 = vunpack.c.l.b16 %v4729
  %v5165 = vunpack.c.h.b16 %v4729
  %v5166 = vunpack.c.l.b16 %v4730
  %v5167 = vunpack.c.h.b16 %v4730
  %v5168 = vunpack.c.l.b16 %v4731
  %v5169 = vunpack.c.h.b16 %v4731
  %v5170 = vunpack.c.l.b16 %v4732
  %v5171 = vunpack.c.h.b16 %v4732
  %v5172 = vunpack.c.l.b16 %v4733
  %v5173 = vunpack.c.h.b16 %v4733
  %v5174 = vunpack.c.l.b16 %v4734
  %v5175 = vunpack.c.h.b16 %v4734
  %v5176 = vunpack.c.l.b16 %v4735
  %v5177 = vunpack.c.h.b16 %v4735
  %v5178 = vunpack.c.l.b16 %v4736
  %v5179 = vunpack.c.h.b16 %v4736
  %v5180 = vunpack.c.l.b16 %v4737
  %v5181 = vunpack.c.h.b16 %v4737
  %v5182 = vunpack.c.l.b16 %v4738
  %v5183 = vunpack.c.h.b16 %v4738
  %v5184 = vunpack.c.l.b16 %v4739
  %v5185 = vunpack.c.h.b16 %v4739
  %v5186 = vunpack.c.l.b16 %v4740
  %v5187 = vunpack.c.h.b16 %v4740
  %v5188 = vunpack.c.l.b16 %v4741
  %v5189 = vunpack.c.h.b16 %v4741
  %v5190 = vunpack.c.l.b16 %v4742
  %v5191 = vunpack.c.h.b16 %v4742
  %v5192 = vunpack.c.l.b16 %v4743
  %v5193 = vunpack.c.h.b16 %v4743
  %v5194 = vunpack.c.l.b16 %v4744
  %v5195 = vunpack.c.h.b16 %v4744
  %v5196 = vunpack.c.l.b16 %v4745
  %v5197 = vunpack.c.h.b16 %v4745
  %v5198 = vunpack.c.l.b16 %v4746
  %v5199 = vunpack.c.h.b16 %v4746
  %v5200 = vunpack.c.l.b16 %v4747
  %v5201 = vunpack.c.h.b16 %v4747
  %v5202 = vunpack.c.l.b16 %v4748
  %v5203 = vunpack.c.h.b16 %v4748
  %v5204 = vunpack.c.l.b16 %v4749
  %v5205 = vunpack.c.h.b16 %v4749
  %v5206 = vunpack.c.l.b16 %v4750
  %v5207 = vunpack.c.h.b16 %v4750
  %v5208 = vunpack.c.l.b16 %v4751
  %v5209 = vunpack.c.h.b16 %v4751
  %v5210 = vunpack.c.l.b16 %v4752
  %v5211 = vunpack.c.h.b16 %v4752
  %v5212 = vunpack.c.l.b16 %v4753
  %v5213 = vunpack.c.h.b16 %v4753
  %v5214 = vunpack.c.l.b16 %v4754
  %v5215 = vunpack.c.h.b16 %v4754
  %v5216 = vunpack.c.l.b16 %v4755
  %v5217 = vunpack.c.h.b16 %v4755
  %v5218 = vunpack.c.l.b16 %v4756
  %v5219 = vunpack.c.h.b16 %v4756
  %v5220 = vunpack.c.l.b16 %v4757
  %v5221 = vunpack.c.h.b16 %v4757
  %v5222 = vunpack.c.l.b16 %v4758
  %v5223 = vunpack.c.h.b16 %v4758
  %v5224 = vunpack.c.l.b16 %v4759
  %v5225 = vunpack.c.h.b16 %v4759
  %v5226 = vunpack.c.l.b16 %v4760
  %v5227 = vunpack.c.h.b16 %v4760
  %v5228 = vunpack.c.l.b16 %v4761
  %v5229 = vunpack.c.h.b16 %v4761
  %v5230 = vunpack.c.l.b16 %v4762
  %v5231 = vunpack.c.h.b16 %v4762
  %v5232 = vunpack.c.l.b16 %v4763
  %v5233 = vunpack.c.h.b16 %v4763
  %v5234 = vunpack.c.l.b16 %v4764
  %v5235 = vunpack.c.h.b16 %v4764
  %v5236 = vunpack.c.l.b16 %v4765
  %v5237 = vunpack.c.h.b16 %v4765
  %v5238 = vunpack.c.l.b16 %v4766
  %v5239 = vunpack.c.h.b16 %v4766
  %v5240 = vunpack.c.l.b16 %v4767
  %v5241 = vunpack.c.h.b16 %v4767
  %v5242 = vunpack.c.l.b16 %v4768
  %v5243 = vunpack.c.h.b16 %v4768
  %v5244 = vunpack.c.l.b16 %v4769
  %v5245 = vunpack.c.h.b16 %v4769
  %v5246 = vunpack.c.l.b16 %v4770
  %v5247 = vunpack.c.h.b16 %v4770
  %v5248 = vunpack.c.l.b16 %v4771
  %v5249 = vunpack.c.h.b16 %v4771
  %v5250 = vunpack.c.l.b16 %v4772
  %v5251 = vunpack.c.h.b16 %v4772
  %v5252 = vunpack.c.l.b16 %v4773
  %v5253 = vunpack.c.h.b16 %v4773
  %v5254 = vunpack.c.l.b16 %v4774
  %v5255 = vunpack.c.h.b16 %v4774
  %v5256 = vunpack.c.l.b16 %v4775
  %v5257 = vunpack.c.h.b16 %v4775
  %v5258 = vunpack.c.l.b16 %v4776
  %v5259 = vunpack.c.h.b16 %v4776
  %v5260 = vunpack.c.l.b16 %v4777
  %v5261 = vunpack.c.h.b16 %v4777
  %v5262 = vunpack.c.l.b16 %v4778
  %v5263 = vunpack.c.h.b16 %v4778
  %v5264 = vunpack.c.l.b16 %v4779
  %v5265 = vunpack.c.h.b16 %v4779
  %v5266 = vunpack.c.l.b16 %v4780
  %v5267 = vunpack.c.h.b16 %v4780
  %v5268 = vunpack.c.l.b16 %v4781
  %v5269 = vunpack.c.h.b16 %v4781
  %v5270 = vunpack.c.l.b16 %v4782
  %v5271 = vunpack.c.h.b16 %v4782
  %v5272 = vunpack.c.l.b16 %v4783
  %v5273 = vunpack.c.h.b16 %v4783
  %v5274 = vunpack.c.l.b16 %v4784
  %v5275 = vunpack.c.h.b16 %v4784
  %v5276 = vunpack.c.l.b16 %v4785
  %v5277 = vunpack.c.h.b16 %v4785
  %v5278 = vunpack.c.l.b16 %v4786
  %v5279 = vunpack.c.h.b16 %v4786
  %v5280 = vunpack.c.l.b16 %v4787
  %v5281 = vunpack.c.h.b16 %v4787
  %v5282 = vunpack.c.l.b16 %v4788
  %v5283 = vunpack.c.h.b16 %v4788
  %v5284 = vunpack.c.l.b16 %v4789
  %v5285 = vunpack.c.h.b16 %v4789
  %v5286 = vunpack.c.l.b16 %v4790
  %v5287 = vunpack.c.h.b16 %v4790
  %v5288 = vunpack.c.l.b16 %v4791
  %v5289 = vunpack.c.h.b16 %v4791
  %v5290 = vunpack.c.l.b16 %v4792
  %v5291 = vunpack.c.h.b16 %v4792
  %v5292 = vunpack.c.l.b16 %v4793
  %v5293 = vunpack.c.h.b16 %v4793
  %v5294 = vunpack.c.l.b16 %v4794
  %v5295 = vunpack.c.h.b16 %v4794
  %v5296 = vunpack.c.l.b16 %v4795
  %v5297 = vunpack.c.h.b16 %v4795
  %v5298 = vunpack.c.l.b16 %v4796
  %v5299 = vunpack.c.h.b16 %v4796
  %v5300 = vunpack.c.l.b16 %v4797
  %v5301 = vunpack.c.h.b16 %v4797
  %v5302 = vunpack.c.l.b16 %v4798
  %v5303 = vunpack.c.h.b16 %v4798
  %v5304 = vunpack.c.l.b16 %v4799
  %v5305 = vunpack.c.h.b16 %v4799
  %v5306 = vunpack.c.l.b16 %v4800
  %v5307 = vunpack.c.h.b16 %v4800
  %v5308 = vunpack.c.l.b16 %v4801
  %v5309 = vunpack.c.h.b16 %v4801
  %v5310 = vunpack.c.l.b16 %v4802
  %v5311 = vunpack.c.h.b16 %v4802
  %v5312 = vunpack.c.l.b16 %v4803
  %v5313 = vunpack.c.h.b16 %v4803
  %v5314 = vunpack.c.l.b16 %v4804
  %v5315 = vunpack.c.h.b16 %v4804
  %v5316 = vunpack.c.l.b16 %v4805
  %v5317 = vunpack.c.h.b16 %v4805
  %v5318 = vunpack.c.l.b16 %v4806
  %v5319 = vunpack.c.h.b16 %v4806
  %v5320 = vunpack.c.l.b16 %v4807
  %v5321 = vunpack.c.h.b16 %v4807
  %v5322 = vunpack.c.l.b16 %v4808
  %v5323 = vunpack.c.h.b16 %v4808
  %v5324 = vunpack.c.l.b16 %v4809
  %v5325 = vunpack.c.h.b16 %v4809
  %v5326 = vunpack.c.l.b16 %v4810
  %v5327 = vunpack.c.h.b16 %v4810
  %v5328 = vunpack.c.l.b16 %v4811
  %v5329 = vunpack.c.h.b16 %v4811
  %v5330 = vunpack.c.l.b16 %v4812
  %v5331 = vunpack.c.h.b16 %v4812
  %v5332 = vunpack.c.l.b16 %v4813
  %v5333 = vunpack.c.h.b16 %v4813
  %v5334 = vunpack.c.l.b16 %v4814
  %v5335 = vunpack.c.h.b16 %v4814
  %v5336 = vunpack.c.l.b16 %v4815
  %v5337 = vunpack.c.h.b16 %v4815
  %v5338 = vunpack.c.l.b16 %v4816
  %v5339 = vunpack.c.h.b16 %v4816
  %v5340 = vunpack.c.l.b16 %v4817
  %v5341 = vunpack.c.h.b16 %v4817
  %v5342 = vunpack.c.l.b16 %v4818
  %v5343 = vunpack.c.h.b16 %v4818
  %v5344 = vunpack.c.l.b16 %v4819
  %v5345 = vunpack.c.h.b16 %v4819
  %v5346 = vunpack.c.l.b16 %v4820
  %v5347 = vunpack.c.h.b16 %v4820
  %v5348 = vunpack.c.l.b16 %v4821
  %v5349 = vunpack.c.h.b16 %v4821
  %v5350 = vunpack.c.l.b16 %v4822
  %v5351 = vunpack.c.h.b16 %v4822
  %v5352 = vunpack.c.l.b16 %v4823
  %v5353 = vunpack.c.h.b16 %v4823
  %v5354 = vunpack.c.l.b16 %v4824
  %v5355 = vunpack.c.h.b16 %v4824
  %v5356 = vunpack.c.l.b16 %v4825
  %v5357 = vunpack.c.h.b16 %v4825
  %v5358 = vunpack.c.l.b16 %v4826
  %v5359 = vunpack.c.h.b16 %v4826
  %v5360 = vunpack.c.l.b16 %v4827
  %v5361 = vunpack.c.h.b16 %v4827
  %v5362 = vunpack.c.l.b16 %v4828
  %v5363 = vunpack.c.h.b16 %v4828
  %v5364 = vunpack.c.l.b16 %v4829
  %v5365 = vunpack.c.h.b16 %v4829
  %v5366 = vunpack.c.l.b16 %v4830
  %v5367 = vunpack.c.h.b16 %v4830
  %v5368 = vunpack.c.l.b16 %v4831
  %v5369 = vunpack.c.h.b16 %v4831
  %v5370 = vunpack.c.l.b16 %v4832
  %v5371 = vunpack.c.h.b16 %v4832
  %v5372 = vunpack.c.l.b16 %v4833
  %v5373 = vunpack.c.h.b16 %v4833
  %v5374 = vunpack.c.l.b16 %v4834
  %v5375 = vunpack.c.h.b16 %v4834
  %v5376 = vunpack.c.l.b16 %v4835
  %v5377 = vunpack.c.h.b16 %v4835
  %v5378 = vunpack.c.l.b16 %v4836
  %v5379 = vunpack.c.h.b16 %v4836
  %v5380 = vunpack.c.l.b16 %v4837
  %v5381 = vunpack.c.h.b16 %v4837
  %v5382 = vunpack.c.l.b16 %v4838
  %v5383 = vunpack.c.h.b16 %v4838
  %v5384 = vunpack.c.l.b16 %v4839
  %v5385 = vunpack.c.h.b16 %v4839
  %v5386 = vunpack.c.l.b16 %v4840
  %v5387 = vunpack.c.h.b16 %v4840
  %v5388 = vunpack.c.l.b16 %v4841
  %v5389 = vunpack.c.h.b16 %v4841
  %v5390 = vunpack.c.l.b16 %v4842
  %v5391 = vunpack.c.h.b16 %v4842
  %v5392 = vunpack.c.l.b16 %v4843
  %v5393 = vunpack.c.h.b16 %v4843
  %v5394 = vunpack.c.l.b16 %v4844
  %v5395 = vunpack.c.h.b16 %v4844
  %v5396 = vunpack.c.l.b16 %v4845
  %v5397 = vunpack.c.h.b16 %v4845
  %v5398 = vunpack.c.l.b16 %v4846
  %v5399 = vunpack.c.h.b16 %v4846
  %v5400 = vunpack.c.l.b16 %v4847
  %v5401 = vunpack.c.h.b16 %v4847
  %v5402 = vunpack.c.l.b16 %v4848
  %v5403 = vunpack.c.h.b16 %v4848
  %v5404 = vunpack.c.l.b16 %v4849
  %v5405 = vunpack.c.h.b16 %v4849
  %v5406 = vunpack.c.l.b16 %v4850
  %v5407 = vunpack.c.h.b16 %v4850
  %v5408 = vunpack.c.l.b16 %v4851
  %v5409 = vunpack.c.h.b16 %v4851
  %v5410 = vunpack.c.l.b16 %v4852
  %v5411 = vunpack.c.h.b16 %v4852
  %v5412 = vunpack.c.l.b16 %v4853
  %v5413 = vunpack.c.h.b16 %v4853
  %v5414 = vunpack.c.l.b16 %v4854
  %v5415 = vunpack.c.h.b16 %v4854
  %v5416 = vunpack.c.l.b16 %v4855
  %v5417 = vunpack.c.h.b16 %v4855
  %v5418 = vunpack.c.l.b16 %v4856
  %v5419 = vunpack.c.h.b16 %v4856
  %v5420 = vunpack.c.l.b16 %v4857
  %v5421 = vunpack.c.h.b16 %v4857
  %v5422 = vunpack.c.l.b16 %v4858
  %v5423 = vunpack.c.h.b16 %v4858
  %v5424 = vunpack.c.l.b16 %v4859
  %v5425 = vunpack.c.h.b16 %v4859
  %v5426 = vunpack.c.l.b16 %v4860
  %v5427 = vunpack.c.h.b16 %v4860
  %v5428 = vunpack.c.l.b16 %v4861
  %v5429 = vunpack.c.h.b16 %v4861
  %v5430 = vunpack.c.l.b16 %v4862
  %v5431 = vunpack.c.h.b16 %v4862
  %v5432 = vunpack.c.l.b16 %v4863
  %v5433 = vunpack.c.h.b16 %v4863
  %v5434 = vunpack.c.l.b16 %v4864
  %v5435 = vunpack.c.h.b16 %v4864
  %v5436 = vunpack.c.l.b16 %v4865
  %v5437 = vunpack.c.h.b16 %v4865
  %v5438 = vunpack.c.l.b16 %v4866
  %v5439 = vunpack.c.h.b16 %v4866
  %v5440 = vunpack.c.l.b16 %v4867
  %v5441 = vunpack.c.h.b16 %v4867
  %v5442 = vunpack.c.l.b16 %v4868
  %v5443 = vunpack.c.h.b16 %v4868
  %v5444 = vunpack.c.l.b16 %v4869
  %v5445 = vunpack.c.h.b16 %v4869
  %v5446 = vpack.c.b16 %v5062, %v5062
  %v5447 = vpack.c.b16 %v5063, %v5063
  %v5448 = vpack.c.b16 %v5064, %v5064
  %v5449 = vpack.c.b16 %v5065, %v5065
  %v5450 = vpack.c.b16 %v5066, %v5066
  %v5451 = vpack.c.b16 %v5067, %v5067
  %v5452 = vpack.c.b16 %v5068, %v5068
  %v5453 = vpack.c.b16 %v5069, %v5069
  %v5454 = vpack.c.b16 %v5070, %v5070
  %v5455 = vpack.c.b16 %v5071, %v5071
  %v5456 = vpack.c.b16 %v5072, %v5072
  %v5457 = vpack.c.b16 %v5073, %v5073
  %v5458 = vpack.c.b16 %v5074, %v5074
  %v5459 = vpack.c.b16 %v5075, %v5075
  %v5460 = vpack.c.b16 %v5076, %v5076
  %v5461 = vpack.c.b16 %v5077, %v5077
  %v5462 = vpack.c.b16 %v5078, %v5078
  %v5463 = vpack.c.b16 %v5079, %v5079
  %v5464 = vpack.c.b16 %v5080, %v5080
  %v5465 = vpack.c.b16 %v5081, %v5081
  %v5466 = vpack.c.b16 %v5082, %v5082
  %v5467 = vpack.c.b16 %v5083, %v5083
  %v5468 = vpack.c.b16 %v5084, %v5084
  %v5469 = vpack.c.b16 %v5085, %v5085
  %v5470 = vpack.c.b16 %v5086, %v5086
  %v5471 = vpack.c.b16 %v5087, %v5087
  %v5472 = vpack.c.b16 %v5088, %v5088
  %v5473 = vpack.c.b16 %v5089, %v5089
  %v5474 = vpack.c.b16 %v5090, %v5090
  %v5475 = vpack.c.b16 %v5091, %v5091
  %v5476 = vpack.c.b16 %v5092, %v5092
  %v5477 = vpack.c.b16 %v5093, %v5093
  %v5478 = vpack.c.b16 %v5094, %v5094
  %v5479 = vpack.c.b16 %v5095, %v5095
  %v5480 = vpack.c.b16 %v5096, %v5096
  %v5481 = vpack.c.b16 %v5097, %v5097
  %v5482 = vpack.c.b16 %v5098, %v5098
  %v5483 = vpack.c.b16 %v5099, %v5099
  %v5484 = vpack.c.b16 %v5100, %v5100
  %v5485 = vpack.c.b16 %v5101, %v5101
  %v5486 = vpack.c.b16 %v5102, %v5102
  %v5487 = vpack.c.b16 %v5103, %v5103
  %v5488 = vpack.c.b16 %v5104, %v5104
  %v5489 = vpack.c.b16 %v5105, %v5105
  %v5490 = vpack.c.b16 %v5106, %v5106
  %v5491 = vpack.c.b16 %v5107, %v5107
  %v5492 = vpack.c.b16 %v5108, %v5108
  %v5493 = vpack.c.b16 %v5109, %v5109
  %v5494 = vpack.c.b16 %v5110, %v5110
  %v5495 = vpack.c.b16 %v5111, %v5111
  %v5496 = vpack.c.b16 %v5112, %v5112
  %v5497 = vpack.c.b16 %v5113, %v5113
  %v5498 = vpack.c.b16 %v5114, %v5114
  %v5499 = vpack.c.b16 %v5115, %v5115
  %v5500 = vpack.c.b16 %v5116, %v5116
  %v5501 = vpack.c.b16 %v5117, %v5117
  %v5502 = vpack.c.b16 %v5118, %v5118
  %v5503 = vpack.c.b16 %v5119, %v5119
  %v5504 = vpack.c.b16 %v5120, %v5120
  %v5505 = vpack.c.b16 %v5121, %v5121
  %v5506 = vpack.c.b16 %v5122, %v5122
  %v5507 = vpack.c.b16 %v5123, %v5123
  %v5508 = vpack.c.b16 %v5124, %v5124
  %v5509 = vpack.c.b16 %v5125, %v5125
  %v5510 = vpack.c.b16 %v5126, %v5126
  %v5511 = vpack.c.b16 %v5127, %v5127
  %v5512 = vpack.c.b16 %v5128, %v5128
  %v5513 = vpack.c.b16 %v5129, %v5129
  %v5514 = vpack.c.b16 %v5130, %v5130
  %v5515 = vpack.c.b16 %v5131, %v5131
  %v5516 = vpack.c.b16 %v5132, %v5132
  %v5517 = vpack.c.b16 %v5133, %v5133
  %v5518 = vpack.c.b16 %v5134, %v5134
  %v5519 = vpack.c.b16 %v5135, %v5135
  %v5520 = vpack.c.b16 %v5136, %v5136
  %v5521 = vpack.c.b16 %v5137, %v5137
  %v5522 = vpack.c.b16 %v5138, %v5138
  %v5523 = vpack.c.b16 %v5139, %v5139
  %v5524 = vpack.c.b16 %v5140, %v5140
  %v5525 = vpack.c.b16 %v5141, %v5141
  %v5526 = vpack.c.b16 %v5142, %v5142
  %v5527 = vpack.c.b16 %v5143, %v5143
  %v5528 = vpack.c.b16 %v5144, %v5144
  %v5529 = vpack.c.b16 %v5145, %v5145
  %v5530 = vpack.c.b16 %v5146, %v5146
  %v5531 = vpack.c.b16 %v5147, %v5147
  %v5532 = vpack.c.b16 %v5148, %v5148
  %v5533 = vpack.c.b16 %v5149, %v5149
  %v5534 = vpack.c.b16 %v5150, %v5150
  %v5535 = vpack.c.b16 %v5151, %v5151
  %v5536 = vpack.c.b16 %v5152, %v5152
  %v5537 = vpack.c.b16 %v5153, %v5153
  %v5538 = vpack.c.b16 %v5154, %v5154
  %v5539 = vpack.c.b16 %v5155, %v5155
  %v5540 = vpack.c.b16 %v5156, %v5156
  %v5541 = vpack.c.b16 %v5157, %v5157
  %v5542 = vpack.c.b16 %v5158, %v5158
  %v5543 = vpack.c.b16 %v5159, %v5159
  %v5544 = vpack.c.b16 %v5160, %v5160
  %v5545 = vpack.c.b16 %v5161, %v5161
  %v5546 = vpack.c.b16 %v5162, %v5162
  %v5547 = vpack.c.b16 %v5163, %v5163
  %v5548 = vpack.c.b16 %v5164, %v5164
  %v5549 = vpack.c.b16 %v5165, %v5165
  %v5550 = vpack.c.b16 %v5166, %v5166
  %v5551 = vpack.c.b16 %v5167, %v5167
  %v5552 = vpack.c.b16 %v5168, %v5168
  %v5553 = vpack.c.b16 %v5169, %v5169
  %v5554 = vpack.c.b16 %v5170, %v5170
  %v5555 = vpack.c.b16 %v5171, %v5171
  %v5556 = vpack.c.b16 %v5172, %v5172
  %v5557 = vpack.c.b16 %v5173, %v5173
  %v5558 = vpack.c.b16 %v5174, %v5174
  %v5559 = vpack.c.b16 %v5175, %v5175
  %v5560 = vpack.c.b16 %v5176, %v5176
  %v5561 = vpack.c.b16 %v5177, %v5177
  %v5562 = vpack.c.b16 %v5178, %v5178
  %v5563 = vpack.c.b16 %v5179, %v5179
  %v5564 = vpack.c.b16 %v5180, %v5180
  %v5565 = vpack.c.b16 %v5181, %v5181
  %v5566 = vpack.c.b16 %v5182, %v5182
  %v5567 = vpack.c.b16 %v5183, %v5183
  %v5568 = vpack.c.b16 %v5184, %v5184
  %v5569 = vpack.c.b16 %v5185, %v5185
  %v5570 = vpack.c.b16 %v5186, %v5186
  %v5571 = vpack.c.b16 %v5187, %v5187
  %v5572 = vpack.c.b16 %v5188, %v5188
  %v5573 = vpack.c.b16 %v5189, %v5189
  %v5574 = vpack.c.b16 %v5190, %v5190
  %v5575 = vpack.c.b16 %v5191, %v5191
  %v5576 = vpack.c.b16 %v5192, %v5192
  %v5577 = vpack.c.b16 %v5193, %v5193
  %v5578 = vpack.c.b16 %v5194, %v5194
  %v5579 = vpack.c.b16 %v5195, %v5195
  %v5580 = vpack.c.b16 %v5196, %v5196
  %v5581 = vpack.c.b16 %v5197, %v5197
  %v5582 = vpack.c.b16 %v5198, %v5198
  %v5583 = vpack.c.b16 %v5199, %v5199
  %v5584 = vpack.c.b16 %v5200, %v5200
  %v5585 = vpack.c.b16 %v5201, %v5201
  %v5586 = vpack.c.b16 %v5202, %v5202
  %v5587 = vpack.c.b16 %v5203, %v5203
  %v5588 = vpack.c.b16 %v5204, %v5204
  %v5589 = vpack.c.b16 %v5205, %v5205
  %v5590 = vpack.c.b16 %v5206, %v5206
  %v5591 = vpack.c.b16 %v5207, %v5207
  %v5592 = vpack.c.b16 %v5208, %v5208
  %v5593 = vpack.c.b16 %v5209, %v5209
  %v5594 = vpack.c.b16 %v5210, %v5210
  %v5595 = vpack.c.b16 %v5211, %v5211
  %v5596 = vpack.c.b16 %v5212, %v5212
  %v5597 = vpack.c.b16 %v5213, %v5213
  %v5598 = vpack.c.b16 %v5214, %v5214
  %v5599 = vpack.c.b16 %v5215, %v5215
  %v5600 = vpack.c.b16 %v5216, %v5216
  %v5601 = vpack.c.b16 %v5217, %v5217
  %v5602 = vpack.c.b16 %v5218, %v5218
  %v5603 = vpack.c.b16 %v5219, %v5219
  %v5604 = vpack.c.b16 %v5220, %v5220
  %v5605 = vpack.c.b16 %v5221, %v5221
  %v5606 = vpack.c.b16 %v5222, %v5222
  %v5607 = vpack.c.b16 %v5223, %v5223
  %v5608 = vpack.c.b16 %v5224, %v5224
  %v5609 = vpack.c.b16 %v5225, %v5225
  %v5610 = vpack.c.b16 %v5226, %v5226
  %v5611 = vpack.c.b16 %v5227, %v5227
  %v5612 = vpack.c.b16 %v5228, %v5228
  %v5613 = vpack.c.b16 %v5229, %v5229
  %v5614 = vpack.c.b16 %v5230, %v5230
  %v5615 = vpack.c.b16 %v5231, %v5231
  %v5616 = vpack.c.b16 %v5232, %v5232
  %v5617 = vpack.c.b16 %v5233, %v5233
  %v5618 = vpack.c.b16 %v5234, %v5234
  %v5619 = vpack.c.b16 %v5235, %v5235
  %v5620 = vpack.c.b16 %v5236, %v5236
  %v5621 = vpack.c.b16 %v5237, %v5237
  %v5622 = vpack.c.b16 %v5238, %v5238
  %v5623 = vpack.c.b16 %v5239, %v5239
  %v5624 = vpack.c.b16 %v5240, %v5240
  %v5625 = vpack.c.b16 %v5241, %v5241
  %v5626 = vpack.c.b16 %v5242, %v5242
  %v5627 = vpack.c.b16 %v5243, %v5243
  %v5628 = vpack.c.b16 %v5244, %v5244
  %v5629 = vpack.c.b16 %v5245, %v5245
  %v5630 = vpack.c.b16 %v5246, %v5246
  %v5631 = vpack.c.b16 %v5247, %v5247
  %v5632 = vpack.c.b16 %v5248, %v5248
  %v5633 = vpack.c.b16 %v5249, %v5249
  %v5634 = vpack.c.b16 %v5250, %v5250
  %v5635 = vpack.c.b16 %v5251, %v5251
  %v5636 = vpack.c.b16 %v5252, %v5252
  %v5637 = vpack.c.b16 %v5253, %v5253
  %v5638 = vpack.c.b16 %v5254, %v5254
  %v5639 = vpack.c.b16 %v5255, %v5255
  %v5640 = vpack.c.b16 %v5256, %v5256
  %v5641 = vpack.c.b16 %v5257, %v5257
  %v5642 = vpack.c.b16 %v5258, %v5258
  %v5643 = vpack.c.b16 %v5259, %v5259
  %v5644 = vpack.c.b16 %v5260, %v5260
  %v5645 = vpack.c.b16 %v5261, %v5261
  %v5646 = vpack.c.b16 %v5262, %v5262
  %v5647 = vpack.c.b16 %v5263, %v5263
  %v5648 = vpack.c.b16 %v5264, %v5264
  %v5649 = vpack.c.b16 %v5265, %v5265
  %v5650 = vpack.c.b16 %v5266, %v5266
  %v5651 = vpack.c.b16 %v5267, %v5267
  %v5652 = vpack.c.b16 %v5268, %v5268
  %v5653 = vpack.c.b16 %v5269, %v5269
  %v5654 = vpack.c.b16 %v5270, %v5270
  %v5655 = vpack.c.b16 %v5271, %v5271
  %v5656 = vpack.c.b16 %v5272, %v5272
  %v5657 = vpack.c.b16 %v5273, %v5273
  %v5658 = vpack.c.b16 %v5274, %v5274
  %v5659 = vpack.c.b16 %v5275, %v5275
  %v5660 = vpack.c.b16 %v5276, %v5276
  %v5661 = vpack.c.b16 %v5277, %v5277
  %v5662 = vpack.c.b16 %v5278, %v5278
  %v5663 = vpack.c.b16 %v5279, %v5279
  %v5664 = vpack.c.b16 %v5280, %v5280
  %v5665 = vpack.c.b16 %v5281, %v5281
  %v5666 = vpack.c.b16 %v5282, %v5282
  %v5667 = vpack.c.b16 %v5283, %v5283
  %v5668 = vpack.c.b16 %v5284, %v5284
  %v5669 = vpack.c.b16 %v5285, %v5285
  %v5670 = vpack.c.b16 %v5286, %v5286
  %v5671 = vpack.c.b16 %v5287, %v5287
  %v5672 = vpack.c.b16 %v5288, %v5288
  %v5673 = vpack.c.b16 %v5289, %v5289
  %v5674 = vpack.c.b16 %v5290, %v5290
  %v5675 = vpack.c.b16 %v5291, %v5291
  %v5676 = vpack.c.b16 %v5292, %v5292
  %v5677 = vpack.c.b16 %v5293, %v5293
  %v5678 = vpack.c.b16 %v5294, %v5294
  %v5679 = vpack.c.b16 %v5295, %v5295
  %v5680 = vpack.c.b16 %v5296, %v5296
  %v5681 = vpack.c.b16 %v5297, %v5297
  %v5682 = vpack.c.b16 %v5298, %v5298
  %v5683 = vpack.c.b16 %v5299, %v5299
  %v5684 = vpack.c.b16 %v5300, %v5300
  %v5685 = vpack.c.b16 %v5301, %v5301
  %v5686 = vpack.c.b16 %v5302, %v5302
  %v5687 = vpack.c.b16 %v5303, %v5303
  %v5688 = vpack.c.b16 %v5304, %v5304
  %v5689 = vpack.c.b16 %v5305, %v5305
  %v5690 = vpack.c.b16 %v5306, %v5306
  %v5691 = vpack.c.b16 %v5307, %v5307
  %v5692 = vpack.c.b16 %v5308, %v5308
  %v5693 = vpack.c.b16 %v5309, %v5309
  %v5694 = vpack.c.b16 %v5310, %v5310
  %v5695 = vpack.c.b16 %v5311, %v5311
  %v5696 = vpack.c.b16 %v5312, %v5312
  %v5697 = vpack.c.b16 %v5313, %v5313
  %v5698 = vpack.c.b16 %v5314, %v5314
  %v5699 = vpack.c.b16 %v5315, %v5315
  %v5700 = vpack.c.b16 %v5316, %v5316
  %v5701 = vpack.c.b16 %v5317, %v5317
  %v5702 = vpack.c.b16 %v5318, %v5318
  %v5703 = vpack.c.b16 %v5319, %v5319
  %v5704 = vpack.c.b16 %v5320, %v5320
  %v5705 = vpack.c.b16 %v5321, %v5321
  %v5706 = vpack.c.b16 %v5322, %v5322
  %v5707 = vpack.c.b16 %v5323, %v5323
  %v5708 = vpack.c.b16 %v5324, %v5324
  %v5709 = vpack.c.b16 %v5325, %v5325
  %v5710 = vpack.c.b16 %v5326, %v5326
  %v5711 = vpack.c.b16 %v5327, %v5327
  %v5712 = vpack.c.b16 %v5328, %v5328
  %v5713 = vpack.c.b16 %v5329, %v5329
  %v5714 = vpack.c.b16 %v5330, %v5330
  %v5715 = vpack.c.b16 %v5331, %v5331
  %v5716 = vpack.c.b16 %v5332, %v5332
  %v5717 = vpack.c.b16 %v5333, %v5333
  %v5718 = vpack.c.b16 %v5334, %v5334
  %v5719 = vpack.c.b16 %v5335, %v5335
  %v5720 = vpack.c.b16 %v5336, %v5336
  %v5721 = vpack.c.b16 %v5337, %v5337
  %v5722 = vpack.c.b16 %v5338, %v5338
  %v5723 = vpack.c.b16 %v5339, %v5339
  %v5724 = vpack.c.b16 %v5340, %v5340
  %v5725 = vpack.c.b16 %v5341, %v5341
  %v5726 = vpack.c.b16 %v5342, %v5342
  %v5727 = vpack.c.b16 %v5343, %v5343
  %v5728 = vpack.c.b16 %v5344, %v5344
  %v5729 = vpack.c.b16 %v5345, %v5345
  %v5730 = vpack.c.b16 %v5346, %v5346
  %v5731 = vpack.c.b16 %v5347, %v5347
  %v5732 = vpack.c.b16 %v5348, %v5348
  %v5733 = vpack.c.b16 %v5349, %v5349
  %v5734 = vpack.c.b16 %v5350, %v5350
  %v5735 = vpack.c.b16 %v5351, %v5351
  %v5736 = vpack.c.b16 %v5352, %v5352
  %v5737 = vpack.c.b16 %v5353, %v5353
  %v5738 = vpack.c.b16 %v5354, %v5354
  %v5739 = vpack.c.b16 %v5355, %v5355
  %v5740 = vpack.c.b16 %v5356, %v5356
  %v5741 = vpack.c.b16 %v5357, %v5357
  %v5742 = vpack.c.b16 %v5358, %v5358
  %v5743 = vpack.c.b16 %v5359, %v5359
  %v5744 = vpack.c.b16 %v5360, %v5360
  %v5745 = vpack.c.b16 %v5361, %v5361
  %v5746 = vpack.c.b16 %v5362, %v5362
  %v5747 = vpack.c.b16 %v5363, %v5363
  %v5748 = vpack.c.b16 %v5364, %v5364
  %v5749 = vpack.c.b16 %v5365, %v5365
  %v5750 = vpack.c.b16 %v5366, %v5366
  %v5751 = vpack.c.b16 %v5367, %v5367
  %v5752 = vpack.c.b16 %v5368, %v5368
  %v5753 = vpack.c.b16 %v5369, %v5369
  %v5754 = vpack.c.b16 %v5370, %v5370
  %v5755 = vpack.c.b16 %v5371, %v5371
  %v5756 = vpack.c.b16 %v5372, %v5372
  %v5757 = vpack.c.b16 %v5373, %v5373
  %v5758 = vpack.c.b16 %v5374, %v5374
  %v5759 = vpack.c.b16 %v5375, %v5375
  %v5760 = vpack.c.b16 %v5376, %v5376
  %v5761 = vpack.c.b16 %v5377, %v5377
  %v5762 = vpack.c.b16 %v5378, %v5378
  %v5763 = vpack.c.b16 %v5379, %v5379
  %v5764 = vpack.c.b16 %v5380, %v5380
  %v5765 = vpack.c.b16 %v5381, %v5381
  %v5766 = vpack.c.b16 %v5382, %v5382
  %v5767 = vpack.c.b16 %v5383, %v5383
  %v5768 = vpack.c.b16 %v5384, %v5384
  %v5769 = vpack.c.b16 %v5385, %v5385
  %v5770 = vpack.c.b16 %v5386, %v5386
  %v5771 = vpack.c.b16 %v5387, %v5387
  %v5772 = vpack.c.b16 %v5388, %v5388
  %v5773 = vpack.c.b16 %v5389, %v5389
  %v5774 = vpack.c.b16 %v5390, %v5390
  %v5775 = vpack.c.b16 %v5391, %v5391
  %v5776 = vpack.c.b16 %v5392, %v5392
  %v5777 = vpack.c.b16 %v5393, %v5393
  %v5778 = vpack.c.b16 %v5394, %v5394
  %v5779 = vpack.c.b16 %v5395, %v5395
  %v5780 = vpack.c.b16 %v5396, %v5396
  %v5781 = vpack.c.b16 %v5397, %v5397
  %v5782 = vpack.c.b16 %v5398, %v5398
  %v5783 = vpack.c.b16 %v5399, %v5399
  %v5784 = vpack.c.b16 %v5400, %v5400
  %v5785 = vpack.c.b16 %v5401, %v5401
  %v5786 = vpack.c.b16 %v5402, %v5402
  %v5787 = vpack.c.b16 %v5403, %v5403
  %v5788 = vpack.c.b16 %v5404, %v5404
  %v5789 = vpack.c.b16 %v5405, %v5405
  %v5790 = vpack.c.b16 %v5406, %v5406
  %v5791 = vpack.c.b16 %v5407, %v5407
  %v5792 = vpack.c.b16 %v5408, %v5408
  %v5793 = vpack.c.b16 %v5409, %v5409
  %v5794 = vpack.c.b16 %v5410, %v5410
  %v5795 = vpack.c.b16 %v5411, %v5411
  %v5796 = vpack.c.b16 %v5412, %v5412
  %v5797 = vpack.c.b16 %v5413, %v5413
  %v5798 = vpack.c.b16 %v5414, %v5414
  %v5799 = vpack.c.b16 %v5415, %v5415
  %v5800 = vpack.c.b16 %v5416, %v5416
  %v5801 = vpack.c.b16 %v5417, %v5417
  %v5802 = vpack.c.b16 %v5418, %v5418
  %v5803 = vpack.c.b16 %v5419, %v5419
  %v5804 = vpack.c.b16 %v5420, %v5420
  %v5805 = vpack.c.b16 %v5421, %v5421
  %v5806 = vpack.c.b16 %v5422, %v5422
  %v5807 = vpack.c.b16 %v5423, %v5423
  %v5808 = vpack.c.b16 %v5424, %v5424
  %v5809 = vpack.c.b16 %v5425, %v5425
  %v5810 = vpack.c.b16 %v5426, %v5426
  %v5811 = vpack.c.b16 %v5427, %v5427
  %v5812 = vpack.c.b16 %v5428, %v5428
  %v5813 = vpack.c.b16 %v5429, %v5429
  %v5814 = vpack.c.b16 %v5430, %v5430
  %v5815 = vpack.c.b16 %v5431, %v5431
  %v5816 = vpack.c.b16 %v5432, %v5432
  %v5817 = vpack.c.b16 %v5433, %v5433
  %v5818 = vpack.c.b16 %v5434, %v5434
  %v5819 = vpack.c.b16 %v5435, %v5435
  %v5820 = vpack.c.b16 %v5436, %v5436
  %v5821 = vpack.c.b16 %v5437, %v5437
  %v5822 = vpack.c.b16 %v5438, %v5438
  %v5823 = vpack.c.b16 %v5439, %v5439
  %v5824 = vpack.c.b16 %v5440, %v5440
  %v5825 = vpack.c.b16 %v5441, %v5441
  %v5826 = vpack.c.b16 %v5442, %v5442
  %v5827 = vpack.c.b16 %v5443, %v5443
  %v5828 = vpack.c.b16 %v5444, %v5444
  %v5829 = vpack.c.b16 %v5445, %v5445
  %vm6214 = vcmask 60416
  %6215 = vst.msk [vmem:[%s2] sm:$0xf] %vm6214, %v5446
  %6216 = vst.msk [vmem:[%s2 + $0x4] sm:$0xf] %vm6214, %v5447
  %6217 = vst.msk [vmem:[%s2 + $0x8] sm:$0xf] %vm6214, %v5448
  %6218 = vst.msk [vmem:[%s2 + $0xc] sm:$0xf] %vm6214, %v5449
  %6219 = vst.msk [vmem:[%s2 + $0x10] sm:$0xf] %vm6214, %v5450
  %6220 = vst.msk [vmem:[%s2 + $0x14] sm:$0xf] %vm6214, %v5451
  %6221 = vst.msk [vmem:[%s2 + $0x18] sm:$0xf] %vm6214, %v5452
  %6222 = vst.msk [vmem:[%s2 + $0x1c] sm:$0xf] %vm6214, %v5453
  %6223 = vst.msk [vmem:[%s2 + $0x20] sm:$0xf] %vm6214, %v5454
  %6224 = vst.msk [vmem:[%s2 + $0x24] sm:$0xf] %vm6214, %v5455
  %6225 = vst.msk [vmem:[%s2 + $0x28] sm:$0xf] %vm6214, %v5456
  %6226 = vst.msk [vmem:[%s2 + $0x2c] sm:$0xf] %vm6214, %v5457
  %6227 = vst.msk [vmem:[%s2 + $0x30] sm:$0xf] %vm6214, %v5458
  %6228 = vst.msk [vmem:[%s2 + $0x34] sm:$0xf] %vm6214, %v5459
  %6229 = vst.msk [vmem:[%s2 + $0x38] sm:$0xf] %vm6214, %v5460
  %6230 = vst.msk [vmem:[%s2 + $0x3c] sm:$0xf] %vm6214, %v5461
  %6231 = vst.msk [vmem:[%s2 + $0x40] sm:$0xf] %vm6214, %v5462
  %6232 = vst.msk [vmem:[%s2 + $0x44] sm:$0xf] %vm6214, %v5463
  %6233 = vst.msk [vmem:[%s2 + $0x48] sm:$0xf] %vm6214, %v5464
  %6234 = vst.msk [vmem:[%s2 + $0x4c] sm:$0xf] %vm6214, %v5465
  %6235 = vst.msk [vmem:[%s2 + $0x50] sm:$0xf] %vm6214, %v5466
  %6236 = vst.msk [vmem:[%s2 + $0x54] sm:$0xf] %vm6214, %v5467
  %6237 = vst.msk [vmem:[%s2 + $0x58] sm:$0xf] %vm6214, %v5468
  %6238 = vst.msk [vmem:[%s2 + $0x5c] sm:$0xf] %vm6214, %v5469
  %6239 = vst.msk [vmem:[%s2 + $0x60] sm:$0xf] %vm6214, %v5470
  %6240 = vst.msk [vmem:[%s2 + $0x64] sm:$0xf] %vm6214, %v5471
  %6241 = vst.msk [vmem:[%s2 + $0x68] sm:$0xf] %vm6214, %v5472
  %6242 = vst.msk [vmem:[%s2 + $0x6c] sm:$0xf] %vm6214, %v5473
  %6243 = vst.msk [vmem:[%s2 + $0x70] sm:$0xf] %vm6214, %v5474
  %6244 = vst.msk [vmem:[%s2 + $0x74] sm:$0xf] %vm6214, %v5475
  %6245 = vst.msk [vmem:[%s2 + $0x78] sm:$0xf] %vm6214, %v5476
  %6246 = vst.msk [vmem:[%s2 + $0x7c] sm:$0xf] %vm6214, %v5477
  %6247 = vst.msk [vmem:[%s2 + $0x80] sm:$0xf] %vm6214, %v5478
  %6248 = vst.msk [vmem:[%s2 + $0x84] sm:$0xf] %vm6214, %v5479
  %6249 = vst.msk [vmem:[%s2 + $0x88] sm:$0xf] %vm6214, %v5480
  %6250 = vst.msk [vmem:[%s2 + $0x8c] sm:$0xf] %vm6214, %v5481
  %6251 = vst.msk [vmem:[%s2 + $0x90] sm:$0xf] %vm6214, %v5482
  %6252 = vst.msk [vmem:[%s2 + $0x94] sm:$0xf] %vm6214, %v5483
  %6253 = vst.msk [vmem:[%s2 + $0x98] sm:$0xf] %vm6214, %v5484
  %6254 = vst.msk [vmem:[%s2 + $0x9c] sm:$0xf] %vm6214, %v5485
  %6255 = vst.msk [vmem:[%s2 + $0xa0] sm:$0xf] %vm6214, %v5486
  %6256 = vst.msk [vmem:[%s2 + $0xa4] sm:$0xf] %vm6214, %v5487
  %6257 = vst.msk [vmem:[%s2 + $0xa8] sm:$0xf] %vm6214, %v5488
  %6258 = vst.msk [vmem:[%s2 + $0xac] sm:$0xf] %vm6214, %v5489
  %6259 = vst.msk [vmem:[%s2 + $0xb0] sm:$0xf] %vm6214, %v5490
  %6260 = vst.msk [vmem:[%s2 + $0xb4] sm:$0xf] %vm6214, %v5491
  %6261 = vst.msk [vmem:[%s2 + $0xb8] sm:$0xf] %vm6214, %v5492
  %6262 = vst.msk [vmem:[%s2 + $0xbc] sm:$0xf] %vm6214, %v5493
  %6263 = vst.msk [vmem:[%s2 + $0xc0] sm:$0xf] %vm6214, %v5494
  %6264 = vst.msk [vmem:[%s2 + $0xc4] sm:$0xf] %vm6214, %v5495
  %6265 = vst.msk [vmem:[%s2 + $0xc8] sm:$0xf] %vm6214, %v5496
  %6266 = vst.msk [vmem:[%s2 + $0xcc] sm:$0xf] %vm6214, %v5497
  %6267 = vst.msk [vmem:[%s2 + $0xd0] sm:$0xf] %vm6214, %v5498
  %6268 = vst.msk [vmem:[%s2 + $0xd4] sm:$0xf] %vm6214, %v5499
  %6269 = vst.msk [vmem:[%s2 + $0xd8] sm:$0xf] %vm6214, %v5500
  %6270 = vst.msk [vmem:[%s2 + $0xdc] sm:$0xf] %vm6214, %v5501
  %6271 = vst.msk [vmem:[%s2 + $0xe0] sm:$0xf] %vm6214, %v5502
  %6272 = vst.msk [vmem:[%s2 + $0xe4] sm:$0xf] %vm6214, %v5503
  %6273 = vst.msk [vmem:[%s2 + $0xe8] sm:$0xf] %vm6214, %v5504
  %6274 = vst.msk [vmem:[%s2 + $0xec] sm:$0xf] %vm6214, %v5505
  %6275 = vst.msk [vmem:[%s2 + $0xf0] sm:$0xf] %vm6214, %v5506
  %6276 = vst.msk [vmem:[%s2 + $0xf4] sm:$0xf] %vm6214, %v5507
  %6277 = vst.msk [vmem:[%s2 + $0xf8] sm:$0xf] %vm6214, %v5508
  %6278 = vst.msk [vmem:[%s2 + $0xfc] sm:$0xf] %vm6214, %v5509
  %6279 = vst.msk [vmem:[%s2 + $0x100] sm:$0xf] %vm6214, %v5510
  %6280 = vst.msk [vmem:[%s2 + $0x104] sm:$0xf] %vm6214, %v5511
  %6281 = vst.msk [vmem:[%s2 + $0x108] sm:$0xf] %vm6214, %v5512
  %6282 = vst.msk [vmem:[%s2 + $0x10c] sm:$0xf] %vm6214, %v5513
  %6283 = vst.msk [vmem:[%s2 + $0x110] sm:$0xf] %vm6214, %v5514
  %6284 = vst.msk [vmem:[%s2 + $0x114] sm:$0xf] %vm6214, %v5515
  %6285 = vst.msk [vmem:[%s2 + $0x118] sm:$0xf] %vm6214, %v5516
  %6286 = vst.msk [vmem:[%s2 + $0x11c] sm:$0xf] %vm6214, %v5517
  %6287 = vst.msk [vmem:[%s2 + $0x120] sm:$0xf] %vm6214, %v5518
  %6288 = vst.msk [vmem:[%s2 + $0x124] sm:$0xf] %vm6214, %v5519
  %6289 = vst.msk [vmem:[%s2 + $0x128] sm:$0xf] %vm6214, %v5520
  %6290 = vst.msk [vmem:[%s2 + $0x12c] sm:$0xf] %vm6214, %v5521
  %6291 = vst.msk [vmem:[%s2 + $0x130] sm:$0xf] %vm6214, %v5522
  %6292 = vst.msk [vmem:[%s2 + $0x134] sm:$0xf] %vm6214, %v5523
  %6293 = vst.msk [vmem:[%s2 + $0x138] sm:$0xf] %vm6214, %v5524
  %6294 = vst.msk [vmem:[%s2 + $0x13c] sm:$0xf] %vm6214, %v5525
  %6295 = vst.msk [vmem:[%s2 + $0x140] sm:$0xf] %vm6214, %v5526
  %6296 = vst.msk [vmem:[%s2 + $0x144] sm:$0xf] %vm6214, %v5527
  %6297 = vst.msk [vmem:[%s2 + $0x148] sm:$0xf] %vm6214, %v5528
  %6298 = vst.msk [vmem:[%s2 + $0x14c] sm:$0xf] %vm6214, %v5529
  %6299 = vst.msk [vmem:[%s2 + $0x150] sm:$0xf] %vm6214, %v5530
  %6300 = vst.msk [vmem:[%s2 + $0x154] sm:$0xf] %vm6214, %v5531
  %6301 = vst.msk [vmem:[%s2 + $0x158] sm:$0xf] %vm6214, %v5532
  %6302 = vst.msk [vmem:[%s2 + $0x15c] sm:$0xf] %vm6214, %v5533
  %6303 = vst.msk [vmem:[%s2 + $0x160] sm:$0xf] %vm6214, %v5534
  %6304 = vst.msk [vmem:[%s2 + $0x164] sm:$0xf] %vm6214, %v5535
  %6305 = vst.msk [vmem:[%s2 + $0x168] sm:$0xf] %vm6214, %v5536
  %6306 = vst.msk [vmem:[%s2 + $0x16c] sm:$0xf] %vm6214, %v5537
  %6307 = vst.msk [vmem:[%s2 + $0x170] sm:$0xf] %vm6214, %v5538
  %6308 = vst.msk [vmem:[%s2 + $0x174] sm:$0xf] %vm6214, %v5539
  %6309 = vst.msk [vmem:[%s2 + $0x178] sm:$0xf] %vm6214, %v5540
  %6310 = vst.msk [vmem:[%s2 + $0x17c] sm:$0xf] %vm6214, %v5541
  %6311 = vst.msk [vmem:[%s2 + $0x180] sm:$0xf] %vm6214, %v5542
  %6312 = vst.msk [vmem:[%s2 + $0x184] sm:$0xf] %vm6214, %v5543
  %6313 = vst.msk [vmem:[%s2 + $0x188] sm:$0xf] %vm6214, %v5544
  %6314 = vst.msk [vmem:[%s2 + $0x18c] sm:$0xf] %vm6214, %v5545
  %6315 = vst.msk [vmem:[%s2 + $0x190] sm:$0xf] %vm6214, %v5546
  %6316 = vst.msk [vmem:[%s2 + $0x194] sm:$0xf] %vm6214, %v5547
  %6317 = vst.msk [vmem:[%s2 + $0x198] sm:$0xf] %vm6214, %v5548
  %6318 = vst.msk [vmem:[%s2 + $0x19c] sm:$0xf] %vm6214, %v5549
  %6319 = vst.msk [vmem:[%s2 + $0x1a0] sm:$0xf] %vm6214, %v5550
  %6320 = vst.msk [vmem:[%s2 + $0x1a4] sm:$0xf] %vm6214, %v5551
  %6321 = vst.msk [vmem:[%s2 + $0x1a8] sm:$0xf] %vm6214, %v5552
  %6322 = vst.msk [vmem:[%s2 + $0x1ac] sm:$0xf] %vm6214, %v5553
  %6323 = vst.msk [vmem:[%s2 + $0x1b0] sm:$0xf] %vm6214, %v5554
  %6324 = vst.msk [vmem:[%s2 + $0x1b4] sm:$0xf] %vm6214, %v5555
  %6325 = vst.msk [vmem:[%s2 + $0x1b8] sm:$0xf] %vm6214, %v5556
  %6326 = vst.msk [vmem:[%s2 + $0x1bc] sm:$0xf] %vm6214, %v5557
  %6327 = vst.msk [vmem:[%s2 + $0x1c0] sm:$0xf] %vm6214, %v5558
  %6328 = vst.msk [vmem:[%s2 + $0x1c4] sm:$0xf] %vm6214, %v5559
  %6329 = vst.msk [vmem:[%s2 + $0x1c8] sm:$0xf] %vm6214, %v5560
  %6330 = vst.msk [vmem:[%s2 + $0x1cc] sm:$0xf] %vm6214, %v5561
  %6331 = vst.msk [vmem:[%s2 + $0x1d0] sm:$0xf] %vm6214, %v5562
  %6332 = vst.msk [vmem:[%s2 + $0x1d4] sm:$0xf] %vm6214, %v5563
  %6333 = vst.msk [vmem:[%s2 + $0x1d8] sm:$0xf] %vm6214, %v5564
  %6334 = vst.msk [vmem:[%s2 + $0x1dc] sm:$0xf] %vm6214, %v5565
  %6335 = vst.msk [vmem:[%s2 + $0x1e0] sm:$0xf] %vm6214, %v5566
  %6336 = vst.msk [vmem:[%s2 + $0x1e4] sm:$0xf] %vm6214, %v5567
  %6337 = vst.msk [vmem:[%s2 + $0x1e8] sm:$0xf] %vm6214, %v5568
  %6338 = vst.msk [vmem:[%s2 + $0x1ec] sm:$0xf] %vm6214, %v5569
  %6339 = vst.msk [vmem:[%s2 + $0x1f0] sm:$0xf] %vm6214, %v5570
  %6340 = vst.msk [vmem:[%s2 + $0x1f4] sm:$0xf] %vm6214, %v5571
  %6341 = vst.msk [vmem:[%s2 + $0x1f8] sm:$0xf] %vm6214, %v5572
  %6342 = vst.msk [vmem:[%s2 + $0x1fc] sm:$0xf] %vm6214, %v5573
  %6343 = vst.msk [vmem:[%s2 + $0x200] sm:$0xf] %vm6214, %v5574
  %6344 = vst.msk [vmem:[%s2 + $0x204] sm:$0xf] %vm6214, %v5575
  %6345 = vst.msk [vmem:[%s2 + $0x208] sm:$0xf] %vm6214, %v5576
  %6346 = vst.msk [vmem:[%s2 + $0x20c] sm:$0xf] %vm6214, %v5577
  %6347 = vst.msk [vmem:[%s2 + $0x210] sm:$0xf] %vm6214, %v5578
  %6348 = vst.msk [vmem:[%s2 + $0x214] sm:$0xf] %vm6214, %v5579
  %6349 = vst.msk [vmem:[%s2 + $0x218] sm:$0xf] %vm6214, %v5580
  %6350 = vst.msk [vmem:[%s2 + $0x21c] sm:$0xf] %vm6214, %v5581
  %6351 = vst.msk [vmem:[%s2 + $0x220] sm:$0xf] %vm6214, %v5582
  %6352 = vst.msk [vmem:[%s2 + $0x224] sm:$0xf] %vm6214, %v5583
  %6353 = vst.msk [vmem:[%s2 + $0x228] sm:$0xf] %vm6214, %v5584
  %6354 = vst.msk [vmem:[%s2 + $0x22c] sm:$0xf] %vm6214, %v5585
  %6355 = vst.msk [vmem:[%s2 + $0x230] sm:$0xf] %vm6214, %v5586
  %6356 = vst.msk [vmem:[%s2 + $0x234] sm:$0xf] %vm6214, %v5587
  %6357 = vst.msk [vmem:[%s2 + $0x238] sm:$0xf] %vm6214, %v5588
  %6358 = vst.msk [vmem:[%s2 + $0x23c] sm:$0xf] %vm6214, %v5589
  %6359 = vst.msk [vmem:[%s2 + $0x240] sm:$0xf] %vm6214, %v5590
  %6360 = vst.msk [vmem:[%s2 + $0x244] sm:$0xf] %vm6214, %v5591
  %6361 = vst.msk [vmem:[%s2 + $0x248] sm:$0xf] %vm6214, %v5592
  %6362 = vst.msk [vmem:[%s2 + $0x24c] sm:$0xf] %vm6214, %v5593
  %6363 = vst.msk [vmem:[%s2 + $0x250] sm:$0xf] %vm6214, %v5594
  %6364 = vst.msk [vmem:[%s2 + $0x254] sm:$0xf] %vm6214, %v5595
  %6365 = vst.msk [vmem:[%s2 + $0x258] sm:$0xf] %vm6214, %v5596
  %6366 = vst.msk [vmem:[%s2 + $0x25c] sm:$0xf] %vm6214, %v5597
  %6367 = vst.msk [vmem:[%s2 + $0x260] sm:$0xf] %vm6214, %v5598
  %6368 = vst.msk [vmem:[%s2 + $0x264] sm:$0xf] %vm6214, %v5599
  %6369 = vst.msk [vmem:[%s2 + $0x268] sm:$0xf] %vm6214, %v5600
  %6370 = vst.msk [vmem:[%s2 + $0x26c] sm:$0xf] %vm6214, %v5601
  %6371 = vst.msk [vmem:[%s2 + $0x270] sm:$0xf] %vm6214, %v5602
  %6372 = vst.msk [vmem:[%s2 + $0x274] sm:$0xf] %vm6214, %v5603
  %6373 = vst.msk [vmem:[%s2 + $0x278] sm:$0xf] %vm6214, %v5604
  %6374 = vst.msk [vmem:[%s2 + $0x27c] sm:$0xf] %vm6214, %v5605
  %6375 = vst.msk [vmem:[%s2 + $0x280] sm:$0xf] %vm6214, %v5606
  %6376 = vst.msk [vmem:[%s2 + $0x284] sm:$0xf] %vm6214, %v5607
  %6377 = vst.msk [vmem:[%s2 + $0x288] sm:$0xf] %vm6214, %v5608
  %6378 = vst.msk [vmem:[%s2 + $0x28c] sm:$0xf] %vm6214, %v5609
  %6379 = vst.msk [vmem:[%s2 + $0x290] sm:$0xf] %vm6214, %v5610
  %6380 = vst.msk [vmem:[%s2 + $0x294] sm:$0xf] %vm6214, %v5611
  %6381 = vst.msk [vmem:[%s2 + $0x298] sm:$0xf] %vm6214, %v5612
  %6382 = vst.msk [vmem:[%s2 + $0x29c] sm:$0xf] %vm6214, %v5613
  %6383 = vst.msk [vmem:[%s2 + $0x2a0] sm:$0xf] %vm6214, %v5614
  %6384 = vst.msk [vmem:[%s2 + $0x2a4] sm:$0xf] %vm6214, %v5615
  %6385 = vst.msk [vmem:[%s2 + $0x2a8] sm:$0xf] %vm6214, %v5616
  %6386 = vst.msk [vmem:[%s2 + $0x2ac] sm:$0xf] %vm6214, %v5617
  %6387 = vst.msk [vmem:[%s2 + $0x2b0] sm:$0xf] %vm6214, %v5618
  %6388 = vst.msk [vmem:[%s2 + $0x2b4] sm:$0xf] %vm6214, %v5619
  %6389 = vst.msk [vmem:[%s2 + $0x2b8] sm:$0xf] %vm6214, %v5620
  %6390 = vst.msk [vmem:[%s2 + $0x2bc] sm:$0xf] %vm6214, %v5621
  %6391 = vst.msk [vmem:[%s2 + $0x2c0] sm:$0xf] %vm6214, %v5622
  %6392 = vst.msk [vmem:[%s2 + $0x2c4] sm:$0xf] %vm6214, %v5623
  %6393 = vst.msk [vmem:[%s2 + $0x2c8] sm:$0xf] %vm6214, %v5624
  %6394 = vst.msk [vmem:[%s2 + $0x2cc] sm:$0xf] %vm6214, %v5625
  %6395 = vst.msk [vmem:[%s2 + $0x2d0] sm:$0xf] %vm6214, %v5626
  %6396 = vst.msk [vmem:[%s2 + $0x2d4] sm:$0xf] %vm6214, %v5627
  %6397 = vst.msk [vmem:[%s2 + $0x2d8] sm:$0xf] %vm6214, %v5628
  %6398 = vst.msk [vmem:[%s2 + $0x2dc] sm:$0xf] %vm6214, %v5629
  %6399 = vst.msk [vmem:[%s2 + $0x2e0] sm:$0xf] %vm6214, %v5630
  %6400 = vst.msk [vmem:[%s2 + $0x2e4] sm:$0xf] %vm6214, %v5631
  %6401 = vst.msk [vmem:[%s2 + $0x2e8] sm:$0xf] %vm6214, %v5632
  %6402 = vst.msk [vmem:[%s2 + $0x2ec] sm:$0xf] %vm6214, %v5633
  %6403 = vst.msk [vmem:[%s2 + $0x2f0] sm:$0xf] %vm6214, %v5634
  %6404 = vst.msk [vmem:[%s2 + $0x2f4] sm:$0xf] %vm6214, %v5635
  %6405 = vst.msk [vmem:[%s2 + $0x2f8] sm:$0xf] %vm6214, %v5636
  %6406 = vst.msk [vmem:[%s2 + $0x2fc] sm:$0xf] %vm6214, %v5637
  %6407 = vst.msk [vmem:[%s2 + $0x300] sm:$0xf] %vm6214, %v5638
  %6408 = vst.msk [vmem:[%s2 + $0x304] sm:$0xf] %vm6214, %v5639
  %6409 = vst.msk [vmem:[%s2 + $0x308] sm:$0xf] %vm6214, %v5640
  %6410 = vst.msk [vmem:[%s2 + $0x30c] sm:$0xf] %vm6214, %v5641
  %6411 = vst.msk [vmem:[%s2 + $0x310] sm:$0xf] %vm6214, %v5642
  %6412 = vst.msk [vmem:[%s2 + $0x314] sm:$0xf] %vm6214, %v5643
  %6413 = vst.msk [vmem:[%s2 + $0x318] sm:$0xf] %vm6214, %v5644
  %6414 = vst.msk [vmem:[%s2 + $0x31c] sm:$0xf] %vm6214, %v5645
  %6415 = vst.msk [vmem:[%s2 + $0x320] sm:$0xf] %vm6214, %v5646
  %6416 = vst.msk [vmem:[%s2 + $0x324] sm:$0xf] %vm6214, %v5647
  %6417 = vst.msk [vmem:[%s2 + $0x328] sm:$0xf] %vm6214, %v5648
  %6418 = vst.msk [vmem:[%s2 + $0x32c] sm:$0xf] %vm6214, %v5649
  %6419 = vst.msk [vmem:[%s2 + $0x330] sm:$0xf] %vm6214, %v5650
  %6420 = vst.msk [vmem:[%s2 + $0x334] sm:$0xf] %vm6214, %v5651
  %6421 = vst.msk [vmem:[%s2 + $0x338] sm:$0xf] %vm6214, %v5652
  %6422 = vst.msk [vmem:[%s2 + $0x33c] sm:$0xf] %vm6214, %v5653
  %6423 = vst.msk [vmem:[%s2 + $0x340] sm:$0xf] %vm6214, %v5654
  %6424 = vst.msk [vmem:[%s2 + $0x344] sm:$0xf] %vm6214, %v5655
  %6425 = vst.msk [vmem:[%s2 + $0x348] sm:$0xf] %vm6214, %v5656
  %6426 = vst.msk [vmem:[%s2 + $0x34c] sm:$0xf] %vm6214, %v5657
  %6427 = vst.msk [vmem:[%s2 + $0x350] sm:$0xf] %vm6214, %v5658
  %6428 = vst.msk [vmem:[%s2 + $0x354] sm:$0xf] %vm6214, %v5659
  %6429 = vst.msk [vmem:[%s2 + $0x358] sm:$0xf] %vm6214, %v5660
  %6430 = vst.msk [vmem:[%s2 + $0x35c] sm:$0xf] %vm6214, %v5661
  %6431 = vst.msk [vmem:[%s2 + $0x360] sm:$0xf] %vm6214, %v5662
  %6432 = vst.msk [vmem:[%s2 + $0x364] sm:$0xf] %vm6214, %v5663
  %6433 = vst.msk [vmem:[%s2 + $0x368] sm:$0xf] %vm6214, %v5664
  %6434 = vst.msk [vmem:[%s2 + $0x36c] sm:$0xf] %vm6214, %v5665
  %6435 = vst.msk [vmem:[%s2 + $0x370] sm:$0xf] %vm6214, %v5666
  %6436 = vst.msk [vmem:[%s2 + $0x374] sm:$0xf] %vm6214, %v5667
  %6437 = vst.msk [vmem:[%s2 + $0x378] sm:$0xf] %vm6214, %v5668
  %6438 = vst.msk [vmem:[%s2 + $0x37c] sm:$0xf] %vm6214, %v5669
  %6439 = vst.msk [vmem:[%s2 + $0x380] sm:$0xf] %vm6214, %v5670
  %6440 = vst.msk [vmem:[%s2 + $0x384] sm:$0xf] %vm6214, %v5671
  %6441 = vst.msk [vmem:[%s2 + $0x388] sm:$0xf] %vm6214, %v5672
  %6442 = vst.msk [vmem:[%s2 + $0x38c] sm:$0xf] %vm6214, %v5673
  %6443 = vst.msk [vmem:[%s2 + $0x390] sm:$0xf] %vm6214, %v5674
  %6444 = vst.msk [vmem:[%s2 + $0x394] sm:$0xf] %vm6214, %v5675
  %6445 = vst.msk [vmem:[%s2 + $0x398] sm:$0xf] %vm6214, %v5676
  %6446 = vst.msk [vmem:[%s2 + $0x39c] sm:$0xf] %vm6214, %v5677
  %6447 = vst.msk [vmem:[%s2 + $0x3a0] sm:$0xf] %vm6214, %v5678
  %6448 = vst.msk [vmem:[%s2 + $0x3a4] sm:$0xf] %vm6214, %v5679
  %6449 = vst.msk [vmem:[%s2 + $0x3a8] sm:$0xf] %vm6214, %v5680
  %6450 = vst.msk [vmem:[%s2 + $0x3ac] sm:$0xf] %vm6214, %v5681
  %6451 = vst.msk [vmem:[%s2 + $0x3b0] sm:$0xf] %vm6214, %v5682
  %6452 = vst.msk [vmem:[%s2 + $0x3b4] sm:$0xf] %vm6214, %v5683
  %6453 = vst.msk [vmem:[%s2 + $0x3b8] sm:$0xf] %vm6214, %v5684
  %6454 = vst.msk [vmem:[%s2 + $0x3bc] sm:$0xf] %vm6214, %v5685
  %6455 = vst.msk [vmem:[%s2 + $0x3c0] sm:$0xf] %vm6214, %v5686
  %6456 = vst.msk [vmem:[%s2 + $0x3c4] sm:$0xf] %vm6214, %v5687
  %6457 = vst.msk [vmem:[%s2 + $0x3c8] sm:$0xf] %vm6214, %v5688
  %6458 = vst.msk [vmem:[%s2 + $0x3cc] sm:$0xf] %vm6214, %v5689
  %6459 = vst.msk [vmem:[%s2 + $0x3d0] sm:$0xf] %vm6214, %v5690
  %6460 = vst.msk [vmem:[%s2 + $0x3d4] sm:$0xf] %vm6214, %v5691
  %6461 = vst.msk [vmem:[%s2 + $0x3d8] sm:$0xf] %vm6214, %v5692
  %6462 = vst.msk [vmem:[%s2 + $0x3dc] sm:$0xf] %vm6214, %v5693
  %6463 = vst.msk [vmem:[%s2 + $0x3e0] sm:$0xf] %vm6214, %v5694
  %6464 = vst.msk [vmem:[%s2 + $0x3e4] sm:$0xf] %vm6214, %v5695
  %6465 = vst.msk [vmem:[%s2 + $0x3e8] sm:$0xf] %vm6214, %v5696
  %6466 = vst.msk [vmem:[%s2 + $0x3ec] sm:$0xf] %vm6214, %v5697
  %6467 = vst.msk [vmem:[%s2 + $0x3f0] sm:$0xf] %vm6214, %v5698
  %6468 = vst.msk [vmem:[%s2 + $0x3f4] sm:$0xf] %vm6214, %v5699
  %6469 = vst.msk [vmem:[%s2 + $0x3f8] sm:$0xf] %vm6214, %v5700
  %6470 = vst.msk [vmem:[%s2 + $0x3fc] sm:$0xf] %vm6214, %v5701
  %6471 = vst.msk [vmem:[%s2 + $0x400] sm:$0xf] %vm6214, %v5702
  %6472 = vst.msk [vmem:[%s2 + $0x404] sm:$0xf] %vm6214, %v5703
  %6473 = vst.msk [vmem:[%s2 + $0x408] sm:$0xf] %vm6214, %v5704
  %6474 = vst.msk [vmem:[%s2 + $0x40c] sm:$0xf] %vm6214, %v5705
  %6475 = vst.msk [vmem:[%s2 + $0x410] sm:$0xf] %vm6214, %v5706
  %6476 = vst.msk [vmem:[%s2 + $0x414] sm:$0xf] %vm6214, %v5707
  %6477 = vst.msk [vmem:[%s2 + $0x418] sm:$0xf] %vm6214, %v5708
  %6478 = vst.msk [vmem:[%s2 + $0x41c] sm:$0xf] %vm6214, %v5709
  %6479 = vst.msk [vmem:[%s2 + $0x420] sm:$0xf] %vm6214, %v5710
  %6480 = vst.msk [vmem:[%s2 + $0x424] sm:$0xf] %vm6214, %v5711
  %6481 = vst.msk [vmem:[%s2 + $0x428] sm:$0xf] %vm6214, %v5712
  %6482 = vst.msk [vmem:[%s2 + $0x42c] sm:$0xf] %vm6214, %v5713
  %6483 = vst.msk [vmem:[%s2 + $0x430] sm:$0xf] %vm6214, %v5714
  %6484 = vst.msk [vmem:[%s2 + $0x434] sm:$0xf] %vm6214, %v5715
  %6485 = vst.msk [vmem:[%s2 + $0x438] sm:$0xf] %vm6214, %v5716
  %6486 = vst.msk [vmem:[%s2 + $0x43c] sm:$0xf] %vm6214, %v5717
  %6487 = vst.msk [vmem:[%s2 + $0x440] sm:$0xf] %vm6214, %v5718
  %6488 = vst.msk [vmem:[%s2 + $0x444] sm:$0xf] %vm6214, %v5719
  %6489 = vst.msk [vmem:[%s2 + $0x448] sm:$0xf] %vm6214, %v5720
  %6490 = vst.msk [vmem:[%s2 + $0x44c] sm:$0xf] %vm6214, %v5721
  %6491 = vst.msk [vmem:[%s2 + $0x450] sm:$0xf] %vm6214, %v5722
  %6492 = vst.msk [vmem:[%s2 + $0x454] sm:$0xf] %vm6214, %v5723
  %6493 = vst.msk [vmem:[%s2 + $0x458] sm:$0xf] %vm6214, %v5724
  %6494 = vst.msk [vmem:[%s2 + $0x45c] sm:$0xf] %vm6214, %v5725
  %6495 = vst.msk [vmem:[%s2 + $0x460] sm:$0xf] %vm6214, %v5726
  %6496 = vst.msk [vmem:[%s2 + $0x464] sm:$0xf] %vm6214, %v5727
  %6497 = vst.msk [vmem:[%s2 + $0x468] sm:$0xf] %vm6214, %v5728
  %6498 = vst.msk [vmem:[%s2 + $0x46c] sm:$0xf] %vm6214, %v5729
  %6499 = vst.msk [vmem:[%s2 + $0x470] sm:$0xf] %vm6214, %v5730
  %6500 = vst.msk [vmem:[%s2 + $0x474] sm:$0xf] %vm6214, %v5731
  %6501 = vst.msk [vmem:[%s2 + $0x478] sm:$0xf] %vm6214, %v5732
  %6502 = vst.msk [vmem:[%s2 + $0x47c] sm:$0xf] %vm6214, %v5733
  %6503 = vst.msk [vmem:[%s2 + $0x480] sm:$0xf] %vm6214, %v5734
  %6504 = vst.msk [vmem:[%s2 + $0x484] sm:$0xf] %vm6214, %v5735
  %6505 = vst.msk [vmem:[%s2 + $0x488] sm:$0xf] %vm6214, %v5736
  %6506 = vst.msk [vmem:[%s2 + $0x48c] sm:$0xf] %vm6214, %v5737
  %6507 = vst.msk [vmem:[%s2 + $0x490] sm:$0xf] %vm6214, %v5738
  %6508 = vst.msk [vmem:[%s2 + $0x494] sm:$0xf] %vm6214, %v5739
  %6509 = vst.msk [vmem:[%s2 + $0x498] sm:$0xf] %vm6214, %v5740
  %6510 = vst.msk [vmem:[%s2 + $0x49c] sm:$0xf] %vm6214, %v5741
  %6511 = vst.msk [vmem:[%s2 + $0x4a0] sm:$0xf] %vm6214, %v5742
  %6512 = vst.msk [vmem:[%s2 + $0x4a4] sm:$0xf] %vm6214, %v5743
  %6513 = vst.msk [vmem:[%s2 + $0x4a8] sm:$0xf] %vm6214, %v5744
  %6514 = vst.msk [vmem:[%s2 + $0x4ac] sm:$0xf] %vm6214, %v5745
  %6515 = vst.msk [vmem:[%s2 + $0x4b0] sm:$0xf] %vm6214, %v5746
  %6516 = vst.msk [vmem:[%s2 + $0x4b4] sm:$0xf] %vm6214, %v5747
  %6517 = vst.msk [vmem:[%s2 + $0x4b8] sm:$0xf] %vm6214, %v5748
  %6518 = vst.msk [vmem:[%s2 + $0x4bc] sm:$0xf] %vm6214, %v5749
  %6519 = vst.msk [vmem:[%s2 + $0x4c0] sm:$0xf] %vm6214, %v5750
  %6520 = vst.msk [vmem:[%s2 + $0x4c4] sm:$0xf] %vm6214, %v5751
  %6521 = vst.msk [vmem:[%s2 + $0x4c8] sm:$0xf] %vm6214, %v5752
  %6522 = vst.msk [vmem:[%s2 + $0x4cc] sm:$0xf] %vm6214, %v5753
  %6523 = vst.msk [vmem:[%s2 + $0x4d0] sm:$0xf] %vm6214, %v5754
  %6524 = vst.msk [vmem:[%s2 + $0x4d4] sm:$0xf] %vm6214, %v5755
  %6525 = vst.msk [vmem:[%s2 + $0x4d8] sm:$0xf] %vm6214, %v5756
  %6526 = vst.msk [vmem:[%s2 + $0x4dc] sm:$0xf] %vm6214, %v5757
  %6527 = vst.msk [vmem:[%s2 + $0x4e0] sm:$0xf] %vm6214, %v5758
  %6528 = vst.msk [vmem:[%s2 + $0x4e4] sm:$0xf] %vm6214, %v5759
  %6529 = vst.msk [vmem:[%s2 + $0x4e8] sm:$0xf] %vm6214, %v5760
  %6530 = vst.msk [vmem:[%s2 + $0x4ec] sm:$0xf] %vm6214, %v5761
  %6531 = vst.msk [vmem:[%s2 + $0x4f0] sm:$0xf] %vm6214, %v5762
  %6532 = vst.msk [vmem:[%s2 + $0x4f4] sm:$0xf] %vm6214, %v5763
  %6533 = vst.msk [vmem:[%s2 + $0x4f8] sm:$0xf] %vm6214, %v5764
  %6534 = vst.msk [vmem:[%s2 + $0x4fc] sm:$0xf] %vm6214, %v5765
  %6535 = vst.msk [vmem:[%s2 + $0x500] sm:$0xf] %vm6214, %v5766
  %6536 = vst.msk [vmem:[%s2 + $0x504] sm:$0xf] %vm6214, %v5767
  %6537 = vst.msk [vmem:[%s2 + $0x508] sm:$0xf] %vm6214, %v5768
  %6538 = vst.msk [vmem:[%s2 + $0x50c] sm:$0xf] %vm6214, %v5769
  %6539 = vst.msk [vmem:[%s2 + $0x510] sm:$0xf] %vm6214, %v5770
  %6540 = vst.msk [vmem:[%s2 + $0x514] sm:$0xf] %vm6214, %v5771
  %6541 = vst.msk [vmem:[%s2 + $0x518] sm:$0xf] %vm6214, %v5772
  %6542 = vst.msk [vmem:[%s2 + $0x51c] sm:$0xf] %vm6214, %v5773
  %6543 = vst.msk [vmem:[%s2 + $0x520] sm:$0xf] %vm6214, %v5774
  %6544 = vst.msk [vmem:[%s2 + $0x524] sm:$0xf] %vm6214, %v5775
  %6545 = vst.msk [vmem:[%s2 + $0x528] sm:$0xf] %vm6214, %v5776
  %6546 = vst.msk [vmem:[%s2 + $0x52c] sm:$0xf] %vm6214, %v5777
  %6547 = vst.msk [vmem:[%s2 + $0x530] sm:$0xf] %vm6214, %v5778
  %6548 = vst.msk [vmem:[%s2 + $0x534] sm:$0xf] %vm6214, %v5779
  %6549 = vst.msk [vmem:[%s2 + $0x538] sm:$0xf] %vm6214, %v5780
  %6550 = vst.msk [vmem:[%s2 + $0x53c] sm:$0xf] %vm6214, %v5781
  %6551 = vst.msk [vmem:[%s2 + $0x540] sm:$0xf] %vm6214, %v5782
  %6552 = vst.msk [vmem:[%s2 + $0x544] sm:$0xf] %vm6214, %v5783
  %6553 = vst.msk [vmem:[%s2 + $0x548] sm:$0xf] %vm6214, %v5784
  %6554 = vst.msk [vmem:[%s2 + $0x54c] sm:$0xf] %vm6214, %v5785
  %6555 = vst.msk [vmem:[%s2 + $0x550] sm:$0xf] %vm6214, %v5786
  %6556 = vst.msk [vmem:[%s2 + $0x554] sm:$0xf] %vm6214, %v5787
  %6557 = vst.msk [vmem:[%s2 + $0x558] sm:$0xf] %vm6214, %v5788
  %6558 = vst.msk [vmem:[%s2 + $0x55c] sm:$0xf] %vm6214, %v5789
  %6559 = vst.msk [vmem:[%s2 + $0x560] sm:$0xf] %vm6214, %v5790
  %6560 = vst.msk [vmem:[%s2 + $0x564] sm:$0xf] %vm6214, %v5791
  %6561 = vst.msk [vmem:[%s2 + $0x568] sm:$0xf] %vm6214, %v5792
  %6562 = vst.msk [vmem:[%s2 + $0x56c] sm:$0xf] %vm6214, %v5793
  %6563 = vst.msk [vmem:[%s2 + $0x570] sm:$0xf] %vm6214, %v5794
  %6564 = vst.msk [vmem:[%s2 + $0x574] sm:$0xf] %vm6214, %v5795
  %6565 = vst.msk [vmem:[%s2 + $0x578] sm:$0xf] %vm6214, %v5796
  %6566 = vst.msk [vmem:[%s2 + $0x57c] sm:$0xf] %vm6214, %v5797
  %6567 = vst.msk [vmem:[%s2 + $0x580] sm:$0xf] %vm6214, %v5798
  %6568 = vst.msk [vmem:[%s2 + $0x584] sm:$0xf] %vm6214, %v5799
  %6569 = vst.msk [vmem:[%s2 + $0x588] sm:$0xf] %vm6214, %v5800
  %6570 = vst.msk [vmem:[%s2 + $0x58c] sm:$0xf] %vm6214, %v5801
  %6571 = vst.msk [vmem:[%s2 + $0x590] sm:$0xf] %vm6214, %v5802
  %6572 = vst.msk [vmem:[%s2 + $0x594] sm:$0xf] %vm6214, %v5803
  %6573 = vst.msk [vmem:[%s2 + $0x598] sm:$0xf] %vm6214, %v5804
  %6574 = vst.msk [vmem:[%s2 + $0x59c] sm:$0xf] %vm6214, %v5805
  %6575 = vst.msk [vmem:[%s2 + $0x5a0] sm:$0xf] %vm6214, %v5806
  %6576 = vst.msk [vmem:[%s2 + $0x5a4] sm:$0xf] %vm6214, %v5807
  %6577 = vst.msk [vmem:[%s2 + $0x5a8] sm:$0xf] %vm6214, %v5808
  %6578 = vst.msk [vmem:[%s2 + $0x5ac] sm:$0xf] %vm6214, %v5809
  %6579 = vst.msk [vmem:[%s2 + $0x5b0] sm:$0xf] %vm6214, %v5810
  %6580 = vst.msk [vmem:[%s2 + $0x5b4] sm:$0xf] %vm6214, %v5811
  %6581 = vst.msk [vmem:[%s2 + $0x5b8] sm:$0xf] %vm6214, %v5812
  %6582 = vst.msk [vmem:[%s2 + $0x5bc] sm:$0xf] %vm6214, %v5813
  %6583 = vst.msk [vmem:[%s2 + $0x5c0] sm:$0xf] %vm6214, %v5814
  %6584 = vst.msk [vmem:[%s2 + $0x5c4] sm:$0xf] %vm6214, %v5815
  %6585 = vst.msk [vmem:[%s2 + $0x5c8] sm:$0xf] %vm6214, %v5816
  %6586 = vst.msk [vmem:[%s2 + $0x5cc] sm:$0xf] %vm6214, %v5817
  %6587 = vst.msk [vmem:[%s2 + $0x5d0] sm:$0xf] %vm6214, %v5818
  %6588 = vst.msk [vmem:[%s2 + $0x5d4] sm:$0xf] %vm6214, %v5819
  %6589 = vst.msk [vmem:[%s2 + $0x5d8] sm:$0xf] %vm6214, %v5820
  %6590 = vst.msk [vmem:[%s2 + $0x5dc] sm:$0xf] %vm6214, %v5821
  %6591 = vst.msk [vmem:[%s2 + $0x5e0] sm:$0xf] %vm6214, %v5822
  %6592 = vst.msk [vmem:[%s2 + $0x5e4] sm:$0xf] %vm6214, %v5823
  %6593 = vst.msk [vmem:[%s2 + $0x5e8] sm:$0xf] %vm6214, %v5824
  %6594 = vst.msk [vmem:[%s2 + $0x5ec] sm:$0xf] %vm6214, %v5825
  %6595 = vst.msk [vmem:[%s2 + $0x5f0] sm:$0xf] %vm6214, %v5826
  %6596 = vst.msk [vmem:[%s2 + $0x5f4] sm:$0xf] %vm6214, %v5827
  %6597 = vst.msk [vmem:[%s2 + $0x5f8] sm:$0xf] %vm6214, %v5828
  %6598 = vst.msk [vmem:[%s2 + $0x5fc] sm:$0xf] %vm6214, %v5829
  // Predicated region
  $region10: #{discriminator_forward.4} parent=0 // pred_check
    _
  $region11: #{discriminator_forward.4} parent=0 // pred_check_branch
    %6600 = sbr.rel (0) target = $region13
  $region12: #{discriminator_forward.4} parent=0 // pred_region
    _
  $region13: #{discriminator_forward.4} parent=0 // pred_fallthru
    _
  // Predicated region
  $region14: #{discriminator_forward.4} parent=0 // pred_check
    _
  $region15: #{discriminator_forward.4} parent=0 // pred_check_branch
    %6602 = sbr.rel (0) target = $region17
  $region16: #{discriminator_forward.4} parent=0 // pred_region
    _
  $region17: #{discriminator_forward.4} parent=0 // pred_fallthru
    _

// kernel: discriminator_forward.5
$region0: #{discriminator_forward.5}
  #allocation0 [shape = 'u32[]', space=smem, size = 0x4, offset = 0x4, fixed_abs, tag = 'smem constant byte address 0x4 - core index']
  #allocation1 [shape = 'u32[144,128]{1,0:T(1,128)}', space=vmem, size = 0x12000, scoped, tag = 'internal scratch']
  %s0 = inlined_call_operand.vmem [shape: bf16[768,128], index: 0, kind: input, shape index: {}]
  %s1 = inlined_call_operand.vmem [shape: bf16[128,16], index: 1, kind: input, shape index: {}]
  %s2 = inlined_call_operand.vmem [shape: bf16[768,16], index: 2, kind: output, shape index: {}]
  %s3 = sld [smem:[#allocation0]]
  $region18: #{discriminator_forward.5} parent=0
    _
  %s5 = ssub.s32 1, %s3
  %s6 = scalar_select 0, %s5, %s3
  // Predicated region
  $region2: #{discriminator_forward.5} parent=0 // pred_check
    _
  $region3: #{discriminator_forward.5} parent=0 // pred_check_branch
    %8 = sbr.rel (0) target = $region5
  $region4: #{discriminator_forward.5} parent=0 // pred_region
    _
  $region5: #{discriminator_forward.5} parent=0 // pred_fallthru
    _
  // Predicated region
  $region6: #{discriminator_forward.5} parent=0 // pred_check
    _
  $region7: #{discriminator_forward.5} parent=0 // pred_check_branch
    %10 = sbr.rel (0) target = $region9
  $region8: #{discriminator_forward.5} parent=0 // pred_region
    _
  $region9: #{discriminator_forward.5} parent=0 // pred_fallthru
    _
  %v12 = vld [vmem:[%s0] sm:$0xf]
  %v13 = vld [vmem:[%s0 + $0x4] sm:$0xf]
  %v14 = vld [vmem:[%s0 + $0x8] sm:$0xf]
  %v15 = vld [vmem:[%s0 + $0xc] sm:$0xf]
  %v16 = vld [vmem:[%s0 + $0x10] sm:$0xf]
  %v17 = vld [vmem:[%s0 + $0x14] sm:$0xf]
  %v18 = vld [vmem:[%s0 + $0x18] sm:$0xf]
  %v19 = vld [vmem:[%s0 + $0x1c] sm:$0xf]
  %v20 = vld [vmem:[%s0 + $0x20] sm:$0xf]
  %v21 = vld [vmem:[%s0 + $0x24] sm:$0xf]
  %v22 = vld [vmem:[%s0 + $0x28] sm:$0xf]
  %v23 = vld [vmem:[%s0 + $0x2c] sm:$0xf]
  %v24 = vld [vmem:[%s0 + $0x30] sm:$0xf]
  %v25 = vld [vmem:[%s0 + $0x34] sm:$0xf]
  %v26 = vld [vmem:[%s0 + $0x38] sm:$0xf]
  %v27 = vld [vmem:[%s0 + $0x3c] sm:$0xf]
  %v28 = vld [vmem:[%s0 + $0x40] sm:$0xf]
  %v29 = vld [vmem:[%s0 + $0x44] sm:$0xf]
  %v30 = vld [vmem:[%s0 + $0x48] sm:$0xf]
  %v31 = vld [vmem:[%s0 + $0x4c] sm:$0xf]
  %v32 = vld [vmem:[%s0 + $0x50] sm:$0xf]
  %v33 = vld [vmem:[%s0 + $0x54] sm:$0xf]
  %v34 = vld [vmem:[%s0 + $0x58] sm:$0xf]
  %v35 = vld [vmem:[%s0 + $0x5c] sm:$0xf]
  %v36 = vld [vmem:[%s0 + $0x60] sm:$0xf]
  %v37 = vld [vmem:[%s0 + $0x64] sm:$0xf]
  %v38 = vld [vmem:[%s0 + $0x68] sm:$0xf]
  %v39 = vld [vmem:[%s0 + $0x6c] sm:$0xf]
  %v40 = vld [vmem:[%s0 + $0x70] sm:$0xf]
  %v41 = vld [vmem:[%s0 + $0x74] sm:$0xf]
  %v42 = vld [vmem:[%s0 + $0x78] sm:$0xf]
  %v43 = vld [vmem:[%s0 + $0x7c] sm:$0xf]
  %v44 = vld [vmem:[%s0 + $0x80] sm:$0xf]
  %v45 = vld [vmem:[%s0 + $0x84] sm:$0xf]
  %v46 = vld [vmem:[%s0 + $0x88] sm:$0xf]
  %v47 = vld [vmem:[%s0 + $0x8c] sm:$0xf]
  %v48 = vld [vmem:[%s0 + $0x90] sm:$0xf]
  %v49 = vld [vmem:[%s0 + $0x94] sm:$0xf]
  %v50 = vld [vmem:[%s0 + $0x98] sm:$0xf]
  %v51 = vld [vmem:[%s0 + $0x9c] sm:$0xf]
  %v52 = vld [vmem:[%s0 + $0xa0] sm:$0xf]
  %v53 = vld [vmem:[%s0 + $0xa4] sm:$0xf]
  %v54 = vld [vmem:[%s0 + $0xa8] sm:$0xf]
  %v55 = vld [vmem:[%s0 + $0xac] sm:$0xf]
  %v56 = vld [vmem:[%s0 + $0xb0] sm:$0xf]
  %v57 = vld [vmem:[%s0 + $0xb4] sm:$0xf]
  %v58 = vld [vmem:[%s0 + $0xb8] sm:$0xf]
  %v59 = vld [vmem:[%s0 + $0xbc] sm:$0xf]
  %v60 = vld [vmem:[%s0 + $0xc0] sm:$0xf]
  %v61 = vld [vmem:[%s0 + $0xc4] sm:$0xf]
  %v62 = vld [vmem:[%s0 + $0xc8] sm:$0xf]
  %v63 = vld [vmem:[%s0 + $0xcc] sm:$0xf]
  %v64 = vld [vmem:[%s0 + $0xd0] sm:$0xf]
  %v65 = vld [vmem:[%s0 + $0xd4] sm:$0xf]
  %v66 = vld [vmem:[%s0 + $0xd8] sm:$0xf]
  %v67 = vld [vmem:[%s0 + $0xdc] sm:$0xf]
  %v68 = vld [vmem:[%s0 + $0xe0] sm:$0xf]
  %v69 = vld [vmem:[%s0 + $0xe4] sm:$0xf]
  %v70 = vld [vmem:[%s0 + $0xe8] sm:$0xf]
  %v71 = vld [vmem:[%s0 + $0xec] sm:$0xf]
  %v72 = vld [vmem:[%s0 + $0xf0] sm:$0xf]
  %v73 = vld [vmem:[%s0 + $0xf4] sm:$0xf]
  %v74 = vld [vmem:[%s0 + $0xf8] sm:$0xf]
  %v75 = vld [vmem:[%s0 + $0xfc] sm:$0xf]
  %v76 = vld [vmem:[%s0 + $0x100] sm:$0xf]
  %v77 = vld [vmem:[%s0 + $0x104] sm:$0xf]
  %v78 = vld [vmem:[%s0 + $0x108] sm:$0xf]
  %v79 = vld [vmem:[%s0 + $0x10c] sm:$0xf]
  %v80 = vld [vmem:[%s0 + $0x110] sm:$0xf]
  %v81 = vld [vmem:[%s0 + $0x114] sm:$0xf]
  %v82 = vld [vmem:[%s0 + $0x118] sm:$0xf]
  %v83 = vld [vmem:[%s0 + $0x11c] sm:$0xf]
  %v84 = vld [vmem:[%s0 + $0x120] sm:$0xf]
  %v85 = vld [vmem:[%s0 + $0x124] sm:$0xf]
  %v86 = vld [vmem:[%s0 + $0x128] sm:$0xf]
  %v87 = vld [vmem:[%s0 + $0x12c] sm:$0xf]
  %v88 = vld [vmem:[%s0 + $0x130] sm:$0xf]
  %v89 = vld [vmem:[%s0 + $0x134] sm:$0xf]
  %v90 = vld [vmem:[%s0 + $0x138] sm:$0xf]
  %v91 = vld [vmem:[%s0 + $0x13c] sm:$0xf]
  %v92 = vld [vmem:[%s0 + $0x140] sm:$0xf]
  %v93 = vld [vmem:[%s0 + $0x144] sm:$0xf]
  %v94 = vld [vmem:[%s0 + $0x148] sm:$0xf]
  %v95 = vld [vmem:[%s0 + $0x14c] sm:$0xf]
  %v96 = vld [vmem:[%s0 + $0x150] sm:$0xf]
  %v97 = vld [vmem:[%s0 + $0x154] sm:$0xf]
  %v98 = vld [vmem:[%s0 + $0x158] sm:$0xf]
  %v99 = vld [vmem:[%s0 + $0x15c] sm:$0xf]
  %v100 = vld [vmem:[%s0 + $0x160] sm:$0xf]
  %v101 = vld [vmem:[%s0 + $0x164] sm:$0xf]
  %v102 = vld [vmem:[%s0 + $0x168] sm:$0xf]
  %v103 = vld [vmem:[%s0 + $0x16c] sm:$0xf]
  %v104 = vld [vmem:[%s0 + $0x170] sm:$0xf]
  %v105 = vld [vmem:[%s0 + $0x174] sm:$0xf]
  %v106 = vld [vmem:[%s0 + $0x178] sm:$0xf]
  %v107 = vld [vmem:[%s0 + $0x17c] sm:$0xf]
  %v108 = vld [vmem:[%s1] sm:$0xf]
  %v109 = vld [vmem:[%s1 + $0x4] sm:$0xf]
  %v110 = vld [vmem:[%s1 + $0x8] sm:$0xf]
  %v111 = vld [vmem:[%s1 + $0xc] sm:$0xf]
  %v112 = vld [vmem:[%s1 + $0x10] sm:$0xf]
  %v113 = vld [vmem:[%s1 + $0x14] sm:$0xf]
  %v114 = vld [vmem:[%s1 + $0x18] sm:$0xf]
  %v115 = vld [vmem:[%s1 + $0x1c] sm:$0xf]
  %v116 = vld [vmem:[%s1 + $0x20] sm:$0xf]
  %v117 = vld [vmem:[%s1 + $0x24] sm:$0xf]
  %v118 = vld [vmem:[%s1 + $0x28] sm:$0xf]
  %v119 = vld [vmem:[%s1 + $0x2c] sm:$0xf]
  %v120 = vld [vmem:[%s1 + $0x30] sm:$0xf]
  %v121 = vld [vmem:[%s1 + $0x34] sm:$0xf]
  %v122 = vld [vmem:[%s1 + $0x38] sm:$0xf]
  %v123 = vld [vmem:[%s1 + $0x3c] sm:$0xf]
  %v220 = vunpack.c.l.b16 %v12
  %v221 = vunpack.c.l.b16 %v13
  %v222 = vunpack.c.l.b16 %v14
  %v223 = vunpack.c.l.b16 %v15
  %v224 = vunpack.c.l.b16 %v16
  %v225 = vunpack.c.l.b16 %v17
  %v226 = vunpack.c.l.b16 %v18
  %v227 = vunpack.c.l.b16 %v19
  %v228 = vunpack.c.l.b16 %v20
  %v229 = vunpack.c.l.b16 %v21
  %v230 = vunpack.c.l.b16 %v22
  %v231 = vunpack.c.l.b16 %v23
  %v232 = vunpack.c.l.b16 %v24
  %v233 = vunpack.c.l.b16 %v25
  %v234 = vunpack.c.l.b16 %v26
  %v235 = vunpack.c.l.b16 %v27
  %v236 = vunpack.c.l.b16 %v28
  %v237 = vunpack.c.l.b16 %v29
  %v238 = vunpack.c.l.b16 %v30
  %v239 = vunpack.c.l.b16 %v31
  %v240 = vunpack.c.l.b16 %v32
  %v241 = vunpack.c.l.b16 %v33
  %v242 = vunpack.c.l.b16 %v34
  %v243 = vunpack.c.l.b16 %v35
  %v244 = vunpack.c.l.b16 %v36
  %v245 = vunpack.c.l.b16 %v37
  %v246 = vunpack.c.l.b16 %v38
  %v247 = vunpack.c.l.b16 %v39
  %v248 = vunpack.c.l.b16 %v40
  %v249 = vunpack.c.l.b16 %v41
  %v250 = vunpack.c.l.b16 %v42
  %v251 = vunpack.c.l.b16 %v43
  %v252 = vunpack.c.l.b16 %v44
  %v253 = vunpack.c.l.b16 %v45
  %v254 = vunpack.c.l.b16 %v46
  %v255 = vunpack.c.l.b16 %v47
  %v256 = vunpack.c.l.b16 %v48
  %v257 = vunpack.c.l.b16 %v49
  %v258 = vunpack.c.l.b16 %v50
  %v259 = vunpack.c.l.b16 %v51
  %v260 = vunpack.c.l.b16 %v52
  %v261 = vunpack.c.l.b16 %v53
  %v262 = vunpack.c.l.b16 %v54
  %v263 = vunpack.c.l.b16 %v55
  %v264 = vunpack.c.l.b16 %v56
  %v265 = vunpack.c.l.b16 %v57
  %v266 = vunpack.c.l.b16 %v58
  %v267 = vunpack.c.l.b16 %v59
  %v268 = vunpack.c.l.b16 %v60
  %v269 = vunpack.c.l.b16 %v61
  %v270 = vunpack.c.l.b16 %v62
  %v271 = vunpack.c.l.b16 %v63
  %v272 = vunpack.c.l.b16 %v64
  %v273 = vunpack.c.l.b16 %v65
  %v274 = vunpack.c.l.b16 %v66
  %v275 = vunpack.c.l.b16 %v67
  %v276 = vunpack.c.l.b16 %v68
  %v277 = vunpack.c.l.b16 %v69
  %v278 = vunpack.c.l.b16 %v70
  %v279 = vunpack.c.l.b16 %v71
  %v280 = vunpack.c.l.b16 %v72
  %v281 = vunpack.c.l.b16 %v73
  %v282 = vunpack.c.l.b16 %v74
  %v283 = vunpack.c.l.b16 %v75
  %v284 = vunpack.c.l.b16 %v76
  %v285 = vunpack.c.l.b16 %v77
  %v286 = vunpack.c.l.b16 %v78
  %v287 = vunpack.c.l.b16 %v79
  %v288 = vunpack.c.l.b16 %v80
  %v289 = vunpack.c.l.b16 %v81
  %v290 = vunpack.c.l.b16 %v82
  %v291 = vunpack.c.l.b16 %v83
  %v292 = vunpack.c.l.b16 %v84
  %v293 = vunpack.c.l.b16 %v85
  %v294 = vunpack.c.l.b16 %v86
  %v295 = vunpack.c.l.b16 %v87
  %v296 = vunpack.c.l.b16 %v88
  %v297 = vunpack.c.l.b16 %v89
  %v298 = vunpack.c.l.b16 %v90
  %v299 = vunpack.c.l.b16 %v91
  %v300 = vunpack.c.l.b16 %v92
  %v301 = vunpack.c.l.b16 %v93
  %v302 = vunpack.c.l.b16 %v94
  %v303 = vunpack.c.l.b16 %v95
  %v304 = vunpack.c.l.b16 %v96
  %v305 = vunpack.c.l.b16 %v97
  %v306 = vunpack.c.l.b16 %v98
  %v307 = vunpack.c.l.b16 %v99
  %v308 = vunpack.c.l.b16 %v100
  %v309 = vunpack.c.l.b16 %v101
  %v310 = vunpack.c.l.b16 %v102
  %v311 = vunpack.c.l.b16 %v103
  %v312 = vunpack.c.l.b16 %v104
  %v313 = vunpack.c.l.b16 %v105
  %v314 = vunpack.c.l.b16 %v106
  %v315 = vunpack.c.l.b16 %v107
  %v316 = vpack.c.b16 %v221, %v220
  %v317 = vpack.c.b16 %v223, %v222
  %v318 = vpack.c.b16 %v225, %v224
  %v319 = vpack.c.b16 %v227, %v226
  %v320 = vpack.c.b16 %v229, %v228
  %v321 = vpack.c.b16 %v231, %v230
  %v322 = vpack.c.b16 %v233, %v232
  %v323 = vpack.c.b16 %v235, %v234
  %v324 = vpack.c.b16 %v237, %v236
  %v325 = vpack.c.b16 %v239, %v238
  %v326 = vpack.c.b16 %v241, %v240
  %v327 = vpack.c.b16 %v243, %v242
  %v328 = vpack.c.b16 %v245, %v244
  %v329 = vpack.c.b16 %v247, %v246
  %v330 = vpack.c.b16 %v249, %v248
  %v331 = vpack.c.b16 %v251, %v250
  %v332 = vpack.c.b16 %v253, %v252
  %v333 = vpack.c.b16 %v255, %v254
  %v334 = vpack.c.b16 %v257, %v256
  %v335 = vpack.c.b16 %v259, %v258
  %v336 = vpack.c.b16 %v261, %v260
  %v337 = vpack.c.b16 %v263, %v262
  %v338 = vpack.c.b16 %v265, %v264
  %v339 = vpack.c.b16 %v267, %v266
  %v340 = vpack.c.b16 %v269, %v268
  %v341 = vpack.c.b16 %v271, %v270
  %v342 = vpack.c.b16 %v273, %v272
  %v343 = vpack.c.b16 %v275, %v274
  %v344 = vpack.c.b16 %v277, %v276
  %v345 = vpack.c.b16 %v279, %v278
  %v346 = vpack.c.b16 %v281, %v280
  %v347 = vpack.c.b16 %v283, %v282
  %v348 = vpack.c.b16 %v285, %v284
  %v349 = vpack.c.b16 %v287, %v286
  %v350 = vpack.c.b16 %v289, %v288
  %v351 = vpack.c.b16 %v291, %v290
  %v352 = vpack.c.b16 %v293, %v292
  %v353 = vpack.c.b16 %v295, %v294
  %v354 = vpack.c.b16 %v297, %v296
  %v355 = vpack.c.b16 %v299, %v298
  %v356 = vpack.c.b16 %v301, %v300
  %v357 = vpack.c.b16 %v303, %v302
  %v358 = vpack.c.b16 %v305, %v304
  %v359 = vpack.c.b16 %v307, %v306
  %v360 = vpack.c.b16 %v309, %v308
  %v361 = vpack.c.b16 %v311, %v310
  %v362 = vpack.c.b16 %v313, %v312
  %v363 = vpack.c.b16 %v315, %v314
  %v428 = vunpack.c.l.b16 %v108
  %v429 = vunpack.c.l.b16 %v109
  %v430 = vunpack.c.l.b16 %v110
  %v431 = vunpack.c.l.b16 %v111
  %v432 = vunpack.c.l.b16 %v112
  %v433 = vunpack.c.l.b16 %v113
  %v434 = vunpack.c.l.b16 %v114
  %v435 = vunpack.c.l.b16 %v115
  %v436 = vunpack.c.l.b16 %v116
  %v437 = vunpack.c.l.b16 %v117
  %v438 = vunpack.c.l.b16 %v118
  %v439 = vunpack.c.l.b16 %v119
  %v440 = vunpack.c.l.b16 %v120
  %v441 = vunpack.c.l.b16 %v121
  %v442 = vunpack.c.l.b16 %v122
  %v443 = vunpack.c.l.b16 %v123
  %v444 = vpack.c.b16 %v429, %v428
  %v445 = vpack.c.b16 %v431, %v430
  %v446 = vpack.c.b16 %v433, %v432
  %v447 = vpack.c.b16 %v435, %v434
  %v448 = vpack.c.b16 %v437, %v436
  %v449 = vpack.c.b16 %v439, %v438
  %v450 = vpack.c.b16 %v441, %v440
  %v451 = vpack.c.b16 %v443, %v442
  %460 = vmatprep.subr.bf16.mxu0 0
  %461 = vmatpush1.bf16.msra.mxu0 %v444
  %462 = vmatprep.subr.bf16.mxu0 0
  %463 = vmatpush1.bf16.msra.mxu0 %v445
  %464 = vmatprep.subr.bf16.mxu0 0
  %465 = vmatpush1.bf16.msra.mxu0 %v446
  %466 = vmatprep.subr.bf16.mxu0 0
  %467 = vmatpush1.bf16.msra.mxu0 %v447
  %468 = vmatprep.subr.bf16.mxu0 0
  %469 = vmatpush1.bf16.msra.mxu0 %v448
  %470 = vmatprep.subr.bf16.mxu0 0
  %471 = vmatpush1.bf16.msra.mxu0 %v449
  %472 = vmatprep.subr.bf16.mxu0 0
  %473 = vmatpush1.bf16.msra.mxu0 %v450
  %474 = vmatprep.subr.bf16.mxu0 0
  %475 = vmatpush1.bf16.msra.mxu0 %v451
  %476 = vmatprep.subr.bf16.mxu0 0
  %477 = vmatpush1.bf16.msra.mxu0 0
  %478 = vmatprep.subr.bf16.mxu0 0
  %479 = vmatpush1.bf16.msra.mxu0 0
  %480 = vmatprep.subr.bf16.mxu0 0
  %481 = vmatpush1.bf16.msra.mxu0 0
  %482 = vmatprep.subr.bf16.mxu0 0
  %483 = vmatpush1.bf16.msra.mxu0 0
  %484 = vmatprep.subr.bf16.mxu0 0
  %485 = vmatpush1.bf16.msra.mxu0 0
  %486 = vmatprep.subr.bf16.mxu0 0
  %487 = vmatpush1.bf16.msra.mxu0 0
  %488 = vmatprep.subr.bf16.mxu0 0
  %489 = vmatpush1.bf16.msra.mxu0 0
  %490 = vmatprep.subr.bf16.mxu0 0
  %491 = vmatpush1.bf16.msra.mxu0 0
  %492 = vmatprep.mubr.bf16.mxu0 0
  %493 = vmatmul.mubr.bf16.gmra.mrb[0].mxu0 %v316
  %v494 = vpop.f32.mrb[0].mxu0
  %v495 = vadd.f32 0.0, %v494
  %v496 = vpop.f32.mrb[0].mxu0
  %v497 = vpop.f32.mrb[0].mxu0
  %v498 = vadd.f32 0.0, %v497
  %v499 = vpop.f32.mrb[0].mxu0
  %500 = vmatprep.mubr.bf16.mxu0 0
  %501 = vmatmul.mubr.bf16.gmra.mrb[0].mxu0 %v317
  %v502 = vpop.f32.mrb[0].mxu0
  %v503 = vadd.f32 0.0, %v502
  %v504 = vpop.f32.mrb[0].mxu0
  %v505 = vpop.f32.mrb[0].mxu0
  %v506 = vadd.f32 0.0, %v505
  %v507 = vpop.f32.mrb[0].mxu0
  %508 = vmatprep.mubr.bf16.mxu0 0
  %509 = vmatmul.mubr.bf16.gmra.mrb[0].mxu0 %v318
  %v510 = vpop.f32.mrb[0].mxu0
  %v511 = vadd.f32 0.0, %v510
  %v512 = vpop.f32.mrb[0].mxu0
  %v513 = vpop.f32.mrb[0].mxu0
  %v514 = vadd.f32 0.0, %v513
  %v515 = vpop.f32.mrb[0].mxu0
  %516 = vmatprep.mubr.bf16.mxu0 0
  %517 = vmatmul.mubr.bf16.gmra.mrb[0].mxu0 %v319
  %v518 = vpop.f32.mrb[0].mxu0
  %v519 = vadd.f32 0.0, %v518
  %v520 = vpop.f32.mrb[0].mxu0
  %v521 = vpop.f32.mrb[0].mxu0
  %v522 = vadd.f32 0.0, %v521
  %v523 = vpop.f32.mrb[0].mxu0
  %524 = vmatprep.mubr.bf16.mxu0 0
  %525 = vmatmul.mubr.bf16.gmra.mrb[0].mxu0 %v320
  %v526 = vpop.f32.mrb[0].mxu0
  %v527 = vadd.f32 0.0, %v526
  %v528 = vpop.f32.mrb[0].mxu0
  %v529 = vpop.f32.mrb[0].mxu0
  %v530 = vadd.f32 0.0, %v529
  %v531 = vpop.f32.mrb[0].mxu0
  %532 = vmatprep.mubr.bf16.mxu0 0
  %533 = vmatmul.mubr.bf16.gmra.mrb[0].mxu0 %v321
  %v534 = vpop.f32.mrb[0].mxu0
  %v535 = vadd.f32 0.0, %v534
  %v536 = vpop.f32.mrb[0].mxu0
  %v537 = vpop.f32.mrb[0].mxu0
  %v538 = vadd.f32 0.0, %v537
  %v539 = vpop.f32.mrb[0].mxu0
  %540 = vmatprep.mubr.bf16.mxu0 0
  %541 = vmatmul.mubr.bf16.gmra.mrb[0].mxu0 %v322
  %v542 = vpop.f32.mrb[0].mxu0
  %v543 = vadd.f32 0.0, %v542
  %v544 = vpop.f32.mrb[0].mxu0
  %v545 = vpop.f32.mrb[0].mxu0
  %v546 = vadd.f32 0.0, %v545
  %v547 = vpop.f32.mrb[0].mxu0
  %548 = vmatprep.mubr.bf16.mxu0 0
  %549 = vmatmul.mubr.bf16.gmra.mrb[0].mxu0 %v323
  %v550 = vpop.f32.mrb[0].mxu0
  %v551 = vadd.f32 0.0, %v550
  %v552 = vpop.f32.mrb[0].mxu0
  %v553 = vpop.f32.mrb[0].mxu0
  %v554 = vadd.f32 0.0, %v553
  %v555 = vpop.f32.mrb[0].mxu0
  %556 = vmatprep.mubr.bf16.mxu0 0
  %557 = vmatmul.mubr.bf16.gmra.mrb[0].mxu0 %v324
  %v558 = vpop.f32.mrb[0].mxu0
  %v559 = vadd.f32 0.0, %v558
  %v560 = vpop.f32.mrb[0].mxu0
  %v561 = vpop.f32.mrb[0].mxu0
  %v562 = vadd.f32 0.0, %v561
  %v563 = vpop.f32.mrb[0].mxu0
  %564 = vmatprep.mubr.bf16.mxu0 0
  %565 = vmatmul.mubr.bf16.gmra.mrb[0].mxu0 %v325
  %v566 = vpop.f32.mrb[0].mxu0
  %v567 = vadd.f32 0.0, %v566
  %v568 = vpop.f32.mrb[0].mxu0
  %v569 = vpop.f32.mrb[0].mxu0
  %v570 = vadd.f32 0.0, %v569
  %v571 = vpop.f32.mrb[0].mxu0
  %572 = vmatprep.mubr.bf16.mxu0 0
  %573 = vmatmul.mubr.bf16.gmra.mrb[0].mxu0 %v326
  %v574 = vpop.f32.mrb[0].mxu0
  %v575 = vadd.f32 0.0, %v574
  %v576 = vpop.f32.mrb[0].mxu0
  %v577 = vpop.f32.mrb[0].mxu0
  %v578 = vadd.f32 0.0, %v577
  %v579 = vpop.f32.mrb[0].mxu0
  %580 = vmatprep.mubr.bf16.mxu0 0
  %581 = vmatmul.mubr.bf16.gmra.mrb[0].mxu0 %v327
  %v582 = vpop.f32.mrb[0].mxu0
  %v583 = vadd.f32 0.0, %v582
  %v584 = vpop.f32.mrb[0].mxu0
  %v585 = vpop.f32.mrb[0].mxu0
  %v586 = vadd.f32 0.0, %v585
  %v587 = vpop.f32.mrb[0].mxu0
  %588 = vmatprep.mubr.bf16.mxu0 0
  %589 = vmatmul.mubr.bf16.gmra.mrb[0].mxu0 %v328
  %v590 = vpop.f32.mrb[0].mxu0
  %v591 = vadd.f32 0.0, %v590
  %v592 = vpop.f32.mrb[0].mxu0
  %v593 = vpop.f32.mrb[0].mxu0
  %v594 = vadd.f32 0.0, %v593
  %v595 = vpop.f32.mrb[0].mxu0
  %596 = vmatprep.mubr.bf16.mxu0 0
  %597 = vmatmul.mubr.bf16.gmra.mrb[0].mxu0 %v329
  %v598 = vpop.f32.mrb[0].mxu0
  %v599 = vadd.f32 0.0, %v598
  %v600 = vpop.f32.mrb[0].mxu0
  %v601 = vpop.f32.mrb[0].mxu0
  %v602 = vadd.f32 0.0, %v601
  %v603 = vpop.f32.mrb[0].mxu0
  %604 = vmatprep.mubr.bf16.mxu0 0
  %605 = vmatmul.mubr.bf16.gmra.mrb[0].mxu0 %v330
  %v606 = vpop.f32.mrb[0].mxu0
  %v607 = vadd.f32 0.0, %v606
  %v608 = vpop.f32.mrb[0].mxu0
  %v609 = vpop.f32.mrb[0].mxu0
  %v610 = vadd.f32 0.0, %v609
  %v611 = vpop.f32.mrb[0].mxu0
  %612 = vmatprep.mubr.bf16.mxu0 0
  %613 = vmatmul.mubr.bf16.gmra.mrb[0].mxu0 %v331
  %v614 = vpop.f32.mrb[0].mxu0
  %v615 = vadd.f32 0.0, %v614
  %v616 = vpop.f32.mrb[0].mxu0
  %v617 = vpop.f32.mrb[0].mxu0
  %v618 = vadd.f32 0.0, %v617
  %v619 = vpop.f32.mrb[0].mxu0
  %620 = vmatprep.mubr.bf16.mxu0 0
  %621 = vmatmul.mubr.bf16.gmra.mrb[0].mxu0 %v332
  %v622 = vpop.f32.mrb[0].mxu0
  %v623 = vadd.f32 0.0, %v622
  %v624 = vpop.f32.mrb[0].mxu0
  %v625 = vpop.f32.mrb[0].mxu0
  %v626 = vadd.f32 0.0, %v625
  %v627 = vpop.f32.mrb[0].mxu0
  %628 = vmatprep.mubr.bf16.mxu0 0
  %629 = vmatmul.mubr.bf16.gmra.mrb[0].mxu0 %v333
  %v630 = vpop.f32.mrb[0].mxu0
  %v631 = vadd.f32 0.0, %v630
  %v632 = vpop.f32.mrb[0].mxu0
  %v633 = vpop.f32.mrb[0].mxu0
  %v634 = vadd.f32 0.0, %v633
  %v635 = vpop.f32.mrb[0].mxu0
  %636 = vmatprep.mubr.bf16.mxu0 0
  %637 = vmatmul.mubr.bf16.gmra.mrb[0].mxu0 %v334
  %v638 = vpop.f32.mrb[0].mxu0
  %v639 = vadd.f32 0.0, %v638
  %v640 = vpop.f32.mrb[0].mxu0
  %v641 = vpop.f32.mrb[0].mxu0
  %v642 = vadd.f32 0.0, %v641
  %v643 = vpop.f32.mrb[0].mxu0
  %644 = vmatprep.mubr.bf16.mxu0 0
  %645 = vmatmul.mubr.bf16.gmra.mrb[0].mxu0 %v335
  %v646 = vpop.f32.mrb[0].mxu0
  %v647 = vadd.f32 0.0, %v646
  %v648 = vpop.f32.mrb[0].mxu0
  %v649 = vpop.f32.mrb[0].mxu0
  %v650 = vadd.f32 0.0, %v649
  %v651 = vpop.f32.mrb[0].mxu0
  %652 = vmatprep.mubr.bf16.mxu0 0
  %653 = vmatmul.mubr.bf16.gmra.mrb[0].mxu0 %v336
  %v654 = vpop.f32.mrb[0].mxu0
  %v655 = vadd.f32 0.0, %v654
  %v656 = vpop.f32.mrb[0].mxu0
  %v657 = vpop.f32.mrb[0].mxu0
  %v658 = vadd.f32 0.0, %v657
  %v659 = vpop.f32.mrb[0].mxu0
  %660 = vmatprep.mubr.bf16.mxu0 0
  %661 = vmatmul.mubr.bf16.gmra.mrb[0].mxu0 %v337
  %v662 = vpop.f32.mrb[0].mxu0
  %v663 = vadd.f32 0.0, %v662
  %v664 = vpop.f32.mrb[0].mxu0
  %v665 = vpop.f32.mrb[0].mxu0
  %v666 = vadd.f32 0.0, %v665
  %v667 = vpop.f32.mrb[0].mxu0
  %668 = vmatprep.mubr.bf16.mxu0 0
  %669 = vmatmul.mubr.bf16.gmra.mrb[0].mxu0 %v338
  %v670 = vpop.f32.mrb[0].mxu0
  %v671 = vadd.f32 0.0, %v670
  %v672 = vpop.f32.mrb[0].mxu0
  %v673 = vpop.f32.mrb[0].mxu0
  %v674 = vadd.f32 0.0, %v673
  %v675 = vpop.f32.mrb[0].mxu0
  %676 = vmatprep.mubr.bf16.mxu0 0
  %677 = vmatmul.mubr.bf16.gmra.mrb[0].mxu0 %v339
  %v678 = vpop.f32.mrb[0].mxu0
  %v679 = vadd.f32 0.0, %v678
  %v680 = vpop.f32.mrb[0].mxu0
  %v681 = vpop.f32.mrb[0].mxu0
  %v682 = vadd.f32 0.0, %v681
  %v683 = vpop.f32.mrb[0].mxu0
  %684 = vmatprep.mubr.bf16.mxu0 0
  %685 = vmatmul.mubr.bf16.gmra.mrb[0].mxu0 %v340
  %v686 = vpop.f32.mrb[0].mxu0
  %v687 = vadd.f32 0.0, %v686
  %v688 = vpop.f32.mrb[0].mxu0
  %v689 = vpop.f32.mrb[0].mxu0
  %v690 = vadd.f32 0.0, %v689
  %v691 = vpop.f32.mrb[0].mxu0
  %692 = vmatprep.mubr.bf16.mxu0 0
  %693 = vmatmul.mubr.bf16.gmra.mrb[0].mxu0 %v341
  %v694 = vpop.f32.mrb[0].mxu0
  %v695 = vadd.f32 0.0, %v694
  %v696 = vpop.f32.mrb[0].mxu0
  %v697 = vpop.f32.mrb[0].mxu0
  %v698 = vadd.f32 0.0, %v697
  %v699 = vpop.f32.mrb[0].mxu0
  %700 = vmatprep.mubr.bf16.mxu0 0
  %701 = vmatmul.mubr.bf16.gmra.mrb[0].mxu0 %v342
  %v702 = vpop.f32.mrb[0].mxu0
  %v703 = vadd.f32 0.0, %v702
  %v704 = vpop.f32.mrb[0].mxu0
  %v705 = vpop.f32.mrb[0].mxu0
  %v706 = vadd.f32 0.0, %v705
  %v707 = vpop.f32.mrb[0].mxu0
  %708 = vmatprep.mubr.bf16.mxu0 0
  %709 = vmatmul.mubr.bf16.gmra.mrb[0].mxu0 %v343
  %v710 = vpop.f32.mrb[0].mxu0
  %v711 = vadd.f32 0.0, %v710
  %v712 = vpop.f32.mrb[0].mxu0
  %v713 = vpop.f32.mrb[0].mxu0
  %v714 = vadd.f32 0.0, %v713
  %v715 = vpop.f32.mrb[0].mxu0
  %716 = vmatprep.mubr.bf16.mxu0 0
  %717 = vmatmul.mubr.bf16.gmra.mrb[0].mxu0 %v344
  %v718 = vpop.f32.mrb[0].mxu0
  %v719 = vadd.f32 0.0, %v718
  %v720 = vpop.f32.mrb[0].mxu0
  %v721 = vpop.f32.mrb[0].mxu0
  %v722 = vadd.f32 0.0, %v721
  %v723 = vpop.f32.mrb[0].mxu0
  %724 = vmatprep.mubr.bf16.mxu0 0
  %725 = vmatmul.mubr.bf16.gmra.mrb[0].mxu0 %v345
  %v726 = vpop.f32.mrb[0].mxu0
  %v727 = vadd.f32 0.0, %v726
  %v728 = vpop.f32.mrb[0].mxu0
  %v729 = vpop.f32.mrb[0].mxu0
  %v730 = vadd.f32 0.0, %v729
  %v731 = vpop.f32.mrb[0].mxu0
  %732 = vmatprep.mubr.bf16.mxu0 0
  %733 = vmatmul.mubr.bf16.gmra.mrb[0].mxu0 %v346
  %v734 = vpop.f32.mrb[0].mxu0
  %v735 = vadd.f32 0.0, %v734
  %v736 = vpop.f32.mrb[0].mxu0
  %v737 = vpop.f32.mrb[0].mxu0
  %v738 = vadd.f32 0.0, %v737
  %v739 = vpop.f32.mrb[0].mxu0
  %740 = vmatprep.mubr.bf16.mxu0 0
  %741 = vmatmul.mubr.bf16.gmra.mrb[0].mxu0 %v347
  %v742 = vpop.f32.mrb[0].mxu0
  %v743 = vadd.f32 0.0, %v742
  %v744 = vpop.f32.mrb[0].mxu0
  %v745 = vpop.f32.mrb[0].mxu0
  %v746 = vadd.f32 0.0, %v745
  %v747 = vpop.f32.mrb[0].mxu0
  %748 = vmatprep.mubr.bf16.mxu0 0
  %749 = vmatmul.mubr.bf16.gmra.mrb[0].mxu0 %v348
  %v750 = vpop.f32.mrb[0].mxu0
  %v751 = vadd.f32 0.0, %v750
  %v752 = vpop.f32.mrb[0].mxu0
  %v753 = vpop.f32.mrb[0].mxu0
  %v754 = vadd.f32 0.0, %v753
  %v755 = vpop.f32.mrb[0].mxu0
  %756 = vmatprep.mubr.bf16.mxu0 0
  %757 = vmatmul.mubr.bf16.gmra.mrb[0].mxu0 %v349
  %v758 = vpop.f32.mrb[0].mxu0
  %v759 = vadd.f32 0.0, %v758
  %v760 = vpop.f32.mrb[0].mxu0
  %v761 = vpop.f32.mrb[0].mxu0
  %v762 = vadd.f32 0.0, %v761
  %v763 = vpop.f32.mrb[0].mxu0
  %764 = vmatprep.mubr.bf16.mxu0 0
  %765 = vmatmul.mubr.bf16.gmra.mrb[0].mxu0 %v350
  %v766 = vpop.f32.mrb[0].mxu0
  %v767 = vadd.f32 0.0, %v766
  %v768 = vpop.f32.mrb[0].mxu0
  %v769 = vpop.f32.mrb[0].mxu0
  %v770 = vadd.f32 0.0, %v769
  %v771 = vpop.f32.mrb[0].mxu0
  %772 = vmatprep.mubr.bf16.mxu0 0
  %773 = vmatmul.mubr.bf16.gmra.mrb[0].mxu0 %v351
  %v774 = vpop.f32.mrb[0].mxu0
  %v775 = vadd.f32 0.0, %v774
  %v776 = vpop.f32.mrb[0].mxu0
  %v777 = vpop.f32.mrb[0].mxu0
  %v778 = vadd.f32 0.0, %v777
  %v779 = vpop.f32.mrb[0].mxu0
  %780 = vmatprep.mubr.bf16.mxu0 0
  %781 = vmatmul.mubr.bf16.gmra.mrb[0].mxu0 %v352
  %v782 = vpop.f32.mrb[0].mxu0
  %v783 = vadd.f32 0.0, %v782
  %v784 = vpop.f32.mrb[0].mxu0
  %v785 = vpop.f32.mrb[0].mxu0
  %v786 = vadd.f32 0.0, %v785
  %v787 = vpop.f32.mrb[0].mxu0
  %788 = vmatprep.mubr.bf16.mxu0 0
  %789 = vmatmul.mubr.bf16.gmra.mrb[0].mxu0 %v353
  %v790 = vpop.f32.mrb[0].mxu0
  %v791 = vadd.f32 0.0, %v790
  %v792 = vpop.f32.mrb[0].mxu0
  %v793 = vpop.f32.mrb[0].mxu0
  %v794 = vadd.f32 0.0, %v793
  %v795 = vpop.f32.mrb[0].mxu0
  %796 = vmatprep.mubr.bf16.mxu0 0
  %797 = vmatmul.mubr.bf16.gmra.mrb[0].mxu0 %v354
  %v798 = vpop.f32.mrb[0].mxu0
  %v799 = vadd.f32 0.0, %v798
  %v800 = vpop.f32.mrb[0].mxu0
  %v801 = vpop.f32.mrb[0].mxu0
  %v802 = vadd.f32 0.0, %v801
  %v803 = vpop.f32.mrb[0].mxu0
  %804 = vmatprep.mubr.bf16.mxu0 0
  %805 = vmatmul.mubr.bf16.gmra.mrb[0].mxu0 %v355
  %v806 = vpop.f32.mrb[0].mxu0
  %v807 = vadd.f32 0.0, %v806
  %v808 = vpop.f32.mrb[0].mxu0
  %v809 = vpop.f32.mrb[0].mxu0
  %v810 = vadd.f32 0.0, %v809
  %v811 = vpop.f32.mrb[0].mxu0
  %812 = vmatprep.mubr.bf16.mxu0 0
  %813 = vmatmul.mubr.bf16.gmra.mrb[0].mxu0 %v356
  %v814 = vpop.f32.mrb[0].mxu0
  %v815 = vadd.f32 0.0, %v814
  %v816 = vpop.f32.mrb[0].mxu0
  %v817 = vpop.f32.mrb[0].mxu0
  %v818 = vadd.f32 0.0, %v817
  %v819 = vpop.f32.mrb[0].mxu0
  %820 = vmatprep.mubr.bf16.mxu0 0
  %821 = vmatmul.mubr.bf16.gmra.mrb[0].mxu0 %v357
  %v822 = vpop.f32.mrb[0].mxu0
  %v823 = vadd.f32 0.0, %v822
  %v824 = vpop.f32.mrb[0].mxu0
  %v825 = vpop.f32.mrb[0].mxu0
  %v826 = vadd.f32 0.0, %v825
  %v827 = vpop.f32.mrb[0].mxu0
  %828 = vmatprep.mubr.bf16.mxu0 0
  %829 = vmatmul.mubr.bf16.gmra.mrb[0].mxu0 %v358
  %v830 = vpop.f32.mrb[0].mxu0
  %v831 = vadd.f32 0.0, %v830
  %v832 = vpop.f32.mrb[0].mxu0
  %v833 = vpop.f32.mrb[0].mxu0
  %v834 = vadd.f32 0.0, %v833
  %v835 = vpop.f32.mrb[0].mxu0
  %836 = vmatprep.mubr.bf16.mxu0 0
  %837 = vmatmul.mubr.bf16.gmra.mrb[0].mxu0 %v359
  %v838 = vpop.f32.mrb[0].mxu0
  %v839 = vadd.f32 0.0, %v838
  %v840 = vpop.f32.mrb[0].mxu0
  %v841 = vpop.f32.mrb[0].mxu0
  %v842 = vadd.f32 0.0, %v841
  %v843 = vpop.f32.mrb[0].mxu0
  %844 = vmatprep.mubr.bf16.mxu0 0
  %845 = vmatmul.mubr.bf16.gmra.mrb[0].mxu0 %v360
  %v846 = vpop.f32.mrb[0].mxu0
  %v847 = vadd.f32 0.0, %v846
  %v848 = vpop.f32.mrb[0].mxu0
  %v849 = vpop.f32.mrb[0].mxu0
  %v850 = vadd.f32 0.0, %v849
  %v851 = vpop.f32.mrb[0].mxu0
  %852 = vmatprep.mubr.bf16.mxu0 0
  %853 = vmatmul.mubr.bf16.gmra.mrb[0].mxu0 %v361
  %v854 = vpop.f32.mrb[0].mxu0
  %v855 = vadd.f32 0.0, %v854
  %v856 = vpop.f32.mrb[0].mxu0
  %v857 = vpop.f32.mrb[0].mxu0
  %v858 = vadd.f32 0.0, %v857
  %v859 = vpop.f32.mrb[0].mxu0
  %860 = vmatprep.mubr.bf16.mxu0 0
  %861 = vmatmul.mubr.bf16.gmra.mrb[0].mxu0 %v362
  %v862 = vpop.f32.mrb[0].mxu0
  %v863 = vadd.f32 0.0, %v862
  %v864 = vpop.f32.mrb[0].mxu0
  %v865 = vpop.f32.mrb[0].mxu0
  %v866 = vadd.f32 0.0, %v865
  %v867 = vpop.f32.mrb[0].mxu0
  %868 = vmatprep.mubr.bf16.mxu0 0
  %869 = vmatmul.mubr.bf16.gmra.mrb[0].mxu0 %v363
  %v870 = vpop.f32.mrb[0].mxu0
  %v871 = vadd.f32 0.0, %v870
  %v872 = vpop.f32.mrb[0].mxu0
  %v873 = vpop.f32.mrb[0].mxu0
  %v874 = vadd.f32 0.0, %v873
  %v875 = vpop.f32.mrb[0].mxu0
  %876 = vdwg.mxu0
  %vm877 = vcmask 130048
  %v878 = vsel %vm877, %v495, 0.0
  %v879 = vsel %vm877, %v498, 0.0
  %v880 = vadd.f32 %v878, %v879
  %v881 = vsel %vm877, %v503, 0.0
  %v882 = vadd.f32 %v880, %v881
  %v883 = vsel %vm877, %v506, 0.0
  %v884 = vadd.f32 %v882, %v883
  %v885 = vsel %vm877, %v511, 0.0
  %v886 = vadd.f32 %v884, %v885
  %v887 = vsel %vm877, %v514, 0.0
  %v888 = vadd.f32 %v886, %v887
  %v889 = vsel %vm877, %v519, 0.0
  %v890 = vadd.f32 %v888, %v889
  %v891 = vsel %vm877, %v522, 0.0
  %v892 = vadd.f32 %v890, %v891
  %v893 = vsel %vm877, %v527, 0.0
  %v894 = vadd.f32 %v892, %v893
  %v895 = vsel %vm877, %v530, 0.0
  %v896 = vadd.f32 %v894, %v895
  %v897 = vsel %vm877, %v535, 0.0
  %v898 = vadd.f32 %v896, %v897
  %v899 = vsel %vm877, %v538, 0.0
  %v900 = vadd.f32 %v898, %v899
  %v901 = vsel %vm877, %v543, 0.0
  %v902 = vadd.f32 %v900, %v901
  %v903 = vsel %vm877, %v546, 0.0
  %v904 = vadd.f32 %v902, %v903
  %v905 = vsel %vm877, %v551, 0.0
  %v906 = vadd.f32 %v904, %v905
  %v907 = vsel %vm877, %v554, 0.0
  %v908 = vadd.f32 %v906, %v907
  %v909 = vsel %vm877, %v559, 0.0
  %v910 = vadd.f32 %v908, %v909
  %v911 = vsel %vm877, %v562, 0.0
  %v912 = vadd.f32 %v910, %v911
  %v913 = vsel %vm877, %v567, 0.0
  %v914 = vadd.f32 %v912, %v913
  %v915 = vsel %vm877, %v570, 0.0
  %v916 = vadd.f32 %v914, %v915
  %v917 = vsel %vm877, %v575, 0.0
  %v918 = vadd.f32 %v916, %v917
  %v919 = vsel %vm877, %v578, 0.0
  %v920 = vadd.f32 %v918, %v919
  %v921 = vsel %vm877, %v583, 0.0
  %v922 = vadd.f32 %v920, %v921
  %v923 = vsel %vm877, %v586, 0.0
  %v924 = vadd.f32 %v922, %v923
  %v925 = vsel %vm877, %v591, 0.0
  %v926 = vadd.f32 %v924, %v925
  %v927 = vsel %vm877, %v594, 0.0
  %v928 = vadd.f32 %v926, %v927
  %v929 = vsel %vm877, %v599, 0.0
  %v930 = vadd.f32 %v928, %v929
  %v931 = vsel %vm877, %v602, 0.0
  %v932 = vadd.f32 %v930, %v931
  %v933 = vsel %vm877, %v607, 0.0
  %v934 = vadd.f32 %v932, %v933
  %v935 = vsel %vm877, %v610, 0.0
  %v936 = vadd.f32 %v934, %v935
  %v937 = vsel %vm877, %v615, 0.0
  %v938 = vadd.f32 %v936, %v937
  %v939 = vsel %vm877, %v618, 0.0
  %v940 = vadd.f32 %v938, %v939
  %v941 = vsel %vm877, %v623, 0.0
  %v942 = vadd.f32 %v940, %v941
  %v943 = vsel %vm877, %v626, 0.0
  %v944 = vadd.f32 %v942, %v943
  %v945 = vsel %vm877, %v631, 0.0
  %v946 = vadd.f32 %v944, %v945
  %v947 = vsel %vm877, %v634, 0.0
  %v948 = vadd.f32 %v946, %v947
  %v949 = vsel %vm877, %v639, 0.0
  %v950 = vadd.f32 %v948, %v949
  %v951 = vsel %vm877, %v642, 0.0
  %v952 = vadd.f32 %v950, %v951
  %v953 = vsel %vm877, %v647, 0.0
  %v954 = vadd.f32 %v952, %v953
  %v955 = vsel %vm877, %v650, 0.0
  %v956 = vadd.f32 %v954, %v955
  %v957 = vsel %vm877, %v655, 0.0
  %v958 = vadd.f32 %v956, %v957
  %v959 = vsel %vm877, %v658, 0.0
  %v960 = vadd.f32 %v958, %v959
  %v961 = vsel %vm877, %v663, 0.0
  %v962 = vadd.f32 %v960, %v961
  %v963 = vsel %vm877, %v666, 0.0
  %v964 = vadd.f32 %v962, %v963
  %v965 = vsel %vm877, %v671, 0.0
  %v966 = vadd.f32 %v964, %v965
  %v967 = vsel %vm877, %v674, 0.0
  %v968 = vadd.f32 %v966, %v967
  %v969 = vsel %vm877, %v679, 0.0
  %v970 = vadd.f32 %v968, %v969
  %v971 = vsel %vm877, %v682, 0.0
  %v972 = vadd.f32 %v970, %v971
  %v973 = vsel %vm877, %v687, 0.0
  %v974 = vadd.f32 %v972, %v973
  %v975 = vsel %vm877, %v690, 0.0
  %v976 = vadd.f32 %v974, %v975
  %v977 = vsel %vm877, %v695, 0.0
  %v978 = vadd.f32 %v976, %v977
  %v979 = vsel %vm877, %v698, 0.0
  %v980 = vadd.f32 %v978, %v979
  %v981 = vsel %vm877, %v703, 0.0
  %v982 = vadd.f32 %v980, %v981
  %v983 = vsel %vm877, %v706, 0.0
  %v984 = vadd.f32 %v982, %v983
  %v985 = vsel %vm877, %v711, 0.0
  %v986 = vadd.f32 %v984, %v985
  %v987 = vsel %vm877, %v714, 0.0
  %v988 = vadd.f32 %v986, %v987
  %v989 = vsel %vm877, %v719, 0.0
  %v990 = vadd.f32 %v988, %v989
  %v991 = vsel %vm877, %v722, 0.0
  %v992 = vadd.f32 %v990, %v991
  %v993 = vsel %vm877, %v727, 0.0
  %v994 = vadd.f32 %v992, %v993
  %v995 = vsel %vm877, %v730, 0.0
  %v996 = vadd.f32 %v994, %v995
  %v997 = vsel %vm877, %v735, 0.0
  %v998 = vadd.f32 %v996, %v997
  %v999 = vsel %vm877, %v738, 0.0
  %v1000 = vadd.f32 %v998, %v999
  %v1001 = vsel %vm877, %v743, 0.0
  %v1002 = vadd.f32 %v1000, %v1001
  %v1003 = vsel %vm877, %v746, 0.0
  %v1004 = vadd.f32 %v1002, %v1003
  %v1005 = vsel %vm877, %v751, 0.0
  %v1006 = vadd.f32 %v1004, %v1005
  %v1007 = vsel %vm877, %v754, 0.0
  %v1008 = vadd.f32 %v1006, %v1007
  %v1009 = vsel %vm877, %v759, 0.0
  %v1010 = vadd.f32 %v1008, %v1009
  %v1011 = vsel %vm877, %v762, 0.0
  %v1012 = vadd.f32 %v1010, %v1011
  %v1013 = vsel %vm877, %v767, 0.0
  %v1014 = vadd.f32 %v1012, %v1013
  %v1015 = vsel %vm877, %v770, 0.0
  %v1016 = vadd.f32 %v1014, %v1015
  %v1017 = vsel %vm877, %v775, 0.0
  %v1018 = vadd.f32 %v1016, %v1017
  %v1019 = vsel %vm877, %v778, 0.0
  %v1020 = vadd.f32 %v1018, %v1019
  %v1021 = vsel %vm877, %v783, 0.0
  %v1022 = vadd.f32 %v1020, %v1021
  %v1023 = vsel %vm877, %v786, 0.0
  %v1024 = vadd.f32 %v1022, %v1023
  %v1025 = vsel %vm877, %v791, 0.0
  %v1026 = vadd.f32 %v1024, %v1025
  %v1027 = vsel %vm877, %v794, 0.0
  %v1028 = vadd.f32 %v1026, %v1027
  %v1029 = vsel %vm877, %v799, 0.0
  %v1030 = vadd.f32 %v1028, %v1029
  %v1031 = vsel %vm877, %v802, 0.0
  %v1032 = vadd.f32 %v1030, %v1031
  %v1033 = vsel %vm877, %v807, 0.0
  %v1034 = vadd.f32 %v1032, %v1033
  %v1035 = vsel %vm877, %v810, 0.0
  %v1036 = vadd.f32 %v1034, %v1035
  %v1037 = vsel %vm877, %v815, 0.0
  %v1038 = vadd.f32 %v1036, %v1037
  %v1039 = vsel %vm877, %v818, 0.0
  %v1040 = vadd.f32 %v1038, %v1039
  %v1041 = vsel %vm877, %v823, 0.0
  %v1042 = vadd.f32 %v1040, %v1041
  %v1043 = vsel %vm877, %v826, 0.0
  %v1044 = vadd.f32 %v1042, %v1043
  %v1045 = vsel %vm877, %v831, 0.0
  %v1046 = vadd.f32 %v1044, %v1045
  %v1047 = vsel %vm877, %v834, 0.0
  %v1048 = vadd.f32 %v1046, %v1047
  %v1049 = vsel %vm877, %v839, 0.0
  %v1050 = vadd.f32 %v1048, %v1049
  %v1051 = vsel %vm877, %v842, 0.0
  %v1052 = vadd.f32 %v1050, %v1051
  %v1053 = vsel %vm877, %v847, 0.0
  %v1054 = vadd.f32 %v1052, %v1053
  %v1055 = vsel %vm877, %v850, 0.0
  %v1056 = vadd.f32 %v1054, %v1055
  %v1057 = vsel %vm877, %v855, 0.0
  %v1058 = vadd.f32 %v1056, %v1057
  %v1059 = vsel %vm877, %v858, 0.0
  %v1060 = vadd.f32 %v1058, %v1059
  %v1061 = vsel %vm877, %v863, 0.0
  %v1062 = vadd.f32 %v1060, %v1061
  %v1063 = vsel %vm877, %v866, 0.0
  %v1064 = vadd.f32 %v1062, %v1063
  %v1065 = vsel %vm877, %v871, 0.0
  %v1066 = vadd.f32 %v1064, %v1065
  %v1067 = vsel %vm877, %v874, 0.0
  %v1068 = vadd.f32 %v1066, %v1067
  %v1069 = vrot.slane %v1068, 4
  %v1070 = vadd.f32 %v1068, %v1069
  %v1071 = vrot.slane %v1070, 2
  %v1072 = vadd.f32 %v1070, %v1071
  %v1073 = vrot.slane %v1072, 1
  %v1074 = vadd.f32 %v1072, %v1073
  %v1075 = vrcp.pop 768.0
  %v1076 = vmul.f32 %v1074, %v1075
  %v1077 = vsub.f32 %v495, %v1076
  %v1078 = vsub.f32 %v498, %v1076
  %v1079 = vsub.f32 %v503, %v1076
  %v1080 = vsub.f32 %v506, %v1076
  %v1081 = vsub.f32 %v511, %v1076
  %v1082 = vsub.f32 %v514, %v1076
  %v1083 = vsub.f32 %v519, %v1076
  %v1084 = vsub.f32 %v522, %v1076
  %v1085 = vsub.f32 %v527, %v1076
  %v1086 = vsub.f32 %v530, %v1076
  %v1087 = vsub.f32 %v535, %v1076
  %v1088 = vsub.f32 %v538, %v1076
  %v1089 = vsub.f32 %v543, %v1076
  %v1090 = vsub.f32 %v546, %v1076
  %v1091 = vsub.f32 %v551, %v1076
  %v1092 = vsub.f32 %v554, %v1076
  %v1093 = vsub.f32 %v559, %v1076
  %v1094 = vsub.f32 %v562, %v1076
  %v1095 = vsub.f32 %v567, %v1076
  %v1096 = vsub.f32 %v570, %v1076
  %v1097 = vsub.f32 %v575, %v1076
  %v1098 = vsub.f32 %v578, %v1076
  %v1099 = vsub.f32 %v583, %v1076
  %v1100 = vsub.f32 %v586, %v1076
  %v1101 = vsub.f32 %v591, %v1076
  %v1102 = vsub.f32 %v594, %v1076
  %v1103 = vsub.f32 %v599, %v1076
  %v1104 = vsub.f32 %v602, %v1076
  %v1105 = vsub.f32 %v607, %v1076
  %v1106 = vsub.f32 %v610, %v1076
  %v1107 = vsub.f32 %v615, %v1076
  %v1108 = vsub.f32 %v618, %v1076
  %v1109 = vsub.f32 %v623, %v1076
  %v1110 = vsub.f32 %v626, %v1076
  %v1111 = vsub.f32 %v631, %v1076
  %v1112 = vsub.f32 %v634, %v1076
  %v1113 = vsub.f32 %v639, %v1076
  %v1114 = vsub.f32 %v642, %v1076
  %v1115 = vsub.f32 %v647, %v1076
  %v1116 = vsub.f32 %v650, %v1076
  %v1117 = vsub.f32 %v655, %v1076
  %v1118 = vsub.f32 %v658, %v1076
  %v1119 = vsub.f32 %v663, %v1076
  %v1120 = vsub.f32 %v666, %v1076
  %v1121 = vsub.f32 %v671, %v1076
  %v1122 = vsub.f32 %v674, %v1076
  %v1123 = vsub.f32 %v679, %v1076
  %v1124 = vsub.f32 %v682, %v1076
  %v1125 = vsub.f32 %v687, %v1076
  %v1126 = vsub.f32 %v690, %v1076
  %v1127 = vsub.f32 %v695, %v1076
  %v1128 = vsub.f32 %v698, %v1076
  %v1129 = vsub.f32 %v703, %v1076
  %v1130 = vsub.f32 %v706, %v1076
  %v1131 = vsub.f32 %v711, %v1076
  %v1132 = vsub.f32 %v714, %v1076
  %v1133 = vsub.f32 %v719, %v1076
  %v1134 = vsub.f32 %v722, %v1076
  %v1135 = vsub.f32 %v727, %v1076
  %v1136 = vsub.f32 %v730, %v1076
  %v1137 = vsub.f32 %v735, %v1076
  %v1138 = vsub.f32 %v738, %v1076
  %v1139 = vsub.f32 %v743, %v1076
  %v1140 = vsub.f32 %v746, %v1076
  %v1141 = vsub.f32 %v751, %v1076
  %v1142 = vsub.f32 %v754, %v1076
  %v1143 = vsub.f32 %v759, %v1076
  %v1144 = vsub.f32 %v762, %v1076
  %v1145 = vsub.f32 %v767, %v1076
  %v1146 = vsub.f32 %v770, %v1076
  %v1147 = vsub.f32 %v775, %v1076
  %v1148 = vsub.f32 %v778, %v1076
  %v1149 = vsub.f32 %v783, %v1076
  %v1150 = vsub.f32 %v786, %v1076
  %v1151 = vsub.f32 %v791, %v1076
  %v1152 = vsub.f32 %v794, %v1076
  %v1153 = vsub.f32 %v799, %v1076
  %v1154 = vsub.f32 %v802, %v1076
  %v1155 = vsub.f32 %v807, %v1076
  %v1156 = vsub.f32 %v810, %v1076
  %v1157 = vsub.f32 %v815, %v1076
  %v1158 = vsub.f32 %v818, %v1076
  %v1159 = vsub.f32 %v823, %v1076
  %v1160 = vsub.f32 %v826, %v1076
  %v1161 = vsub.f32 %v831, %v1076
  %v1162 = vsub.f32 %v834, %v1076
  %v1163 = vsub.f32 %v839, %v1076
  %v1164 = vsub.f32 %v842, %v1076
  %v1165 = vsub.f32 %v847, %v1076
  %v1166 = vsub.f32 %v850, %v1076
  %v1167 = vsub.f32 %v855, %v1076
  %v1168 = vsub.f32 %v858, %v1076
  %v1169 = vsub.f32 %v863, %v1076
  %v1170 = vsub.f32 %v866, %v1076
  %v1171 = vsub.f32 %v871, %v1076
  %v1172 = vsub.f32 %v874, %v1076
  %v1173 = vmul.f32 %v1077, %v1077
  %v1174 = vmul.f32 %v1078, %v1078
  %v1175 = vmul.f32 %v1079, %v1079
  %v1176 = vmul.f32 %v1080, %v1080
  %v1177 = vmul.f32 %v1081, %v1081
  %v1178 = vmul.f32 %v1082, %v1082
  %v1179 = vmul.f32 %v1083, %v1083
  %v1180 = vmul.f32 %v1084, %v1084
  %v1181 = vmul.f32 %v1085, %v1085
  %v1182 = vmul.f32 %v1086, %v1086
  %v1183 = vmul.f32 %v1087, %v1087
  %v1184 = vmul.f32 %v1088, %v1088
  %v1185 = vmul.f32 %v1089, %v1089
  %v1186 = vmul.f32 %v1090, %v1090
  %v1187 = vmul.f32 %v1091, %v1091
  %v1188 = vmul.f32 %v1092, %v1092
  %v1189 = vmul.f32 %v1093, %v1093
  %v1190 = vmul.f32 %v1094, %v1094
  %v1191 = vmul.f32 %v1095, %v1095
  %v1192 = vmul.f32 %v1096, %v1096
  %v1193 = vmul.f32 %v1097, %v1097
  %v1194 = vmul.f32 %v1098, %v1098
  %v1195 = vmul.f32 %v1099, %v1099
  %v1196 = vmul.f32 %v1100, %v1100
  %v1197 = vmul.f32 %v1101, %v1101
  %v1198 = vmul.f32 %v1102, %v1102
  %v1199 = vmul.f32 %v1103, %v1103
  %v1200 = vmul.f32 %v1104, %v1104
  %v1201 = vmul.f32 %v1105, %v1105
  %v1202 = vmul.f32 %v1106, %v1106
  %v1203 = vmul.f32 %v1107, %v1107
  %v1204 = vmul.f32 %v1108, %v1108
  %v1205 = vmul.f32 %v1109, %v1109
  %v1206 = vmul.f32 %v1110, %v1110
  %v1207 = vmul.f32 %v1111, %v1111
  %v1208 = vmul.f32 %v1112, %v1112
  %v1209 = vmul.f32 %v1113, %v1113
  %v1210 = vmul.f32 %v1114, %v1114
  %v1211 = vmul.f32 %v1115, %v1115
  %v1212 = vmul.f32 %v1116, %v1116
  %v1213 = vmul.f32 %v1117, %v1117
  %v1214 = vmul.f32 %v1118, %v1118
  %v1215 = vmul.f32 %v1119, %v1119
  %v1216 = vmul.f32 %v1120, %v1120
  %v1217 = vmul.f32 %v1121, %v1121
  %v1218 = vmul.f32 %v1122, %v1122
  %v1219 = vmul.f32 %v1123, %v1123
  %v1220 = vmul.f32 %v1124, %v1124
  %v1221 = vmul.f32 %v1125, %v1125
  %v1222 = vmul.f32 %v1126, %v1126
  %v1223 = vmul.f32 %v1127, %v1127
  %v1224 = vmul.f32 %v1128, %v1128
  %v1225 = vmul.f32 %v1129, %v1129
  %v1226 = vmul.f32 %v1130, %v1130
  %v1227 = vmul.f32 %v1131, %v1131
  %v1228 = vmul.f32 %v1132, %v1132
  %v1229 = vmul.f32 %v1133, %v1133
  %v1230 = vmul.f32 %v1134, %v1134
  %v1231 = vmul.f32 %v1135, %v1135
  %v1232 = vmul.f32 %v1136, %v1136
  %v1233 = vmul.f32 %v1137, %v1137
  %v1234 = vmul.f32 %v1138, %v1138
  %v1235 = vmul.f32 %v1139, %v1139
  %v1236 = vmul.f32 %v1140, %v1140
  %v1237 = vmul.f32 %v1141, %v1141
  %v1238 = vmul.f32 %v1142, %v1142
  %v1239 = vmul.f32 %v1143, %v1143
  %v1240 = vmul.f32 %v1144, %v1144
  %v1241 = vmul.f32 %v1145, %v1145
  %v1242 = vmul.f32 %v1146, %v1146
  %v1243 = vmul.f32 %v1147, %v1147
  %v1244 = vmul.f32 %v1148, %v1148
  %v1245 = vmul.f32 %v1149, %v1149
  %v1246 = vmul.f32 %v1150, %v1150
  %v1247 = vmul.f32 %v1151, %v1151
  %v1248 = vmul.f32 %v1152, %v1152
  %v1249 = vmul.f32 %v1153, %v1153
  %v1250 = vmul.f32 %v1154, %v1154
  %v1251 = vmul.f32 %v1155, %v1155
  %v1252 = vmul.f32 %v1156, %v1156
  %v1253 = vmul.f32 %v1157, %v1157
  %v1254 = vmul.f32 %v1158, %v1158
  %v1255 = vmul.f32 %v1159, %v1159
  %v1256 = vmul.f32 %v1160, %v1160
  %v1257 = vmul.f32 %v1161, %v1161
  %v1258 = vmul.f32 %v1162, %v1162
  %v1259 = vmul.f32 %v1163, %v1163
  %v1260 = vmul.f32 %v1164, %v1164
  %v1261 = vmul.f32 %v1165, %v1165
  %v1262 = vmul.f32 %v1166, %v1166
  %v1263 = vmul.f32 %v1167, %v1167
  %v1264 = vmul.f32 %v1168, %v1168
  %v1265 = vmul.f32 %v1169, %v1169
  %v1266 = vmul.f32 %v1170, %v1170
  %v1267 = vmul.f32 %v1171, %v1171
  %v1268 = vmul.f32 %v1172, %v1172
  %v1269 = vsel %vm877, %v1173, 0.0
  %v1270 = vsel %vm877, %v1174, 0.0
  %v1271 = vadd.f32 %v1269, %v1270
  %v1272 = vsel %vm877, %v1175, 0.0
  %v1273 = vadd.f32 %v1271, %v1272
  %v1274 = vsel %vm877, %v1176, 0.0
  %v1275 = vadd.f32 %v1273, %v1274
  %v1276 = vsel %vm877, %v1177, 0.0
  %v1277 = vadd.f32 %v1275, %v1276
  %v1278 = vsel %vm877, %v1178, 0.0
  %v1279 = vadd.f32 %v1277, %v1278
  %v1280 = vsel %vm877, %v1179, 0.0
  %v1281 = vadd.f32 %v1279, %v1280
  %v1282 = vsel %vm877, %v1180, 0.0
  %v1283 = vadd.f32 %v1281, %v1282
  %v1284 = vsel %vm877, %v1181, 0.0
  %v1285 = vadd.f32 %v1283, %v1284
  %v1286 = vsel %vm877, %v1182, 0.0
  %v1287 = vadd.f32 %v1285, %v1286
  %v1288 = vsel %vm877, %v1183, 0.0
  %v1289 = vadd.f32 %v1287, %v1288
  %v1290 = vsel %vm877, %v1184, 0.0
  %v1291 = vadd.f32 %v1289, %v1290
  %v1292 = vsel %vm877, %v1185, 0.0
  %v1293 = vadd.f32 %v1291, %v1292
  %v1294 = vsel %vm877, %v1186, 0.0
  %v1295 = vadd.f32 %v1293, %v1294
  %v1296 = vsel %vm877, %v1187, 0.0
  %v1297 = vadd.f32 %v1295, %v1296
  %v1298 = vsel %vm877, %v1188, 0.0
  %v1299 = vadd.f32 %v1297, %v1298
  %v1300 = vsel %vm877, %v1189, 0.0
  %v1301 = vadd.f32 %v1299, %v1300
  %v1302 = vsel %vm877, %v1190, 0.0
  %v1303 = vadd.f32 %v1301, %v1302
  %v1304 = vsel %vm877, %v1191, 0.0
  %v1305 = vadd.f32 %v1303, %v1304
  %v1306 = vsel %vm877, %v1192, 0.0
  %v1307 = vadd.f32 %v1305, %v1306
  %v1308 = vsel %vm877, %v1193, 0.0
  %v1309 = vadd.f32 %v1307, %v1308
  %v1310 = vsel %vm877, %v1194, 0.0
  %v1311 = vadd.f32 %v1309, %v1310
  %v1312 = vsel %vm877, %v1195, 0.0
  %v1313 = vadd.f32 %v1311, %v1312
  %v1314 = vsel %vm877, %v1196, 0.0
  %v1315 = vadd.f32 %v1313, %v1314
  %v1316 = vsel %vm877, %v1197, 0.0
  %v1317 = vadd.f32 %v1315, %v1316
  %v1318 = vsel %vm877, %v1198, 0.0
  %v1319 = vadd.f32 %v1317, %v1318
  %v1320 = vsel %vm877, %v1199, 0.0
  %v1321 = vadd.f32 %v1319, %v1320
  %v1322 = vsel %vm877, %v1200, 0.0
  %v1323 = vadd.f32 %v1321, %v1322
  %v1324 = vsel %vm877, %v1201, 0.0
  %v1325 = vadd.f32 %v1323, %v1324
  %v1326 = vsel %vm877, %v1202, 0.0
  %v1327 = vadd.f32 %v1325, %v1326
  %v1328 = vsel %vm877, %v1203, 0.0
  %v1329 = vadd.f32 %v1327, %v1328
  %v1330 = vsel %vm877, %v1204, 0.0
  %v1331 = vadd.f32 %v1329, %v1330
  %v1332 = vsel %vm877, %v1205, 0.0
  %v1333 = vadd.f32 %v1331, %v1332
  %v1334 = vsel %vm877, %v1206, 0.0
  %v1335 = vadd.f32 %v1333, %v1334
  %v1336 = vsel %vm877, %v1207, 0.0
  %v1337 = vadd.f32 %v1335, %v1336
  %v1338 = vsel %vm877, %v1208, 0.0
  %v1339 = vadd.f32 %v1337, %v1338
  %v1340 = vsel %vm877, %v1209, 0.0
  %v1341 = vadd.f32 %v1339, %v1340
  %v1342 = vsel %vm877, %v1210, 0.0
  %v1343 = vadd.f32 %v1341, %v1342
  %v1344 = vsel %vm877, %v1211, 0.0
  %v1345 = vadd.f32 %v1343, %v1344
  %v1346 = vsel %vm877, %v1212, 0.0
  %v1347 = vadd.f32 %v1345, %v1346
  %v1348 = vsel %vm877, %v1213, 0.0
  %v1349 = vadd.f32 %v1347, %v1348
  %v1350 = vsel %vm877, %v1214, 0.0
  %v1351 = vadd.f32 %v1349, %v1350
  %v1352 = vsel %vm877, %v1215, 0.0
  %v1353 = vadd.f32 %v1351, %v1352
  %v1354 = vsel %vm877, %v1216, 0.0
  %v1355 = vadd.f32 %v1353, %v1354
  %v1356 = vsel %vm877, %v1217, 0.0
  %v1357 = vadd.f32 %v1355, %v1356
  %v1358 = vsel %vm877, %v1218, 0.0
  %v1359 = vadd.f32 %v1357, %v1358
  %v1360 = vsel %vm877, %v1219, 0.0
  %v1361 = vadd.f32 %v1359, %v1360
  %v1362 = vsel %vm877, %v1220, 0.0
  %v1363 = vadd.f32 %v1361, %v1362
  %v1364 = vsel %vm877, %v1221, 0.0
  %v1365 = vadd.f32 %v1363, %v1364
  %v1366 = vsel %vm877, %v1222, 0.0
  %v1367 = vadd.f32 %v1365, %v1366
  %v1368 = vsel %vm877, %v1223, 0.0
  %v1369 = vadd.f32 %v1367, %v1368
  %v1370 = vsel %vm877, %v1224, 0.0
  %v1371 = vadd.f32 %v1369, %v1370
  %v1372 = vsel %vm877, %v1225, 0.0
  %v1373 = vadd.f32 %v1371, %v1372
  %v1374 = vsel %vm877, %v1226, 0.0
  %v1375 = vadd.f32 %v1373, %v1374
  %v1376 = vsel %vm877, %v1227, 0.0
  %v1377 = vadd.f32 %v1375, %v1376
  %v1378 = vsel %vm877, %v1228, 0.0
  %v1379 = vadd.f32 %v1377, %v1378
  %v1380 = vsel %vm877, %v1229, 0.0
  %v1381 = vadd.f32 %v1379, %v1380
  %v1382 = vsel %vm877, %v1230, 0.0
  %v1383 = vadd.f32 %v1381, %v1382
  %v1384 = vsel %vm877, %v1231, 0.0
  %v1385 = vadd.f32 %v1383, %v1384
  %v1386 = vsel %vm877, %v1232, 0.0
  %v1387 = vadd.f32 %v1385, %v1386
  %v1388 = vsel %vm877, %v1233, 0.0
  %v1389 = vadd.f32 %v1387, %v1388
  %v1390 = vsel %vm877, %v1234, 0.0
  %v1391 = vadd.f32 %v1389, %v1390
  %v1392 = vsel %vm877, %v1235, 0.0
  %v1393 = vadd.f32 %v1391, %v1392
  %v1394 = vsel %vm877, %v1236, 0.0
  %v1395 = vadd.f32 %v1393, %v1394
  %v1396 = vsel %vm877, %v1237, 0.0
  %v1397 = vadd.f32 %v1395, %v1396
  %v1398 = vsel %vm877, %v1238, 0.0
  %v1399 = vadd.f32 %v1397, %v1398
  %v1400 = vsel %vm877, %v1239, 0.0
  %v1401 = vadd.f32 %v1399, %v1400
  %v1402 = vsel %vm877, %v1240, 0.0
  %v1403 = vadd.f32 %v1401, %v1402
  %v1404 = vsel %vm877, %v1241, 0.0
  %v1405 = vadd.f32 %v1403, %v1404
  %v1406 = vsel %vm877, %v1242, 0.0
  %v1407 = vadd.f32 %v1405, %v1406
  %v1408 = vsel %vm877, %v1243, 0.0
  %v1409 = vadd.f32 %v1407, %v1408
  %v1410 = vsel %vm877, %v1244, 0.0
  %v1411 = vadd.f32 %v1409, %v1410
  %v1412 = vsel %vm877, %v1245, 0.0
  %v1413 = vadd.f32 %v1411, %v1412
  %v1414 = vsel %vm877, %v1246, 0.0
  %v1415 = vadd.f32 %v1413, %v1414
  %v1416 = vsel %vm877, %v1247, 0.0
  %v1417 = vadd.f32 %v1415, %v1416
  %v1418 = vsel %vm877, %v1248, 0.0
  %v1419 = vadd.f32 %v1417, %v1418
  %v1420 = vsel %vm877, %v1249, 0.0
  %v1421 = vadd.f32 %v1419, %v1420
  %v1422 = vsel %vm877, %v1250, 0.0
  %v1423 = vadd.f32 %v1421, %v1422
  %v1424 = vsel %vm877, %v1251, 0.0
  %v1425 = vadd.f32 %v1423, %v1424
  %v1426 = vsel %vm877, %v1252, 0.0
  %v1427 = vadd.f32 %v1425, %v1426
  %v1428 = vsel %vm877, %v1253, 0.0
  %v1429 = vadd.f32 %v1427, %v1428
  %v1430 = vsel %vm877, %v1254, 0.0
  %v1431 = vadd.f32 %v1429, %v1430
  %v1432 = vsel %vm877, %v1255, 0.0
  %v1433 = vadd.f32 %v1431, %v1432
  %v1434 = vsel %vm877, %v1256, 0.0
  %v1435 = vadd.f32 %v1433, %v1434
  %v1436 = vsel %vm877, %v1257, 0.0
  %v1437 = vadd.f32 %v1435, %v1436
  %v1438 = vsel %vm877, %v1258, 0.0
  %v1439 = vadd.f32 %v1437, %v1438
  %v1440 = vsel %vm877, %v1259, 0.0
  %v1441 = vadd.f32 %v1439, %v1440
  %v1442 = vsel %vm877, %v1260, 0.0
  %v1443 = vadd.f32 %v1441, %v1442
  %v1444 = vsel %vm877, %v1261, 0.0
  %v1445 = vadd.f32 %v1443, %v1444
  %v1446 = vsel %vm877, %v1262, 0.0
  %v1447 = vadd.f32 %v1445, %v1446
  %v1448 = vsel %vm877, %v1263, 0.0
  %v1449 = vadd.f32 %v1447, %v1448
  %v1450 = vsel %vm877, %v1264, 0.0
  %v1451 = vadd.f32 %v1449, %v1450
  %v1452 = vsel %vm877, %v1265, 0.0
  %v1453 = vadd.f32 %v1451, %v1452
  %v1454 = vsel %vm877, %v1266, 0.0
  %v1455 = vadd.f32 %v1453, %v1454
  %v1456 = vsel %vm877, %v1267, 0.0
  %v1457 = vadd.f32 %v1455, %v1456
  %v1458 = vsel %vm877, %v1268, 0.0
  %v1459 = vadd.f32 %v1457, %v1458
  %v1460 = vrot.slane %v1459, 4
  %v1461 = vadd.f32 %v1459, %v1460
  %v1462 = vrot.slane %v1461, 2
  %v1463 = vadd.f32 %v1461, %v1462
  %v1464 = vrot.slane %v1463, 1
  %v1465 = vadd.f32 %v1463, %v1464
  %v1466 = vmul.f32 %v1465, %v1075
  %v1467 = vadd.f32 %v1466, 1e-05
  %v1468 = vrsqrt.pop %v1467
  %v1469 = vmul.f32 %v1077, %v1468
  %v1470 = vmul.f32 %v1078, %v1468
  %v1471 = vmul.f32 %v1079, %v1468
  %v1472 = vmul.f32 %v1080, %v1468
  %v1473 = vmul.f32 %v1081, %v1468
  %v1474 = vmul.f32 %v1082, %v1468
  %v1475 = vmul.f32 %v1083, %v1468
  %v1476 = vmul.f32 %v1084, %v1468
  %v1477 = vmul.f32 %v1085, %v1468
  %v1478 = vmul.f32 %v1086, %v1468
  %v1479 = vmul.f32 %v1087, %v1468
  %v1480 = vmul.f32 %v1088, %v1468
  %v1481 = vmul.f32 %v1089, %v1468
  %v1482 = vmul.f32 %v1090, %v1468
  %v1483 = vmul.f32 %v1091, %v1468
  %v1484 = vmul.f32 %v1092, %v1468
  %v1485 = vmul.f32 %v1093, %v1468
  %v1486 = vmul.f32 %v1094, %v1468
  %v1487 = vmul.f32 %v1095, %v1468
  %v1488 = vmul.f32 %v1096, %v1468
  %v1489 = vmul.f32 %v1097, %v1468
  %v1490 = vmul.f32 %v1098, %v1468
  %v1491 = vmul.f32 %v1099, %v1468
  %v1492 = vmul.f32 %v1100, %v1468
  %v1493 = vmul.f32 %v1101, %v1468
  %v1494 = vmul.f32 %v1102, %v1468
  %v1495 = vmul.f32 %v1103, %v1468
  %v1496 = vmul.f32 %v1104, %v1468
  %v1497 = vmul.f32 %v1105, %v1468
  %v1498 = vmul.f32 %v1106, %v1468
  %v1499 = vmul.f32 %v1107, %v1468
  %v1500 = vmul.f32 %v1108, %v1468
  %v1501 = vmul.f32 %v1109, %v1468
  %v1502 = vmul.f32 %v1110, %v1468
  %v1503 = vmul.f32 %v1111, %v1468
  %v1504 = vmul.f32 %v1112, %v1468
  %v1505 = vmul.f32 %v1113, %v1468
  %v1506 = vmul.f32 %v1114, %v1468
  %v1507 = vmul.f32 %v1115, %v1468
  %v1508 = vmul.f32 %v1116, %v1468
  %v1509 = vmul.f32 %v1117, %v1468
  %v1510 = vmul.f32 %v1118, %v1468
  %v1511 = vmul.f32 %v1119, %v1468
  %v1512 = vmul.f32 %v1120, %v1468
  %v1513 = vmul.f32 %v1121, %v1468
  %v1514 = vmul.f32 %v1122, %v1468
  %v1515 = vmul.f32 %v1123, %v1468
  %v1516 = vmul.f32 %v1124, %v1468
  %v1517 = vmul.f32 %v1125, %v1468
  %v1518 = vmul.f32 %v1126, %v1468
  %v1519 = vmul.f32 %v1127, %v1468
  %v1520 = vmul.f32 %v1128, %v1468
  %v1521 = vmul.f32 %v1129, %v1468
  %v1522 = vmul.f32 %v1130, %v1468
  %v1523 = vmul.f32 %v1131, %v1468
  %v1524 = vmul.f32 %v1132, %v1468
  %v1525 = vmul.f32 %v1133, %v1468
  %v1526 = vmul.f32 %v1134, %v1468
  %v1527 = vmul.f32 %v1135, %v1468
  %v1528 = vmul.f32 %v1136, %v1468
  %v1529 = vmul.f32 %v1137, %v1468
  %v1530 = vmul.f32 %v1138, %v1468
  %v1531 = vmul.f32 %v1139, %v1468
  %v1532 = vmul.f32 %v1140, %v1468
  %v1533 = vmul.f32 %v1141, %v1468
  %v1534 = vmul.f32 %v1142, %v1468
  %v1535 = vmul.f32 %v1143, %v1468
  %v1536 = vmul.f32 %v1144, %v1468
  %v1537 = vmul.f32 %v1145, %v1468
  %v1538 = vmul.f32 %v1146, %v1468
  %v1539 = vmul.f32 %v1147, %v1468
  %v1540 = vmul.f32 %v1148, %v1468
  %v1541 = vmul.f32 %v1149, %v1468
  %v1542 = vmul.f32 %v1150, %v1468
  %v1543 = vmul.f32 %v1151, %v1468
  %v1544 = vmul.f32 %v1152, %v1468
  %v1545 = vmul.f32 %v1153, %v1468
  %v1546 = vmul.f32 %v1154, %v1468
  %v1547 = vmul.f32 %v1155, %v1468
  %v1548 = vmul.f32 %v1156, %v1468
  %v1549 = vmul.f32 %v1157, %v1468
  %v1550 = vmul.f32 %v1158, %v1468
  %v1551 = vmul.f32 %v1159, %v1468
  %v1552 = vmul.f32 %v1160, %v1468
  %v1553 = vmul.f32 %v1161, %v1468
  %v1554 = vmul.f32 %v1162, %v1468
  %v1555 = vmul.f32 %v1163, %v1468
  %v1556 = vmul.f32 %v1164, %v1468
  %v1557 = vmul.f32 %v1165, %v1468
  %v1558 = vmul.f32 %v1166, %v1468
  %v1559 = vmul.f32 %v1167, %v1468
  %v1560 = vmul.f32 %v1168, %v1468
  %v1561 = vmul.f32 %v1169, %v1468
  %v1562 = vmul.f32 %v1170, %v1468
  %v1563 = vmul.f32 %v1171, %v1468
  %v1564 = vmul.f32 %v1172, %v1468
  %vm1565 = vcmp.ge.f32.partialorder %v1469, 0.0
  %vm1566 = vcmp.ge.f32.partialorder %v1470, 0.0
  %vm1567 = vcmp.ge.f32.partialorder %v1471, 0.0
  %vm1568 = vcmp.ge.f32.partialorder %v1472, 0.0
  %vm1569 = vcmp.ge.f32.partialorder %v1473, 0.0
  %vm1570 = vcmp.ge.f32.partialorder %v1474, 0.0
  %vm1571 = vcmp.ge.f32.partialorder %v1475, 0.0
  %vm1572 = vcmp.ge.f32.partialorder %v1476, 0.0
  %vm1573 = vcmp.ge.f32.partialorder %v1477, 0.0
  %vm1574 = vcmp.ge.f32.partialorder %v1478, 0.0
  %vm1575 = vcmp.ge.f32.partialorder %v1479, 0.0
  %vm1576 = vcmp.ge.f32.partialorder %v1480, 0.0
  %vm1577 = vcmp.ge.f32.partialorder %v1481, 0.0
  %vm1578 = vcmp.ge.f32.partialorder %v1482, 0.0
  %vm1579 = vcmp.ge.f32.partialorder %v1483, 0.0
  %vm1580 = vcmp.ge.f32.partialorder %v1484, 0.0
  %vm1581 = vcmp.ge.f32.partialorder %v1485, 0.0
  %vm1582 = vcmp.ge.f32.partialorder %v1486, 0.0
  %vm1583 = vcmp.ge.f32.partialorder %v1487, 0.0
  %vm1584 = vcmp.ge.f32.partialorder %v1488, 0.0
  %vm1585 = vcmp.ge.f32.partialorder %v1489, 0.0
  %vm1586 = vcmp.ge.f32.partialorder %v1490, 0.0
  %vm1587 = vcmp.ge.f32.partialorder %v1491, 0.0
  %vm1588 = vcmp.ge.f32.partialorder %v1492, 0.0
  %vm1589 = vcmp.ge.f32.partialorder %v1493, 0.0
  %vm1590 = vcmp.ge.f32.partialorder %v1494, 0.0
  %vm1591 = vcmp.ge.f32.partialorder %v1495, 0.0
  %vm1592 = vcmp.ge.f32.partialorder %v1496, 0.0
  %vm1593 = vcmp.ge.f32.partialorder %v1497, 0.0
  %vm1594 = vcmp.ge.f32.partialorder %v1498, 0.0
  %vm1595 = vcmp.ge.f32.partialorder %v1499, 0.0
  %vm1596 = vcmp.ge.f32.partialorder %v1500, 0.0
  %vm1597 = vcmp.ge.f32.partialorder %v1501, 0.0
  %vm1598 = vcmp.ge.f32.partialorder %v1502, 0.0
  %vm1599 = vcmp.ge.f32.partialorder %v1503, 0.0
  %vm1600 = vcmp.ge.f32.partialorder %v1504, 0.0
  %vm1601 = vcmp.ge.f32.partialorder %v1505, 0.0
  %vm1602 = vcmp.ge.f32.partialorder %v1506, 0.0
  %vm1603 = vcmp.ge.f32.partialorder %v1507, 0.0
  %vm1604 = vcmp.ge.f32.partialorder %v1508, 0.0
  %vm1605 = vcmp.ge.f32.partialorder %v1509, 0.0
  %vm1606 = vcmp.ge.f32.partialorder %v1510, 0.0
  %vm1607 = vcmp.ge.f32.partialorder %v1511, 0.0
  %vm1608 = vcmp.ge.f32.partialorder %v1512, 0.0
  %vm1609 = vcmp.ge.f32.partialorder %v1513, 0.0
  %vm1610 = vcmp.ge.f32.partialorder %v1514, 0.0
  %vm1611 = vcmp.ge.f32.partialorder %v1515, 0.0
  %vm1612 = vcmp.ge.f32.partialorder %v1516, 0.0
  %vm1613 = vcmp.ge.f32.partialorder %v1517, 0.0
  %vm1614 = vcmp.ge.f32.partialorder %v1518, 0.0
  %vm1615 = vcmp.ge.f32.partialorder %v1519, 0.0
  %vm1616 = vcmp.ge.f32.partialorder %v1520, 0.0
  %vm1617 = vcmp.ge.f32.partialorder %v1521, 0.0
  %vm1618 = vcmp.ge.f32.partialorder %v1522, 0.0
  %vm1619 = vcmp.ge.f32.partialorder %v1523, 0.0
  %vm1620 = vcmp.ge.f32.partialorder %v1524, 0.0
  %vm1621 = vcmp.ge.f32.partialorder %v1525, 0.0
  %vm1622 = vcmp.ge.f32.partialorder %v1526, 0.0
  %vm1623 = vcmp.ge.f32.partialorder %v1527, 0.0
  %vm1624 = vcmp.ge.f32.partialorder %v1528, 0.0
  %vm1625 = vcmp.ge.f32.partialorder %v1529, 0.0
  %vm1626 = vcmp.ge.f32.partialorder %v1530, 0.0
  %vm1627 = vcmp.ge.f32.partialorder %v1531, 0.0
  %vm1628 = vcmp.ge.f32.partialorder %v1532, 0.0
  %vm1629 = vcmp.ge.f32.partialorder %v1533, 0.0
  %vm1630 = vcmp.ge.f32.partialorder %v1534, 0.0
  %vm1631 = vcmp.ge.f32.partialorder %v1535, 0.0
  %vm1632 = vcmp.ge.f32.partialorder %v1536, 0.0
  %vm1633 = vcmp.ge.f32.partialorder %v1537, 0.0
  %vm1634 = vcmp.ge.f32.partialorder %v1538, 0.0
  %vm1635 = vcmp.ge.f32.partialorder %v1539, 0.0
  %vm1636 = vcmp.ge.f32.partialorder %v1540, 0.0
  %vm1637 = vcmp.ge.f32.partialorder %v1541, 0.0
  %vm1638 = vcmp.ge.f32.partialorder %v1542, 0.0
  %vm1639 = vcmp.ge.f32.partialorder %v1543, 0.0
  %vm1640 = vcmp.ge.f32.partialorder %v1544, 0.0
  %vm1641 = vcmp.ge.f32.partialorder %v1545, 0.0
  %vm1642 = vcmp.ge.f32.partialorder %v1546, 0.0
  %vm1643 = vcmp.ge.f32.partialorder %v1547, 0.0
  %vm1644 = vcmp.ge.f32.partialorder %v1548, 0.0
  %vm1645 = vcmp.ge.f32.partialorder %v1549, 0.0
  %vm1646 = vcmp.ge.f32.partialorder %v1550, 0.0
  %vm1647 = vcmp.ge.f32.partialorder %v1551, 0.0
  %vm1648 = vcmp.ge.f32.partialorder %v1552, 0.0
  %vm1649 = vcmp.ge.f32.partialorder %v1553, 0.0
  %vm1650 = vcmp.ge.f32.partialorder %v1554, 0.0
  %vm1651 = vcmp.ge.f32.partialorder %v1555, 0.0
  %vm1652 = vcmp.ge.f32.partialorder %v1556, 0.0
  %vm1653 = vcmp.ge.f32.partialorder %v1557, 0.0
  %vm1654 = vcmp.ge.f32.partialorder %v1558, 0.0
  %vm1655 = vcmp.ge.f32.partialorder %v1559, 0.0
  %vm1656 = vcmp.ge.f32.partialorder %v1560, 0.0
  %vm1657 = vcmp.ge.f32.partialorder %v1561, 0.0
  %vm1658 = vcmp.ge.f32.partialorder %v1562, 0.0
  %vm1659 = vcmp.ge.f32.partialorder %v1563, 0.0
  %vm1660 = vcmp.ge.f32.partialorder %v1564, 0.0
  %v1661 = vmul.f32 %v1469, 0.1
  %v1662 = vmul.f32 %v1470, 0.1
  %v1663 = vmul.f32 %v1471, 0.1
  %v1664 = vmul.f32 %v1472, 0.1
  %v1665 = vmul.f32 %v1473, 0.1
  %v1666 = vmul.f32 %v1474, 0.1
  %v1667 = vmul.f32 %v1475, 0.1
  %v1668 = vmul.f32 %v1476, 0.1
  %v1669 = vmul.f32 %v1477, 0.1
  %v1670 = vmul.f32 %v1478, 0.1
  %v1671 = vmul.f32 %v1479, 0.1
  %v1672 = vmul.f32 %v1480, 0.1
  %v1673 = vmul.f32 %v1481, 0.1
  %v1674 = vmul.f32 %v1482, 0.1
  %v1675 = vmul.f32 %v1483, 0.1
  %v1676 = vmul.f32 %v1484, 0.1
  %v1677 = vmul.f32 %v1485, 0.1
  %v1678 = vmul.f32 %v1486, 0.1
  %v1679 = vmul.f32 %v1487, 0.1
  %v1680 = vmul.f32 %v1488, 0.1
  %v1681 = vmul.f32 %v1489, 0.1
  %v1682 = vmul.f32 %v1490, 0.1
  %v1683 = vmul.f32 %v1491, 0.1
  %v1684 = vmul.f32 %v1492, 0.1
  %v1685 = vmul.f32 %v1493, 0.1
  %v1686 = vmul.f32 %v1494, 0.1
  %v1687 = vmul.f32 %v1495, 0.1
  %v1688 = vmul.f32 %v1496, 0.1
  %v1689 = vmul.f32 %v1497, 0.1
  %v1690 = vmul.f32 %v1498, 0.1
  %v1691 = vmul.f32 %v1499, 0.1
  %v1692 = vmul.f32 %v1500, 0.1
  %v1693 = vmul.f32 %v1501, 0.1
  %v1694 = vmul.f32 %v1502, 0.1
  %v1695 = vmul.f32 %v1503, 0.1
  %v1696 = vmul.f32 %v1504, 0.1
  %v1697 = vmul.f32 %v1505, 0.1
  %v1698 = vmul.f32 %v1506, 0.1
  %v1699 = vmul.f32 %v1507, 0.1
  %v1700 = vmul.f32 %v1508, 0.1
  %v1701 = vmul.f32 %v1509, 0.1
  %v1702 = vmul.f32 %v1510, 0.1
  %v1703 = vmul.f32 %v1511, 0.1
  %v1704 = vmul.f32 %v1512, 0.1
  %v1705 = vmul.f32 %v1513, 0.1
  %v1706 = vmul.f32 %v1514, 0.1
  %v1707 = vmul.f32 %v1515, 0.1
  %v1708 = vmul.f32 %v1516, 0.1
  %v1709 = vmul.f32 %v1517, 0.1
  %v1710 = vmul.f32 %v1518, 0.1
  %v1711 = vmul.f32 %v1519, 0.1
  %v1712 = vmul.f32 %v1520, 0.1
  %v1713 = vmul.f32 %v1521, 0.1
  %v1714 = vmul.f32 %v1522, 0.1
  %v1715 = vmul.f32 %v1523, 0.1
  %v1716 = vmul.f32 %v1524, 0.1
  %v1717 = vmul.f32 %v1525, 0.1
  %v1718 = vmul.f32 %v1526, 0.1
  %v1719 = vmul.f32 %v1527, 0.1
  %v1720 = vmul.f32 %v1528, 0.1
  %v1721 = vmul.f32 %v1529, 0.1
  %v1722 = vmul.f32 %v1530, 0.1
  %v1723 = vmul.f32 %v1531, 0.1
  %v1724 = vmul.f32 %v1532, 0.1
  %v1725 = vmul.f32 %v1533, 0.1
  %v1726 = vmul.f32 %v1534, 0.1
  %v1727 = vmul.f32 %v1535, 0.1
  %v1728 = vmul.f32 %v1536, 0.1
  %v1729 = vmul.f32 %v1537, 0.1
  %v1730 = vmul.f32 %v1538, 0.1
  %v1731 = vmul.f32 %v1539, 0.1
  %v1732 = vmul.f32 %v1540, 0.1
  %v1733 = vmul.f32 %v1541, 0.1
  %v1734 = vmul.f32 %v1542, 0.1
  %v1735 = vmul.f32 %v1543, 0.1
  %v1736 = vmul.f32 %v1544, 0.1
  %v1737 = vmul.f32 %v1545, 0.1
  %v1738 = vmul.f32 %v1546, 0.1
  %v1739 = vmul.f32 %v1547, 0.1
  %v1740 = vmul.f32 %v1548, 0.1
  %v1741 = vmul.f32 %v1549, 0.1
  %v1742 = vmul.f32 %v1550, 0.1
  %v1743 = vmul.f32 %v1551, 0.1
  %v1744 = vmul.f32 %v1552, 0.1
  %v1745 = vmul.f32 %v1553, 0.1
  %v1746 = vmul.f32 %v1554, 0.1
  %v1747 = vmul.f32 %v1555, 0.1
  %v1748 = vmul.f32 %v1556, 0.1
  %v1749 = vmul.f32 %v1557, 0.1
  %v1750 = vmul.f32 %v1558, 0.1
  %v1751 = vmul.f32 %v1559, 0.1
  %v1752 = vmul.f32 %v1560, 0.1
  %v1753 = vmul.f32 %v1561, 0.1
  %v1754 = vmul.f32 %v1562, 0.1
  %v1755 = vmul.f32 %v1563, 0.1
  %v1756 = vmul.f32 %v1564, 0.1
  %v1757 = vsel %vm1565, %v1469, %v1661
  %v1758 = vsel %vm1566, %v1470, %v1662
  %v1759 = vsel %vm1567, %v1471, %v1663
  %v1760 = vsel %vm1568, %v1472, %v1664
  %v1761 = vsel %vm1569, %v1473, %v1665
  %v1762 = vsel %vm1570, %v1474, %v1666
  %v1763 = vsel %vm1571, %v1475, %v1667
  %v1764 = vsel %vm1572, %v1476, %v1668
  %v1765 = vsel %vm1573, %v1477, %v1669
  %v1766 = vsel %vm1574, %v1478, %v1670
  %v1767 = vsel %vm1575, %v1479, %v1671
  %v1768 = vsel %vm1576, %v1480, %v1672
  %v1769 = vsel %vm1577, %v1481, %v1673
  %v1770 = vsel %vm1578, %v1482, %v1674
  %v1771 = vsel %vm1579, %v1483, %v1675
  %v1772 = vsel %vm1580, %v1484, %v1676
  %v1773 = vsel %vm1581, %v1485, %v1677
  %v1774 = vsel %vm1582, %v1486, %v1678
  %v1775 = vsel %vm1583, %v1487, %v1679
  %v1776 = vsel %vm1584, %v1488, %v1680
  %v1777 = vsel %vm1585, %v1489, %v1681
  %v1778 = vsel %vm1586, %v1490, %v1682
  %v1779 = vsel %vm1587, %v1491, %v1683
  %v1780 = vsel %vm1588, %v1492, %v1684
  %v1781 = vsel %vm1589, %v1493, %v1685
  %v1782 = vsel %vm1590, %v1494, %v1686
  %v1783 = vsel %vm1591, %v1495, %v1687
  %v1784 = vsel %vm1592, %v1496, %v1688
  %v1785 = vsel %vm1593, %v1497, %v1689
  %v1786 = vsel %vm1594, %v1498, %v1690
  %v1787 = vsel %vm1595, %v1499, %v1691
  %v1788 = vsel %vm1596, %v1500, %v1692
  %v1789 = vsel %vm1597, %v1501, %v1693
  %v1790 = vsel %vm1598, %v1502, %v1694
  %v1791 = vsel %vm1599, %v1503, %v1695
  %v1792 = vsel %vm1600, %v1504, %v1696
  %v1793 = vsel %vm1601, %v1505, %v1697
  %v1794 = vsel %vm1602, %v1506, %v1698
  %v1795 = vsel %vm1603, %v1507, %v1699
  %v1796 = vsel %vm1604, %v1508, %v1700
  %v1797 = vsel %vm1605, %v1509, %v1701
  %v1798 = vsel %vm1606, %v1510, %v1702
  %v1799 = vsel %vm1607, %v1511, %v1703
  %v1800 = vsel %vm1608, %v1512, %v1704
  %v1801 = vsel %vm1609, %v1513, %v1705
  %v1802 = vsel %vm1610, %v1514, %v1706
  %v1803 = vsel %vm1611, %v1515, %v1707
  %v1804 = vsel %vm1612, %v1516, %v1708
  %v1805 = vsel %vm1613, %v1517, %v1709
  %v1806 = vsel %vm1614, %v1518, %v1710
  %v1807 = vsel %vm1615, %v1519, %v1711
  %v1808 = vsel %vm1616, %v1520, %v1712
  %v1809 = vsel %vm1617, %v1521, %v1713
  %v1810 = vsel %vm1618, %v1522, %v1714
  %v1811 = vsel %vm1619, %v1523, %v1715
  %v1812 = vsel %vm1620, %v1524, %v1716
  %v1813 = vsel %vm1621, %v1525, %v1717
  %v1814 = vsel %vm1622, %v1526, %v1718
  %v1815 = vsel %vm1623, %v1527, %v1719
  %v1816 = vsel %vm1624, %v1528, %v1720
  %v1817 = vsel %vm1625, %v1529, %v1721
  %v1818 = vsel %vm1626, %v1530, %v1722
  %v1819 = vsel %vm1627, %v1531, %v1723
  %v1820 = vsel %vm1628, %v1532, %v1724
  %v1821 = vsel %vm1629, %v1533, %v1725
  %v1822 = vsel %vm1630, %v1534, %v1726
  %v1823 = vsel %vm1631, %v1535, %v1727
  %v1824 = vsel %vm1632, %v1536, %v1728
  %v1825 = vsel %vm1633, %v1537, %v1729
  %v1826 = vsel %vm1634, %v1538, %v1730
  %v1827 = vsel %vm1635, %v1539, %v1731
  %v1828 = vsel %vm1636, %v1540, %v1732
  %v1829 = vsel %vm1637, %v1541, %v1733
  %v1830 = vsel %vm1638, %v1542, %v1734
  %v1831 = vsel %vm1639, %v1543, %v1735
  %v1832 = vsel %vm1640, %v1544, %v1736
  %v1833 = vsel %vm1641, %v1545, %v1737
  %v1834 = vsel %vm1642, %v1546, %v1738
  %v1835 = vsel %vm1643, %v1547, %v1739
  %v1836 = vsel %vm1644, %v1548, %v1740
  %v1837 = vsel %vm1645, %v1549, %v1741
  %v1838 = vsel %vm1646, %v1550, %v1742
  %v1839 = vsel %vm1647, %v1551, %v1743
  %v1840 = vsel %vm1648, %v1552, %v1744
  %v1841 = vsel %vm1649, %v1553, %v1745
  %v1842 = vsel %vm1650, %v1554, %v1746
  %v1843 = vsel %vm1651, %v1555, %v1747
  %v1844 = vsel %vm1652, %v1556, %v1748
  %v1845 = vsel %vm1653, %v1557, %v1749
  %v1846 = vsel %vm1654, %v1558, %v1750
  %v1847 = vsel %vm1655, %v1559, %v1751
  %v1848 = vsel %vm1656, %v1560, %v1752
  %v1849 = vsel %vm1657, %v1561, %v1753
  %v1850 = vsel %vm1658, %v1562, %v1754
  %v1851 = vsel %vm1659, %v1563, %v1755
  %v1852 = vsel %vm1660, %v1564, %v1756
  %v1853 = vpack.c.bf16 %v1758, %v1757
  %v1854 = vpack.c.bf16 %v1760, %v1759
  %v1855 = vpack.c.bf16 %v1762, %v1761
  %v1856 = vpack.c.bf16 %v1764, %v1763
  %v1857 = vpack.c.bf16 %v1766, %v1765
  %v1858 = vpack.c.bf16 %v1768, %v1767
  %v1859 = vpack.c.bf16 %v1770, %v1769
  %v1860 = vpack.c.bf16 %v1772, %v1771
  %v1861 = vpack.c.bf16 %v1774, %v1773
  %v1862 = vpack.c.bf16 %v1776, %v1775
  %v1863 = vpack.c.bf16 %v1778, %v1777
  %v1864 = vpack.c.bf16 %v1780, %v1779
  %v1865 = vpack.c.bf16 %v1782, %v1781
  %v1866 = vpack.c.bf16 %v1784, %v1783
  %v1867 = vpack.c.bf16 %v1786, %v1785
  %v1868 = vpack.c.bf16 %v1788, %v1787
  %v1869 = vpack.c.bf16 %v1790, %v1789
  %v1870 = vpack.c.bf16 %v1792, %v1791
  %v1871 = vpack.c.bf16 %v1794, %v1793
  %v1872 = vpack.c.bf16 %v1796, %v1795
  %v1873 = vpack.c.bf16 %v1798, %v1797
  %v1874 = vpack.c.bf16 %v1800, %v1799
  %v1875 = vpack.c.bf16 %v1802, %v1801
  %v1876 = vpack.c.bf16 %v1804, %v1803
  %v1877 = vpack.c.bf16 %v1806, %v1805
  %v1878 = vpack.c.bf16 %v1808, %v1807
  %v1879 = vpack.c.bf16 %v1810, %v1809
  %v1880 = vpack.c.bf16 %v1812, %v1811
  %v1881 = vpack.c.bf16 %v1814, %v1813
  %v1882 = vpack.c.bf16 %v1816, %v1815
  %v1883 = vpack.c.bf16 %v1818, %v1817
  %v1884 = vpack.c.bf16 %v1820, %v1819
  %v1885 = vpack.c.bf16 %v1822, %v1821
  %v1886 = vpack.c.bf16 %v1824, %v1823
  %v1887 = vpack.c.bf16 %v1826, %v1825
  %v1888 = vpack.c.bf16 %v1828, %v1827
  %v1889 = vpack.c.bf16 %v1830, %v1829
  %v1890 = vpack.c.bf16 %v1832, %v1831
  %v1891 = vpack.c.bf16 %v1834, %v1833
  %v1892 = vpack.c.bf16 %v1836, %v1835
  %v1893 = vpack.c.bf16 %v1838, %v1837
  %v1894 = vpack.c.bf16 %v1840, %v1839
  %v1895 = vpack.c.bf16 %v1842, %v1841
  %v1896 = vpack.c.bf16 %v1844, %v1843
  %v1897 = vpack.c.bf16 %v1846, %v1845
  %v1898 = vpack.c.bf16 %v1848, %v1847
  %v1899 = vpack.c.bf16 %v1850, %v1849
  %v1900 = vpack.c.bf16 %v1852, %v1851
  %v1949 = vunpack.c.l.b16 %v1853
  %v1950 = vunpack.c.h.b16 %v1853
  %v1951 = vunpack.c.l.b16 %v1854
  %v1952 = vunpack.c.h.b16 %v1854
  %v1953 = vunpack.c.l.b16 %v1855
  %v1954 = vunpack.c.h.b16 %v1855
  %v1955 = vunpack.c.l.b16 %v1856
  %v1956 = vunpack.c.h.b16 %v1856
  %v1957 = vunpack.c.l.b16 %v1857
  %v1958 = vunpack.c.h.b16 %v1857
  %v1959 = vunpack.c.l.b16 %v1858
  %v1960 = vunpack.c.h.b16 %v1858
  %v1961 = vunpack.c.l.b16 %v1859
  %v1962 = vunpack.c.h.b16 %v1859
  %v1963 = vunpack.c.l.b16 %v1860
  %v1964 = vunpack.c.h.b16 %v1860
  %v1965 = vunpack.c.l.b16 %v1861
  %v1966 = vunpack.c.h.b16 %v1861
  %v1967 = vunpack.c.l.b16 %v1862
  %v1968 = vunpack.c.h.b16 %v1862
  %v1969 = vunpack.c.l.b16 %v1863
  %v1970 = vunpack.c.h.b16 %v1863
  %v1971 = vunpack.c.l.b16 %v1864
  %v1972 = vunpack.c.h.b16 %v1864
  %v1973 = vunpack.c.l.b16 %v1865
  %v1974 = vunpack.c.h.b16 %v1865
  %v1975 = vunpack.c.l.b16 %v1866
  %v1976 = vunpack.c.h.b16 %v1866
  %v1977 = vunpack.c.l.b16 %v1867
  %v1978 = vunpack.c.h.b16 %v1867
  %v1979 = vunpack.c.l.b16 %v1868
  %v1980 = vunpack.c.h.b16 %v1868
  %v1981 = vunpack.c.l.b16 %v1869
  %v1982 = vunpack.c.h.b16 %v1869
  %v1983 = vunpack.c.l.b16 %v1870
  %v1984 = vunpack.c.h.b16 %v1870
  %v1985 = vunpack.c.l.b16 %v1871
  %v1986 = vunpack.c.h.b16 %v1871
  %v1987 = vunpack.c.l.b16 %v1872
  %v1988 = vunpack.c.h.b16 %v1872
  %v1989 = vunpack.c.l.b16 %v1873
  %v1990 = vunpack.c.h.b16 %v1873
  %v1991 = vunpack.c.l.b16 %v1874
  %v1992 = vunpack.c.h.b16 %v1874
  %v1993 = vunpack.c.l.b16 %v1875
  %v1994 = vunpack.c.h.b16 %v1875
  %v1995 = vunpack.c.l.b16 %v1876
  %v1996 = vunpack.c.h.b16 %v1876
  %v1997 = vunpack.c.l.b16 %v1877
  %v1998 = vunpack.c.h.b16 %v1877
  %v1999 = vunpack.c.l.b16 %v1878
  %v2000 = vunpack.c.h.b16 %v1878
  %v2001 = vunpack.c.l.b16 %v1879
  %v2002 = vunpack.c.h.b16 %v1879
  %v2003 = vunpack.c.l.b16 %v1880
  %v2004 = vunpack.c.h.b16 %v1880
  %v2005 = vunpack.c.l.b16 %v1881
  %v2006 = vunpack.c.h.b16 %v1881
  %v2007 = vunpack.c.l.b16 %v1882
  %v2008 = vunpack.c.h.b16 %v1882
  %v2009 = vunpack.c.l.b16 %v1883
  %v2010 = vunpack.c.h.b16 %v1883
  %v2011 = vunpack.c.l.b16 %v1884
  %v2012 = vunpack.c.h.b16 %v1884
  %v2013 = vunpack.c.l.b16 %v1885
  %v2014 = vunpack.c.h.b16 %v1885
  %v2015 = vunpack.c.l.b16 %v1886
  %v2016 = vunpack.c.h.b16 %v1886
  %v2017 = vunpack.c.l.b16 %v1887
  %v2018 = vunpack.c.h.b16 %v1887
  %v2019 = vunpack.c.l.b16 %v1888
  %v2020 = vunpack.c.h.b16 %v1888
  %v2021 = vunpack.c.l.b16 %v1889
  %v2022 = vunpack.c.h.b16 %v1889
  %v2023 = vunpack.c.l.b16 %v1890
  %v2024 = vunpack.c.h.b16 %v1890
  %v2025 = vunpack.c.l.b16 %v1891
  %v2026 = vunpack.c.h.b16 %v1891
  %v2027 = vunpack.c.l.b16 %v1892
  %v2028 = vunpack.c.h.b16 %v1892
  %v2029 = vunpack.c.l.b16 %v1893
  %v2030 = vunpack.c.h.b16 %v1893
  %v2031 = vunpack.c.l.b16 %v1894
  %v2032 = vunpack.c.h.b16 %v1894
  %v2033 = vunpack.c.l.b16 %v1895
  %v2034 = vunpack.c.h.b16 %v1895
  %v2035 = vunpack.c.l.b16 %v1896
  %v2036 = vunpack.c.h.b16 %v1896
  %v2037 = vunpack.c.l.b16 %v1897
  %v2038 = vunpack.c.h.b16 %v1897
  %v2039 = vunpack.c.l.b16 %v1898
  %v2040 = vunpack.c.h.b16 %v1898
  %v2041 = vunpack.c.l.b16 %v1899
  %v2042 = vunpack.c.h.b16 %v1899
  %v2043 = vunpack.c.l.b16 %v1900
  %v2044 = vunpack.c.h.b16 %v1900
  %v2045 = vpack.c.b16 %v1949, %v1949
  %v2046 = vpack.c.b16 %v1950, %v1950
  %v2047 = vpack.c.b16 %v1951, %v1951
  %v2048 = vpack.c.b16 %v1952, %v1952
  %v2049 = vpack.c.b16 %v1953, %v1953
  %v2050 = vpack.c.b16 %v1954, %v1954
  %v2051 = vpack.c.b16 %v1955, %v1955
  %v2052 = vpack.c.b16 %v1956, %v1956
  %v2053 = vpack.c.b16 %v1957, %v1957
  %v2054 = vpack.c.b16 %v1958, %v1958
  %v2055 = vpack.c.b16 %v1959, %v1959
  %v2056 = vpack.c.b16 %v1960, %v1960
  %v2057 = vpack.c.b16 %v1961, %v1961
  %v2058 = vpack.c.b16 %v1962, %v1962
  %v2059 = vpack.c.b16 %v1963, %v1963
  %v2060 = vpack.c.b16 %v1964, %v1964
  %v2061 = vpack.c.b16 %v1965, %v1965
  %v2062 = vpack.c.b16 %v1966, %v1966
  %v2063 = vpack.c.b16 %v1967, %v1967
  %v2064 = vpack.c.b16 %v1968, %v1968
  %v2065 = vpack.c.b16 %v1969, %v1969
  %v2066 = vpack.c.b16 %v1970, %v1970
  %v2067 = vpack.c.b16 %v1971, %v1971
  %v2068 = vpack.c.b16 %v1972, %v1972
  %v2069 = vpack.c.b16 %v1973, %v1973
  %v2070 = vpack.c.b16 %v1974, %v1974
  %v2071 = vpack.c.b16 %v1975, %v1975
  %v2072 = vpack.c.b16 %v1976, %v1976
  %v2073 = vpack.c.b16 %v1977, %v1977
  %v2074 = vpack.c.b16 %v1978, %v1978
  %v2075 = vpack.c.b16 %v1979, %v1979
  %v2076 = vpack.c.b16 %v1980, %v1980
  %v2077 = vpack.c.b16 %v1981, %v1981
  %v2078 = vpack.c.b16 %v1982, %v1982
  %v2079 = vpack.c.b16 %v1983, %v1983
  %v2080 = vpack.c.b16 %v1984, %v1984
  %v2081 = vpack.c.b16 %v1985, %v1985
  %v2082 = vpack.c.b16 %v1986, %v1986
  %v2083 = vpack.c.b16 %v1987, %v1987
  %v2084 = vpack.c.b16 %v1988, %v1988
  %v2085 = vpack.c.b16 %v1989, %v1989
  %v2086 = vpack.c.b16 %v1990, %v1990
  %v2087 = vpack.c.b16 %v1991, %v1991
  %v2088 = vpack.c.b16 %v1992, %v1992
  %v2089 = vpack.c.b16 %v1993, %v1993
  %v2090 = vpack.c.b16 %v1994, %v1994
  %v2091 = vpack.c.b16 %v1995, %v1995
  %v2092 = vpack.c.b16 %v1996, %v1996
  %v2093 = vpack.c.b16 %v1997, %v1997
  %v2094 = vpack.c.b16 %v1998, %v1998
  %v2095 = vpack.c.b16 %v1999, %v1999
  %v2096 = vpack.c.b16 %v2000, %v2000
  %v2097 = vpack.c.b16 %v2001, %v2001
  %v2098 = vpack.c.b16 %v2002, %v2002
  %v2099 = vpack.c.b16 %v2003, %v2003
  %v2100 = vpack.c.b16 %v2004, %v2004
  %v2101 = vpack.c.b16 %v2005, %v2005
  %v2102 = vpack.c.b16 %v2006, %v2006
  %v2103 = vpack.c.b16 %v2007, %v2007
  %v2104 = vpack.c.b16 %v2008, %v2008
  %v2105 = vpack.c.b16 %v2009, %v2009
  %v2106 = vpack.c.b16 %v2010, %v2010
  %v2107 = vpack.c.b16 %v2011, %v2011
  %v2108 = vpack.c.b16 %v2012, %v2012
  %v2109 = vpack.c.b16 %v2013, %v2013
  %v2110 = vpack.c.b16 %v2014, %v2014
  %v2111 = vpack.c.b16 %v2015, %v2015
  %v2112 = vpack.c.b16 %v2016, %v2016
  %v2113 = vpack.c.b16 %v2017, %v2017
  %v2114 = vpack.c.b16 %v2018, %v2018
  %v2115 = vpack.c.b16 %v2019, %v2019
  %v2116 = vpack.c.b16 %v2020, %v2020
  %v2117 = vpack.c.b16 %v2021, %v2021
  %v2118 = vpack.c.b16 %v2022, %v2022
  %v2119 = vpack.c.b16 %v2023, %v2023
  %v2120 = vpack.c.b16 %v2024, %v2024
  %v2121 = vpack.c.b16 %v2025, %v2025
  %v2122 = vpack.c.b16 %v2026, %v2026
  %v2123 = vpack.c.b16 %v2027, %v2027
  %v2124 = vpack.c.b16 %v2028, %v2028
  %v2125 = vpack.c.b16 %v2029, %v2029
  %v2126 = vpack.c.b16 %v2030, %v2030
  %v2127 = vpack.c.b16 %v2031, %v2031
  %v2128 = vpack.c.b16 %v2032, %v2032
  %v2129 = vpack.c.b16 %v2033, %v2033
  %v2130 = vpack.c.b16 %v2034, %v2034
  %v2131 = vpack.c.b16 %v2035, %v2035
  %v2132 = vpack.c.b16 %v2036, %v2036
  %v2133 = vpack.c.b16 %v2037, %v2037
  %v2134 = vpack.c.b16 %v2038, %v2038
  %v2135 = vpack.c.b16 %v2039, %v2039
  %v2136 = vpack.c.b16 %v2040, %v2040
  %v2137 = vpack.c.b16 %v2041, %v2041
  %v2138 = vpack.c.b16 %v2042, %v2042
  %v2139 = vpack.c.b16 %v2043, %v2043
  %v2140 = vpack.c.b16 %v2044, %v2044
  %vm2237 = vcmask 125952
  %2238 = vst.msk [vmem:[%s2] sm:$0xf] %vm2237, %v2045
  %2239 = vst.msk [vmem:[%s2 + $0x4] sm:$0xf] %vm2237, %v2046
  %2240 = vst.msk [vmem:[%s2 + $0x8] sm:$0xf] %vm2237, %v2047
  %2241 = vst.msk [vmem:[%s2 + $0xc] sm:$0xf] %vm2237, %v2048
  %2242 = vst.msk [vmem:[%s2 + $0x10] sm:$0xf] %vm2237, %v2049
  %2243 = vst.msk [vmem:[%s2 + $0x14] sm:$0xf] %vm2237, %v2050
  %2244 = vst.msk [vmem:[%s2 + $0x18] sm:$0xf] %vm2237, %v2051
  %2245 = vst.msk [vmem:[%s2 + $0x1c] sm:$0xf] %vm2237, %v2052
  %2246 = vst.msk [vmem:[%s2 + $0x20] sm:$0xf] %vm2237, %v2053
  %2247 = vst.msk [vmem:[%s2 + $0x24] sm:$0xf] %vm2237, %v2054
  %2248 = vst.msk [vmem:[%s2 + $0x28] sm:$0xf] %vm2237, %v2055
  %2249 = vst.msk [vmem:[%s2 + $0x2c] sm:$0xf] %vm2237, %v2056
  %2250 = vst.msk [vmem:[%s2 + $0x30] sm:$0xf] %vm2237, %v2057
  %2251 = vst.msk [vmem:[%s2 + $0x34] sm:$0xf] %vm2237, %v2058
  %2252 = vst.msk [vmem:[%s2 + $0x38] sm:$0xf] %vm2237, %v2059
  %2253 = vst.msk [vmem:[%s2 + $0x3c] sm:$0xf] %vm2237, %v2060
  %2254 = vst.msk [vmem:[%s2 + $0x40] sm:$0xf] %vm2237, %v2061
  %2255 = vst.msk [vmem:[%s2 + $0x44] sm:$0xf] %vm2237, %v2062
  %2256 = vst.msk [vmem:[%s2 + $0x48] sm:$0xf] %vm2237, %v2063
  %2257 = vst.msk [vmem:[%s2 + $0x4c] sm:$0xf] %vm2237, %v2064
  %2258 = vst.msk [vmem:[%s2 + $0x50] sm:$0xf] %vm2237, %v2065
  %2259 = vst.msk [vmem:[%s2 + $0x54] sm:$0xf] %vm2237, %v2066
  %2260 = vst.msk [vmem:[%s2 + $0x58] sm:$0xf] %vm2237, %v2067
  %2261 = vst.msk [vmem:[%s2 + $0x5c] sm:$0xf] %vm2237, %v2068
  %2262 = vst.msk [vmem:[%s2 + $0x60] sm:$0xf] %vm2237, %v2069
  %2263 = vst.msk [vmem:[%s2 + $0x64] sm:$0xf] %vm2237, %v2070
  %2264 = vst.msk [vmem:[%s2 + $0x68] sm:$0xf] %vm2237, %v2071
  %2265 = vst.msk [vmem:[%s2 + $0x6c] sm:$0xf] %vm2237, %v2072
  %2266 = vst.msk [vmem:[%s2 + $0x70] sm:$0xf] %vm2237, %v2073
  %2267 = vst.msk [vmem:[%s2 + $0x74] sm:$0xf] %vm2237, %v2074
  %2268 = vst.msk [vmem:[%s2 + $0x78] sm:$0xf] %vm2237, %v2075
  %2269 = vst.msk [vmem:[%s2 + $0x7c] sm:$0xf] %vm2237, %v2076
  %2270 = vst.msk [vmem:[%s2 + $0x80] sm:$0xf] %vm2237, %v2077
  %2271 = vst.msk [vmem:[%s2 + $0x84] sm:$0xf] %vm2237, %v2078
  %2272 = vst.msk [vmem:[%s2 + $0x88] sm:$0xf] %vm2237, %v2079
  %2273 = vst.msk [vmem:[%s2 + $0x8c] sm:$0xf] %vm2237, %v2080
  %2274 = vst.msk [vmem:[%s2 + $0x90] sm:$0xf] %vm2237, %v2081
  %2275 = vst.msk [vmem:[%s2 + $0x94] sm:$0xf] %vm2237, %v2082
  %2276 = vst.msk [vmem:[%s2 + $0x98] sm:$0xf] %vm2237, %v2083
  %2277 = vst.msk [vmem:[%s2 + $0x9c] sm:$0xf] %vm2237, %v2084
  %2278 = vst.msk [vmem:[%s2 + $0xa0] sm:$0xf] %vm2237, %v2085
  %2279 = vst.msk [vmem:[%s2 + $0xa4] sm:$0xf] %vm2237, %v2086
  %2280 = vst.msk [vmem:[%s2 + $0xa8] sm:$0xf] %vm2237, %v2087
  %2281 = vst.msk [vmem:[%s2 + $0xac] sm:$0xf] %vm2237, %v2088
  %2282 = vst.msk [vmem:[%s2 + $0xb0] sm:$0xf] %vm2237, %v2089
  %2283 = vst.msk [vmem:[%s2 + $0xb4] sm:$0xf] %vm2237, %v2090
  %2284 = vst.msk [vmem:[%s2 + $0xb8] sm:$0xf] %vm2237, %v2091
  %2285 = vst.msk [vmem:[%s2 + $0xbc] sm:$0xf] %vm2237, %v2092
  %2286 = vst.msk [vmem:[%s2 + $0xc0] sm:$0xf] %vm2237, %v2093
  %2287 = vst.msk [vmem:[%s2 + $0xc4] sm:$0xf] %vm2237, %v2094
  %2288 = vst.msk [vmem:[%s2 + $0xc8] sm:$0xf] %vm2237, %v2095
  %2289 = vst.msk [vmem:[%s2 + $0xcc] sm:$0xf] %vm2237, %v2096
  %2290 = vst.msk [vmem:[%s2 + $0xd0] sm:$0xf] %vm2237, %v2097
  %2291 = vst.msk [vmem:[%s2 + $0xd4] sm:$0xf] %vm2237, %v2098
  %2292 = vst.msk [vmem:[%s2 + $0xd8] sm:$0xf] %vm2237, %v2099
  %2293 = vst.msk [vmem:[%s2 + $0xdc] sm:$0xf] %vm2237, %v2100
  %2294 = vst.msk [vmem:[%s2 + $0xe0] sm:$0xf] %vm2237, %v2101
  %2295 = vst.msk [vmem:[%s2 + $0xe4] sm:$0xf] %vm2237, %v2102
  %2296 = vst.msk [vmem:[%s2 + $0xe8] sm:$0xf] %vm2237, %v2103
  %2297 = vst.msk [vmem:[%s2 + $0xec] sm:$0xf] %vm2237, %v2104
  %2298 = vst.msk [vmem:[%s2 + $0xf0] sm:$0xf] %vm2237, %v2105
  %2299 = vst.msk [vmem:[%s2 + $0xf4] sm:$0xf] %vm2237, %v2106
  %2300 = vst.msk [vmem:[%s2 + $0xf8] sm:$0xf] %vm2237, %v2107
  %2301 = vst.msk [vmem:[%s2 + $0xfc] sm:$0xf] %vm2237, %v2108
  %2302 = vst.msk [vmem:[%s2 + $0x100] sm:$0xf] %vm2237, %v2109
  %2303 = vst.msk [vmem:[%s2 + $0x104] sm:$0xf] %vm2237, %v2110
  %2304 = vst.msk [vmem:[%s2 + $0x108] sm:$0xf] %vm2237, %v2111
  %2305 = vst.msk [vmem:[%s2 + $0x10c] sm:$0xf] %vm2237, %v2112
  %2306 = vst.msk [vmem:[%s2 + $0x110] sm:$0xf] %vm2237, %v2113
  %2307 = vst.msk [vmem:[%s2 + $0x114] sm:$0xf] %vm2237, %v2114
  %2308 = vst.msk [vmem:[%s2 + $0x118] sm:$0xf] %vm2237, %v2115
  %2309 = vst.msk [vmem:[%s2 + $0x11c] sm:$0xf] %vm2237, %v2116
  %2310 = vst.msk [vmem:[%s2 + $0x120] sm:$0xf] %vm2237, %v2117
  %2311 = vst.msk [vmem:[%s2 + $0x124] sm:$0xf] %vm2237, %v2118
  %2312 = vst.msk [vmem:[%s2 + $0x128] sm:$0xf] %vm2237, %v2119
  %2313 = vst.msk [vmem:[%s2 + $0x12c] sm:$0xf] %vm2237, %v2120
  %2314 = vst.msk [vmem:[%s2 + $0x130] sm:$0xf] %vm2237, %v2121
  %2315 = vst.msk [vmem:[%s2 + $0x134] sm:$0xf] %vm2237, %v2122
  %2316 = vst.msk [vmem:[%s2 + $0x138] sm:$0xf] %vm2237, %v2123
  %2317 = vst.msk [vmem:[%s2 + $0x13c] sm:$0xf] %vm2237, %v2124
  %2318 = vst.msk [vmem:[%s2 + $0x140] sm:$0xf] %vm2237, %v2125
  %2319 = vst.msk [vmem:[%s2 + $0x144] sm:$0xf] %vm2237, %v2126
  %2320 = vst.msk [vmem:[%s2 + $0x148] sm:$0xf] %vm2237, %v2127
  %2321 = vst.msk [vmem:[%s2 + $0x14c] sm:$0xf] %vm2237, %v2128
  %2322 = vst.msk [vmem:[%s2 + $0x150] sm:$0xf] %vm2237, %v2129
  %2323 = vst.msk [vmem:[%s2 + $0x154] sm:$0xf] %vm2237, %v2130
  %2324 = vst.msk [vmem:[%s2 + $0x158] sm:$0xf] %vm2237, %v2131
  %2325 = vst.msk [vmem:[%s2 + $0x15c] sm:$0xf] %vm2237, %v2132
  %2326 = vst.msk [vmem:[%s2 + $0x160] sm:$0xf] %vm2237, %v2133
  %2327 = vst.msk [vmem:[%s2 + $0x164] sm:$0xf] %vm2237, %v2134
  %2328 = vst.msk [vmem:[%s2 + $0x168] sm:$0xf] %vm2237, %v2135
  %2329 = vst.msk [vmem:[%s2 + $0x16c] sm:$0xf] %vm2237, %v2136
  %2330 = vst.msk [vmem:[%s2 + $0x170] sm:$0xf] %vm2237, %v2137
  %2331 = vst.msk [vmem:[%s2 + $0x174] sm:$0xf] %vm2237, %v2138
  %2332 = vst.msk [vmem:[%s2 + $0x178] sm:$0xf] %vm2237, %v2139
  %2333 = vst.msk [vmem:[%s2 + $0x17c] sm:$0xf] %vm2237, %v2140
  // Predicated region
  $region10: #{discriminator_forward.5} parent=0 // pred_check
    _
  $region11: #{discriminator_forward.5} parent=0 // pred_check_branch
    %2335 = sbr.rel (0) target = $region13
  $region12: #{discriminator_forward.5} parent=0 // pred_region
    _
  $region13: #{discriminator_forward.5} parent=0 // pred_fallthru
    _
  // Predicated region
  $region14: #{discriminator_forward.5} parent=0 // pred_check
    _
  $region15: #{discriminator_forward.5} parent=0 // pred_check_branch
    %2337 = sbr.rel (0) target = $region17
  $region16: #{discriminator_forward.5} parent=0 // pred_region
    _
  $region17: #{discriminator_forward.5} parent=0 // pred_fallthru
    _

// kernel: discriminator_forward.6
$region0: #{discriminator_forward.6}
  #allocation0 [shape = 'u32[]', space=smem, size = 0x4, offset = 0x4, fixed_abs, tag = 'smem constant byte address 0x4 - core index']
  #allocation1 [shape = 'u32[144,128]{1,0:T(1,128)}', space=vmem, size = 0x12000, scoped, tag = 'internal scratch']
  %s0 = inlined_call_operand.vmem [shape: bf16[192,256], index: 0, kind: input, shape index: {}]
  %s1 = inlined_call_operand.vmem [shape: bf16[256,32], index: 1, kind: input, shape index: {}]
  %s2 = inlined_call_operand.vmem [shape: bf16[192,32], index: 2, kind: output, shape index: {}]
  %s3 = sld [smem:[#allocation0]]
  $region18: #{discriminator_forward.6} parent=0
    _
  %s5 = ssub.s32 1, %s3
  %s6 = scalar_select 0, %s5, %s3
  // Predicated region
  $region2: #{discriminator_forward.6} parent=0 // pred_check
    _
  $region3: #{discriminator_forward.6} parent=0 // pred_check_branch
    %8 = sbr.rel (0) target = $region5
  $region4: #{discriminator_forward.6} parent=0 // pred_region
    _
  $region5: #{discriminator_forward.6} parent=0 // pred_fallthru
    _
  // Predicated region
  $region6: #{discriminator_forward.6} parent=0 // pred_check
    _
  $region7: #{discriminator_forward.6} parent=0 // pred_check_branch
    %10 = sbr.rel (0) target = $region9
  $region8: #{discriminator_forward.6} parent=0 // pred_region
    _
  $region9: #{discriminator_forward.6} parent=0 // pred_fallthru
    _
  %v12 = vld [vmem:[%s0] sm:$0xff]
  %v13 = vld [vmem:[%s0 + $0x8] sm:$0xff]
  %v14 = vld [vmem:[%s0 + $0x10] sm:$0xff]
  %v15 = vld [vmem:[%s0 + $0x18] sm:$0xff]
  %v16 = vld [vmem:[%s0 + $0x20] sm:$0xff]
  %v17 = vld [vmem:[%s0 + $0x28] sm:$0xff]
  %v18 = vld [vmem:[%s0 + $0x30] sm:$0xff]
  %v19 = vld [vmem:[%s0 + $0x38] sm:$0xff]
  %v20 = vld [vmem:[%s0 + $0x40] sm:$0xff]
  %v21 = vld [vmem:[%s0 + $0x48] sm:$0xff]
  %v22 = vld [vmem:[%s0 + $0x50] sm:$0xff]
  %v23 = vld [vmem:[%s0 + $0x58] sm:$0xff]
  %v24 = vld [vmem:[%s0 + $0x60] sm:$0xff]
  %v25 = vld [vmem:[%s0 + $0x68] sm:$0xff]
  %v26 = vld [vmem:[%s0 + $0x70] sm:$0xff]
  %v27 = vld [vmem:[%s0 + $0x78] sm:$0xff]
  %v28 = vld [vmem:[%s0 + $0x80] sm:$0xff]
  %v29 = vld [vmem:[%s0 + $0x88] sm:$0xff]
  %v30 = vld [vmem:[%s0 + $0x90] sm:$0xff]
  %v31 = vld [vmem:[%s0 + $0x98] sm:$0xff]
  %v32 = vld [vmem:[%s0 + $0xa0] sm:$0xff]
  %v33 = vld [vmem:[%s0 + $0xa8] sm:$0xff]
  %v34 = vld [vmem:[%s0 + $0xb0] sm:$0xff]
  %v35 = vld [vmem:[%s0 + $0xb8] sm:$0xff]
  %v36 = vld [vmem:[%s1] sm:$0xf]
  %v37 = vld [vmem:[%s1 + $0x4] sm:$0xf]
  %v38 = vld [vmem:[%s1 + $0x8] sm:$0xf]
  %v39 = vld [vmem:[%s1 + $0xc] sm:$0xf]
  %v40 = vld [vmem:[%s1 + $0x10] sm:$0xf]
  %v41 = vld [vmem:[%s1 + $0x14] sm:$0xf]
  %v42 = vld [vmem:[%s1 + $0x18] sm:$0xf]
  %v43 = vld [vmem:[%s1 + $0x1c] sm:$0xf]
  %v44 = vld [vmem:[%s1 + $0x20] sm:$0xf]
  %v45 = vld [vmem:[%s1 + $0x24] sm:$0xf]
  %v46 = vld [vmem:[%s1 + $0x28] sm:$0xf]
  %v47 = vld [vmem:[%s1 + $0x2c] sm:$0xf]
  %v48 = vld [vmem:[%s1 + $0x30] sm:$0xf]
  %v49 = vld [vmem:[%s1 + $0x34] sm:$0xf]
  %v50 = vld [vmem:[%s1 + $0x38] sm:$0xf]
  %v51 = vld [vmem:[%s1 + $0x3c] sm:$0xf]
  %v52 = vld [vmem:[%s1 + $0x40] sm:$0xf]
  %v53 = vld [vmem:[%s1 + $0x44] sm:$0xf]
  %v54 = vld [vmem:[%s1 + $0x48] sm:$0xf]
  %v55 = vld [vmem:[%s1 + $0x4c] sm:$0xf]
  %v56 = vld [vmem:[%s1 + $0x50] sm:$0xf]
  %v57 = vld [vmem:[%s1 + $0x54] sm:$0xf]
  %v58 = vld [vmem:[%s1 + $0x58] sm:$0xf]
  %v59 = vld [vmem:[%s1 + $0x5c] sm:$0xf]
  %v60 = vld [vmem:[%s1 + $0x60] sm:$0xf]
  %v61 = vld [vmem:[%s1 + $0x64] sm:$0xf]
  %v62 = vld [vmem:[%s1 + $0x68] sm:$0xf]
  %v63 = vld [vmem:[%s1 + $0x6c] sm:$0xf]
  %v64 = vld [vmem:[%s1 + $0x70] sm:$0xf]
  %v65 = vld [vmem:[%s1 + $0x74] sm:$0xf]
  %v66 = vld [vmem:[%s1 + $0x78] sm:$0xf]
  %v67 = vld [vmem:[%s1 + $0x7c] sm:$0xf]
  %v92 = vunpack.c.l.b16 %v12
  %v93 = vunpack.c.h.b16 %v12
  %v94 = vunpack.c.l.b16 %v13
  %v95 = vunpack.c.h.b16 %v13
  %v96 = vunpack.c.l.b16 %v14
  %v97 = vunpack.c.h.b16 %v14
  %v98 = vunpack.c.l.b16 %v15
  %v99 = vunpack.c.h.b16 %v15
  %v100 = vunpack.c.l.b16 %v16
  %v101 = vunpack.c.h.b16 %v16
  %v102 = vunpack.c.l.b16 %v17
  %v103 = vunpack.c.h.b16 %v17
  %v104 = vunpack.c.l.b16 %v18
  %v105 = vunpack.c.h.b16 %v18
  %v106 = vunpack.c.l.b16 %v19
  %v107 = vunpack.c.h.b16 %v19
  %v108 = vunpack.c.l.b16 %v20
  %v109 = vunpack.c.h.b16 %v20
  %v110 = vunpack.c.l.b16 %v21
  %v111 = vunpack.c.h.b16 %v21
  %v112 = vunpack.c.l.b16 %v22
  %v113 = vunpack.c.h.b16 %v22
  %v114 = vunpack.c.l.b16 %v23
  %v115 = vunpack.c.h.b16 %v23
  %v116 = vunpack.c.l.b16 %v24
  %v117 = vunpack.c.h.b16 %v24
  %v118 = vunpack.c.l.b16 %v25
  %v119 = vunpack.c.h.b16 %v25
  %v120 = vunpack.c.l.b16 %v26
  %v121 = vunpack.c.h.b16 %v26
  %v122 = vunpack.c.l.b16 %v27
  %v123 = vunpack.c.h.b16 %v27
  %v124 = vunpack.c.l.b16 %v28
  %v125 = vunpack.c.h.b16 %v28
  %v126 = vunpack.c.l.b16 %v29
  %v127 = vunpack.c.h.b16 %v29
  %v128 = vunpack.c.l.b16 %v30
  %v129 = vunpack.c.h.b16 %v30
  %v130 = vunpack.c.l.b16 %v31
  %v131 = vunpack.c.h.b16 %v31
  %v132 = vunpack.c.l.b16 %v32
  %v133 = vunpack.c.h.b16 %v32
  %v134 = vunpack.c.l.b16 %v33
  %v135 = vunpack.c.h.b16 %v33
  %v136 = vunpack.c.l.b16 %v34
  %v137 = vunpack.c.h.b16 %v34
  %v138 = vunpack.c.l.b16 %v35
  %v139 = vunpack.c.h.b16 %v35
  %v140 = vpack.c.b16 %v94, %v92
  %v141 = vpack.c.b16 %v95, %v93
  %v142 = vpack.c.b16 %v98, %v96
  %v143 = vpack.c.b16 %v99, %v97
  %v144 = vpack.c.b16 %v102, %v100
  %v145 = vpack.c.b16 %v103, %v101
  %v146 = vpack.c.b16 %v106, %v104
  %v147 = vpack.c.b16 %v107, %v105
  %v148 = vpack.c.b16 %v110, %v108
  %v149 = vpack.c.b16 %v111, %v109
  %v150 = vpack.c.b16 %v114, %v112
  %v151 = vpack.c.b16 %v115, %v113
  %v152 = vpack.c.b16 %v118, %v116
  %v153 = vpack.c.b16 %v119, %v117
  %v154 = vpack.c.b16 %v122, %v120
  %v155 = vpack.c.b16 %v123, %v121
  %v156 = vpack.c.b16 %v126, %v124
  %v157 = vpack.c.b16 %v127, %v125
  %v158 = vpack.c.b16 %v130, %v128
  %v159 = vpack.c.b16 %v131, %v129
  %v160 = vpack.c.b16 %v134, %v132
  %v161 = vpack.c.b16 %v135, %v133
  %v162 = vpack.c.b16 %v138, %v136
  %v163 = vpack.c.b16 %v139, %v137
  %v220 = vunpack.c.l.b16 %v36
  %v221 = vunpack.c.l.b16 %v37
  %v222 = vunpack.c.l.b16 %v38
  %v223 = vunpack.c.l.b16 %v39
  %v224 = vunpack.c.l.b16 %v40
  %v225 = vunpack.c.l.b16 %v41
  %v226 = vunpack.c.l.b16 %v42
  %v227 = vunpack.c.l.b16 %v43
  %v228 = vunpack.c.l.b16 %v44
  %v229 = vunpack.c.l.b16 %v45
  %v230 = vunpack.c.l.b16 %v46
  %v231 = vunpack.c.l.b16 %v47
  %v232 = vunpack.c.l.b16 %v48
  %v233 = vunpack.c.l.b16 %v49
  %v234 = vunpack.c.l.b16 %v50
  %v235 = vunpack.c.l.b16 %v51
  %v236 = vunpack.c.l.b16 %v52
  %v237 = vunpack.c.l.b16 %v53
  %v238 = vunpack.c.l.b16 %v54
  %v239 = vunpack.c.l.b16 %v55
  %v240 = vunpack.c.l.b16 %v56
  %v241 = vunpack.c.l.b16 %v57
  %v242 = vunpack.c.l.b16 %v58
  %v243 = vunpack.c.l.b16 %v59
  %v244 = vunpack.c.l.b16 %v60
  %v245 = vunpack.c.l.b16 %v61
  %v246 = vunpack.c.l.b16 %v62
  %v247 = vunpack.c.l.b16 %v63
  %v248 = vunpack.c.l.b16 %v64
  %v249 = vunpack.c.l.b16 %v65
  %v250 = vunpack.c.l.b16 %v66
  %v251 = vunpack.c.l.b16 %v67
  %v252 = vpack.c.b16 %v221, %v220
  %v253 = vpack.c.b16 %v223, %v222
  %v254 = vpack.c.b16 %v225, %v224
  %v255 = vpack.c.b16 %v227, %v226
  %v256 = vpack.c.b16 %v229, %v228
  %v257 = vpack.c.b16 %v231, %v230
  %v258 = vpack.c.b16 %v233, %v232
  %v259 = vpack.c.b16 %v235, %v234
  %v260 = vpack.c.b16 %v237, %v236
  %v261 = vpack.c.b16 %v239, %v238
  %v262 = vpack.c.b16 %v241, %v240
  %v263 = vpack.c.b16 %v243, %v242
  %v264 = vpack.c.b16 %v245, %v244
  %v265 = vpack.c.b16 %v247, %v246
  %v266 = vpack.c.b16 %v249, %v248
  %v267 = vpack.c.b16 %v251, %v250
  %284 = vmatprep.subr.bf16.mxu0 0
  %285 = vmatpush1.bf16.msra.mxu0 %v252
  %286 = vmatprep.subr.bf16.mxu0 0
  %287 = vmatpush1.bf16.msra.mxu0 %v253
  %288 = vmatprep.subr.bf16.mxu0 0
  %289 = vmatpush1.bf16.msra.mxu0 %v254
  %290 = vmatprep.subr.bf16.mxu0 0
  %291 = vmatpush1.bf16.msra.mxu0 %v255
  %292 = vmatprep.subr.bf16.mxu0 0
  %293 = vmatpush1.bf16.msra.mxu0 %v256
  %294 = vmatprep.subr.bf16.mxu0 0
  %295 = vmatpush1.bf16.msra.mxu0 %v257
  %296 = vmatprep.subr.bf16.mxu0 0
  %297 = vmatpush1.bf16.msra.mxu0 %v258
  %298 = vmatprep.subr.bf16.mxu0 0
  %299 = vmatpush1.bf16.msra.mxu0 %v259
  %300 = vmatprep.subr.bf16.mxu0 0
  %301 = vmatpush1.bf16.msra.mxu0 %v260
  %302 = vmatprep.subr.bf16.mxu0 0
  %303 = vmatpush1.bf16.msra.mxu0 %v261
  %304 = vmatprep.subr.bf16.mxu0 0
  %305 = vmatpush1.bf16.msra.mxu0 %v262
  %306 = vmatprep.subr.bf16.mxu0 0
  %307 = vmatpush1.bf16.msra.mxu0 %v263
  %308 = vmatprep.subr.bf16.mxu0 0
  %309 = vmatpush1.bf16.msra.mxu0 %v264
  %310 = vmatprep.subr.bf16.mxu0 0
  %311 = vmatpush1.bf16.msra.mxu0 %v265
  %312 = vmatprep.subr.bf16.mxu0 0
  %313 = vmatpush1.bf16.msra.mxu0 %v266
  %314 = vmatprep.subr.bf16.mxu0 0
  %315 = vmatpush1.bf16.msra.mxu0 %v267
  %316 = vmatprep.mubr.bf16.mxu0 %v141
  %317 = vmatmul.mubr.bf16.gmra.mrb[0].mxu0 %v140
  %v318 = vpop.f32.mrb[0].mxu0
  %v319 = vadd.f32 0.0, %v318
  %v320 = vpop.f32.mrb[0].mxu0
  %v321 = vpop.f32.mrb[0].mxu0
  %v322 = vadd.f32 0.0, %v321
  %v323 = vpop.f32.mrb[0].mxu0
  %324 = vmatprep.mubr.bf16.mxu0 %v143
  %325 = vmatmul.mubr.bf16.gmra.mrb[0].mxu0 %v142
  %v326 = vpop.f32.mrb[0].mxu0
  %v327 = vadd.f32 0.0, %v326
  %v328 = vpop.f32.mrb[0].mxu0
  %v329 = vpop.f32.mrb[0].mxu0
  %v330 = vadd.f32 0.0, %v329
  %v331 = vpop.f32.mrb[0].mxu0
  %332 = vmatprep.mubr.bf16.mxu0 %v145
  %333 = vmatmul.mubr.bf16.gmra.mrb[0].mxu0 %v144
  %v334 = vpop.f32.mrb[0].mxu0
  %v335 = vadd.f32 0.0, %v334
  %v336 = vpop.f32.mrb[0].mxu0
  %v337 = vpop.f32.mrb[0].mxu0
  %v338 = vadd.f32 0.0, %v337
  %v339 = vpop.f32.mrb[0].mxu0
  %340 = vmatprep.mubr.bf16.mxu0 %v147
  %341 = vmatmul.mubr.bf16.gmra.mrb[0].mxu0 %v146
  %v342 = vpop.f32.mrb[0].mxu0
  %v343 = vadd.f32 0.0, %v342
  %v344 = vpop.f32.mrb[0].mxu0
  %v345 = vpop.f32.mrb[0].mxu0
  %v346 = vadd.f32 0.0, %v345
  %v347 = vpop.f32.mrb[0].mxu0
  %348 = vmatprep.mubr.bf16.mxu0 %v149
  %349 = vmatmul.mubr.bf16.gmra.mrb[0].mxu0 %v148
  %v350 = vpop.f32.mrb[0].mxu0
  %v351 = vadd.f32 0.0, %v350
  %v352 = vpop.f32.mrb[0].mxu0
  %v353 = vpop.f32.mrb[0].mxu0
  %v354 = vadd.f32 0.0, %v353
  %v355 = vpop.f32.mrb[0].mxu0
  %356 = vmatprep.mubr.bf16.mxu0 %v151
  %357 = vmatmul.mubr.bf16.gmra.mrb[0].mxu0 %v150
  %v358 = vpop.f32.mrb[0].mxu0
  %v359 = vadd.f32 0.0, %v358
  %v360 = vpop.f32.mrb[0].mxu0
  %v361 = vpop.f32.mrb[0].mxu0
  %v362 = vadd.f32 0.0, %v361
  %v363 = vpop.f32.mrb[0].mxu0
  %364 = vmatprep.mubr.bf16.mxu0 %v153
  %365 = vmatmul.mubr.bf16.gmra.mrb[0].mxu0 %v152
  %v366 = vpop.f32.mrb[0].mxu0
  %v367 = vadd.f32 0.0, %v366
  %v368 = vpop.f32.mrb[0].mxu0
  %v369 = vpop.f32.mrb[0].mxu0
  %v370 = vadd.f32 0.0, %v369
  %v371 = vpop.f32.mrb[0].mxu0
  %372 = vmatprep.mubr.bf16.mxu0 %v155
  %373 = vmatmul.mubr.bf16.gmra.mrb[0].mxu0 %v154
  %v374 = vpop.f32.mrb[0].mxu0
  %v375 = vadd.f32 0.0, %v374
  %v376 = vpop.f32.mrb[0].mxu0
  %v377 = vpop.f32.mrb[0].mxu0
  %v378 = vadd.f32 0.0, %v377
  %v379 = vpop.f32.mrb[0].mxu0
  %380 = vmatprep.mubr.bf16.mxu0 %v157
  %381 = vmatmul.mubr.bf16.gmra.mrb[0].mxu0 %v156
  %v382 = vpop.f32.mrb[0].mxu0
  %v383 = vadd.f32 0.0, %v382
  %v384 = vpop.f32.mrb[0].mxu0
  %v385 = vpop.f32.mrb[0].mxu0
  %v386 = vadd.f32 0.0, %v385
  %v387 = vpop.f32.mrb[0].mxu0
  %388 = vmatprep.mubr.bf16.mxu0 %v159
  %389 = vmatmul.mubr.bf16.gmra.mrb[0].mxu0 %v158
  %v390 = vpop.f32.mrb[0].mxu0
  %v391 = vadd.f32 0.0, %v390
  %v392 = vpop.f32.mrb[0].mxu0
  %v393 = vpop.f32.mrb[0].mxu0
  %v394 = vadd.f32 0.0, %v393
  %v395 = vpop.f32.mrb[0].mxu0
  %396 = vmatprep.mubr.bf16.mxu0 %v161
  %397 = vmatmul.mubr.bf16.gmra.mrb[0].mxu0 %v160
  %v398 = vpop.f32.mrb[0].mxu0
  %v399 = vadd.f32 0.0, %v398
  %v400 = vpop.f32.mrb[0].mxu0
  %v401 = vpop.f32.mrb[0].mxu0
  %v402 = vadd.f32 0.0, %v401
  %v403 = vpop.f32.mrb[0].mxu0
  %404 = vmatprep.mubr.bf16.mxu0 %v163
  %405 = vmatmul.mubr.bf16.gmra.mrb[0].mxu0 %v162
  %v406 = vpop.f32.mrb[0].mxu0
  %v407 = vadd.f32 0.0, %v406
  %v408 = vpop.f32.mrb[0].mxu0
  %v409 = vpop.f32.mrb[0].mxu0
  %v410 = vadd.f32 0.0, %v409
  %v411 = vpop.f32.mrb[0].mxu0
  %412 = vdwg.mxu0
  %vm413 = vcmask 261120
  %v414 = vsel %vm413, %v319, 0.0
  %v415 = vsel %vm413, %v322, 0.0
  %v416 = vadd.f32 %v414, %v415
  %v417 = vsel %vm413, %v327, 0.0
  %v418 = vadd.f32 %v416, %v417
  %v419 = vsel %vm413, %v330, 0.0
  %v420 = vadd.f32 %v418, %v419
  %v421 = vsel %vm413, %v335, 0.0
  %v422 = vadd.f32 %v420, %v421
  %v423 = vsel %vm413, %v338, 0.0
  %v424 = vadd.f32 %v422, %v423
  %v425 = vsel %vm413, %v343, 0.0
  %v426 = vadd.f32 %v424, %v425
  %v427 = vsel %vm413, %v346, 0.0
  %v428 = vadd.f32 %v426, %v427
  %v429 = vsel %vm413, %v351, 0.0
  %v430 = vadd.f32 %v428, %v429
  %v431 = vsel %vm413, %v354, 0.0
  %v432 = vadd.f32 %v430, %v431
  %v433 = vsel %vm413, %v359, 0.0
  %v434 = vadd.f32 %v432, %v433
  %v435 = vsel %vm413, %v362, 0.0
  %v436 = vadd.f32 %v434, %v435
  %v437 = vsel %vm413, %v367, 0.0
  %v438 = vadd.f32 %v436, %v437
  %v439 = vsel %vm413, %v370, 0.0
  %v440 = vadd.f32 %v438, %v439
  %v441 = vsel %vm413, %v375, 0.0
  %v442 = vadd.f32 %v440, %v441
  %v443 = vsel %vm413, %v378, 0.0
  %v444 = vadd.f32 %v442, %v443
  %v445 = vsel %vm413, %v383, 0.0
  %v446 = vadd.f32 %v444, %v445
  %v447 = vsel %vm413, %v386, 0.0
  %v448 = vadd.f32 %v446, %v447
  %v449 = vsel %vm413, %v391, 0.0
  %v450 = vadd.f32 %v448, %v449
  %v451 = vsel %vm413, %v394, 0.0
  %v452 = vadd.f32 %v450, %v451
  %v453 = vsel %vm413, %v399, 0.0
  %v454 = vadd.f32 %v452, %v453
  %v455 = vsel %vm413, %v402, 0.0
  %v456 = vadd.f32 %v454, %v455
  %v457 = vsel %vm413, %v407, 0.0
  %v458 = vadd.f32 %v456, %v457
  %v459 = vsel %vm413, %v410, 0.0
  %v460 = vadd.f32 %v458, %v459
  %v461 = vrot.slane %v460, 4
  %v462 = vadd.f32 %v460, %v461
  %v463 = vrot.slane %v462, 2
  %v464 = vadd.f32 %v462, %v463
  %v465 = vrot.slane %v464, 1
  %v466 = vadd.f32 %v464, %v465
  %v467 = vrcp.pop 192.0
  %v468 = vmul.f32 %v466, %v467
  %v469 = vsub.f32 %v319, %v468
  %v470 = vsub.f32 %v322, %v468
  %v471 = vsub.f32 %v327, %v468
  %v472 = vsub.f32 %v330, %v468
  %v473 = vsub.f32 %v335, %v468
  %v474 = vsub.f32 %v338, %v468
  %v475 = vsub.f32 %v343, %v468
  %v476 = vsub.f32 %v346, %v468
  %v477 = vsub.f32 %v351, %v468
  %v478 = vsub.f32 %v354, %v468
  %v479 = vsub.f32 %v359, %v468
  %v480 = vsub.f32 %v362, %v468
  %v481 = vsub.f32 %v367, %v468
  %v482 = vsub.f32 %v370, %v468
  %v483 = vsub.f32 %v375, %v468
  %v484 = vsub.f32 %v378, %v468
  %v485 = vsub.f32 %v383, %v468
  %v486 = vsub.f32 %v386, %v468
  %v487 = vsub.f32 %v391, %v468
  %v488 = vsub.f32 %v394, %v468
  %v489 = vsub.f32 %v399, %v468
  %v490 = vsub.f32 %v402, %v468
  %v491 = vsub.f32 %v407, %v468
  %v492 = vsub.f32 %v410, %v468
  %v493 = vmul.f32 %v469, %v469
  %v494 = vmul.f32 %v470, %v470
  %v495 = vmul.f32 %v471, %v471
  %v496 = vmul.f32 %v472, %v472
  %v497 = vmul.f32 %v473, %v473
  %v498 = vmul.f32 %v474, %v474
  %v499 = vmul.f32 %v475, %v475
  %v500 = vmul.f32 %v476, %v476
  %v501 = vmul.f32 %v477, %v477
  %v502 = vmul.f32 %v478, %v478
  %v503 = vmul.f32 %v479, %v479
  %v504 = vmul.f32 %v480, %v480
  %v505 = vmul.f32 %v481, %v481
  %v506 = vmul.f32 %v482, %v482
  %v507 = vmul.f32 %v483, %v483
  %v508 = vmul.f32 %v484, %v484
  %v509 = vmul.f32 %v485, %v485
  %v510 = vmul.f32 %v486, %v486
  %v511 = vmul.f32 %v487, %v487
  %v512 = vmul.f32 %v488, %v488
  %v513 = vmul.f32 %v489, %v489
  %v514 = vmul.f32 %v490, %v490
  %v515 = vmul.f32 %v491, %v491
  %v516 = vmul.f32 %v492, %v492
  %v517 = vsel %vm413, %v493, 0.0
  %v518 = vsel %vm413, %v494, 0.0
  %v519 = vadd.f32 %v517, %v518
  %v520 = vsel %vm413, %v495, 0.0
  %v521 = vadd.f32 %v519, %v520
  %v522 = vsel %vm413, %v496, 0.0
  %v523 = vadd.f32 %v521, %v522
  %v524 = vsel %vm413, %v497, 0.0
  %v525 = vadd.f32 %v523, %v524
  %v526 = vsel %vm413, %v498, 0.0
  %v527 = vadd.f32 %v525, %v526
  %v528 = vsel %vm413, %v499, 0.0
  %v529 = vadd.f32 %v527, %v528
  %v530 = vsel %vm413, %v500, 0.0
  %v531 = vadd.f32 %v529, %v530
  %v532 = vsel %vm413, %v501, 0.0
  %v533 = vadd.f32 %v531, %v532
  %v534 = vsel %vm413, %v502, 0.0
  %v535 = vadd.f32 %v533, %v534
  %v536 = vsel %vm413, %v503, 0.0
  %v537 = vadd.f32 %v535, %v536
  %v538 = vsel %vm413, %v504, 0.0
  %v539 = vadd.f32 %v537, %v538
  %v540 = vsel %vm413, %v505, 0.0
  %v541 = vadd.f32 %v539, %v540
  %v542 = vsel %vm413, %v506, 0.0
  %v543 = vadd.f32 %v541, %v542
  %v544 = vsel %vm413, %v507, 0.0
  %v545 = vadd.f32 %v543, %v544
  %v546 = vsel %vm413, %v508, 0.0
  %v547 = vadd.f32 %v545, %v546
  %v548 = vsel %vm413, %v509, 0.0
  %v549 = vadd.f32 %v547, %v548
  %v550 = vsel %vm413, %v510, 0.0
  %v551 = vadd.f32 %v549, %v550
  %v552 = vsel %vm413, %v511, 0.0
  %v553 = vadd.f32 %v551, %v552
  %v554 = vsel %vm413, %v512, 0.0
  %v555 = vadd.f32 %v553, %v554
  %v556 = vsel %vm413, %v513, 0.0
  %v557 = vadd.f32 %v555, %v556
  %v558 = vsel %vm413, %v514, 0.0
  %v559 = vadd.f32 %v557, %v558
  %v560 = vsel %vm413, %v515, 0.0
  %v561 = vadd.f32 %v559, %v560
  %v562 = vsel %vm413, %v516, 0.0
  %v563 = vadd.f32 %v561, %v562
  %v564 = vrot.slane %v563, 4
  %v565 = vadd.f32 %v563, %v564
  %v566 = vrot.slane %v565, 2
  %v567 = vadd.f32 %v565, %v566
  %v568 = vrot.slane %v567, 1
  %v569 = vadd.f32 %v567, %v568
  %v570 = vmul.f32 %v569, %v467
  %v571 = vadd.f32 %v570, 1e-05
  %v572 = vrsqrt.pop %v571
  %v573 = vmul.f32 %v469, %v572
  %v574 = vmul.f32 %v470, %v572
  %v575 = vmul.f32 %v471, %v572
  %v576 = vmul.f32 %v472, %v572
  %v577 = vmul.f32 %v473, %v572
  %v578 = vmul.f32 %v474, %v572
  %v579 = vmul.f32 %v475, %v572
  %v580 = vmul.f32 %v476, %v572
  %v581 = vmul.f32 %v477, %v572
  %v582 = vmul.f32 %v478, %v572
  %v583 = vmul.f32 %v479, %v572
  %v584 = vmul.f32 %v480, %v572
  %v585 = vmul.f32 %v481, %v572
  %v586 = vmul.f32 %v482, %v572
  %v587 = vmul.f32 %v483, %v572
  %v588 = vmul.f32 %v484, %v572
  %v589 = vmul.f32 %v485, %v572
  %v590 = vmul.f32 %v486, %v572
  %v591 = vmul.f32 %v487, %v572
  %v592 = vmul.f32 %v488, %v572
  %v593 = vmul.f32 %v489, %v572
  %v594 = vmul.f32 %v490, %v572
  %v595 = vmul.f32 %v491, %v572
  %v596 = vmul.f32 %v492, %v572
  %vm597 = vcmp.ge.f32.partialorder %v573, 0.0
  %vm598 = vcmp.ge.f32.partialorder %v574, 0.0
  %vm599 = vcmp.ge.f32.partialorder %v575, 0.0
  %vm600 = vcmp.ge.f32.partialorder %v576, 0.0
  %vm601 = vcmp.ge.f32.partialorder %v577, 0.0
  %vm602 = vcmp.ge.f32.partialorder %v578, 0.0
  %vm603 = vcmp.ge.f32.partialorder %v579, 0.0
  %vm604 = vcmp.ge.f32.partialorder %v580, 0.0
  %vm605 = vcmp.ge.f32.partialorder %v581, 0.0
  %vm606 = vcmp.ge.f32.partialorder %v582, 0.0
  %vm607 = vcmp.ge.f32.partialorder %v583, 0.0
  %vm608 = vcmp.ge.f32.partialorder %v584, 0.0
  %vm609 = vcmp.ge.f32.partialorder %v585, 0.0
  %vm610 = vcmp.ge.f32.partialorder %v586, 0.0
  %vm611 = vcmp.ge.f32.partialorder %v587, 0.0
  %vm612 = vcmp.ge.f32.partialorder %v588, 0.0
  %vm613 = vcmp.ge.f32.partialorder %v589, 0.0
  %vm614 = vcmp.ge.f32.partialorder %v590, 0.0
  %vm615 = vcmp.ge.f32.partialorder %v591, 0.0
  %vm616 = vcmp.ge.f32.partialorder %v592, 0.0
  %vm617 = vcmp.ge.f32.partialorder %v593, 0.0
  %vm618 = vcmp.ge.f32.partialorder %v594, 0.0
  %vm619 = vcmp.ge.f32.partialorder %v595, 0.0
  %vm620 = vcmp.ge.f32.partialorder %v596, 0.0
  %v621 = vmul.f32 %v573, 0.1
  %v622 = vmul.f32 %v574, 0.1
  %v623 = vmul.f32 %v575, 0.1
  %v624 = vmul.f32 %v576, 0.1
  %v625 = vmul.f32 %v577, 0.1
  %v626 = vmul.f32 %v578, 0.1
  %v627 = vmul.f32 %v579, 0.1
  %v628 = vmul.f32 %v580, 0.1
  %v629 = vmul.f32 %v581, 0.1
  %v630 = vmul.f32 %v582, 0.1
  %v631 = vmul.f32 %v583, 0.1
  %v632 = vmul.f32 %v584, 0.1
  %v633 = vmul.f32 %v585, 0.1
  %v634 = vmul.f32 %v586, 0.1
  %v635 = vmul.f32 %v587, 0.1
  %v636 = vmul.f32 %v588, 0.1
  %v637 = vmul.f32 %v589, 0.1
  %v638 = vmul.f32 %v590, 0.1
  %v639 = vmul.f32 %v591, 0.1
  %v640 = vmul.f32 %v592, 0.1
  %v641 = vmul.f32 %v593, 0.1
  %v642 = vmul.f32 %v594, 0.1
  %v643 = vmul.f32 %v595, 0.1
  %v644 = vmul.f32 %v596, 0.1
  %v645 = vsel %vm597, %v573, %v621
  %v646 = vsel %vm598, %v574, %v622
  %v647 = vsel %vm599, %v575, %v623
  %v648 = vsel %vm600, %v576, %v624
  %v649 = vsel %vm601, %v577, %v625
  %v650 = vsel %vm602, %v578, %v626
  %v651 = vsel %vm603, %v579, %v627
  %v652 = vsel %vm604, %v580, %v628
  %v653 = vsel %vm605, %v581, %v629
  %v654 = vsel %vm606, %v582, %v630
  %v655 = vsel %vm607, %v583, %v631
  %v656 = vsel %vm608, %v584, %v632
  %v657 = vsel %vm609, %v585, %v633
  %v658 = vsel %vm610, %v586, %v634
  %v659 = vsel %vm611, %v587, %v635
  %v660 = vsel %vm612, %v588, %v636
  %v661 = vsel %vm613, %v589, %v637
  %v662 = vsel %vm614, %v590, %v638
  %v663 = vsel %vm615, %v591, %v639
  %v664 = vsel %vm616, %v592, %v640
  %v665 = vsel %vm617, %v593, %v641
  %v666 = vsel %vm618, %v594, %v642
  %v667 = vsel %vm619, %v595, %v643
  %v668 = vsel %vm620, %v596, %v644
  %v669 = vpack.c.bf16 %v646, %v645
  %v670 = vpack.c.bf16 %v648, %v647
  %v671 = vpack.c.bf16 %v650, %v649
  %v672 = vpack.c.bf16 %v652, %v651
  %v673 = vpack.c.bf16 %v654, %v653
  %v674 = vpack.c.bf16 %v656, %v655
  %v675 = vpack.c.bf16 %v658, %v657
  %v676 = vpack.c.bf16 %v660, %v659
  %v677 = vpack.c.bf16 %v662, %v661
  %v678 = vpack.c.bf16 %v664, %v663
  %v679 = vpack.c.bf16 %v666, %v665
  %v680 = vpack.c.bf16 %v668, %v667
  %v693 = vunpack.c.l.b16 %v669
  %v694 = vunpack.c.h.b16 %v669
  %v695 = vunpack.c.l.b16 %v670
  %v696 = vunpack.c.h.b16 %v670
  %v697 = vunpack.c.l.b16 %v671
  %v698 = vunpack.c.h.b16 %v671
  %v699 = vunpack.c.l.b16 %v672
  %v700 = vunpack.c.h.b16 %v672
  %v701 = vunpack.c.l.b16 %v673
  %v702 = vunpack.c.h.b16 %v673
  %v703 = vunpack.c.l.b16 %v674
  %v704 = vunpack.c.h.b16 %v674
  %v705 = vunpack.c.l.b16 %v675
  %v706 = vunpack.c.h.b16 %v675
  %v707 = vunpack.c.l.b16 %v676
  %v708 = vunpack.c.h.b16 %v676
  %v709 = vunpack.c.l.b16 %v677
  %v710 = vunpack.c.h.b16 %v677
  %v711 = vunpack.c.l.b16 %v678
  %v712 = vunpack.c.h.b16 %v678
  %v713 = vunpack.c.l.b16 %v679
  %v714 = vunpack.c.h.b16 %v679
  %v715 = vunpack.c.l.b16 %v680
  %v716 = vunpack.c.h.b16 %v680
  %v717 = vpack.c.b16 %v693, %v693
  %v718 = vpack.c.b16 %v694, %v694
  %v719 = vpack.c.b16 %v695, %v695
  %v720 = vpack.c.b16 %v696, %v696
  %v721 = vpack.c.b16 %v697, %v697
  %v722 = vpack.c.b16 %v698, %v698
  %v723 = vpack.c.b16 %v699, %v699
  %v724 = vpack.c.b16 %v700, %v700
  %v725 = vpack.c.b16 %v701, %v701
  %v726 = vpack.c.b16 %v702, %v702
  %v727 = vpack.c.b16 %v703, %v703
  %v728 = vpack.c.b16 %v704, %v704
  %v729 = vpack.c.b16 %v705, %v705
  %v730 = vpack.c.b16 %v706, %v706
  %v731 = vpack.c.b16 %v707, %v707
  %v732 = vpack.c.b16 %v708, %v708
  %v733 = vpack.c.b16 %v709, %v709
  %v734 = vpack.c.b16 %v710, %v710
  %v735 = vpack.c.b16 %v711, %v711
  %v736 = vpack.c.b16 %v712, %v712
  %v737 = vpack.c.b16 %v713, %v713
  %v738 = vpack.c.b16 %v714, %v714
  %v739 = vpack.c.b16 %v715, %v715
  %v740 = vpack.c.b16 %v716, %v716
  %vm765 = vcmask 257024
  %766 = vst.msk [vmem:[%s2] sm:$0xf] %vm765, %v717
  %767 = vst.msk [vmem:[%s2 + $0x4] sm:$0xf] %vm765, %v718
  %768 = vst.msk [vmem:[%s2 + $0x8] sm:$0xf] %vm765, %v719
  %769 = vst.msk [vmem:[%s2 + $0xc] sm:$0xf] %vm765, %v720
  %770 = vst.msk [vmem:[%s2 + $0x10] sm:$0xf] %vm765, %v721
  %771 = vst.msk [vmem:[%s2 + $0x14] sm:$0xf] %vm765, %v722
  %772 = vst.msk [vmem:[%s2 + $0x18] sm:$0xf] %vm765, %v723
  %773 = vst.msk [vmem:[%s2 + $0x1c] sm:$0xf] %vm765, %v724
  %774 = vst.msk [vmem:[%s2 + $0x20] sm:$0xf] %vm765, %v725
  %775 = vst.msk [vmem:[%s2 + $0x24] sm:$0xf] %vm765, %v726
  %776 = vst.msk [vmem:[%s2 + $0x28] sm:$0xf] %vm765, %v727
  %777 = vst.msk [vmem:[%s2 + $0x2c] sm:$0xf] %vm765, %v728
  %778 = vst.msk [vmem:[%s2 + $0x30] sm:$0xf] %vm765, %v729
  %779 = vst.msk [vmem:[%s2 + $0x34] sm:$0xf] %vm765, %v730
  %780 = vst.msk [vmem:[%s2 + $0x38] sm:$0xf] %vm765, %v731
  %781 = vst.msk [vmem:[%s2 + $0x3c] sm:$0xf] %vm765, %v732
  %782 = vst.msk [vmem:[%s2 + $0x40] sm:$0xf] %vm765, %v733
  %783 = vst.msk [vmem:[%s2 + $0x44] sm:$0xf] %vm765, %v734
  %784 = vst.msk [vmem:[%s2 + $0x48] sm:$0xf] %vm765, %v735
  %785 = vst.msk [vmem:[%s2 + $0x4c] sm:$0xf] %vm765, %v736
  %786 = vst.msk [vmem:[%s2 + $0x50] sm:$0xf] %vm765, %v737
  %787 = vst.msk [vmem:[%s2 + $0x54] sm:$0xf] %vm765, %v738
  %788 = vst.msk [vmem:[%s2 + $0x58] sm:$0xf] %vm765, %v739
  %789 = vst.msk [vmem:[%s2 + $0x5c] sm:$0xf] %vm765, %v740
  // Predicated region
  $region10: #{discriminator_forward.6} parent=0 // pred_check
    _
  $region11: #{discriminator_forward.6} parent=0 // pred_check_branch
    %791 = sbr.rel (0) target = $region13
  $region12: #{discriminator_forward.6} parent=0 // pred_region
    _
  $region13: #{discriminator_forward.6} parent=0 // pred_fallthru
    _
  // Predicated region
  $region14: #{discriminator_forward.6} parent=0 // pred_check
    _
  $region15: #{discriminator_forward.6} parent=0 // pred_check_branch
    %793 = sbr.rel (0) target = $region17
  $region16: #{discriminator_forward.6} parent=0 // pred_region
    _
  $region17: #{discriminator_forward.6} parent=0 // pred_fallthru
    _

// kernel: discriminator_forward.7
$region0: #{discriminator_forward.7}
  #allocation0 [shape = 'u32[]', space=smem, size = 0x4, offset = 0x4, fixed_abs, tag = 'smem constant byte address 0x4 - core index']
  #allocation1 [shape = 'u32[144,128]{1,0:T(1,128)}', space=vmem, size = 0x12000, scoped, tag = 'internal scratch']
  %s0 = inlined_call_operand.vmem [shape: bf16[48,512], index: 0, kind: input, shape index: {}]
  %s1 = inlined_call_operand.vmem [shape: bf16[512,64], index: 1, kind: input, shape index: {}]
  %s2 = inlined_call_operand.vmem [shape: bf16[48,64], index: 2, kind: output, shape index: {}]
  %s3 = sld [smem:[#allocation0]]
  $region18: #{discriminator_forward.7} parent=0
    _
  %s5 = ssub.s32 1, %s3
  %s6 = scalar_select 0, %s5, %s3
  // Predicated region
  $region2: #{discriminator_forward.7} parent=0 // pred_check
    _
  $region3: #{discriminator_forward.7} parent=0 // pred_check_branch
    %8 = sbr.rel (0) target = $region5
  $region4: #{discriminator_forward.7} parent=0 // pred_region
    _
  $region5: #{discriminator_forward.7} parent=0 // pred_fallthru
    _
  // Predicated region
  $region6: #{discriminator_forward.7} parent=0 // pred_check
    _
  $region7: #{discriminator_forward.7} parent=0 // pred_check_branch
    %10 = sbr.rel (0) target = $region9
  $region8: #{discriminator_forward.7} parent=0 // pred_region
    _
  $region9: #{discriminator_forward.7} parent=0 // pred_fallthru
    _
  %v12 = vld [vmem:[%s0] sm:$0xff]
  %v13 = vld [vmem:[%s0 + $0x8] sm:$0xff]
  %v14 = vld [vmem:[%s0 + $0x10] sm:$0xff]
  %v15 = vld [vmem:[%s0 + $0x18] sm:$0xff]
  %v16 = vld [vmem:[%s0 + $0x20] sm:$0xff]
  %v17 = vld [vmem:[%s0 + $0x28] sm:$0xff]
  %v18 = vld [vmem:[%s0 + $0x30] sm:$0xff]
  %v19 = vld [vmem:[%s0 + $0x38] sm:$0xff]
  %v20 = vld [vmem:[%s0 + $0x40] sm:$0xff]
  %v21 = vld [vmem:[%s0 + $0x48] sm:$0xff]
  %v22 = vld [vmem:[%s0 + $0x50] sm:$0xff]
  %v23 = vld [vmem:[%s0 + $0x58] sm:$0xff]
  %v24 = vld [vmem:[%s1] sm:$0xf]
  %v25 = vld [vmem:[%s1 + $0x4] sm:$0xf]
  %v26 = vld [vmem:[%s1 + $0x8] sm:$0xf]
  %v27 = vld [vmem:[%s1 + $0xc] sm:$0xf]
  %v28 = vld [vmem:[%s1 + $0x10] sm:$0xf]
  %v29 = vld [vmem:[%s1 + $0x14] sm:$0xf]
  %v30 = vld [vmem:[%s1 + $0x18] sm:$0xf]
  %v31 = vld [vmem:[%s1 + $0x1c] sm:$0xf]
  %v32 = vld [vmem:[%s1 + $0x20] sm:$0xf]
  %v33 = vld [vmem:[%s1 + $0x24] sm:$0xf]
  %v34 = vld [vmem:[%s1 + $0x28] sm:$0xf]
  %v35 = vld [vmem:[%s1 + $0x2c] sm:$0xf]
  %v36 = vld [vmem:[%s1 + $0x30] sm:$0xf]
  %v37 = vld [vmem:[%s1 + $0x34] sm:$0xf]
  %v38 = vld [vmem:[%s1 + $0x38] sm:$0xf]
  %v39 = vld [vmem:[%s1 + $0x3c] sm:$0xf]
  %v40 = vld [vmem:[%s1 + $0x40] sm:$0xf]
  %v41 = vld [vmem:[%s1 + $0x44] sm:$0xf]
  %v42 = vld [vmem:[%s1 + $0x48] sm:$0xf]
  %v43 = vld [vmem:[%s1 + $0x4c] sm:$0xf]
  %v44 = vld [vmem:[%s1 + $0x50] sm:$0xf]
  %v45 = vld [vmem:[%s1 + $0x54] sm:$0xf]
  %v46 = vld [vmem:[%s1 + $0x58] sm:$0xf]
  %v47 = vld [vmem:[%s1 + $0x5c] sm:$0xf]
  %v48 = vld [vmem:[%s1 + $0x60] sm:$0xf]
  %v49 = vld [vmem:[%s1 + $0x64] sm:$0xf]
  %v50 = vld [vmem:[%s1 + $0x68] sm:$0xf]
  %v51 = vld [vmem:[%s1 + $0x6c] sm:$0xf]
  %v52 = vld [vmem:[%s1 + $0x70] sm:$0xf]
  %v53 = vld [vmem:[%s1 + $0x74] sm:$0xf]
  %v54 = vld [vmem:[%s1 + $0x78] sm:$0xf]
  %v55 = vld [vmem:[%s1 + $0x7c] sm:$0xf]
  %v56 = vld [vmem:[%s1 + $0x80] sm:$0xf]
  %v57 = vld [vmem:[%s1 + $0x84] sm:$0xf]
  %v58 = vld [vmem:[%s1 + $0x88] sm:$0xf]
  %v59 = vld [vmem:[%s1 + $0x8c] sm:$0xf]
  %v60 = vld [vmem:[%s1 + $0x90] sm:$0xf]
  %v61 = vld [vmem:[%s1 + $0x94] sm:$0xf]
  %v62 = vld [vmem:[%s1 + $0x98] sm:$0xf]
  %v63 = vld [vmem:[%s1 + $0x9c] sm:$0xf]
  %v64 = vld [vmem:[%s1 + $0xa0] sm:$0xf]
  %v65 = vld [vmem:[%s1 + $0xa4] sm:$0xf]
  %v66 = vld [vmem:[%s1 + $0xa8] sm:$0xf]
  %v67 = vld [vmem:[%s1 + $0xac] sm:$0xf]
  %v68 = vld [vmem:[%s1 + $0xb0] sm:$0xf]
  %v69 = vld [vmem:[%s1 + $0xb4] sm:$0xf]
  %v70 = vld [vmem:[%s1 + $0xb8] sm:$0xf]
  %v71 = vld [vmem:[%s1 + $0xbc] sm:$0xf]
  %v72 = vld [vmem:[%s1 + $0xc0] sm:$0xf]
  %v73 = vld [vmem:[%s1 + $0xc4] sm:$0xf]
  %v74 = vld [vmem:[%s1 + $0xc8] sm:$0xf]
  %v75 = vld [vmem:[%s1 + $0xcc] sm:$0xf]
  %v76 = vld [vmem:[%s1 + $0xd0] sm:$0xf]
  %v77 = vld [vmem:[%s1 + $0xd4] sm:$0xf]
  %v78 = vld [vmem:[%s1 + $0xd8] sm:$0xf]
  %v79 = vld [vmem:[%s1 + $0xdc] sm:$0xf]
  %v80 = vld [vmem:[%s1 + $0xe0] sm:$0xf]
  %v81 = vld [vmem:[%s1 + $0xe4] sm:$0xf]
  %v82 = vld [vmem:[%s1 + $0xe8] sm:$0xf]
  %v83 = vld [vmem:[%s1 + $0xec] sm:$0xf]
  %v84 = vld [vmem:[%s1 + $0xf0] sm:$0xf]
  %v85 = vld [vmem:[%s1 + $0xf4] sm:$0xf]
  %v86 = vld [vmem:[%s1 + $0xf8] sm:$0xf]
  %v87 = vld [vmem:[%s1 + $0xfc] sm:$0xf]
  %v100 = vunpack.c.l.b16 %v12
  %v101 = vunpack.c.h.b16 %v12
  %v102 = vunpack.c.l.b16 %v13
  %v103 = vunpack.c.h.b16 %v13
  %v104 = vunpack.c.l.b16 %v14
  %v105 = vunpack.c.h.b16 %v14
  %v106 = vunpack.c.l.b16 %v15
  %v107 = vunpack.c.h.b16 %v15
  %v108 = vunpack.c.l.b16 %v16
  %v109 = vunpack.c.h.b16 %v16
  %v110 = vunpack.c.l.b16 %v17
  %v111 = vunpack.c.h.b16 %v17
  %v112 = vunpack.c.l.b16 %v18
  %v113 = vunpack.c.h.b16 %v18
  %v114 = vunpack.c.l.b16 %v19
  %v115 = vunpack.c.h.b16 %v19
  %v116 = vunpack.c.l.b16 %v20
  %v117 = vunpack.c.h.b16 %v20
  %v118 = vunpack.c.l.b16 %v21
  %v119 = vunpack.c.h.b16 %v21
  %v120 = vunpack.c.l.b16 %v22
  %v121 = vunpack.c.h.b16 %v22
  %v122 = vunpack.c.l.b16 %v23
  %v123 = vunpack.c.h.b16 %v23
  %v124 = vpack.c.b16 %v104, %v100
  %v125 = vpack.c.b16 %v105, %v101
  %v126 = vpack.c.b16 %v106, %v102
  %v127 = vpack.c.b16 %v107, %v103
  %v128 = vpack.c.b16 %v112, %v108
  %v129 = vpack.c.b16 %v113, %v109
  %v130 = vpack.c.b16 %v114, %v110
  %v131 = vpack.c.b16 %v115, %v111
  %v132 = vpack.c.b16 %v120, %v116
  %v133 = vpack.c.b16 %v121, %v117
  %v134 = vpack.c.b16 %v122, %v118
  %v135 = vpack.c.b16 %v123, %v119
  %v212 = vunpack.c.l.b16 %v24
  %v213 = vunpack.c.l.b16 %v25
  %v214 = vunpack.c.l.b16 %v26
  %v215 = vunpack.c.l.b16 %v27
  %v216 = vunpack.c.l.b16 %v28
  %v217 = vunpack.c.l.b16 %v29
  %v218 = vunpack.c.l.b16 %v30
  %v219 = vunpack.c.l.b16 %v31
  %v220 = vunpack.c.l.b16 %v32
  %v221 = vunpack.c.l.b16 %v33
  %v222 = vunpack.c.l.b16 %v34
  %v223 = vunpack.c.l.b16 %v35
  %v224 = vunpack.c.l.b16 %v36
  %v225 = vunpack.c.l.b16 %v37
  %v226 = vunpack.c.l.b16 %v38
  %v227 = vunpack.c.l.b16 %v39
  %v228 = vunpack.c.l.b16 %v40
  %v229 = vunpack.c.l.b16 %v41
  %v230 = vunpack.c.l.b16 %v42
  %v231 = vunpack.c.l.b16 %v43
  %v232 = vunpack.c.l.b16 %v44
  %v233 = vunpack.c.l.b16 %v45
  %v234 = vunpack.c.l.b16 %v46
  %v235 = vunpack.c.l.b16 %v47
  %v236 = vunpack.c.l.b16 %v48
  %v237 = vunpack.c.l.b16 %v49
  %v238 = vunpack.c.l.b16 %v50
  %v239 = vunpack.c.l.b16 %v51
  %v240 = vunpack.c.l.b16 %v52
  %v241 = vunpack.c.l.b16 %v53
  %v242 = vunpack.c.l.b16 %v54
  %v243 = vunpack.c.l.b16 %v55
  %v244 = vunpack.c.l.b16 %v56
  %v245 = vunpack.c.l.b16 %v57
  %v246 = vunpack.c.l.b16 %v58
  %v247 = vunpack.c.l.b16 %v59
  %v248 = vunpack.c.l.b16 %v60
  %v249 = vunpack.c.l.b16 %v61
  %v250 = vunpack.c.l.b16 %v62
  %v251 = vunpack.c.l.b16 %v63
  %v252 = vunpack.c.l.b16 %v64
  %v253 = vunpack.c.l.b16 %v65
  %v254 = vunpack.c.l.b16 %v66
  %v255 = vunpack.c.l.b16 %v67
  %v256 = vunpack.c.l.b16 %v68
  %v257 = vunpack.c.l.b16 %v69
  %v258 = vunpack.c.l.b16 %v70
  %v259 = vunpack.c.l.b16 %v71
  %v260 = vunpack.c.l.b16 %v72
  %v261 = vunpack.c.l.b16 %v73
  %v262 = vunpack.c.l.b16 %v74
  %v263 = vunpack.c.l.b16 %v75
  %v264 = vunpack.c.l.b16 %v76
  %v265 = vunpack.c.l.b16 %v77
  %v266 = vunpack.c.l.b16 %v78
  %v267 = vunpack.c.l.b16 %v79
  %v268 = vunpack.c.l.b16 %v80
  %v269 = vunpack.c.l.b16 %v81
  %v270 = vunpack.c.l.b16 %v82
  %v271 = vunpack.c.l.b16 %v83
  %v272 = vunpack.c.l.b16 %v84
  %v273 = vunpack.c.l.b16 %v85
  %v274 = vunpack.c.l.b16 %v86
  %v275 = vunpack.c.l.b16 %v87
  %v276 = vpack.c.b16 %v213, %v212
  %v277 = vpack.c.b16 %v215, %v214
  %v278 = vpack.c.b16 %v217, %v216
  %v279 = vpack.c.b16 %v219, %v218
  %v280 = vpack.c.b16 %v221, %v220
  %v281 = vpack.c.b16 %v223, %v222
  %v282 = vpack.c.b16 %v225, %v224
  %v283 = vpack.c.b16 %v227, %v226
  %v284 = vpack.c.b16 %v229, %v228
  %v285 = vpack.c.b16 %v231, %v230
  %v286 = vpack.c.b16 %v233, %v232
  %v287 = vpack.c.b16 %v235, %v234
  %v288 = vpack.c.b16 %v237, %v236
  %v289 = vpack.c.b16 %v239, %v238
  %v290 = vpack.c.b16 %v241, %v240
  %v291 = vpack.c.b16 %v243, %v242
  %v292 = vpack.c.b16 %v245, %v244
  %v293 = vpack.c.b16 %v247, %v246
  %v294 = vpack.c.b16 %v249, %v248
  %v295 = vpack.c.b16 %v251, %v250
  %v296 = vpack.c.b16 %v253, %v252
  %v297 = vpack.c.b16 %v255, %v254
  %v298 = vpack.c.b16 %v257, %v256
  %v299 = vpack.c.b16 %v259, %v258
  %v300 = vpack.c.b16 %v261, %v260
  %v301 = vpack.c.b16 %v263, %v262
  %v302 = vpack.c.b16 %v265, %v264
  %v303 = vpack.c.b16 %v267, %v266
  %v304 = vpack.c.b16 %v269, %v268
  %v305 = vpack.c.b16 %v271, %v270
  %v306 = vpack.c.b16 %v273, %v272
  %v307 = vpack.c.b16 %v275, %v274
  %340 = vmatprep.subr.bf16.mxu0 0
  %341 = vmatpush1.bf16.msra.mxu0 %v276
  %342 = vmatprep.subr.bf16.mxu0 0
  %343 = vmatpush1.bf16.msra.mxu0 %v277
  %344 = vmatprep.subr.bf16.mxu0 0
  %345 = vmatpush1.bf16.msra.mxu0 %v278
  %346 = vmatprep.subr.bf16.mxu0 0
  %347 = vmatpush1.bf16.msra.mxu0 %v279
  %348 = vmatprep.subr.bf16.mxu0 0
  %349 = vmatpush1.bf16.msra.mxu0 %v280
  %350 = vmatprep.subr.bf16.mxu0 0
  %351 = vmatpush1.bf16.msra.mxu0 %v281
  %352 = vmatprep.subr.bf16.mxu0 0
  %353 = vmatpush1.bf16.msra.mxu0 %v282
  %354 = vmatprep.subr.bf16.mxu0 0
  %355 = vmatpush1.bf16.msra.mxu0 %v283
  %356 = vmatprep.subr.bf16.mxu0 0
  %357 = vmatpush1.bf16.msra.mxu0 %v284
  %358 = vmatprep.subr.bf16.mxu0 0
  %359 = vmatpush1.bf16.msra.mxu0 %v285
  %360 = vmatprep.subr.bf16.mxu0 0
  %361 = vmatpush1.bf16.msra.mxu0 %v286
  %362 = vmatprep.subr.bf16.mxu0 0
  %363 = vmatpush1.bf16.msra.mxu0 %v287
  %364 = vmatprep.subr.bf16.mxu0 0
  %365 = vmatpush1.bf16.msra.mxu0 %v288
  %366 = vmatprep.subr.bf16.mxu0 0
  %367 = vmatpush1.bf16.msra.mxu0 %v289
  %368 = vmatprep.subr.bf16.mxu0 0
  %369 = vmatpush1.bf16.msra.mxu0 %v290
  %370 = vmatprep.subr.bf16.mxu0 0
  %371 = vmatpush1.bf16.msra.mxu0 %v291
  %372 = vmatprep.mubr.bf16.mxu0 %v125
  %373 = vmatmul.mubr.bf16.gmra.mrb[0].mxu0 %v124
  %v374 = vpop.f32.mrb[0].mxu0
  %v375 = vadd.f32 0.0, %v374
  %v376 = vpop.f32.mrb[0].mxu0
  %v377 = vpop.f32.mrb[0].mxu0
  %v378 = vadd.f32 0.0, %v377
  %v379 = vpop.f32.mrb[0].mxu0
  %380 = vmatprep.mubr.bf16.mxu0 %v129
  %381 = vmatmul.mubr.bf16.gmra.mrb[0].mxu0 %v128
  %v382 = vpop.f32.mrb[0].mxu0
  %v383 = vadd.f32 0.0, %v382
  %v384 = vpop.f32.mrb[0].mxu0
  %v385 = vpop.f32.mrb[0].mxu0
  %v386 = vadd.f32 0.0, %v385
  %v387 = vpop.f32.mrb[0].mxu0
  %388 = vmatprep.mubr.bf16.mxu0 %v133
  %389 = vmatmul.mubr.bf16.gmra.mrb[0].mxu0 %v132
  %v390 = vpop.f32.mrb[0].mxu0
  %v391 = vadd.f32 0.0, %v390
  %v392 = vpop.f32.mrb[0].mxu0
  %v393 = vpop.f32.mrb[0].mxu0
  %v394 = vadd.f32 0.0, %v393
  %v395 = vpop.f32.mrb[0].mxu0
  %396 = vdwg.mxu0
  %397 = vmatprep.subr.bf16.mxu0 0
  %398 = vmatpush1.bf16.msra.mxu0 %v292
  %399 = vmatprep.subr.bf16.mxu0 0
  %400 = vmatpush1.bf16.msra.mxu0 %v293
  %401 = vmatprep.subr.bf16.mxu0 0
  %402 = vmatpush1.bf16.msra.mxu0 %v294
  %403 = vmatprep.subr.bf16.mxu0 0
  %404 = vmatpush1.bf16.msra.mxu0 %v295
  %405 = vmatprep.subr.bf16.mxu0 0
  %406 = vmatpush1.bf16.msra.mxu0 %v296
  %407 = vmatprep.subr.bf16.mxu0 0
  %408 = vmatpush1.bf16.msra.mxu0 %v297
  %409 = vmatprep.subr.bf16.mxu0 0
  %410 = vmatpush1.bf16.msra.mxu0 %v298
  %411 = vmatprep.subr.bf16.mxu0 0
  %412 = vmatpush1.bf16.msra.mxu0 %v299
  %413 = vmatprep.subr.bf16.mxu0 0
  %414 = vmatpush1.bf16.msra.mxu0 %v300
  %415 = vmatprep.subr.bf16.mxu0 0
  %416 = vmatpush1.bf16.msra.mxu0 %v301
  %417 = vmatprep.subr.bf16.mxu0 0
  %418 = vmatpush1.bf16.msra.mxu0 %v302
  %419 = vmatprep.subr.bf16.mxu0 0
  %420 = vmatpush1.bf16.msra.mxu0 %v303
  %421 = vmatprep.subr.bf16.mxu0 0
  %422 = vmatpush1.bf16.msra.mxu0 %v304
  %423 = vmatprep.subr.bf16.mxu0 0
  %424 = vmatpush1.bf16.msra.mxu0 %v305
  %425 = vmatprep.subr.bf16.mxu0 0
  %426 = vmatpush1.bf16.msra.mxu0 %v306
  %427 = vmatprep.subr.bf16.mxu0 0
  %428 = vmatpush1.bf16.msra.mxu0 %v307
  %429 = vmatprep.mubr.bf16.mxu0 %v127
  %430 = vmatmul.mubr.bf16.gmra.mrb[0].mxu0 %v126
  %v431 = vpop.f32.mrb[0].mxu0
  %v432 = vadd.f32 %v375, %v431
  %v433 = vpop.f32.mrb[0].mxu0
  %v434 = vpop.f32.mrb[0].mxu0
  %v435 = vadd.f32 %v378, %v434
  %v436 = vpop.f32.mrb[0].mxu0
  %437 = vmatprep.mubr.bf16.mxu0 %v131
  %438 = vmatmul.mubr.bf16.gmra.mrb[0].mxu0 %v130
  %v439 = vpop.f32.mrb[0].mxu0
  %v440 = vadd.f32 %v383, %v439
  %v441 = vpop.f32.mrb[0].mxu0
  %v442 = vpop.f32.mrb[0].mxu0
  %v443 = vadd.f32 %v386, %v442
  %v444 = vpop.f32.mrb[0].mxu0
  %445 = vmatprep.mubr.bf16.mxu0 %v135
  %446 = vmatmul.mubr.bf16.gmra.mrb[0].mxu0 %v134
  %v447 = vpop.f32.mrb[0].mxu0
  %v448 = vadd.f32 %v391, %v447
  %v449 = vpop.f32.mrb[0].mxu0
  %v450 = vpop.f32.mrb[0].mxu0
  %v451 = vadd.f32 %v394, %v450
  %v452 = vpop.f32.mrb[0].mxu0
  %453 = vdwg.mxu0
  %vm454 = vcmask 523264
  %v455 = vsel %vm454, %v432, 0.0
  %v456 = vsel %vm454, %v435, 0.0
  %v457 = vadd.f32 %v455, %v456
  %v458 = vsel %vm454, %v440, 0.0
  %v459 = vadd.f32 %v457, %v458
  %v460 = vsel %vm454, %v443, 0.0
  %v461 = vadd.f32 %v459, %v460
  %v462 = vsel %vm454, %v448, 0.0
  %v463 = vadd.f32 %v461, %v462
  %v464 = vsel %vm454, %v451, 0.0
  %v465 = vadd.f32 %v463, %v464
  %v466 = vrot.slane %v465, 4
  %v467 = vadd.f32 %v465, %v466
  %v468 = vrot.slane %v467, 2
  %v469 = vadd.f32 %v467, %v468
  %v470 = vrot.slane %v469, 1
  %v471 = vadd.f32 %v469, %v470
  %v472 = vrcp.pop 48.0
  %v473 = vmul.f32 %v471, %v472
  %v474 = vsub.f32 %v432, %v473
  %v475 = vsub.f32 %v435, %v473
  %v476 = vsub.f32 %v440, %v473
  %v477 = vsub.f32 %v443, %v473
  %v478 = vsub.f32 %v448, %v473
  %v479 = vsub.f32 %v451, %v473
  %v480 = vmul.f32 %v474, %v474
  %v481 = vmul.f32 %v475, %v475
  %v482 = vmul.f32 %v476, %v476
  %v483 = vmul.f32 %v477, %v477
  %v484 = vmul.f32 %v478, %v478
  %v485 = vmul.f32 %v479, %v479
  %v486 = vsel %vm454, %v480, 0.0
  %v487 = vsel %vm454, %v481, 0.0
  %v488 = vadd.f32 %v486, %v487
  %v489 = vsel %vm454, %v482, 0.0
  %v490 = vadd.f32 %v488, %v489
  %v491 = vsel %vm454, %v483, 0.0
  %v492 = vadd.f32 %v490, %v491
  %v493 = vsel %vm454, %v484, 0.0
  %v494 = vadd.f32 %v492, %v493
  %v495 = vsel %vm454, %v485, 0.0
  %v496 = vadd.f32 %v494, %v495
  %v497 = vrot.slane %v496, 4
  %v498 = vadd.f32 %v496, %v497
  %v499 = vrot.slane %v498, 2
  %v500 = vadd.f32 %v498, %v499
  %v501 = vrot.slane %v500, 1
  %v502 = vadd.f32 %v500, %v501
  %v503 = vmul.f32 %v502, %v472
  %v504 = vadd.f32 %v503, 1e-05
  %v505 = vrsqrt.pop %v504
  %v506 = vmul.f32 %v474, %v505
  %v507 = vmul.f32 %v475, %v505
  %v508 = vmul.f32 %v476, %v505
  %v509 = vmul.f32 %v477, %v505
  %v510 = vmul.f32 %v478, %v505
  %v511 = vmul.f32 %v479, %v505
  %vm512 = vcmp.ge.f32.partialorder %v506, 0.0
  %vm513 = vcmp.ge.f32.partialorder %v507, 0.0
  %vm514 = vcmp.ge.f32.partialorder %v508, 0.0
  %vm515 = vcmp.ge.f32.partialorder %v509, 0.0
  %vm516 = vcmp.ge.f32.partialorder %v510, 0.0
  %vm517 = vcmp.ge.f32.partialorder %v511, 0.0
  %v518 = vmul.f32 %v506, 0.1
  %v519 = vmul.f32 %v507, 0.1
  %v520 = vmul.f32 %v508, 0.1
  %v521 = vmul.f32 %v509, 0.1
  %v522 = vmul.f32 %v510, 0.1
  %v523 = vmul.f32 %v511, 0.1
  %v524 = vsel %vm512, %v506, %v518
  %v525 = vsel %vm513, %v507, %v519
  %v526 = vsel %vm514, %v508, %v520
  %v527 = vsel %vm515, %v509, %v521
  %v528 = vsel %vm516, %v510, %v522
  %v529 = vsel %vm517, %v511, %v523
  %v530 = vpack.c.bf16 %v525, %v524
  %v531 = vpack.c.bf16 %v527, %v526
  %v532 = vpack.c.bf16 %v529, %v528
  %v536 = vunpack.c.l.b16 %v530
  %v537 = vunpack.c.h.b16 %v530
  %v538 = vunpack.c.l.b16 %v531
  %v539 = vunpack.c.h.b16 %v531
  %v540 = vunpack.c.l.b16 %v532
  %v541 = vunpack.c.h.b16 %v532
  %v542 = vpack.c.b16 %v536, %v536
  %v543 = vpack.c.b16 %v537, %v537
  %v544 = vpack.c.b16 %v538, %v538
  %v545 = vpack.c.b16 %v539, %v539
  %v546 = vpack.c.b16 %v540, %v540
  %v547 = vpack.c.b16 %v541, %v541
  %vm554 = vcmask 519168
  %555 = vst.msk [vmem:[%s2] sm:$0xf] %vm554, %v542
  %556 = vst.msk [vmem:[%s2 + $0x4] sm:$0xf] %vm554, %v543
  %557 = vst.msk [vmem:[%s2 + $0x8] sm:$0xf] %vm554, %v544
  %558 = vst.msk [vmem:[%s2 + $0xc] sm:$0xf] %vm554, %v545
  %559 = vst.msk [vmem:[%s2 + $0x10] sm:$0xf] %vm554, %v546
  %560 = vst.msk [vmem:[%s2 + $0x14] sm:$0xf] %vm554, %v547
  // Predicated region
  $region10: #{discriminator_forward.7} parent=0 // pred_check
    _
  $region11: #{discriminator_forward.7} parent=0 // pred_check_branch
    %562 = sbr.rel (0) target = $region13
  $region12: #{discriminator_forward.7} parent=0 // pred_region
    _
  $region13: #{discriminator_forward.7} parent=0 // pred_fallthru
    _
  // Predicated region
  $region14: #{discriminator_forward.7} parent=0 // pred_check
    _
  $region15: #{discriminator_forward.7} parent=0 // pred_check_branch
    %564 = sbr.rel (0) target = $region17
  $region16: #{discriminator_forward.7} parent=0 // pred_region
    _
  $region17: #{discriminator_forward.7} parent=0 // pred_fallthru
    _

</llo_original>
